<compile_context>
chip_gen: v7x
topology: tpu7x:2x2x1
jax: 0.10.0
libtpu: 0.0.40
codegen_flags: <defaults>
</compile_context>

<pallas_src>
import functools

import jax
import jax.numpy as jnp
from jax.experimental import pallas as pl
from jax.experimental.pallas import tpu as pltpu


VMEM_LIMIT = 64 * 1024 * 1024   # fits physical VMEM on v5e/v6e/v7x


def _round_up(x: int, m: int) -> int:
    return ((x + m - 1) // m) * m


def _pick_th(h: int) -> int:
    # Row-strip height: >=2 strips per image when possible (v7x dual-TC).
    return 8 if (h % 8 == 0 and h >= 16) else h


# ---------------------------------------------------------------------------
# Shared im2col -> MXU helper: 3 matmuls (one per dh), K = 3*cp_in each.
# get_piece(dh, dw) must return a (th, w_out, cp_in) bf16 tile.
# ---------------------------------------------------------------------------
def _im2col_matmul(get_piece, w_ref, th, w_out, cp_in, cp_out):
    acc = jnp.zeros((th * w_out, cp_out), jnp.float32)
    for dh in range(3):
        cols = [get_piece(dh, dw).reshape(th * w_out, cp_in) for dw in range(3)]
        patch = jnp.concatenate(cols, axis=1)                  # (th*W, 3*cp_in)
        wk = w_ref[dh * 3 * cp_in:(dh + 1) * 3 * cp_in, :]     # static slice
        acc = acc + jnp.dot(patch, wk, preferred_element_type=jnp.float32)
    return acc


def _emit_stats(acc, sum_ref, sq_ref):
    # Resident per-image accumulators across the (arbitrary) strip axis.
    @pl.when(pl.program_id(1) == 0)
    def _():
        sum_ref[...] = jnp.zeros_like(sum_ref)
        sq_ref[...] = jnp.zeros_like(sq_ref)

    sum_ref[0:1, :] += jnp.sum(acc, axis=0, keepdims=True)
    sq_ref[0:1, :] += jnp.sum(acc * acc, axis=0, keepdims=True)


# ---------------------------------------------------------------------------
# Kernel 1: conv1 = 3x3 "same" conv on a spatially pre-padded, channel-padded
# bf16 input; emits bf16 conv output strips + fused per-image BN statistics.
# ---------------------------------------------------------------------------
def _conv1_kernel(xp_ref, w_ref, o_ref, sum_ref, sq_ref):
    th, w_out, cp_out = o_ref.shape
    cp_in = xp_ref.shape[-1]
    r0 = pl.multiple_of(pl.program_id(1) * th, th)

    def piece(dh, dw):
        return xp_ref[pl.ds(r0 + dh, th), dw:dw + w_out, :]

    acc = _im2col_matmul(piece, w_ref, th, w_out, cp_in, cp_out)
    o_ref[...] = acc.reshape(o_ref.shape).astype(o_ref.dtype)
    _emit_stats(acc, sum_ref, sq_ref)


def _conv1(xp_bf16, w_bf16, h, w, th, cp_out):
    n = xp_bf16.shape[0]
    cp_in = xp_bf16.shape[-1]
    return pl.pallas_call(
        _conv1_kernel,
        out_shape=(jax.ShapeDtypeStruct((n, h, w, cp_out), jnp.bfloat16),
                   jax.ShapeDtypeStruct((n, 8, cp_out), jnp.float32),
                   jax.ShapeDtypeStruct((n, 8, cp_out), jnp.float32)),
        grid=(n, h // th),
        in_specs=[
            # whole padded image per batch; re-DMA'd only when batch changes.
            pl.BlockSpec((None, h + 2, w + 2, cp_in), lambda i, j: (i, 0, 0, 0)),
            pl.BlockSpec((9 * cp_in, cp_out), lambda i, j: (0, 0)),
        ],
        out_specs=(
            pl.BlockSpec((None, th, w, cp_out), lambda i, j: (i, j, 0, 0)),
            pl.BlockSpec((None, 8, cp_out), lambda i, j: (i, 0, 0)),   # resident
            pl.BlockSpec((None, 8, cp_out), lambda i, j: (i, 0, 0)),   # resident
        ),
        compiler_params=pltpu.CompilerParams(
            dimension_semantics=("parallel", "arbitrary"),
            vmem_limit_bytes=VMEM_LIMIT),
    )(xp_bf16, w_bf16)


# ---------------------------------------------------------------------------
# Kernel 2: conv2 with BN1-apply + ReLU + implicit SAME zero padding fused in.
# Consumes the UNPADDED bf16 conv1 output; builds the normalized halo strip in
# a small VMEM scratch; emits bf16 conv2 strips + fused BN2 statistics.
# ---------------------------------------------------------------------------
def _conv2_kernel(y_ref, scale_ref, shift_ref, w_ref, o_ref, sum_ref, sq_ref,
                  zbuf, *, relu):
    th, w_out, cp_out = o_ref.shape
    h_full = y_ref.shape[0]
    cp_in = y_ref.shape[-1]
    j = pl.program_id(1)
    last = pl.num_programs(1) - 1
    r0 = pl.multiple_of(j * th, th)

    scale = scale_ref[...]
    shift = shift_ref[...]

    def norm(x):                      # bf16 -> (BN1 apply [+ReLU], f32 math) -> bf16
        v = x.astype(jnp.float32) * scale + shift
        if relu:
            v = jnp.maximum(v, 0.0)
        return v.astype(jnp.bfloat16)

    # Build normalized, zero-padded halo strip: zbuf[k, m] = z1[r0-1+k, m-1].
    zero_col = jnp.zeros((th + 2, 1, cp_in), jnp.bfloat16)
    zbuf[:, 0:1, :] = zero_col
    zbuf[:, w_out + 1:w_out + 2, :] = zero_col
    zbuf[1:th + 1, 1:w_out + 1, :] = norm(y_ref[pl.ds(r0, th), :, :])

    top = norm(y_ref[pl.ds(jnp.maximum(r0 - 1, 0), 1), :, :])
    zbuf[0:1, 1:w_out + 1, :] = jnp.where(j == 0, jnp.zeros_like(top), top)
    bot = norm(y_ref[pl.ds(jnp.minimum(r0 + th, h_full - 1), 1), :, :])
    zbuf[th + 1:th + 2, 1:w_out + 1, :] = jnp.where(j == last,
                                                    jnp.zeros_like(bot), bot)

    def piece(dh, dw):
        return zbuf[dh:dh + th, dw:dw + w_out, :]

    acc = _im2col_matmul(piece, w_ref, th, w_out, cp_in, cp_out)
    o_ref[...] = acc.reshape(o_ref.shape).astype(o_ref.dtype)
    _emit_stats(acc, sum_ref, sq_ref)


def _conv2(y1_bf16, scale1, shift1, w_bf16, h, w, th, cp_out, relu):
    n = y1_bf16.shape[0]
    cp_in = y1_bf16.shape[-1]
    kernel = functools.partial(_conv2_kernel, relu=relu)
    return pl.pallas_call(
        kernel,
        out_shape=(jax.ShapeDtypeStruct((n, h, w, cp_out), jnp.bfloat16),
                   jax.ShapeDtypeStruct((n, 8, cp_out), jnp.float32),
                   jax.ShapeDtypeStruct((n, 8, cp_out), jnp.float32)),
        grid=(n, h // th),
        in_specs=[
            pl.BlockSpec((None, h, w, cp_in), lambda i, j: (i, 0, 0, 0)),
            pl.BlockSpec((1, cp_in), lambda i, j: (0, 0)),
            pl.BlockSpec((1, cp_in), lambda i, j: (0, 0)),
            pl.BlockSpec((9 * cp_in, cp_out), lambda i, j: (0, 0)),
        ],
        out_specs=(
            pl.BlockSpec((None, th, w, cp_out), lambda i, j: (i, j, 0, 0)),
            pl.BlockSpec((None, 8, cp_out), lambda i, j: (i, 0, 0)),
            pl.BlockSpec((None, 8, cp_out), lambda i, j: (i, 0, 0)),
        ),
        scratch_shapes=[pltpu.VMEM((th + 2, w + 2, cp_in), jnp.bfloat16)],
        compiler_params=pltpu.CompilerParams(
            dimension_semantics=("parallel", "arbitrary"),
            vmem_limit_bytes=VMEM_LIMIT),
    )(y1_bf16, scale1, shift1, w_bf16)


# ---------------------------------------------------------------------------
# BN statistic finalize (tiny, plain JAX): sums come from the conv f32 accs.
# ---------------------------------------------------------------------------
def _bn_scale_shift(s_out, q_out, count, gamma_pad, beta_pad, eps):
    s = jnp.sum(s_out[:, 0, :], axis=0)
    q = jnp.sum(q_out[:, 0, :], axis=0)
    mean = s / count
    var = jnp.maximum(q / count - mean * mean, 0.0)     # biased var (BN training)
    scale = gamma_pad * jax.lax.rsqrt(var + eps)
    shift = beta_pad - mean * scale
    return scale.reshape(1, -1), shift.reshape(1, -1)


# ---------------------------------------------------------------------------
# Kernel 3: final BN2-apply (+ optional ReLU), row-strip tiled (no pad path).
# ---------------------------------------------------------------------------
def _bn_act_kernel(y_ref, scale_ref, shift_ref, o_ref, *, relu):
    v = y_ref[...].astype(jnp.float32) * scale_ref[...] + shift_ref[...]
    if relu:
        v = jnp.maximum(v, 0.0)
    o_ref[...] = v.astype(o_ref.dtype)


def _bn_act(y, scale, shift, *, relu, out_dtype, th):
    n, h, w, cp = y.shape
    return pl.pallas_call(
        functools.partial(_bn_act_kernel, relu=relu),
        out_shape=jax.ShapeDtypeStruct((n, h, w, cp), out_dtype),
        grid=(n, h // th),
        in_specs=[
            pl.BlockSpec((None, th, w, cp), lambda i, j: (i, j, 0, 0)),
            pl.BlockSpec((1, cp), lambda i, j: (0, 0)),
            pl.BlockSpec((1, cp), lambda i, j: (0, 0)),
        ],
        out_specs=pl.BlockSpec((None, th, w, cp), lambda i, j: (i, j, 0, 0)),
        compiler_params=pltpu.CompilerParams(
            dimension_semantics=("parallel", "parallel"),
            vmem_limit_bytes=VMEM_LIMIT),
    )(y, scale, shift)


# ---------------------------------------------------------------------------
# Glue (plain JAX, tiny): bilinear x2 upsample with align_corners=True
# (nn.UpsamplingBilinear2d) as two interpolation-matrix contractions.
# ---------------------------------------------------------------------------
def _interp_matrix(n_in: int, n_out: int) -> jnp.ndarray:
    if n_in == 1:
        return jnp.ones((n_out, 1), jnp.float32)
    src = jnp.arange(n_out, dtype=jnp.float32) * (n_in - 1) / (n_out - 1)
    lo = jnp.clip(jnp.floor(src).astype(jnp.int32), 0, n_in - 2)
    frac = src - lo.astype(jnp.float32)
    idx = jnp.arange(n_out)
    m = jnp.zeros((n_out, n_in), jnp.float32)
    m = m.at[idx, lo].add(1.0 - frac)
    m = m.at[idx, lo + 1].add(frac)
    return m


def bilinear_upsample_x2(x_nhwc):
    n, h, w, c = x_nhwc.shape
    mh = _interp_matrix(h, 2 * h)
    mw = _interp_matrix(w, 2 * w)
    y = jnp.einsum("Ph,nhwc->nPwc", mh, x_nhwc)
    y = jnp.einsum("Qw,nPwc->nPQc", mw, y)
    return y


# ---------------------------------------------------------------------------
# Parameter init (matches nn.Conv2d / nn.BatchNorm2d defaults).
# ---------------------------------------------------------------------------
def init_params(key, c_small, c_ref, c_out):
    c_in = c_ref + c_small

    def conv_init(k, cin, cout):
        fan_in = cin * 9
        bound = 1.0 / (fan_in ** 0.5)
        kw, kb = jax.random.split(k)
        w = jax.random.uniform(kw, (3, 3, cin, cout), jnp.float32, -bound, bound)
        b = jax.random.uniform(kb, (cout,), jnp.float32, -bound, bound)
        return w, b

    k1, k2 = jax.random.split(key)
    w1, b1 = conv_init(k1, c_in, c_out)
    w2, b2 = conv_init(k2, c_out, c_out)
    return dict(
        w1=w1, b1=b1, g1=jnp.ones((c_out,), jnp.float32), beta1=jnp.zeros((c_out,), jnp.float32),
        w2=w2, b2=b2, g2=jnp.ones((c_out,), jnp.float32), beta2=jnp.zeros((c_out,), jnp.float32),
    )


def _prep_weight(w, cp_in, cp_out):
    kh, kw, cin, cout = w.shape
    wp = jnp.pad(w, ((0, 0), (0, 0), (0, cp_in - cin), (0, cp_out - cout)))
    # (kh, kw, cp_in, cp_out) -> (9*cp_in, cp_out); K index order (dh, dw, cin)
    # matches the in-kernel im2col concat order.
    return wp.reshape(kh * kw * cp_in, cp_out).astype(jnp.bfloat16)


def _pad_vec(v, cp):
    return jnp.pad(v, (0, cp - v.shape[0]))


# ---------------------------------------------------------------------------
# UConv2d forward (Pallas path).
# ---------------------------------------------------------------------------
def uconv2d_forward(params, small_nchw, ref_nchw, activation=True, eps=1e-5):
    small = jnp.transpose(small_nchw, (0, 2, 3, 1))     # NCHW -> NHWC
    ref = jnp.transpose(ref_nchw, (0, 2, 3, 1))
    up = bilinear_upsample_x2(small)

    n, h, w, c_ref = ref.shape
    c_small = up.shape[-1]
    c_in = c_ref + c_small
    c_out = params["w1"].shape[-1]

    cp_in = _round_up(c_in, 128)    # lane-dense channel padding
    cp_out = _round_up(c_out, 128)
    th = _pick_th(h)

    # Concat + halo pad + channel pad of the first conv's input in one XLA
    # materialization; bf16 halves HBM/DMA traffic into the MXU.
    x = jnp.concatenate([ref, up], axis=-1)
    xp = jnp.pad(x, ((0, 0), (1, 1), (1, 1), (0, cp_in - c_in))).astype(jnp.bfloat16)

    w1 = _prep_weight(params["w1"], cp_in, cp_out)
    w2 = _prep_weight(params["w2"], cp_out, cp_out)
    g1, be1 = _pad_vec(params["g1"], cp_out), _pad_vec(params["beta1"], cp_out)
    g2, be2 = _pad_vec(params["g2"], cp_out), _pad_vec(params["beta2"], cp_out)
    # Note: conv biases (params["b1"/"b2"]) are intentionally NOT added — they
    # are exactly cancelled by training-mode BN mean subtraction.

    count = jnp.float32(n * h * w)

    # conv1 + fused BN1 statistics (bf16 intermediate, single HBM write)
    y1, s1, q1 = _conv1(xp, w1, h, w, th, cp_out)
    sc1, sh1 = _bn_scale_shift(s1, q1, count, g1, be1, eps)

    # conv2 with BN1-apply + ReLU + implicit SAME padding fused in,
    # plus fused BN2 statistics.
    y2, s2, q2 = _conv2(y1, sc1, sh1, w2, h, w, th, cp_out, relu=activation)
    sc2, sh2 = _bn_scale_shift(s2, q2, count, g2, be2, eps)

    # final BN2-apply (+ ReLU), strip-tiled.
    out = _bn_act(y2, sc2, sh2, relu=activation, out_dtype=jnp.float32, th=th)

    out = out[..., :c_out]                                             # strip lane padding
    return jnp.transpose(out, (0, 3, 1, 2))                            # back to NCHW


# ---------------------------------------------------------------------------
# Pure-JAX reference (same semantics, f32, with conv bias) for the sanity check.
# ---------------------------------------------------------------------------
def reference_forward(params, small_nchw, ref_nchw, activation=True):
    small = jnp.transpose(small_nchw, (0, 2, 3, 1))
    ref = jnp.transpose(ref_nchw, (0, 2, 3, 1))
    x = jnp.concatenate([ref, bilinear_upsample_x2(small)], axis=-1)

    def conv_ref(x, w, b):
        return jax.lax.conv_general_dilated(
            x, w, (1, 1), "SAME",
            dimension_numbers=("NHWC", "HWIO", "NHWC")) + b

    def bn_ref(y, g, be, relu):
        mean = jnp.mean(y, axis=(0, 1, 2), keepdims=True)
        var = jnp.mean((y - mean) ** 2, axis=(0, 1, 2), keepdims=True)
        out = (y - mean) * jax.lax.rsqrt(var + 1e-5) * g + be
        return jnp.maximum(out, 0.0) if relu else out

    y = bn_ref(conv_ref(x, params["w1"], params["b1"]), params["g1"], params["beta1"], activation)
    y = bn_ref(conv_ref(y, params["w2"], params["b2"]), params["g2"], params["beta2"], activation)
    return jnp.transpose(y, (0, 3, 1, 2))


if __name__ == "__main__":
    key = jax.random.PRNGKey(0)
    kp, ks, kr = jax.random.split(key, 3)

    C_SMALL, C_REF, C_OUT = 4, 2, 8
    small = jax.random.normal(ks, (2, C_SMALL, 8, 8), jnp.float32)     # NCHW
    ref = jax.random.normal(kr, (2, C_REF, 16, 16), jnp.float32)       # NCHW (2x spatial)

    params = init_params(kp, C_SMALL, C_REF, C_OUT)

    fwd = jax.jit(functools.partial(uconv2d_forward, activation=True))
    out = jax.block_until_ready(fwd(params, small, ref))
    expected = jax.block_until_ready(reference_forward(params, small, ref, activation=True))

    assert out.shape == (2, C_OUT, 16, 16), out.shape
    err = float(jnp.max(jnp.abs(out - expected)))
    assert err < 5e-2, f"max abs err {err}"
    print("KERNEL_OK")
</pallas_src>

<mosaic_0001>
module attributes {stable_mosaic.version = 11 : i64} {
  func.func private @main(%arg0: i32) attributes {dimension_semantics = [#tpu.dimension_semantics<core_parallel>], iteration_bounds = array<i64: 2>, tpu.core_type = #tpu.core_type<sc_scalar_subcore>, window_params = []} {
    return
  }
}

module attributes {stable_mosaic.version = 11 : i64} {
  func.func private @main(%arg0: i32) attributes {dimension_semantics = [#tpu.dimension_semantics<core_parallel>], iteration_bounds = array<i64: 2>, tpu.core_type = #tpu.core_type<sc_scalar_subcore>, window_params = []} {
    return
  }
}

module attributes {stable_mosaic.version = 11 : i64} {
  func.func @_conv1_kernel(%arg0: i32, %arg1: i32, %arg2: memref<1x18x18x128xbf16, #tpu.memory_space<vmem>>, %arg3: memref<1152x128xbf16, #tpu.memory_space<vmem>>, %arg4: memref<1x8x16x128xbf16, #tpu.memory_space<vmem>>, %arg5: memref<1x8x128xf32, #tpu.memory_space<vmem>>, %arg6: memref<1x8x128xf32, #tpu.memory_space<vmem>>) attributes {dimension_semantics = [#tpu.dimension_semantics<parallel>, #tpu.dimension_semantics<arbitrary>], iteration_bounds = array<i64: 2, 2>, scalar_prefetch = 0 : i64, scratch_operands = 0 : i64, tpu.core_type = #tpu.core_type<tc>, window_params = [{transform_indices = @transform_0, window_bounds = array<i64: 1, 18, 18, 128>}, {pipeline_mode = #tpu.pipeline_mode<synchronous>, transform_indices = @transform_1, window_bounds = array<i64: 1152, 128>}, {transform_indices = @transform_2, window_bounds = array<i64: 1, 8, 16, 128>}, {transform_indices = @transform_3, window_bounds = array<i64: 1, 8, 128>}, {transform_indices = @transform_4, window_bounds = array<i64: 1, 8, 128>}]} {
    %c8_i32 = arith.constant 8 : i32
    %0 = arith.muli %arg1, %c8_i32 : i32
    %1 = tpu.assume_multiple %0, 8 : i32
    %cst = arith.constant 0.000000e+00 : f32
    %2 = vector.broadcast %cst : f32 to vector<128x128xf32>
    %c0_i32 = arith.constant 0 : i32
    %3 = arith.addi %1, %c0_i32 : i32
    %c0 = arith.constant 0 : index
    %4 = arith.index_cast %3 : i32 to index
    %c0_0 = arith.constant 0 : index
    %c0_1 = arith.constant 0 : index
    %5 = vector.load %arg2[%c0, %4, %c0_0, %c0_1] : memref<1x18x18x128xbf16, #tpu.memory_space<vmem>>, vector<1x8x16x128xbf16>
    %6 = vector.shape_cast %5 : vector<1x8x16x128xbf16> to vector<8x16x128xbf16>
    %7 = vector.shape_cast %6 : vector<8x16x128xbf16> to vector<128x128xbf16>
    %c0_i32_2 = arith.constant 0 : i32
    %8 = arith.addi %1, %c0_i32_2 : i32
    %c0_3 = arith.constant 0 : index
    %9 = arith.index_cast %8 : i32 to index
    %c1 = arith.constant 1 : index
    %c0_4 = arith.constant 0 : index
    %10 = vector.load %arg2[%c0_3, %9, %c1, %c0_4] : memref<1x18x18x128xbf16, #tpu.memory_space<vmem>>, vector<1x8x16x128xbf16>
    %11 = vector.shape_cast %10 : vector<1x8x16x128xbf16> to vector<8x16x128xbf16>
    %12 = vector.shape_cast %11 : vector<8x16x128xbf16> to vector<128x128xbf16>
    %c0_i32_5 = arith.constant 0 : i32
    %13 = arith.addi %1, %c0_i32_5 : i32
    %c0_6 = arith.constant 0 : index
    %14 = arith.index_cast %13 : i32 to index
    %c2 = arith.constant 2 : index
    %c0_7 = arith.constant 0 : index
    %15 = vector.load %arg2[%c0_6, %14, %c2, %c0_7] : memref<1x18x18x128xbf16, #tpu.memory_space<vmem>>, vector<1x8x16x128xbf16>
    %16 = vector.shape_cast %15 : vector<1x8x16x128xbf16> to vector<8x16x128xbf16>
    %17 = vector.shape_cast %16 : vector<8x16x128xbf16> to vector<128x128xbf16>
    %18 = tpu.concatenate %7, %12, %17 in 1 : vector<128x128xbf16>, vector<128x128xbf16>, vector<128x128xbf16> -> vector<128x384xbf16>
    %c0_8 = arith.constant 0 : index
    %c0_9 = arith.constant 0 : index
    %19 = vector.load %arg3[%c0_8, %c0_9] : memref<1152x128xbf16, #tpu.memory_space<vmem>>, vector<384x128xbf16>
    %cst_10 = arith.constant dense<0.000000e+00> : vector<128x128xf32>
    %20 = tpu.matmul %18, %19, %cst_10 {dimension_numbers = #tpu.dot_dimension_numbers<[1], [0], [0], [1], [0, 0, 1, 1], [], []>} : vector<128x384xbf16>, vector<384x128xbf16>, vector<128x128xf32> -> vector<128x128xf32>
    %21 = arith.addf %2, %20 : vector<128x128xf32>
    %c1_i32 = arith.constant 1 : i32
    %22 = arith.addi %1, %c1_i32 : i32
    %c0_11 = arith.constant 0 : index
    %23 = arith.index_cast %22 : i32 to index
    %c0_12 = arith.constant 0 : index
    %c0_13 = arith.constant 0 : index
    %24 = vector.load %arg2[%c0_11, %23, %c0_12, %c0_13] : memref<1x18x18x128xbf16, #tpu.memory_space<vmem>>, vector<1x8x16x128xbf16>
    %25 = vector.shape_cast %24 : vector<1x8x16x128xbf16> to vector<8x16x128xbf16>
    %26 = vector.shape_cast %25 : vector<8x16x128xbf16> to vector<128x128xbf16>
    %c1_i32_14 = arith.constant 1 : i32
    %27 = arith.addi %1, %c1_i32_14 : i32
    %c0_15 = arith.constant 0 : index
    %28 = arith.index_cast %27 : i32 to index
    %c1_16 = arith.constant 1 : index
    %c0_17 = arith.constant 0 : index
    %29 = vector.load %arg2[%c0_15, %28, %c1_16, %c0_17] : memref<1x18x18x128xbf16, #tpu.memory_space<vmem>>, vector<1x8x16x128xbf16>
    %30 = vector.shape_cast %29 : vector<1x8x16x128xbf16> to vector<8x16x128xbf16>
    %31 = vector.shape_cast %30 : vector<8x16x128xbf16> to vector<128x128xbf16>
    %c1_i32_18 = arith.constant 1 : i32
    %32 = arith.addi %1, %c1_i32_18 : i32
    %c0_19 = arith.constant 0 : index
    %33 = arith.index_cast %32 : i32 to index
    %c2_20 = arith.constant 2 : index
    %c0_21 = arith.constant 0 : index
    %34 = vector.load %arg2[%c0_19, %33, %c2_20, %c0_21] : memref<1x18x18x128xbf16, #tpu.memory_space<vmem>>, vector<1x8x16x128xbf16>
    %35 = vector.shape_cast %34 : vector<1x8x16x128xbf16> to vector<8x16x128xbf16>
    %36 = vector.shape_cast %35 : vector<8x16x128xbf16> to vector<128x128xbf16>
    %37 = tpu.concatenate %26, %31, %36 in 1 : vector<128x128xbf16>, vector<128x128xbf16>, vector<128x128xbf16> -> vector<128x384xbf16>
    %c384 = arith.constant 384 : index
    %c0_22 = arith.constant 0 : index
    %38 = vector.load %arg3[%c384, %c0_22] : memref<1152x128xbf16, #tpu.memory_space<vmem>>, vector<384x128xbf16>
    %cst_23 = arith.constant dense<0.000000e+00> : vector<128x128xf32>
    %39 = tpu.matmul %37, %38, %cst_23 {dimension_numbers = #tpu.dot_dimension_numbers<[1], [0], [0], [1], [0, 0, 1, 1], [], []>} : vector<128x384xbf16>, vector<384x128xbf16>, vector<128x128xf32> -> vector<128x128xf32>
    %40 = arith.addf %21, %39 : vector<128x128xf32>
    %c2_i32 = arith.constant 2 : i32
    %41 = arith.addi %1, %c2_i32 : i32
    %c0_24 = arith.constant 0 : index
    %42 = arith.index_cast %41 : i32 to index
    %c0_25 = arith.constant 0 : index
    %c0_26 = arith.constant 0 : index
    %43 = vector.load %arg2[%c0_24, %42, %c0_25, %c0_26] : memref<1x18x18x128xbf16, #tpu.memory_space<vmem>>, vector<1x8x16x128xbf16>
    %44 = vector.shape_cast %43 : vector<1x8x16x128xbf16> to vector<8x16x128xbf16>
    %45 = vector.shape_cast %44 : vector<8x16x128xbf16> to vector<128x128xbf16>
    %c2_i32_27 = arith.constant 2 : i32
    %46 = arith.addi %1, %c2_i32_27 : i32
    %c0_28 = arith.constant 0 : index
    %47 = arith.index_cast %46 : i32 to index
    %c1_29 = arith.constant 1 : index
    %c0_30 = arith.constant 0 : index
    %48 = vector.load %arg2[%c0_28, %47, %c1_29, %c0_30] : memref<1x18x18x128xbf16, #tpu.memory_space<vmem>>, vector<1x8x16x128xbf16>
    %49 = vector.shape_cast %48 : vector<1x8x16x128xbf16> to vector<8x16x128xbf16>
    %50 = vector.shape_cast %49 : vector<8x16x128xbf16> to vector<128x128xbf16>
    %c2_i32_31 = arith.constant 2 : i32
    %51 = arith.addi %1, %c2_i32_31 : i32
    %c0_32 = arith.constant 0 : index
    %52 = arith.index_cast %51 : i32 to index
    %c2_33 = arith.constant 2 : index
    %c0_34 = arith.constant 0 : index
    %53 = vector.load %arg2[%c0_32, %52, %c2_33, %c0_34] : memref<1x18x18x128xbf16, #tpu.memory_space<vmem>>, vector<1x8x16x128xbf16>
    %54 = vector.shape_cast %53 : vector<1x8x16x128xbf16> to vector<8x16x128xbf16>
    %55 = vector.shape_cast %54 : vector<8x16x128xbf16> to vector<128x128xbf16>
    %56 = tpu.concatenate %45, %50, %55 in 1 : vector<128x128xbf16>, vector<128x128xbf16>, vector<128x128xbf16> -> vector<128x384xbf16>
    %c768 = arith.constant 768 : index
    %c0_35 = arith.constant 0 : index
    %57 = vector.load %arg3[%c768, %c0_35] : memref<1152x128xbf16, #tpu.memory_space<vmem>>, vector<384x128xbf16>
    %cst_36 = arith.constant dense<0.000000e+00> : vector<128x128xf32>
    %58 = tpu.matmul %56, %57, %cst_36 {dimension_numbers = #tpu.dot_dimension_numbers<[1], [0], [0], [1], [0, 0, 1, 1], [], []>} : vector<128x384xbf16>, vector<384x128xbf16>, vector<128x128xf32> -> vector<128x128xf32>
    %59 = arith.addf %40, %58 : vector<128x128xf32>
    %60 = vector.shape_cast %59 : vector<128x128xf32> to vector<8x16x128xf32>
    %61 = arith.truncf %60 : vector<8x16x128xf32> to vector<8x16x128xbf16>
    %c0_37 = arith.constant 0 : index
    %c0_38 = arith.constant 0 : index
    %c0_39 = arith.constant 0 : index
    %c0_40 = arith.constant 0 : index
    %62 = vector.load %arg4[%c0_37, %c0_38, %c0_39, %c0_40] : memref<1x8x16x128xbf16, #tpu.memory_space<vmem>>, vector<1x8x16x128xbf16>
    %63 = vector.shape_cast %62 : vector<1x8x16x128xbf16> to vector<8x16x128xbf16>
    %64 = vector.shape_cast %61 : vector<8x16x128xbf16> to vector<1x8x16x128xbf16>
    tpu.vector_store %arg4[%c0_37, %c0_38, %c0_39, %c0_40], %64 {strides = array<i32>} : memref<1x8x16x128xbf16, #tpu.memory_space<vmem>>, vector<1x8x16x128xbf16>,
    %c0_i32_41 = arith.constant 0 : i32
    %65 = arith.cmpi eq, %arg1, %c0_i32_41 : i32
    %66 = arith.extui %65 : i1 to i32
    %c0_i32_42 = arith.constant 0 : i32
    %67 = arith.cmpi ne, %66, %c0_i32_42 : i32
    scf.if %67 {
      %cst_57 = arith.constant 0.000000e+00 : f32
      %85 = vector.broadcast %cst_57 : f32 to vector<8x128xf32>
      %c0_58 = arith.constant 0 : index
      %c0_59 = arith.constant 0 : index
      %c0_60 = arith.constant 0 : index
      %86 = vector.load %arg5[%c0_58, %c0_59, %c0_60] : memref<1x8x128xf32, #tpu.memory_space<vmem>>, vector<1x8x128xf32>
      %87 = vector.shape_cast %86 : vector<1x8x128xf32> to vector<8x128xf32>
      %88 = vector.shape_cast %85 : vector<8x128xf32> to vector<1x8x128xf32>
      tpu.vector_store %arg5[%c0_58, %c0_59, %c0_60], %88 {strides = array<i32>} : memref<1x8x128xf32, #tpu.memory_space<vmem>>, vector<1x8x128xf32>,
      %cst_61 = arith.constant 0.000000e+00 : f32
      %89 = vector.broadcast %cst_61 : f32 to vector<8x128xf32>
      %c0_62 = arith.constant 0 : index
      %c0_63 = arith.constant 0 : index
      %c0_64 = arith.constant 0 : index
      %90 = vector.load %arg6[%c0_62, %c0_63, %c0_64] : memref<1x8x128xf32, #tpu.memory_space<vmem>>, vector<1x8x128xf32>
      %91 = vector.shape_cast %90 : vector<1x8x128xf32> to vector<8x128xf32>
      %92 = vector.shape_cast %89 : vector<8x128xf32> to vector<1x8x128xf32>
      tpu.vector_store %arg6[%c0_62, %c0_63, %c0_64], %92 {strides = array<i32>} : memref<1x8x128xf32, #tpu.memory_space<vmem>>, vector<1x8x128xf32>,
    } else {
    }
    %c0_43 = arith.constant 0 : index
    %c0_44 = arith.constant 0 : index
    %c0_45 = arith.constant 0 : index
    %68 = vector.load %arg5[%c0_43, %c0_44, %c0_45] : memref<1x8x128xf32, #tpu.memory_space<vmem>>, vector<1x1x128xf32>
    %69 = vector.shape_cast %68 : vector<1x1x128xf32> to vector<1x128xf32>
    %cst_46 = arith.constant dense<0.000000e+00> : vector<128xf32>
    %70 = vector.multi_reduction <add>, %59, %cst_46 [0] : vector<128x128xf32> to vector<128xf32>
    %71 = vector.shape_cast %70 : vector<128xf32> to vector<1x128xf32>
    %72 = arith.addf %69, %71 : vector<1x128xf32>
    %c0_47 = arith.constant 0 : index
    %c0_48 = arith.constant 0 : index
    %c0_49 = arith.constant 0 : index
    %73 = vector.load %arg5[%c0_47, %c0_48, %c0_49] : memref<1x8x128xf32, #tpu.memory_space<vmem>>, vector<1x1x128xf32>
    %74 = vector.shape_cast %73 : vector<1x1x128xf32> to vector<1x128xf32>
    %75 = vector.shape_cast %72 : vector<1x128xf32> to vector<1x1x128xf32>
    tpu.vector_store %arg5[%c0_47, %c0_48, %c0_49], %75 {strides = array<i32>} : memref<1x8x128xf32, #tpu.memory_space<vmem>>, vector<1x1x128xf32>,
    %c0_50 = arith.constant 0 : index
    %c0_51 = arith.constant 0 : index
    %c0_52 = arith.constant 0 : index
    %76 = vector.load %arg6[%c0_50, %c0_51, %c0_52] : memref<1x8x128xf32, #tpu.memory_space<vmem>>, vector<1x1x128xf32>
    %77 = vector.shape_cast %76 : vector<1x1x128xf32> to vector<1x128xf32>
    %78 = arith.mulf %59, %59 : vector<128x128xf32>
    %cst_53 = arith.constant dense<0.000000e+00> : vector<128xf32>
    %79 = vector.multi_reduction <add>, %78, %cst_53 [0] : vector<128x128xf32> to vector<128xf32>
    %80 = vector.shape_cast %79 : vector<128xf32> to vector<1x128xf32>
    %81 = arith.addf %77, %80 : vector<1x128xf32>
    %c0_54 = arith.constant 0 : index
    %c0_55 = arith.constant 0 : index
    %c0_56 = arith.constant 0 : index
    %82 = vector.load %arg6[%c0_54, %c0_55, %c0_56] : memref<1x8x128xf32, #tpu.memory_space<vmem>>, vector<1x1x128xf32>
    %83 = vector.shape_cast %82 : vector<1x1x128xf32> to vector<1x128xf32>
    %84 = vector.shape_cast %81 : vector<1x128xf32> to vector<1x1x128xf32>
    tpu.vector_store %arg6[%c0_54, %c0_55, %c0_56], %84 {strides = array<i32>} : memref<1x8x128xf32, #tpu.memory_space<vmem>>, vector<1x1x128xf32>,
    return
  }
  func.func @transform_0(%arg0: i32, %arg1: i32) -> (i32, i32, i32, i32) {
    %c0_i32 = arith.constant 0 : i32
    %c0_i32_0 = arith.constant 0 : i32
    %c0_i32_1 = arith.constant 0 : i32
    %c0_i32_2 = arith.constant 0 : i32
    return %arg0, %c0_i32, %c0_i32_0, %c0_i32_1 : i32, i32, i32, i32
  }
  func.func @transform_1(%arg0: i32, %arg1: i32) -> (i32, i32) {
    %c0_i32 = arith.constant 0 : i32
    %c0_i32_0 = arith.constant 0 : i32
    %c0_i32_1 = arith.constant 0 : i32
    return %c0_i32, %c0_i32_0 : i32, i32
  }
  func.func @transform_2(%arg0: i32, %arg1: i32) -> (i32, i32, i32, i32) {
    %c0_i32 = arith.constant 0 : i32
    %c0_i32_0 = arith.constant 0 : i32
    %c0_i32_1 = arith.constant 0 : i32
    return %arg0, %arg1, %c0_i32, %c0_i32_0 : i32, i32, i32, i32
  }
  func.func @transform_3(%arg0: i32, %arg1: i32) -> (i32, i32, i32) {
    %c0_i32 = arith.constant 0 : i32
    %c0_i32_0 = arith.constant 0 : i32
    %c0_i32_1 = arith.constant 0 : i32
    return %arg0, %c0_i32, %c0_i32_0 : i32, i32, i32
  }
  func.func @transform_4(%arg0: i32, %arg1: i32) -> (i32, i32, i32) {
    %c0_i32 = arith.constant 0 : i32
    %c0_i32_0 = arith.constant 0 : i32
    %c0_i32_1 = arith.constant 0 : i32
    return %arg0, %c0_i32, %c0_i32_0 : i32, i32, i32
  }
}

module attributes {stable_mosaic.version = 11 : i64} {
  func.func @_bn_act_kernel(%arg0: i32, %arg1: i32, %arg2: memref<1x8x16x128xbf16, #tpu.memory_space<vmem>>, %arg3: memref<1x128xf32, #tpu.memory_space<vmem>>, %arg4: memref<1x128xf32, #tpu.memory_space<vmem>>, %arg5: memref<1x8x16x128xf32, #tpu.memory_space<vmem>>) attributes {dimension_semantics = [#tpu.dimension_semantics<parallel>, #tpu.dimension_semantics<parallel>], iteration_bounds = array<i64: 2, 2>, scalar_prefetch = 0 : i64, scratch_operands = 0 : i64, tpu.core_type = #tpu.core_type<tc>, window_params = [{transform_indices = @transform_0, window_bounds = array<i64: 1, 8, 16, 128>}, {pipeline_mode = #tpu.pipeline_mode<synchronous>, transform_indices = @transform_1, window_bounds = array<i64: 1, 128>}, {pipeline_mode = #tpu.pipeline_mode<synchronous>, transform_indices = @transform_2, window_bounds = array<i64: 1, 128>}, {transform_indices = @transform_3, window_bounds = array<i64: 1, 8, 16, 128>}]} {
    %c0 = arith.constant 0 : index
    %c0_0 = arith.constant 0 : index
    %c0_1 = arith.constant 0 : index
    %c0_2 = arith.constant 0 : index
    %0 = vector.load %arg2[%c0, %c0_0, %c0_1, %c0_2] : memref<1x8x16x128xbf16, #tpu.memory_space<vmem>>, vector<1x8x16x128xbf16>
    %1 = vector.shape_cast %0 : vector<1x8x16x128xbf16> to vector<8x16x128xbf16>
    %2 = arith.extf %1 : vector<8x16x128xbf16> to vector<8x16x128xf32>
    %c0_3 = arith.constant 0 : index
    %c0_4 = arith.constant 0 : index
    %3 = vector.load %arg3[%c0_3, %c0_4] : memref<1x128xf32, #tpu.memory_space<vmem>>, vector<1x128xf32>
    %4 = vector.shape_cast %3 : vector<1x128xf32> to vector<1x1x128xf32>
    %5 = vector.broadcast %4 : vector<1x1x128xf32> to vector<8x16x128xf32>
    %6 = arith.mulf %2, %5 : vector<8x16x128xf32>
    %c0_5 = arith.constant 0 : index
    %c0_6 = arith.constant 0 : index
    %7 = vector.load %arg4[%c0_5, %c0_6] : memref<1x128xf32, #tpu.memory_space<vmem>>, vector<1x128xf32>
    %8 = vector.shape_cast %7 : vector<1x128xf32> to vector<1x1x128xf32>
    %9 = vector.broadcast %8 : vector<1x1x128xf32> to vector<8x16x128xf32>
    %10 = arith.addf %6, %9 : vector<8x16x128xf32>
    %cst = arith.constant 0.000000e+00 : f32
    %11 = vector.broadcast %cst : f32 to vector<8x16x128xf32>
    %12 = arith.maximumf %10, %11 : vector<8x16x128xf32>
    %c0_7 = arith.constant 0 : index
    %c0_8 = arith.constant 0 : index
    %c0_9 = arith.constant 0 : index
    %c0_10 = arith.constant 0 : index
    %13 = vector.load %arg5[%c0_7, %c0_8, %c0_9, %c0_10] : memref<1x8x16x128xf32, #tpu.memory_space<vmem>>, vector<1x8x16x128xf32>
    %14 = vector.shape_cast %13 : vector<1x8x16x128xf32> to vector<8x16x128xf32>
    %15 = vector.shape_cast %12 : vector<8x16x128xf32> to vector<1x8x16x128xf32>
    tpu.vector_store %arg5[%c0_7, %c0_8, %c0_9, %c0_10], %15 {strides = array<i32>} : memref<1x8x16x128xf32, #tpu.memory_space<vmem>>, vector<1x8x16x128xf32>,
    return
  }
  func.func @transform_0(%arg0: i32, %arg1: i32) -> (i32, i32, i32, i32) {
    %c0_i32 = arith.constant 0 : i32
    %c0_i32_0 = arith.constant 0 : i32
    %c0_i32_1 = arith.constant 0 : i32
    return %arg0, %arg1, %c0_i32, %c0_i32_0 : i32, i32, i32, i32
  }
  func.func @transform_1(%arg0: i32, %arg1: i32) -> (i32, i32) {
    %c0_i32 = arith.constant 0 : i32
    %c0_i32_0 = arith.constant 0 : i32
    %c0_i32_1 = arith.constant 0 : i32
    return %c0_i32, %c0_i32_0 : i32, i32
  }
  func.func @transform_2(%arg0: i32, %arg1: i32) -> (i32, i32) {
    %c0_i32 = arith.constant 0 : i32
    %c0_i32_0 = arith.constant 0 : i32
    %c0_i32_1 = arith.constant 0 : i32
    return %c0_i32, %c0_i32_0 : i32, i32
  }
  func.func @transform_3(%arg0: i32, %arg1: i32) -> (i32, i32, i32, i32) {
    %c0_i32 = arith.constant 0 : i32
    %c0_i32_0 = arith.constant 0 : i32
    %c0_i32_1 = arith.constant 0 : i32
    return %arg0, %arg1, %c0_i32, %c0_i32_0 : i32, i32, i32, i32
  }
}

module attributes {stable_mosaic.version = 11 : i64} {
  func.func @_conv2_kernel(%arg0: i32, %arg1: i32, %arg2: memref<1x16x16x128xbf16, #tpu.memory_space<vmem>>, %arg3: memref<1x128xf32, #tpu.memory_space<vmem>>, %arg4: memref<1x128xf32, #tpu.memory_space<vmem>>, %arg5: memref<1152x128xbf16, #tpu.memory_space<vmem>>, %arg6: memref<1x8x16x128xbf16, #tpu.memory_space<vmem>>, %arg7: memref<1x8x128xf32, #tpu.memory_space<vmem>>, %arg8: memref<1x8x128xf32, #tpu.memory_space<vmem>>, %arg9: memref<10x18x128xbf16, #tpu.memory_space<vmem>>) attributes {dimension_semantics = [#tpu.dimension_semantics<parallel>, #tpu.dimension_semantics<arbitrary>], iteration_bounds = array<i64: 2, 2>, scalar_prefetch = 0 : i64, scratch_operands = 1 : i64, tpu.core_type = #tpu.core_type<tc>, window_params = [{transform_indices = @transform_0, window_bounds = array<i64: 1, 16, 16, 128>}, {pipeline_mode = #tpu.pipeline_mode<synchronous>, transform_indices = @transform_1, window_bounds = array<i64: 1, 128>}, {pipeline_mode = #tpu.pipeline_mode<synchronous>, transform_indices = @transform_2, window_bounds = array<i64: 1, 128>}, {pipeline_mode = #tpu.pipeline_mode<synchronous>, transform_indices = @transform_3, window_bounds = array<i64: 1152, 128>}, {transform_indices = @transform_4, window_bounds = array<i64: 1, 8, 16, 128>}, {transform_indices = @transform_5, window_bounds = array<i64: 1, 8, 128>}, {transform_indices = @transform_6, window_bounds = array<i64: 1, 8, 128>}]} {
    %c8_i32 = arith.constant 8 : i32
    %0 = arith.muli %arg1, %c8_i32 : i32
    %1 = tpu.assume_multiple %0, 8 : i32
    %c0 = arith.constant 0 : index
    %c0_0 = arith.constant 0 : index
    %2 = vector.load %arg3[%c0, %c0_0] : memref<1x128xf32, #tpu.memory_space<vmem>>, vector<1x128xf32>
    %c0_1 = arith.constant 0 : index
    %c0_2 = arith.constant 0 : index
    %3 = vector.load %arg4[%c0_1, %c0_2] : memref<1x128xf32, #tpu.memory_space<vmem>>, vector<1x128xf32>
    %cst = arith.constant 0.000000e+00 : bf16
    %4 = vector.broadcast %cst : bf16 to vector<10x1x128xbf16>
    %c0_3 = arith.constant 0 : index
    %c0_4 = arith.constant 0 : index
    %c0_5 = arith.constant 0 : index
    %5 = vector.load %arg9[%c0_3, %c0_4, %c0_5] : memref<10x18x128xbf16, #tpu.memory_space<vmem>>, vector<10x1x128xbf16>
    tpu.vector_store %arg9[%c0_3, %c0_4, %c0_5], %4 {strides = array<i32>} : memref<10x18x128xbf16, #tpu.memory_space<vmem>>, vector<10x1x128xbf16>,
    %c0_6 = arith.constant 0 : index
    %c17 = arith.constant 17 : index
    %c0_7 = arith.constant 0 : index
    %6 = vector.load %arg9[%c0_6, %c17, %c0_7] : memref<10x18x128xbf16, #tpu.memory_space<vmem>>, vector<10x1x128xbf16>
    tpu.vector_store %arg9[%c0_6, %c17, %c0_7], %4 {strides = array<i32>} : memref<10x18x128xbf16, #tpu.memory_space<vmem>>, vector<10x1x128xbf16>,
    %c0_8 = arith.constant 0 : index
    %7 = arith.index_cast %1 : i32 to index
    %c0_9 = arith.constant 0 : index
    %c0_10 = arith.constant 0 : index
    %8 = vector.load %arg2[%c0_8, %7, %c0_9, %c0_10] : memref<1x16x16x128xbf16, #tpu.memory_space<vmem>>, vector<1x8x16x128xbf16>
    %9 = vector.shape_cast %8 : vector<1x8x16x128xbf16> to vector<8x16x128xbf16>
    %10 = arith.extf %9 : vector<8x16x128xbf16> to vector<8x16x128xf32>
    %11 = vector.shape_cast %2 : vector<1x128xf32> to vector<1x1x128xf32>
    %12 = vector.broadcast %11 : vector<1x1x128xf32> to vector<8x16x128xf32>
    %13 = arith.mulf %10, %12 : vector<8x16x128xf32>
    %14 = vector.shape_cast %3 : vector<1x128xf32> to vector<1x1x128xf32>
    %15 = vector.broadcast %14 : vector<1x1x128xf32> to vector<8x16x128xf32>
    %16 = arith.addf %13, %15 : vector<8x16x128xf32>
    %cst_11 = arith.constant 0.000000e+00 : f32
    %17 = vector.broadcast %cst_11 : f32 to vector<8x16x128xf32>
    %18 = arith.maximumf %16, %17 : vector<8x16x128xf32>
    %19 = arith.truncf %18 : vector<8x16x128xf32> to vector<8x16x128xbf16>
    %c1 = arith.constant 1 : index
    %c1_12 = arith.constant 1 : index
    %c0_13 = arith.constant 0 : index
    %20 = vector.load %arg9[%c1, %c1_12, %c0_13] : memref<10x18x128xbf16, #tpu.memory_space<vmem>>, vector<8x16x128xbf16>
    tpu.vector_store %arg9[%c1, %c1_12, %c0_13], %19 {strides = array<i32>} : memref<10x18x128xbf16, #tpu.memory_space<vmem>>, vector<8x16x128xbf16>,
    %c1_i32 = arith.constant 1 : i32
    %21 = arith.subi %1, %c1_i32 : i32
    %c0_i32 = arith.constant 0 : i32
    %22 = arith.maxsi %21, %c0_i32 : i32
    %c0_14 = arith.constant 0 : index
    %23 = arith.index_cast %22 : i32 to index
    %c0_15 = arith.constant 0 : index
    %c0_16 = arith.constant 0 : index
    %24 = vector.load %arg2[%c0_14, %23, %c0_15, %c0_16] : memref<1x16x16x128xbf16, #tpu.memory_space<vmem>>, vector<1x1x16x128xbf16>
    %25 = vector.shape_cast %24 : vector<1x1x16x128xbf16> to vector<1x16x128xbf16>
    %26 = arith.extf %25 : vector<1x16x128xbf16> to vector<1x16x128xf32>
    %27 = vector.shape_cast %2 : vector<1x128xf32> to vector<1x1x128xf32>
    %28 = vector.broadcast %27 : vector<1x1x128xf32> to vector<1x16x128xf32>
    %29 = arith.mulf %26, %28 : vector<1x16x128xf32>
    %30 = vector.shape_cast %3 : vector<1x128xf32> to vector<1x1x128xf32>
    %31 = vector.broadcast %30 : vector<1x1x128xf32> to vector<1x16x128xf32>
    %32 = arith.addf %29, %31 : vector<1x16x128xf32>
    %cst_17 = arith.constant 0.000000e+00 : f32
    %33 = vector.broadcast %cst_17 : f32 to vector<1x16x128xf32>
    %34 = arith.maximumf %32, %33 : vector<1x16x128xf32>
    %35 = arith.truncf %34 : vector<1x16x128xf32> to vector<1x16x128xbf16>
    %c0_i32_18 = arith.constant 0 : i32
    %36 = arith.cmpi eq, %arg1, %c0_i32_18 : i32
    %cst_19 = arith.constant 0.000000e+00 : bf16
    %37 = vector.broadcast %cst_19 : bf16 to vector<1x16x128xbf16>
    %38 = arith.select %36, %37, %35 : vector<1x16x128xbf16>
    %c0_20 = arith.constant 0 : index
    %c1_21 = arith.constant 1 : index
    %c0_22 = arith.constant 0 : index
    %39 = vector.load %arg9[%c0_20, %c1_21, %c0_22] : memref<10x18x128xbf16, #tpu.memory_space<vmem>>, vector<1x16x128xbf16>
    tpu.vector_store %arg9[%c0_20, %c1_21, %c0_22], %38 {strides = array<i32>} : memref<10x18x128xbf16, #tpu.memory_space<vmem>>, vector<1x16x128xbf16>,
    %c8_i32_23 = arith.constant 8 : i32
    %40 = arith.addi %1, %c8_i32_23 : i32
    %c15_i32 = arith.constant 15 : i32
    %41 = arith.minsi %40, %c15_i32 : i32
    %c0_24 = arith.constant 0 : index
    %42 = arith.index_cast %41 : i32 to index
    %c0_25 = arith.constant 0 : index
    %c0_26 = arith.constant 0 : index
    %43 = vector.load %arg2[%c0_24, %42, %c0_25, %c0_26] : memref<1x16x16x128xbf16, #tpu.memory_space<vmem>>, vector<1x1x16x128xbf16>
    %44 = vector.shape_cast %43 : vector<1x1x16x128xbf16> to vector<1x16x128xbf16>
    %45 = arith.extf %44 : vector<1x16x128xbf16> to vector<1x16x128xf32>
    %46 = vector.shape_cast %2 : vector<1x128xf32> to vector<1x1x128xf32>
    %47 = vector.broadcast %46 : vector<1x1x128xf32> to vector<1x16x128xf32>
    %48 = arith.mulf %45, %47 : vector<1x16x128xf32>
    %49 = vector.shape_cast %3 : vector<1x128xf32> to vector<1x1x128xf32>
    %50 = vector.broadcast %49 : vector<1x1x128xf32> to vector<1x16x128xf32>
    %51 = arith.addf %48, %50 : vector<1x16x128xf32>
    %cst_27 = arith.constant 0.000000e+00 : f32
    %52 = vector.broadcast %cst_27 : f32 to vector<1x16x128xf32>
    %53 = arith.maximumf %51, %52 : vector<1x16x128xf32>
    %54 = arith.truncf %53 : vector<1x16x128xf32> to vector<1x16x128xbf16>
    %c1_i32_28 = arith.constant 1 : i32
    %55 = arith.cmpi eq, %arg1, %c1_i32_28 : i32
    %cst_29 = arith.constant 0.000000e+00 : bf16
    %56 = vector.broadcast %cst_29 : bf16 to vector<1x16x128xbf16>
    %57 = arith.select %55, %56, %54 : vector<1x16x128xbf16>
    %c9 = arith.constant 9 : index
    %c1_30 = arith.constant 1 : index
    %c0_31 = arith.constant 0 : index
    %58 = vector.load %arg9[%c9, %c1_30, %c0_31] : memref<10x18x128xbf16, #tpu.memory_space<vmem>>, vector<1x16x128xbf16>
    tpu.vector_store %arg9[%c9, %c1_30, %c0_31], %57 {strides = array<i32>} : memref<10x18x128xbf16, #tpu.memory_space<vmem>>, vector<1x16x128xbf16>,
    %cst_32 = arith.constant 0.000000e+00 : f32
    %59 = vector.broadcast %cst_32 : f32 to vector<128x128xf32>
    %c0_33 = arith.constant 0 : index
    %c0_34 = arith.constant 0 : index
    %c0_35 = arith.constant 0 : index
    %60 = vector.load %arg9[%c0_33, %c0_34, %c0_35] : memref<10x18x128xbf16, #tpu.memory_space<vmem>>, vector<8x16x128xbf16>
    %61 = vector.shape_cast %60 : vector<8x16x128xbf16> to vector<128x128xbf16>
    %c0_36 = arith.constant 0 : index
    %c1_37 = arith.constant 1 : index
    %c0_38 = arith.constant 0 : index
    %62 = vector.load %arg9[%c0_36, %c1_37, %c0_38] : memref<10x18x128xbf16, #tpu.memory_space<vmem>>, vector<8x16x128xbf16>
    %63 = vector.shape_cast %62 : vector<8x16x128xbf16> to vector<128x128xbf16>
    %c0_39 = arith.constant 0 : index
    %c2 = arith.constant 2 : index
    %c0_40 = arith.constant 0 : index
    %64 = vector.load %arg9[%c0_39, %c2, %c0_40] : memref<10x18x128xbf16, #tpu.memory_space<vmem>>, vector<8x16x128xbf16>
    %65 = vector.shape_cast %64 : vector<8x16x128xbf16> to vector<128x128xbf16>
    %66 = tpu.concatenate %61, %63, %65 in 1 : vector<128x128xbf16>, vector<128x128xbf16>, vector<128x128xbf16> -> vector<128x384xbf16>
    %c0_41 = arith.constant 0 : index
    %c0_42 = arith.constant 0 : index
    %67 = vector.load %arg5[%c0_41, %c0_42] : memref<1152x128xbf16, #tpu.memory_space<vmem>>, vector<384x128xbf16>
    %cst_43 = arith.constant dense<0.000000e+00> : vector<128x128xf32>
    %68 = tpu.matmul %66, %67, %cst_43 {dimension_numbers = #tpu.dot_dimension_numbers<[1], [0], [0], [1], [0, 0, 1, 1], [], []>} : vector<128x384xbf16>, vector<384x128xbf16>, vector<128x128xf32> -> vector<128x128xf32>
    %69 = arith.addf %59, %68 : vector<128x128xf32>
    %c1_44 = arith.constant 1 : index
    %c0_45 = arith.constant 0 : index
    %c0_46 = arith.constant 0 : index
    %70 = vector.load %arg9[%c1_44, %c0_45, %c0_46] : memref<10x18x128xbf16, #tpu.memory_space<vmem>>, vector<8x16x128xbf16>
    %71 = vector.shape_cast %70 : vector<8x16x128xbf16> to vector<128x128xbf16>
    %c1_47 = arith.constant 1 : index
    %c1_48 = arith.constant 1 : index
    %c0_49 = arith.constant 0 : index
    %72 = vector.load %arg9[%c1_47, %c1_48, %c0_49] : memref<10x18x128xbf16, #tpu.memory_space<vmem>>, vector<8x16x128xbf16>
    %73 = vector.shape_cast %72 : vector<8x16x128xbf16> to vector<128x128xbf16>
    %c1_50 = arith.constant 1 : index
    %c2_51 = arith.constant 2 : index
    %c0_52 = arith.constant 0 : index
    %74 = vector.load %arg9[%c1_50, %c2_51, %c0_52] : memref<10x18x128xbf16, #tpu.memory_space<vmem>>, vector<8x16x128xbf16>
    %75 = vector.shape_cast %74 : vector<8x16x128xbf16> to vector<128x128xbf16>
    %76 = tpu.concatenate %71, %73, %75 in 1 : vector<128x128xbf16>, vector<128x128xbf16>, vector<128x128xbf16> -> vector<128x384xbf16>
    %c384 = arith.constant 384 : index
    %c0_53 = arith.constant 0 : index
    %77 = vector.load %arg5[%c384, %c0_53] : memref<1152x128xbf16, #tpu.memory_space<vmem>>, vector<384x128xbf16>
    %cst_54 = arith.constant dense<0.000000e+00> : vector<128x128xf32>
    %78 = tpu.matmul %76, %77, %cst_54 {dimension_numbers = #tpu.dot_dimension_numbers<[1], [0], [0], [1], [0, 0, 1, 1], [], []>} : vector<128x384xbf16>, vector<384x128xbf16>, vector<128x128xf32> -> vector<128x128xf32>
    %79 = arith.addf %69, %78 : vector<128x128xf32>
    %c2_55 = arith.constant 2 : index
    %c0_56 = arith.constant 0 : index
    %c0_57 = arith.constant 0 : index
    %80 = vector.load %arg9[%c2_55, %c0_56, %c0_57] : memref<10x18x128xbf16, #tpu.memory_space<vmem>>, vector<8x16x128xbf16>
    %81 = vector.shape_cast %80 : vector<8x16x128xbf16> to vector<128x128xbf16>
    %c2_58 = arith.constant 2 : index
    %c1_59 = arith.constant 1 : index
    %c0_60 = arith.constant 0 : index
    %82 = vector.load %arg9[%c2_58, %c1_59, %c0_60] : memref<10x18x128xbf16, #tpu.memory_space<vmem>>, vector<8x16x128xbf16>
    %83 = vector.shape_cast %82 : vector<8x16x128xbf16> to vector<128x128xbf16>
    %c2_61 = arith.constant 2 : index
    %c2_62 = arith.constant 2 : index
    %c0_63 = arith.constant 0 : index
    %84 = vector.load %arg9[%c2_61, %c2_62, %c0_63] : memref<10x18x128xbf16, #tpu.memory_space<vmem>>, vector<8x16x128xbf16>
    %85 = vector.shape_cast %84 : vector<8x16x128xbf16> to vector<128x128xbf16>
    %86 = tpu.concatenate %81, %83, %85 in 1 : vector<128x128xbf16>, vector<128x128xbf16>, vector<128x128xbf16> -> vector<128x384xbf16>
    %c768 = arith.constant 768 : index
    %c0_64 = arith.constant 0 : index
    %87 = vector.load %arg5[%c768, %c0_64] : memref<1152x128xbf16, #tpu.memory_space<vmem>>, vector<384x128xbf16>
    %cst_65 = arith.constant dense<0.000000e+00> : vector<128x128xf32>
    %88 = tpu.matmul %86, %87, %cst_65 {dimension_numbers = #tpu.dot_dimension_numbers<[1], [0], [0], [1], [0, 0, 1, 1], [], []>} : vector<128x384xbf16>, vector<384x128xbf16>, vector<128x128xf32> -> vector<128x128xf32>
    %89 = arith.addf %79, %88 : vector<128x128xf32>
    %90 = vector.shape_cast %89 : vector<128x128xf32> to vector<8x16x128xf32>
    %91 = arith.truncf %90 : vector<8x16x128xf32> to vector<8x16x128xbf16>
    %c0_66 = arith.constant 0 : index
    %c0_67 = arith.constant 0 : index
    %c0_68 = arith.constant 0 : index
    %c0_69 = arith.constant 0 : index
    %92 = vector.load %arg6[%c0_66, %c0_67, %c0_68, %c0_69] : memref<1x8x16x128xbf16, #tpu.memory_space<vmem>>, vector<1x8x16x128xbf16>
    %93 = vector.shape_cast %92 : vector<1x8x16x128xbf16> to vector<8x16x128xbf16>
    %94 = vector.shape_cast %91 : vector<8x16x128xbf16> to vector<1x8x16x128xbf16>
    tpu.vector_store %arg6[%c0_66, %c0_67, %c0_68, %c0_69], %94 {strides = array<i32>} : memref<1x8x16x128xbf16, #tpu.memory_space<vmem>>, vector<1x8x16x128xbf16>,
    %c0_i32_70 = arith.constant 0 : i32
    %95 = arith.cmpi eq, %arg1, %c0_i32_70 : i32
    %96 = arith.extui %95 : i1 to i32
    %c0_i32_71 = arith.constant 0 : i32
    %97 = arith.cmpi ne, %96, %c0_i32_71 : i32
    scf.if %97 {
      %cst_86 = arith.constant 0.000000e+00 : f32
      %115 = vector.broadcast %cst_86 : f32 to vector<8x128xf32>
      %c0_87 = arith.constant 0 : index
      %c0_88 = arith.constant 0 : index
      %c0_89 = arith.constant 0 : index
      %116 = vector.load %arg7[%c0_87, %c0_88, %c0_89] : memref<1x8x128xf32, #tpu.memory_space<vmem>>, vector<1x8x128xf32>
      %117 = vector.shape_cast %116 : vector<1x8x128xf32> to vector<8x128xf32>
      %118 = vector.shape_cast %115 : vector<8x128xf32> to vector<1x8x128xf32>
      tpu.vector_store %arg7[%c0_87, %c0_88, %c0_89], %118 {strides = array<i32>} : memref<1x8x128xf32, #tpu.memory_space<vmem>>, vector<1x8x128xf32>,
      %cst_90 = arith.constant 0.000000e+00 : f32
      %119 = vector.broadcast %cst_90 : f32 to vector<8x128xf32>
      %c0_91 = arith.constant 0 : index
      %c0_92 = arith.constant 0 : index
      %c0_93 = arith.constant 0 : index
      %120 = vector.load %arg8[%c0_91, %c0_92, %c0_93] : memref<1x8x128xf32, #tpu.memory_space<vmem>>, vector<1x8x128xf32>
      %121 = vector.shape_cast %120 : vector<1x8x128xf32> to vector<8x128xf32>
      %122 = vector.shape_cast %119 : vector<8x128xf32> to vector<1x8x128xf32>
      tpu.vector_store %arg8[%c0_91, %c0_92, %c0_93], %122 {strides = array<i32>} : memref<1x8x128xf32, #tpu.memory_space<vmem>>, vector<1x8x128xf32>,
    } else {
    }
    %c0_72 = arith.constant 0 : index
    %c0_73 = arith.constant 0 : index
    %c0_74 = arith.constant 0 : index
    %98 = vector.load %arg7[%c0_72, %c0_73, %c0_74] : memref<1x8x128xf32, #tpu.memory_space<vmem>>, vector<1x1x128xf32>
    %99 = vector.shape_cast %98 : vector<1x1x128xf32> to vector<1x128xf32>
    %cst_75 = arith.constant dense<0.000000e+00> : vector<128xf32>
    %100 = vector.multi_reduction <add>, %89, %cst_75 [0] : vector<128x128xf32> to vector<128xf32>
    %101 = vector.shape_cast %100 : vector<128xf32> to vector<1x128xf32>
    %102 = arith.addf %99, %101 : vector<1x128xf32>
    %c0_76 = arith.constant 0 : index
    %c0_77 = arith.constant 0 : index
    %c0_78 = arith.constant 0 : index
    %103 = vector.load %arg7[%c0_76, %c0_77, %c0_78] : memref<1x8x128xf32, #tpu.memory_space<vmem>>, vector<1x1x128xf32>
    %104 = vector.shape_cast %103 : vector<1x1x128xf32> to vector<1x128xf32>
    %105 = vector.shape_cast %102 : vector<1x128xf32> to vector<1x1x128xf32>
    tpu.vector_store %arg7[%c0_76, %c0_77, %c0_78], %105 {strides = array<i32>} : memref<1x8x128xf32, #tpu.memory_space<vmem>>, vector<1x1x128xf32>,
    %c0_79 = arith.constant 0 : index
    %c0_80 = arith.constant 0 : index
    %c0_81 = arith.constant 0 : index
    %106 = vector.load %arg8[%c0_79, %c0_80, %c0_81] : memref<1x8x128xf32, #tpu.memory_space<vmem>>, vector<1x1x128xf32>
    %107 = vector.shape_cast %106 : vector<1x1x128xf32> to vector<1x128xf32>
    %108 = arith.mulf %89, %89 : vector<128x128xf32>
    %cst_82 = arith.constant dense<0.000000e+00> : vector<128xf32>
    %109 = vector.multi_reduction <add>, %108, %cst_82 [0] : vector<128x128xf32> to vector<128xf32>
    %110 = vector.shape_cast %109 : vector<128xf32> to vector<1x128xf32>
    %111 = arith.addf %107, %110 : vector<1x128xf32>
    %c0_83 = arith.constant 0 : index
    %c0_84 = arith.constant 0 : index
    %c0_85 = arith.constant 0 : index
    %112 = vector.load %arg8[%c0_83, %c0_84, %c0_85] : memref<1x8x128xf32, #tpu.memory_space<vmem>>, vector<1x1x128xf32>
    %113 = vector.shape_cast %112 : vector<1x1x128xf32> to vector<1x128xf32>
    %114 = vector.shape_cast %111 : vector<1x128xf32> to vector<1x1x128xf32>
    tpu.vector_store %arg8[%c0_83, %c0_84, %c0_85], %114 {strides = array<i32>} : memref<1x8x128xf32, #tpu.memory_space<vmem>>, vector<1x1x128xf32>,
    return
  }
  func.func @transform_0(%arg0: i32, %arg1: i32) -> (i32, i32, i32, i32) {
    %c0_i32 = arith.constant 0 : i32
    %c0_i32_0 = arith.constant 0 : i32
    %c0_i32_1 = arith.constant 0 : i32
    %c0_i32_2 = arith.constant 0 : i32
    return %arg0, %c0_i32, %c0_i32_0, %c0_i32_1 : i32, i32, i32, i32
  }
  func.func @transform_1(%arg0: i32, %arg1: i32) -> (i32, i32) {
    %c0_i32 = arith.constant 0 : i32
    %c0_i32_0 = arith.constant 0 : i32
    %c0_i32_1 = arith.constant 0 : i32
    return %c0_i32, %c0_i32_0 : i32, i32
  }
  func.func @transform_2(%arg0: i32, %arg1: i32) -> (i32, i32) {
    %c0_i32 = arith.constant 0 : i32
    %c0_i32_0 = arith.constant 0 : i32
    %c0_i32_1 = arith.constant 0 : i32
    return %c0_i32, %c0_i32_0 : i32, i32
  }
  func.func @transform_3(%arg0: i32, %arg1: i32) -> (i32, i32) {
    %c0_i32 = arith.constant 0 : i32
    %c0_i32_0 = arith.constant 0 : i32
    %c0_i32_1 = arith.constant 0 : i32
    return %c0_i32, %c0_i32_0 : i32, i32
  }
  func.func @transform_4(%arg0: i32, %arg1: i32) -> (i32, i32, i32, i32) {
    %c0_i32 = arith.constant 0 : i32
    %c0_i32_0 = arith.constant 0 : i32
    %c0_i32_1 = arith.constant 0 : i32
    return %arg0, %arg1, %c0_i32, %c0_i32_0 : i32, i32, i32, i32
  }
  func.func @transform_5(%arg0: i32, %arg1: i32) -> (i32, i32, i32) {
    %c0_i32 = arith.constant 0 : i32
    %c0_i32_0 = arith.constant 0 : i32
    %c0_i32_1 = arith.constant 0 : i32
    return %arg0, %c0_i32, %c0_i32_0 : i32, i32, i32
  }
  func.func @transform_6(%arg0: i32, %arg1: i32) -> (i32, i32, i32) {
    %c0_i32 = arith.constant 0 : i32
    %c0_i32_0 = arith.constant 0 : i32
    %c0_i32_1 = arith.constant 0 : i32
    return %arg0, %c0_i32, %c0_i32_0 : i32, i32, i32
  }
}

</mosaic_0001>

<llo_original>
// kernel: uconv2d_forward.5
$region0: #{uconv2d_forward.5}
  #allocation0 [shape = 'u32[]', space=smem, size = 0x4, offset = 0x4, fixed_abs, tag = 'smem constant byte address 0x4 - core index']
  #allocation1 [shape = 'u32[144,128]{1,0:T(1,128)}', space=vmem, size = 0x12000, scoped, tag = 'internal scratch']
  %s0 = inlined_call_operand.hbm [shape: bf16[2,16,16,128], index: 0, kind: input, shape index: {}]
  %s1 = inlined_call_operand.hbm [shape: f32[1,128], index: 1, kind: input, shape index: {}]
  %s2 = inlined_call_operand.hbm [shape: f32[1,128], index: 2, kind: input, shape index: {}]
  %s3 = inlined_call_operand.hbm [shape: f32[2,16,16,128], index: 3, kind: output, shape index: {}]
  %s4 = sld [smem:[#allocation0]]
  $region57: #{uconv2d_forward.5} parent=0
    _
  %s6 = ssub.s32 1, %s4
  %s7 = scalar_select 0, %s6, %s4
  $region1: #{uconv2d_forward.5} parent=0
    #allocation2 [shape = 'u8[65536]{0}', space=vmem, size = 0x10000, scoped, tag = 'input window, operand 0']
    #allocation3 [shape = 's32[2]{0}', space=sflag, size = 0x8, scoped, tag = 'scoped memory for uconv2d_forward.5']
    #allocation4 [shape = 's32[2]{0}', space=sflag, size = 0x8, scoped, tag = 'scoped memory for uconv2d_forward.5']
    #allocation5 [shape = 'u8[512]{0}', space=vmem, size = 0x400, scoped, tag = 'input window, operand 1, single buffered']
    #allocation6 [shape = 's32[1]{0}', space=sflag, size = 0x4, scoped, tag = 'scoped memory for uconv2d_forward.5']
    #allocation7 [shape = 'u8[512]{0}', space=vmem, size = 0x400, scoped, tag = 'input window, operand 2, single buffered']
    #allocation8 [shape = 'u8[131072]{0}', space=vmem, size = 0x20000, scoped, tag = 'output window, operand 0']
    %8 = vsyncpa [#allocation3], 0
    %s9 = scalar_lea.sflag [#allocation3], 1
    %10 = vsyncpa %s9, 0
    %11 = vsyncpa [#allocation6], 0
    %12 = vsyncpa [#allocation4], 0
    %s13 = scalar_lea.sflag [#allocation4], 1
    %14 = vsyncpa %s13, 0
    loop: start=0, step=1, limit=6
    $region2: #{uconv2d_forward.5} parent=1 // loop_pre_header
      _
    $region3: #{uconv2d_forward.5} parent=1 // loop_header
      %s16 = sphi 0, %s20
      %p17 = scmp.ge.s32.totalorder %s16, 6
      %s23 = sphi 0, %s35
      %s24 = sphi 0, %s31
      %s25 = sphi 0, %s23
      %s26 = sphi 0, %s24
      %s27 = sphi 0, %s25
      %s28 = sphi 0, %s26
      %s40 = sphi 0, %s42
      %s43 = sphi 0, %s40
      %s44 = sphi 0, %s43
      %s60 = sphi 0, %s44
      %s64 = sphi 0, %s64
      %s66 = sphi 0, %s64
      %s67 = sphi 0, %s66
      %s81 = sphi 0, %s67
      %s85 = sphi 0, %s85
      %s87 = sphi 0, %s85
      %s88 = sphi 0, %s87
      %s102 = sphi 0, %s88
      %s110 = sphi 0, %s112
      %s113 = sphi 0, %s110
      %s114 = sphi 0, %s113
      %s130 = sphi 0, %s114
    $region4: #{uconv2d_forward.5} parent=1 // loop_header_branch
      %19 = sbr.rel (%p17) target = $region8
    $region5: #{uconv2d_forward.5} parent=1 // loop_body
      %s21 = ssub.s32 %s16, 1
      %s22 = ssub.s32 %s16, 2
      %s29 = sadd.s32 1, %s24
      %p30 = scmp.ge.s32.totalorder %s29, 2
      %s31 = scalar_select %p30, 0, %s29
      %s32 = sadd.s32 1, %s23
      %s33 = scalar_select %p30, %s32, %s23
      %p34 = scmp.ge.s32.totalorder %s33, 2
      %s35 = scalar_select %p34, 0, %s33
      %s36 = ssub.s32 %s23, %s35
      %s37 = ssub.s32 %s24, %s31
      %s38 = sor.u32 %s36, %s37
      %p39 = scmp.eq.s32.totalorder %s38, 0
      %s41 = sadd.s32 %s40, 1
      %s42 = scalar_select %p39, %s40, %s41
      %p45 = pneg %p39
      %p46 = scmp.eq.s32.totalorder %s16, 3
      %p47 = por %p45, %p46
      %p48 = scmp.ne.s32.totalorder %s40, %s43
      %p49 = scmp.eq.s32.totalorder %s16, 0
      %p50 = por %p48, %p49
      %p51 = scmp.ne.s32.totalorder %s40, %s43
      %p52 = scmp.eq.s32.totalorder %s21, 3
      %p53 = por %p51, %p52
      %p54 = scmp.ne.s32.totalorder %s43, %s44
      %p55 = scmp.eq.s32.totalorder %s21, 0
      %p56 = por %p54, %p55
      %p57 = scmp.ne.s32.totalorder %s43, %s44
      %p58 = scmp.eq.s32.totalorder %s22, 3
      %p59 = por %p57, %p58
      %p61 = scmp.ne.s32.totalorder %s44, %s60
      %p62 = scmp.eq.s32.totalorder %s22, 0
      %p63 = por %p61, %p62
      %s65 = sadd.s32 %s64, 1
      %p68 = scmp.eq.s32.totalorder %s16, 3
      %p69 = scmp.ne.s32.totalorder %s64, %s66
      %p70 = scmp.eq.s32.totalorder %s16, 0
      %p71 = por %p69, %p70
      %p72 = scmp.ne.s32.totalorder %s64, %s66
      %p73 = scmp.eq.s32.totalorder %s21, 3
      %p74 = por %p72, %p73
      %p75 = scmp.ne.s32.totalorder %s66, %s67
      %p76 = scmp.eq.s32.totalorder %s21, 0
      %p77 = por %p75, %p76
      %p78 = scmp.ne.s32.totalorder %s66, %s67
      %p79 = scmp.eq.s32.totalorder %s22, 3
      %p80 = por %p78, %p79
      %p82 = scmp.ne.s32.totalorder %s67, %s81
      %p83 = scmp.eq.s32.totalorder %s22, 0
      %p84 = por %p82, %p83
      %s86 = sadd.s32 %s85, 1
      %p89 = scmp.eq.s32.totalorder %s16, 3
      %p90 = scmp.ne.s32.totalorder %s85, %s87
      %p91 = scmp.eq.s32.totalorder %s16, 0
      %p92 = por %p90, %p91
      %p93 = scmp.ne.s32.totalorder %s85, %s87
      %p94 = scmp.eq.s32.totalorder %s21, 3
      %p95 = por %p93, %p94
      %p96 = scmp.ne.s32.totalorder %s87, %s88
      %p97 = scmp.eq.s32.totalorder %s21, 0
      %p98 = por %p96, %p97
      %p99 = scmp.ne.s32.totalorder %s87, %s88
      %p100 = scmp.eq.s32.totalorder %s22, 3
      %p101 = por %p99, %p100
      %p103 = scmp.ne.s32.totalorder %s88, %s102
      %p104 = scmp.eq.s32.totalorder %s22, 0
      %p105 = por %p103, %p104
      %s106 = ssub.s32 %s23, %s35
      %s107 = ssub.s32 %s24, %s31
      %s108 = sor.u32 %s106, %s107
      %p109 = scmp.eq.s32.totalorder %s108, 0
      %s111 = sadd.s32 %s110, 1
      %s112 = scalar_select %p109, %s110, %s111
      %p115 = pneg %p109
      %p116 = scmp.eq.s32.totalorder %s16, 3
      %p117 = por %p115, %p116
      %p118 = scmp.ne.s32.totalorder %s110, %s113
      %p119 = scmp.eq.s32.totalorder %s16, 0
      %p120 = por %p118, %p119
      %p121 = scmp.ne.s32.totalorder %s110, %s113
      %p122 = scmp.eq.s32.totalorder %s21, 3
      %p123 = por %p121, %p122
      %p124 = scmp.ne.s32.totalorder %s113, %s114
      %p125 = scmp.eq.s32.totalorder %s21, 0
      %p126 = por %p124, %p125
      %p127 = scmp.ne.s32.totalorder %s113, %s114
      %p128 = scmp.eq.s32.totalorder %s22, 3
      %p129 = por %p127, %p128
      %p131 = scmp.ne.s32.totalorder %s114, %s130
      %p132 = scmp.eq.s32.totalorder %s22, 0
      %p133 = por %p131, %p132
      %p134 = scmp.le.s32.totalorder 1, %s16
      %p135 = scmp.lt.s32.totalorder %s16, 5
      %p136 = pnand %p134, %p135
      %p137 = pneg %p136
      // Predicated region
      $region9: #{uconv2d_forward.5} parent=5 // pred_check
        _
      $region10: #{uconv2d_forward.5} parent=5 // pred_check_branch
        %139 = sbr.rel (%p136) target = $region12
      $region11: #{uconv2d_forward.5} parent=5 // pred_region
        %s140 = ssub.s32 %s16, 1
        // Predicated region
        $region13: #{uconv2d_forward.5} parent=11 // pred_check
          %p141 = pneg %p77
        $region14: #{uconv2d_forward.5} parent=11 // pred_check_branch
          %143 = sbr.rel (%p141) target = $region16
        $region15: #{uconv2d_forward.5} parent=11 // pred_region
          %s145 = ssub.s32 16, 16
          %146 = vsyncadd [#allocation6], %s145
          %s148 = sshll.u32 [#allocation5], 4
          %s149 = int_to_ptr.vmem [resolvable:$true] %s148
          %151 = dma.hbm_to_vmem [thread:$0]  %s1, 16, %s149, [#allocation6]
        $region16: #{uconv2d_forward.5} parent=11 // pred_fallthru
          _
        // Predicated region
        $region17: #{uconv2d_forward.5} parent=11 // pred_check
          %p152 = pneg %p98
        $region18: #{uconv2d_forward.5} parent=11 // pred_check_branch
          %154 = sbr.rel (%p152) target = $region20
        $region19: #{uconv2d_forward.5} parent=11 // pred_region
          %s156 = ssub.s32 16, 16
          %157 = vsyncadd [#allocation6], %s156
          %s159 = sshll.u32 [#allocation7], 4
          %s160 = int_to_ptr.vmem [resolvable:$true] %s159
          %162 = dma.hbm_to_vmem [thread:$0]  %s2, 16, %s160, [#allocation6]
        $region20: #{uconv2d_forward.5} parent=11 // pred_fallthru
          _
      $region12: #{uconv2d_forward.5} parent=5 // pred_fallthru
        _
      %p163 = scmp.lt.s32.totalorder %s16, 4
      // Predicated region
      $region21: #{uconv2d_forward.5} parent=5 // pred_check
        %p164 = pneg %p163
      $region22: #{uconv2d_forward.5} parent=5 // pred_check_branch
        %166 = sbr.rel (%p164) target = $region24
      $region23: #{uconv2d_forward.5} parent=5 // pred_region
        // Predicated region
        $region25: #{uconv2d_forward.5} parent=23 // pred_check
          %p167 = pneg %p50
        $region26: #{uconv2d_forward.5} parent=23 // pred_check_branch
          %169 = sbr.rel (%p167) target = $region28
        $region27: #{uconv2d_forward.5} parent=23 // pred_region
          %s170 = sand.u32 %s40, 1
          %s171 = scalar_lea.sflag [#allocation3], %s170
          %s172 = sand.u32 %s40, 1
          %s173 = smul.addr %s172, 64
          %s174 = scalar_lea.vmem [#allocation2], %s173
          %s175 = smul.u32 8, %s24
          %s177 = ssub.s32 1024, 1024
          %178 = vsyncadd %s171, %s177
          %s179 = smul.addr %s175, 2
          %s180 = smul.addr %s23, 32
          %s181 = sadd.s32 %s179, %s180
          %s182 = smul.addr %s181, 64
          %s183 = scalar_lea.hbm %s0, %s182
          %s184 = sshll.u32 %s174, 4
          %s185 = int_to_ptr.vmem [resolvable:$true] %s184
          %190 = dma.hbm_to_vmem [thread:$0]  %s183, 1024, %s185, %s171, 64, 64, 4
        $region28: #{uconv2d_forward.5} parent=23 // pred_fallthru
          _
      $region24: #{uconv2d_forward.5} parent=5 // pred_fallthru
        _
      %p191 = scmp.le.s32.totalorder 1, %s16
      %p192 = scmp.lt.s32.totalorder %s16, 5
      %p193 = pnand %p191, %p192
      %p194 = pneg %p193
      // Predicated region
      $region29: #{uconv2d_forward.5} parent=5 // pred_check
        _
      $region30: #{uconv2d_forward.5} parent=5 // pred_check_branch
        %196 = sbr.rel (%p193) target = $region32
      $region31: #{uconv2d_forward.5} parent=5 // pred_region
        %s197 = ssub.s32 %s16, 1
        %s198 = sand.u32 %s43, 1
        %s199 = scalar_lea.sflag [#allocation3], %s198
        %s200 = sand.u32 %s43, 1
        %s201 = smul.addr %s200, 64
        %s202 = scalar_lea.vmem [#allocation2], %s201
        // Predicated region
        $region33: #{uconv2d_forward.5} parent=31 // pred_check
          %p203 = pneg %p56
        $region34: #{uconv2d_forward.5} parent=31 // pred_check_branch
          %205 = sbr.rel (%p203) target = $region36
        $region35: #{uconv2d_forward.5} parent=31 // pred_region
          %206 = dma.done %s199, 1024
        $region36: #{uconv2d_forward.5} parent=31 // pred_fallthru
          _
        // Predicated region
        $region37: #{uconv2d_forward.5} parent=31 // pred_check
          %p207 = pneg %p77
        $region38: #{uconv2d_forward.5} parent=31 // pred_check_branch
          %209 = sbr.rel (%p207) target = $region40
        $region39: #{uconv2d_forward.5} parent=31 // pred_region
          %210 = dma.done [#allocation6], 16
        $region40: #{uconv2d_forward.5} parent=31 // pred_fallthru
          _
        // Predicated region
        $region41: #{uconv2d_forward.5} parent=31 // pred_check
          %p211 = pneg %p98
        $region42: #{uconv2d_forward.5} parent=31 // pred_check_branch
          %213 = sbr.rel (%p211) target = $region44
        $region43: #{uconv2d_forward.5} parent=31 // pred_region
          %214 = dma.done [#allocation6], 16
        $region44: #{uconv2d_forward.5} parent=31 // pred_fallthru
          _
        %s215 = sand.u32 %s43, 1
        %s216 = scalar_lea.sflag [#allocation3], %s215
        %s217 = sand.u32 %s43, 1
        %s218 = smul.addr %s217, 64
        %s219 = scalar_lea.vmem [#allocation2], %s218
        %p220 = pneg %p56
        %p221 = pneg %p53
        %p222 = pneg %p77
        %p223 = pneg %p74
        %p224 = pneg %p98
        %p225 = pneg %p95
        %p226 = pneg %p126
        %p227 = pneg %p123
        %s228 = sand.u32 %s113, 1
        %s229 = scalar_lea.sflag [#allocation4], %s228
        %s230 = sand.u32 %s113, 1
        %s231 = smul.addr %s230, 128
        %s232 = scalar_lea.vmem [#allocation8], %s231
        %s233 = smul.u32 8, %s26
        %s234 = smul.u32 8, %s26
        %v235 = vld [vmem:[%s202] sm:$0xf]
        %v236 = vld [vmem:[%s202 + $0x4] sm:$0xf]
        %v237 = vld [vmem:[%s202 + $0x8] sm:$0xf]
        %v238 = vld [vmem:[%s202 + $0xc] sm:$0xf]
        %v239 = vld [vmem:[%s202 + $0x10] sm:$0xf]
        %v240 = vld [vmem:[%s202 + $0x14] sm:$0xf]
        %v241 = vld [vmem:[%s202 + $0x18] sm:$0xf]
        %v242 = vld [vmem:[%s202 + $0x1c] sm:$0xf]
        %v243 = vld [vmem:[%s202 + $0x20] sm:$0xf]
        %v244 = vld [vmem:[%s202 + $0x24] sm:$0xf]
        %v245 = vld [vmem:[%s202 + $0x28] sm:$0xf]
        %v246 = vld [vmem:[%s202 + $0x2c] sm:$0xf]
        %v247 = vld [vmem:[%s202 + $0x30] sm:$0xf]
        %v248 = vld [vmem:[%s202 + $0x34] sm:$0xf]
        %v249 = vld [vmem:[%s202 + $0x38] sm:$0xf]
        %v250 = vld [vmem:[%s202 + $0x3c] sm:$0xf]
        %v251 = vunpack.c.l.bf16 %v235
        %v252 = vunpack.c.l.bf16 %v236
        %v253 = vunpack.c.l.bf16 %v237
        %v254 = vunpack.c.l.bf16 %v238
        %v255 = vunpack.c.l.bf16 %v239
        %v256 = vunpack.c.l.bf16 %v240
        %v257 = vunpack.c.l.bf16 %v241
        %v258 = vunpack.c.l.bf16 %v242
        %v259 = vunpack.c.l.bf16 %v243
        %v260 = vunpack.c.l.bf16 %v244
        %v261 = vunpack.c.l.bf16 %v245
        %v262 = vunpack.c.l.bf16 %v246
        %v263 = vunpack.c.l.bf16 %v247
        %v264 = vunpack.c.l.bf16 %v248
        %v265 = vunpack.c.l.bf16 %v249
        %v266 = vunpack.c.l.bf16 %v250
        %v267 = vld [vmem:[#allocation5] sm:$0x1]
        %v269 = vlaneseq
        %v270 = vshrl.u32 %v269, 7
        %v271 = vsub.s32 0, %v270
        %v272 = vrot.slane %v267, %v271
        %v274 = vmul.f32 %v251, %v272
        %v275 = vmul.f32 %v252, %v272
        %v276 = vmul.f32 %v253, %v272
        %v277 = vmul.f32 %v254, %v272
        %v278 = vmul.f32 %v255, %v272
        %v279 = vmul.f32 %v256, %v272
        %v280 = vmul.f32 %v257, %v272
        %v281 = vmul.f32 %v258, %v272
        %v282 = vmul.f32 %v259, %v272
        %v283 = vmul.f32 %v260, %v272
        %v284 = vmul.f32 %v261, %v272
        %v285 = vmul.f32 %v262, %v272
        %v286 = vmul.f32 %v263, %v272
        %v287 = vmul.f32 %v264, %v272
        %v288 = vmul.f32 %v265, %v272
        %v289 = vmul.f32 %v266, %v272
        %v290 = vld [vmem:[#allocation7] sm:$0x1]
        %v292 = vlaneseq
        %v293 = vshrl.u32 %v292, 7
        %v294 = vsub.s32 0, %v293
        %v295 = vrot.slane %v290, %v294
        %v297 = vadd.f32 %v274, %v295
        %v298 = vadd.f32 %v275, %v295
        %v299 = vadd.f32 %v276, %v295
        %v300 = vadd.f32 %v277, %v295
        %v301 = vadd.f32 %v278, %v295
        %v302 = vadd.f32 %v279, %v295
        %v303 = vadd.f32 %v280, %v295
        %v304 = vadd.f32 %v281, %v295
        %v305 = vadd.f32 %v282, %v295
        %v306 = vadd.f32 %v283, %v295
        %v307 = vadd.f32 %v284, %v295
        %v308 = vadd.f32 %v285, %v295
        %v309 = vadd.f32 %v286, %v295
        %v310 = vadd.f32 %v287, %v295
        %v311 = vadd.f32 %v288, %v295
        %v312 = vadd.f32 %v289, %v295
        %v313 = vmax.f32 %v297, 0.0
        %v314 = vmax.f32 %v298, 0.0
        %v315 = vmax.f32 %v299, 0.0
        %v316 = vmax.f32 %v300, 0.0
        %v317 = vmax.f32 %v301, 0.0
        %v318 = vmax.f32 %v302, 0.0
        %v319 = vmax.f32 %v303, 0.0
        %v320 = vmax.f32 %v304, 0.0
        %v321 = vmax.f32 %v305, 0.0
        %v322 = vmax.f32 %v306, 0.0
        %v323 = vmax.f32 %v307, 0.0
        %v324 = vmax.f32 %v308, 0.0
        %v325 = vmax.f32 %v309, 0.0
        %v326 = vmax.f32 %v310, 0.0
        %v327 = vmax.f32 %v311, 0.0
        %v328 = vmax.f32 %v312, 0.0
        %329 = vst [vmem:[%s232] sm:$0xff] %v313
        %330 = vst [vmem:[%s232 + $0x8] sm:$0xff] %v314
        %331 = vst [vmem:[%s232 + $0x10] sm:$0xff] %v315
        %332 = vst [vmem:[%s232 + $0x18] sm:$0xff] %v316
        %333 = vst [vmem:[%s232 + $0x20] sm:$0xff] %v317
        %334 = vst [vmem:[%s232 + $0x28] sm:$0xff] %v318
        %335 = vst [vmem:[%s232 + $0x30] sm:$0xff] %v319
        %336 = vst [vmem:[%s232 + $0x38] sm:$0xff] %v320
        %337 = vst [vmem:[%s232 + $0x40] sm:$0xff] %v321
        %338 = vst [vmem:[%s232 + $0x48] sm:$0xff] %v322
        %339 = vst [vmem:[%s232 + $0x50] sm:$0xff] %v323
        %340 = vst [vmem:[%s232 + $0x58] sm:$0xff] %v324
        %341 = vst [vmem:[%s232 + $0x60] sm:$0xff] %v325
        %342 = vst [vmem:[%s232 + $0x68] sm:$0xff] %v326
        %343 = vst [vmem:[%s232 + $0x70] sm:$0xff] %v327
        %344 = vst [vmem:[%s232 + $0x78] sm:$0xff] %v328
        %s345 = sand.u32 %s113, 1
        %s346 = scalar_lea.sflag [#allocation4], %s345
        %s347 = sand.u32 %s113, 1
        %s348 = smul.addr %s347, 128
        %s349 = scalar_lea.vmem [#allocation8], %s348
        // Predicated region
        $region45: #{uconv2d_forward.5} parent=31 // pred_check
          %p350 = pneg %p123
        $region46: #{uconv2d_forward.5} parent=31 // pred_check_branch
          %352 = sbr.rel (%p350) target = $region48
        $region47: #{uconv2d_forward.5} parent=31 // pred_region
          %s353 = smul.u32 8, %s26
          %s355 = ssub.s32 2048, 2048
          %356 = vsyncadd %s346, %s355
          %s357 = smul.addr %s353, 2
          %s358 = smul.addr %s25, 32
          %s359 = sadd.s32 %s357, %s358
          %s360 = smul.addr %s359, 128
          %s361 = scalar_lea.hbm %s3, %s360
          %s362 = sshll.u32 %s349, 4
          %s363 = int_to_ptr.vmem [resolvable:$true] %s362
          %368 = dma.vmem_to_hbm [thread:$0]  %s363, 2048, %s361, %s346, 128, 128, 8
        $region48: #{uconv2d_forward.5} parent=31 // pred_fallthru
          _
      $region32: #{uconv2d_forward.5} parent=5 // pred_fallthru
        _
      %p369 = scmp.le.s32.totalorder 2, %s16
      // Predicated region
      $region49: #{uconv2d_forward.5} parent=5 // pred_check
        %p370 = pneg %p369
      $region50: #{uconv2d_forward.5} parent=5 // pred_check_branch
        %372 = sbr.rel (%p370) target = $region52
      $region51: #{uconv2d_forward.5} parent=5 // pred_region
        %s373 = ssub.s32 %s16, 2
        // Predicated region
        $region53: #{uconv2d_forward.5} parent=51 // pred_check
          %p374 = pneg %p129
        $region54: #{uconv2d_forward.5} parent=51 // pred_check_branch
          %376 = sbr.rel (%p374) target = $region56
        $region55: #{uconv2d_forward.5} parent=51 // pred_region
          %s377 = sand.u32 %s114, 1
          %s378 = scalar_lea.sflag [#allocation4], %s377
          %s379 = sand.u32 %s114, 1
          %s380 = smul.addr %s379, 128
          %s381 = scalar_lea.vmem [#allocation8], %s380
          %382 = dma.done %s378, 2048
        $region56: #{uconv2d_forward.5} parent=51 // pred_fallthru
          _
      $region52: #{uconv2d_forward.5} parent=5 // pred_fallthru
        _
    $region6: #{uconv2d_forward.5} parent=1 // loop_footer
      %s20 = sadd.s32 1, %s16
    $region7: #{uconv2d_forward.5} parent=1 // loop_footer_branch
      %15 = sbr.rel target = $region3
    $region8: #{uconv2d_forward.5} parent=1 // loop_exit
      _
    %383 = vsyncpa [#allocation3], 1
    %s384 = scalar_lea.sflag [#allocation3], 1
    %385 = vsyncpa %s384, 1
    %386 = vsyncpa [#allocation6], 1
    %387 = vsyncpa [#allocation4], 1
    %s388 = scalar_lea.sflag [#allocation4], 1
    %389 = vsyncpa %s388, 1

// kernel: uconv2d_forward.3
$region0: #{uconv2d_forward.3}
  #allocation0 [shape = 'u32[]', space=smem, size = 0x4, offset = 0x4, fixed_abs, tag = 'smem constant byte address 0x4 - core index']
  #allocation1 [shape = 'u32[144,128]{1,0:T(1,128)}', space=vmem, size = 0x12000, scoped, tag = 'internal scratch']
  %s0 = inlined_call_operand.hbm [shape: bf16[2,18,18,128], index: 0, kind: input, shape index: {}]
  %s1 = inlined_call_operand.hbm [shape: bf16[1152,128], index: 1, kind: input, shape index: {}]
  %s2 = inlined_call_operand.hbm [shape: bf16[2,16,16,128], index: 2, kind: output, shape index: {0}]
  %s3 = inlined_call_operand.hbm [shape: f32[2,8,128], index: 3, kind: output, shape index: {1}]
  %s4 = inlined_call_operand.hbm [shape: f32[2,8,128], index: 4, kind: output, shape index: {2}]
  %5 = xla_tuple %s2, %s3, %s4
  %s6 = sld [smem:[#allocation0]]
  $region69: #{uconv2d_forward.3} parent=0
    _
  %s8 = ssub.s32 1, %s6
  %s9 = scalar_select 0, %s8, %s6
  $region1: #{uconv2d_forward.3} parent=0
    #allocation2 [shape = 'u8[221184]{0}', space=vmem, size = 0x36000, scoped, tag = 'input window, operand 0']
    #allocation3 [shape = 's32[2]{0}', space=sflag, size = 0x8, scoped, tag = 'scoped memory for uconv2d_forward.3']
    #allocation4 [shape = 's32[2]{0}', space=sflag, size = 0x8, scoped, tag = 'scoped memory for uconv2d_forward.3']
    #allocation5 [shape = 'u8[294912]{0}', space=vmem, size = 0x48000, scoped, tag = 'input window, operand 1, single buffered']
    #allocation6 [shape = 's32[1]{0}', space=sflag, size = 0x4, scoped, tag = 'scoped memory for uconv2d_forward.3']
    #allocation7 [shape = 'u8[65536]{0}', space=vmem, size = 0x10000, scoped, tag = 'output window, operand 0']
    #allocation8 [shape = 'u8[8192]{0}', space=vmem, size = 0x2000, scoped, tag = 'output window, operand 1']
    #allocation9 [shape = 's32[2]{0}', space=sflag, size = 0x8, scoped, tag = 'scoped memory for uconv2d_forward.3']
    #allocation10 [shape = 'u8[8192]{0}', space=vmem, size = 0x2000, scoped, tag = 'output window, operand 2']
    %10 = vsyncpa [#allocation3], 0
    %s11 = scalar_lea.sflag [#allocation3], 1
    %12 = vsyncpa %s11, 0
    %13 = vsyncpa [#allocation6], 0
    %14 = vsyncpa [#allocation4], 0
    %s15 = scalar_lea.sflag [#allocation4], 1
    %16 = vsyncpa %s15, 0
    %17 = vsyncpa [#allocation9], 0
    %s18 = scalar_lea.sflag [#allocation9], 1
    %19 = vsyncpa %s18, 0
    loop: start=0, step=1, limit=6
    $region2: #{uconv2d_forward.3} parent=1 // loop_pre_header
      _
    $region3: #{uconv2d_forward.3} parent=1 // loop_header
      %s21 = sphi 0, %s25
      %p22 = scmp.ge.s32.totalorder %s21, 6
      %s28 = sphi 0, %s40
      %s29 = sphi 0, %s36
      %s30 = sphi 0, %s28
      %s31 = sphi 0, %s29
      %s32 = sphi 0, %s30
      %s33 = sphi 0, %s31
      %s43 = sphi 0, %s45
      %s46 = sphi 0, %s43
      %s47 = sphi 0, %s46
      %s63 = sphi 0, %s47
      %s67 = sphi 0, %s67
      %s69 = sphi 0, %s67
      %s70 = sphi 0, %s69
      %s84 = sphi 0, %s70
      %s92 = sphi 0, %s94
      %s95 = sphi 0, %s92
      %s96 = sphi 0, %s95
      %s112 = sphi 0, %s96
      %s118 = sphi 0, %s120
      %s121 = sphi 0, %s118
      %s122 = sphi 0, %s121
      %s138 = sphi 0, %s122
      %s144 = sphi 0, %s146
      %s147 = sphi 0, %s144
      %s148 = sphi 0, %s147
      %s164 = sphi 0, %s148
    $region4: #{uconv2d_forward.3} parent=1 // loop_header_branch
      %24 = sbr.rel (%p22) target = $region8
    $region5: #{uconv2d_forward.3} parent=1 // loop_body
      %s26 = ssub.s32 %s21, 1
      %s27 = ssub.s32 %s21, 2
      %s34 = sadd.s32 1, %s29
      %p35 = scmp.ge.s32.totalorder %s34, 2
      %s36 = scalar_select %p35, 0, %s34
      %s37 = sadd.s32 1, %s28
      %s38 = scalar_select %p35, %s37, %s28
      %p39 = scmp.ge.s32.totalorder %s38, 2
      %s40 = scalar_select %p39, 0, %s38
      %s41 = ssub.s32 %s28, %s40
      %p42 = scmp.eq.s32.totalorder %s41, 0
      %s44 = sadd.s32 %s43, 1
      %s45 = scalar_select %p42, %s43, %s44
      %p48 = pneg %p42
      %p49 = scmp.eq.s32.totalorder %s21, 3
      %p50 = por %p48, %p49
      %p51 = scmp.ne.s32.totalorder %s43, %s46
      %p52 = scmp.eq.s32.totalorder %s21, 0
      %p53 = por %p51, %p52
      %p54 = scmp.ne.s32.totalorder %s43, %s46
      %p55 = scmp.eq.s32.totalorder %s26, 3
      %p56 = por %p54, %p55
      %p57 = scmp.ne.s32.totalorder %s46, %s47
      %p58 = scmp.eq.s32.totalorder %s26, 0
      %p59 = por %p57, %p58
      %p60 = scmp.ne.s32.totalorder %s46, %s47
      %p61 = scmp.eq.s32.totalorder %s27, 3
      %p62 = por %p60, %p61
      %p64 = scmp.ne.s32.totalorder %s47, %s63
      %p65 = scmp.eq.s32.totalorder %s27, 0
      %p66 = por %p64, %p65
      %s68 = sadd.s32 %s67, 1
      %p71 = scmp.eq.s32.totalorder %s21, 3
      %p72 = scmp.ne.s32.totalorder %s67, %s69
      %p73 = scmp.eq.s32.totalorder %s21, 0
      %p74 = por %p72, %p73
      %p75 = scmp.ne.s32.totalorder %s67, %s69
      %p76 = scmp.eq.s32.totalorder %s26, 3
      %p77 = por %p75, %p76
      %p78 = scmp.ne.s32.totalorder %s69, %s70
      %p79 = scmp.eq.s32.totalorder %s26, 0
      %p80 = por %p78, %p79
      %p81 = scmp.ne.s32.totalorder %s69, %s70
      %p82 = scmp.eq.s32.totalorder %s27, 3
      %p83 = por %p81, %p82
      %p85 = scmp.ne.s32.totalorder %s70, %s84
      %p86 = scmp.eq.s32.totalorder %s27, 0
      %p87 = por %p85, %p86
      %s88 = ssub.s32 %s28, %s40
      %s89 = ssub.s32 %s29, %s36
      %s90 = sor.u32 %s88, %s89
      %p91 = scmp.eq.s32.totalorder %s90, 0
      %s93 = sadd.s32 %s92, 1
      %s94 = scalar_select %p91, %s92, %s93
      %p97 = pneg %p91
      %p98 = scmp.eq.s32.totalorder %s21, 3
      %p99 = por %p97, %p98
      %p100 = scmp.ne.s32.totalorder %s92, %s95
      %p101 = scmp.eq.s32.totalorder %s21, 0
      %p102 = por %p100, %p101
      %p103 = scmp.ne.s32.totalorder %s92, %s95
      %p104 = scmp.eq.s32.totalorder %s26, 3
      %p105 = por %p103, %p104
      %p106 = scmp.ne.s32.totalorder %s95, %s96
      %p107 = scmp.eq.s32.totalorder %s26, 0
      %p108 = por %p106, %p107
      %p109 = scmp.ne.s32.totalorder %s95, %s96
      %p110 = scmp.eq.s32.totalorder %s27, 3
      %p111 = por %p109, %p110
      %p113 = scmp.ne.s32.totalorder %s96, %s112
      %p114 = scmp.eq.s32.totalorder %s27, 0
      %p115 = por %p113, %p114
      %s116 = ssub.s32 %s28, %s40
      %p117 = scmp.eq.s32.totalorder %s116, 0
      %s119 = sadd.s32 %s118, 1
      %s120 = scalar_select %p117, %s118, %s119
      %p123 = pneg %p117
      %p124 = scmp.eq.s32.totalorder %s21, 3
      %p125 = por %p123, %p124
      %p126 = scmp.ne.s32.totalorder %s118, %s121
      %p127 = scmp.eq.s32.totalorder %s21, 0
      %p128 = por %p126, %p127
      %p129 = scmp.ne.s32.totalorder %s118, %s121
      %p130 = scmp.eq.s32.totalorder %s26, 3
      %p131 = por %p129, %p130
      %p132 = scmp.ne.s32.totalorder %s121, %s122
      %p133 = scmp.eq.s32.totalorder %s26, 0
      %p134 = por %p132, %p133
      %p135 = scmp.ne.s32.totalorder %s121, %s122
      %p136 = scmp.eq.s32.totalorder %s27, 3
      %p137 = por %p135, %p136
      %p139 = scmp.ne.s32.totalorder %s122, %s138
      %p140 = scmp.eq.s32.totalorder %s27, 0
      %p141 = por %p139, %p140
      %s142 = ssub.s32 %s28, %s40
      %p143 = scmp.eq.s32.totalorder %s142, 0
      %s145 = sadd.s32 %s144, 1
      %s146 = scalar_select %p143, %s144, %s145
      %p149 = pneg %p143
      %p150 = scmp.eq.s32.totalorder %s21, 3
      %p151 = por %p149, %p150
      %p152 = scmp.ne.s32.totalorder %s144, %s147
      %p153 = scmp.eq.s32.totalorder %s21, 0
      %p154 = por %p152, %p153
      %p155 = scmp.ne.s32.totalorder %s144, %s147
      %p156 = scmp.eq.s32.totalorder %s26, 3
      %p157 = por %p155, %p156
      %p158 = scmp.ne.s32.totalorder %s147, %s148
      %p159 = scmp.eq.s32.totalorder %s26, 0
      %p160 = por %p158, %p159
      %p161 = scmp.ne.s32.totalorder %s147, %s148
      %p162 = scmp.eq.s32.totalorder %s27, 3
      %p163 = por %p161, %p162
      %p165 = scmp.ne.s32.totalorder %s148, %s164
      %p166 = scmp.eq.s32.totalorder %s27, 0
      %p167 = por %p165, %p166
      %p168 = scmp.le.s32.totalorder 1, %s21
      %p169 = scmp.lt.s32.totalorder %s21, 5
      %p170 = pnand %p168, %p169
      %p171 = pneg %p170
      // Predicated region
      $region9: #{uconv2d_forward.3} parent=5 // pred_check
        _
      $region10: #{uconv2d_forward.3} parent=5 // pred_check_branch
        %173 = sbr.rel (%p170) target = $region12
      $region11: #{uconv2d_forward.3} parent=5 // pred_region
        %s174 = ssub.s32 %s21, 1
        // Predicated region
        $region13: #{uconv2d_forward.3} parent=11 // pred_check
          %p175 = pneg %p80
        $region14: #{uconv2d_forward.3} parent=11 // pred_check_branch
          %177 = sbr.rel (%p175) target = $region16
        $region15: #{uconv2d_forward.3} parent=11 // pred_region
          %s179 = ssub.s32 9216, 9216
          %180 = vsyncadd [#allocation6], %s179
          %s181 = sshll.u32 [#allocation5], 4
          %s182 = int_to_ptr.vmem [resolvable:$true] %s181
          %187 = dma.hbm_to_vmem [thread:$0]  %s1, 9216, %s182, [#allocation6], 64, 64, 4
        $region16: #{uconv2d_forward.3} parent=11 // pred_fallthru
          _
      $region12: #{uconv2d_forward.3} parent=5 // pred_fallthru
        _
      %p188 = scmp.lt.s32.totalorder %s21, 4
      // Predicated region
      $region17: #{uconv2d_forward.3} parent=5 // pred_check
        %p189 = pneg %p188
      $region18: #{uconv2d_forward.3} parent=5 // pred_check_branch
        %191 = sbr.rel (%p189) target = $region20
      $region19: #{uconv2d_forward.3} parent=5 // pred_region
        // Predicated region
        $region21: #{uconv2d_forward.3} parent=19 // pred_check
          %p192 = pneg %p53
        $region22: #{uconv2d_forward.3} parent=19 // pred_check_branch
          %194 = sbr.rel (%p192) target = $region24
        $region23: #{uconv2d_forward.3} parent=19 // pred_region
          %s195 = sand.u32 %s43, 1
          %s196 = scalar_lea.sflag [#allocation3], %s195
          %s197 = sand.u32 %s43, 1
          %s198 = smul.addr %s197, 216
          %s199 = scalar_lea.vmem [#allocation2], %s198
          %s201 = ssub.s32 3456, 3456
          %202 = vsyncadd %s196, %s201
          %s203 = smul.addr %s28, 54
          %s204 = smul.addr %s203, 64
          %s205 = scalar_lea.hbm %s0, %s204
          %s206 = sshll.u32 %s199, 4
          %s207 = int_to_ptr.vmem [resolvable:$true] %s206
          %212 = dma.hbm_to_vmem [thread:$0]  %s205, 3456, %s207, %s196, 64, 64, 4
        $region24: #{uconv2d_forward.3} parent=19 // pred_fallthru
          _
      $region20: #{uconv2d_forward.3} parent=5 // pred_fallthru
        _
      %p213 = scmp.le.s32.totalorder 1, %s21
      %p214 = scmp.lt.s32.totalorder %s21, 5
      %p215 = pnand %p213, %p214
      %p216 = pneg %p215
      // Predicated region
      $region25: #{uconv2d_forward.3} parent=5 // pred_check
        _
      $region26: #{uconv2d_forward.3} parent=5 // pred_check_branch
        %218 = sbr.rel (%p215) target = $region28
      $region27: #{uconv2d_forward.3} parent=5 // pred_region
        %s219 = ssub.s32 %s21, 1
        %s220 = sand.u32 %s46, 1
        %s221 = scalar_lea.sflag [#allocation3], %s220
        %s222 = sand.u32 %s46, 1
        %s223 = smul.addr %s222, 216
        %s224 = scalar_lea.vmem [#allocation2], %s223
        // Predicated region
        $region29: #{uconv2d_forward.3} parent=27 // pred_check
          %p225 = pneg %p59
        $region30: #{uconv2d_forward.3} parent=27 // pred_check_branch
          %227 = sbr.rel (%p225) target = $region32
        $region31: #{uconv2d_forward.3} parent=27 // pred_region
          %228 = dma.done %s221, 3456
        $region32: #{uconv2d_forward.3} parent=27 // pred_fallthru
          _
        // Predicated region
        $region33: #{uconv2d_forward.3} parent=27 // pred_check
          %p229 = pneg %p80
        $region34: #{uconv2d_forward.3} parent=27 // pred_check_branch
          %231 = sbr.rel (%p229) target = $region36
        $region35: #{uconv2d_forward.3} parent=27 // pred_region
          %232 = dma.done [#allocation6], 9216
        $region36: #{uconv2d_forward.3} parent=27 // pred_fallthru
          _
        %s233 = sand.u32 %s46, 1
        %s234 = scalar_lea.sflag [#allocation3], %s233
        %s235 = sand.u32 %s46, 1
        %s236 = smul.addr %s235, 216
        %s237 = scalar_lea.vmem [#allocation2], %s236
        %p238 = pneg %p59
        %p239 = pneg %p56
        %p240 = pneg %p80
        %p241 = pneg %p77
        %p242 = pneg %p108
        %p243 = pneg %p105
        %s244 = sand.u32 %s95, 1
        %s245 = scalar_lea.sflag [#allocation4], %s244
        %s246 = sand.u32 %s95, 1
        %s247 = smul.addr %s246, 64
        %s248 = scalar_lea.vmem [#allocation7], %s247
        %p249 = pneg %p134
        %p250 = pneg %p131
        %s251 = sand.u32 %s26, 1
        %s252 = scalar_lea.sflag [#allocation9], %s251
        %s253 = sand.u32 %s121, 1
        %s254 = smul.addr %s253, 8
        %s255 = scalar_lea.vmem [#allocation8], %s254
        %p256 = pneg %p160
        %p257 = pneg %p157
        %s258 = sand.u32 %s26, 1
        %s259 = scalar_lea.sflag [#allocation9], %s258
        %s260 = sand.u32 %s147, 1
        %s261 = smul.addr %s260, 8
        %s262 = scalar_lea.vmem [#allocation10], %s261
        %s263 = smul.u32 8, %s31
        %s265 = smul.u32 %s31, 8
        %s266 = smul.u32 %s265, 3
        %s267 = smul.addr %s266, 4
        %s268 = scalar_lea.vmem %s224, %s267 [#allocation2]
        %v269 = vld [vmem:[%s268] sm:$0xf]
        %v270 = vld [vmem:[%s268 + $0x4] sm:$0xf]
        %v271 = vld [vmem:[%s268 + $0xc] sm:$0xf]
        %v272 = vld [vmem:[%s268 + $0x10] sm:$0xf]
        %v273 = vld [vmem:[%s268 + $0x18] sm:$0xf]
        %v274 = vld [vmem:[%s268 + $0x1c] sm:$0xf]
        %v275 = vld [vmem:[%s268 + $0x24] sm:$0xf]
        %v276 = vld [vmem:[%s268 + $0x28] sm:$0xf]
        %v277 = vld [vmem:[%s268 + $0x30] sm:$0xf]
        %v278 = vld [vmem:[%s268 + $0x34] sm:$0xf]
        %v279 = vld [vmem:[%s268 + $0x3c] sm:$0xf]
        %v280 = vld [vmem:[%s268 + $0x40] sm:$0xf]
        %v281 = vld [vmem:[%s268 + $0x48] sm:$0xf]
        %v282 = vld [vmem:[%s268 + $0x4c] sm:$0xf]
        %v283 = vld [vmem:[%s268 + $0x54] sm:$0xf]
        %v284 = vld [vmem:[%s268 + $0x58] sm:$0xf]
        %v285 = vld [vmem:[%s268 + $0x8] sm:$0x1]
        %v286 = vld [vmem:[%s268 + $0x14] sm:$0x1]
        %v287 = vld [vmem:[%s268 + $0x20] sm:$0x1]
        %v288 = vld [vmem:[%s268 + $0x2c] sm:$0x1]
        %v289 = vld [vmem:[%s268 + $0x38] sm:$0x1]
        %v290 = vld [vmem:[%s268 + $0x44] sm:$0x1]
        %v291 = vld [vmem:[%s268 + $0x50] sm:$0x1]
        %v292 = vld [vmem:[%s268 + $0x5c] sm:$0x1]
        %vm293 = vsmask.f32 3328
        %vm294 = vsmask.f32 7440
        %vm295 = vmor %vm293, %vm294
        %v297 = vshrl.u32 %v269, 16
        %v299 = vrot.slane %v297, 4
        %v300 = vshll.u32 %v269, 16
        %v302 = vrot.slane %v300, 5
        %v303 = vor.u32 %v299, %v302
        %v304 = vrot.slane %v303, 4
        %v306 = vshll.u32 %v270, 16
        %v308 = vrot.slane %v306, 5
        %v309 = vsel %vm295, %v304, %v308
        %v310 = vshrl.u32 %v270, 16
        %v312 = vrot.slane %v310, 4
        %v313 = vor.u32 %v312, %v308
        %v314 = vrot.slane %v313, 4
        %v316 = vshll.u32 %v285, 16
        %v318 = vrot.slane %v316, 5
        %v319 = vsel %vm295, %v314, %v318
        %v321 = vshrl.u32 %v271, 16
        %v323 = vrot.slane %v321, 4
        %v324 = vshll.u32 %v271, 16
        %v326 = vrot.slane %v324, 5
        %v327 = vor.u32 %v323, %v326
        %v328 = vrot.slane %v327, 4
        %v330 = vshll.u32 %v272, 16
        %v332 = vrot.slane %v330, 5
        %v333 = vsel %vm295, %v328, %v332
        %v334 = vshrl.u32 %v272, 16
        %v336 = vrot.slane %v334, 4
        %v337 = vor.u32 %v336, %v332
        %v338 = vrot.slane %v337, 4
        %v340 = vshll.u32 %v286, 16
        %v342 = vrot.slane %v340, 5
        %v343 = vsel %vm295, %v338, %v342
        %v345 = vshrl.u32 %v273, 16
        %v347 = vrot.slane %v345, 4
        %v348 = vshll.u32 %v273, 16
        %v350 = vrot.slane %v348, 5
        %v351 = vor.u32 %v347, %v350
        %v352 = vrot.slane %v351, 4
        %v354 = vshll.u32 %v274, 16
        %v356 = vrot.slane %v354, 5
        %v357 = vsel %vm295, %v352, %v356
        %v358 = vshrl.u32 %v274, 16
        %v360 = vrot.slane %v358, 4
        %v361 = vor.u32 %v360, %v356
        %v362 = vrot.slane %v361, 4
        %v364 = vshll.u32 %v287, 16
        %v366 = vrot.slane %v364, 5
        %v367 = vsel %vm295, %v362, %v366
        %v369 = vshrl.u32 %v275, 16
        %v371 = vrot.slane %v369, 4
        %v372 = vshll.u32 %v275, 16
        %v374 = vrot.slane %v372, 5
        %v375 = vor.u32 %v371, %v374
        %v376 = vrot.slane %v375, 4
        %v378 = vshll.u32 %v276, 16
        %v380 = vrot.slane %v378, 5
        %v381 = vsel %vm295, %v376, %v380
        %v382 = vshrl.u32 %v276, 16
        %v384 = vrot.slane %v382, 4
        %v385 = vor.u32 %v384, %v380
        %v386 = vrot.slane %v385, 4
        %v388 = vshll.u32 %v288, 16
        %v390 = vrot.slane %v388, 5
        %v391 = vsel %vm295, %v386, %v390
        %v393 = vshrl.u32 %v277, 16
        %v395 = vrot.slane %v393, 4
        %v396 = vshll.u32 %v277, 16
        %v398 = vrot.slane %v396, 5
        %v399 = vor.u32 %v395, %v398
        %v400 = vrot.slane %v399, 4
        %v402 = vshll.u32 %v278, 16
        %v404 = vrot.slane %v402, 5
        %v405 = vsel %vm295, %v400, %v404
        %v406 = vshrl.u32 %v278, 16
        %v408 = vrot.slane %v406, 4
        %v409 = vor.u32 %v408, %v404
        %v410 = vrot.slane %v409, 4
        %v412 = vshll.u32 %v289, 16
        %v414 = vrot.slane %v412, 5
        %v415 = vsel %vm295, %v410, %v414
        %v417 = vshrl.u32 %v279, 16
        %v419 = vrot.slane %v417, 4
        %v420 = vshll.u32 %v279, 16
        %v422 = vrot.slane %v420, 5
        %v423 = vor.u32 %v419, %v422
        %v424 = vrot.slane %v423, 4
        %v426 = vshll.u32 %v280, 16
        %v428 = vrot.slane %v426, 5
        %v429 = vsel %vm295, %v424, %v428
        %v430 = vshrl.u32 %v280, 16
        %v432 = vrot.slane %v430, 4
        %v433 = vor.u32 %v432, %v428
        %v434 = vrot.slane %v433, 4
        %v436 = vshll.u32 %v290, 16
        %v438 = vrot.slane %v436, 5
        %v439 = vsel %vm295, %v434, %v438
        %v441 = vshrl.u32 %v281, 16
        %v443 = vrot.slane %v441, 4
        %v444 = vshll.u32 %v281, 16
        %v446 = vrot.slane %v444, 5
        %v447 = vor.u32 %v443, %v446
        %v448 = vrot.slane %v447, 4
        %v450 = vshll.u32 %v282, 16
        %v452 = vrot.slane %v450, 5
        %v453 = vsel %vm295, %v448, %v452
        %v454 = vshrl.u32 %v282, 16
        %v456 = vrot.slane %v454, 4
        %v457 = vor.u32 %v456, %v452
        %v458 = vrot.slane %v457, 4
        %v460 = vshll.u32 %v291, 16
        %v462 = vrot.slane %v460, 5
        %v463 = vsel %vm295, %v458, %v462
        %v465 = vshrl.u32 %v283, 16
        %v467 = vrot.slane %v465, 4
        %v468 = vshll.u32 %v283, 16
        %v470 = vrot.slane %v468, 5
        %v471 = vor.u32 %v467, %v470
        %v472 = vrot.slane %v471, 4
        %v474 = vshll.u32 %v284, 16
        %v476 = vrot.slane %v474, 5
        %v477 = vsel %vm295, %v472, %v476
        %v478 = vshrl.u32 %v284, 16
        %v480 = vrot.slane %v478, 4
        %v481 = vor.u32 %v480, %v476
        %v482 = vrot.slane %v481, 4
        %v484 = vshll.u32 %v292, 16
        %v486 = vrot.slane %v484, 5
        %v487 = vsel %vm295, %v482, %v486
        %v488 = vld [vmem:[%s268] sm:$0xe]
        %v489 = vld [vmem:[%s268 + $0xc] sm:$0xe]
        %v490 = vld [vmem:[%s268 + $0x18] sm:$0xe]
        %v491 = vld [vmem:[%s268 + $0x24] sm:$0xe]
        %v492 = vld [vmem:[%s268 + $0x30] sm:$0xe]
        %v493 = vld [vmem:[%s268 + $0x3c] sm:$0xe]
        %v494 = vld [vmem:[%s268 + $0x48] sm:$0xe]
        %v495 = vld [vmem:[%s268 + $0x54] sm:$0xe]
        %vm520 = vcmask 1042432
        %vm521 = vcmask 1046532
        %vm522 = vmor %vm520, %vm521
        %v523 = vrot.slane %v488, 5
        %v524 = vrot.slane %v523, 4
        %v525 = vrot.slane %v270, 5
        %v526 = vsel %vm522, %v524, %v525
        %v527 = vrot.slane %v525, 4
        %v528 = vrot.slane %v285, 5
        %v529 = vsel %vm522, %v527, %v528
        %v530 = vrot.slane %v489, 5
        %v531 = vrot.slane %v530, 4
        %v532 = vrot.slane %v272, 5
        %v533 = vsel %vm522, %v531, %v532
        %v534 = vrot.slane %v532, 4
        %v535 = vrot.slane %v286, 5
        %v536 = vsel %vm522, %v534, %v535
        %v537 = vrot.slane %v490, 5
        %v538 = vrot.slane %v537, 4
        %v539 = vrot.slane %v274, 5
        %v540 = vsel %vm522, %v538, %v539
        %v541 = vrot.slane %v539, 4
        %v542 = vrot.slane %v287, 5
        %v543 = vsel %vm522, %v541, %v542
        %v544 = vrot.slane %v491, 5
        %v545 = vrot.slane %v544, 4
        %v546 = vrot.slane %v276, 5
        %v547 = vsel %vm522, %v545, %v546
        %v548 = vrot.slane %v546, 4
        %v549 = vrot.slane %v288, 5
        %v550 = vsel %vm522, %v548, %v549
        %v551 = vrot.slane %v492, 5
        %v552 = vrot.slane %v551, 4
        %v553 = vrot.slane %v278, 5
        %v554 = vsel %vm522, %v552, %v553
        %v555 = vrot.slane %v553, 4
        %v556 = vrot.slane %v289, 5
        %v557 = vsel %vm522, %v555, %v556
        %v558 = vrot.slane %v493, 5
        %v559 = vrot.slane %v558, 4
        %v560 = vrot.slane %v280, 5
        %v561 = vsel %vm522, %v559, %v560
        %v562 = vrot.slane %v560, 4
        %v563 = vrot.slane %v290, 5
        %v564 = vsel %vm522, %v562, %v563
        %v565 = vrot.slane %v494, 5
        %v566 = vrot.slane %v565, 4
        %v567 = vrot.slane %v282, 5
        %v568 = vsel %vm522, %v566, %v567
        %v569 = vrot.slane %v567, 4
        %v570 = vrot.slane %v291, 5
        %v571 = vsel %vm522, %v569, %v570
        %v572 = vrot.slane %v495, 5
        %v573 = vrot.slane %v572, 4
        %v574 = vrot.slane %v284, 5
        %v575 = vsel %vm522, %v573, %v574
        %v576 = vrot.slane %v574, 4
        %v577 = vrot.slane %v292, 5
        %v578 = vsel %vm522, %v576, %v577
        %v587 = vunpack.c.l.b16 %v269
        %v588 = vunpack.c.l.b16 %v270
        %v589 = vunpack.c.l.b16 %v271
        %v590 = vunpack.c.l.b16 %v272
        %v591 = vunpack.c.l.b16 %v273
        %v592 = vunpack.c.l.b16 %v274
        %v593 = vunpack.c.l.b16 %v275
        %v594 = vunpack.c.l.b16 %v276
        %v595 = vunpack.c.l.b16 %v277
        %v596 = vunpack.c.l.b16 %v278
        %v597 = vunpack.c.l.b16 %v279
        %v598 = vunpack.c.l.b16 %v280
        %v599 = vunpack.c.l.b16 %v281
        %v600 = vunpack.c.l.b16 %v282
        %v601 = vunpack.c.l.b16 %v283
        %v602 = vunpack.c.l.b16 %v284
        %v603 = vpack.c.b16 %v588, %v587
        %v604 = vpack.c.b16 %v590, %v589
        %v605 = vpack.c.b16 %v592, %v591
        %v606 = vpack.c.b16 %v594, %v593
        %v607 = vpack.c.b16 %v596, %v595
        %v608 = vpack.c.b16 %v598, %v597
        %v609 = vpack.c.b16 %v600, %v599
        %v610 = vpack.c.b16 %v602, %v601
        %v619 = vunpack.c.l.b16 %v309
        %v620 = vunpack.c.l.b16 %v319
        %v621 = vunpack.c.l.b16 %v333
        %v622 = vunpack.c.l.b16 %v343
        %v623 = vunpack.c.l.b16 %v357
        %v624 = vunpack.c.l.b16 %v367
        %v625 = vunpack.c.l.b16 %v381
        %v626 = vunpack.c.l.b16 %v391
        %v627 = vunpack.c.l.b16 %v405
        %v628 = vunpack.c.l.b16 %v415
        %v629 = vunpack.c.l.b16 %v429
        %v630 = vunpack.c.l.b16 %v439
        %v631 = vunpack.c.l.b16 %v453
        %v632 = vunpack.c.l.b16 %v463
        %v633 = vunpack.c.l.b16 %v477
        %v634 = vunpack.c.l.b16 %v487
        %v635 = vpack.c.b16 %v620, %v619
        %v636 = vpack.c.b16 %v622, %v621
        %v637 = vpack.c.b16 %v624, %v623
        %v638 = vpack.c.b16 %v626, %v625
        %v639 = vpack.c.b16 %v628, %v627
        %v640 = vpack.c.b16 %v630, %v629
        %v641 = vpack.c.b16 %v632, %v631
        %v642 = vpack.c.b16 %v634, %v633
        %v651 = vunpack.c.l.b16 %v526
        %v652 = vunpack.c.l.b16 %v529
        %v653 = vunpack.c.l.b16 %v533
        %v654 = vunpack.c.l.b16 %v536
        %v655 = vunpack.c.l.b16 %v540
        %v656 = vunpack.c.l.b16 %v543
        %v657 = vunpack.c.l.b16 %v547
        %v658 = vunpack.c.l.b16 %v550
        %v659 = vunpack.c.l.b16 %v554
        %v660 = vunpack.c.l.b16 %v557
        %v661 = vunpack.c.l.b16 %v561
        %v662 = vunpack.c.l.b16 %v564
        %v663 = vunpack.c.l.b16 %v568
        %v664 = vunpack.c.l.b16 %v571
        %v665 = vunpack.c.l.b16 %v575
        %v666 = vunpack.c.l.b16 %v578
        %v667 = vpack.c.b16 %v652, %v651
        %v668 = vpack.c.b16 %v654, %v653
        %v669 = vpack.c.b16 %v656, %v655
        %v670 = vpack.c.b16 %v658, %v657
        %v671 = vpack.c.b16 %v660, %v659
        %v672 = vpack.c.b16 %v662, %v661
        %v673 = vpack.c.b16 %v664, %v663
        %v674 = vpack.c.b16 %v666, %v665
        %v683 = vld [vmem:[#allocation5] sm:$0xf]
        %v684 = vld [vmem:[#allocation5 + $0x4] sm:$0xf]
        %v685 = vld [vmem:[#allocation5 + $0x8] sm:$0xf]
        %v686 = vld [vmem:[#allocation5 + $0xc] sm:$0xf]
        %v687 = vld [vmem:[#allocation5 + $0x10] sm:$0xf]
        %v688 = vld [vmem:[#allocation5 + $0x14] sm:$0xf]
        %v689 = vld [vmem:[#allocation5 + $0x18] sm:$0xf]
        %v690 = vld [vmem:[#allocation5 + $0x1c] sm:$0xf]
        %v691 = vld [vmem:[#allocation5 + $0x20] sm:$0xf]
        %v692 = vld [vmem:[#allocation5 + $0x24] sm:$0xf]
        %v693 = vld [vmem:[#allocation5 + $0x28] sm:$0xf]
        %v694 = vld [vmem:[#allocation5 + $0x2c] sm:$0xf]
        %v695 = vld [vmem:[#allocation5 + $0x30] sm:$0xf]
        %v696 = vld [vmem:[#allocation5 + $0x34] sm:$0xf]
        %v697 = vld [vmem:[#allocation5 + $0x38] sm:$0xf]
        %v698 = vld [vmem:[#allocation5 + $0x3c] sm:$0xf]
        %v699 = vld [vmem:[#allocation5 + $0x40] sm:$0xf]
        %v700 = vld [vmem:[#allocation5 + $0x44] sm:$0xf]
        %v701 = vld [vmem:[#allocation5 + $0x48] sm:$0xf]
        %v702 = vld [vmem:[#allocation5 + $0x4c] sm:$0xf]
        %v703 = vld [vmem:[#allocation5 + $0x50] sm:$0xf]
        %v704 = vld [vmem:[#allocation5 + $0x54] sm:$0xf]
        %v705 = vld [vmem:[#allocation5 + $0x58] sm:$0xf]
        %v706 = vld [vmem:[#allocation5 + $0x5c] sm:$0xf]
        %v707 = vld [vmem:[#allocation5 + $0x60] sm:$0xf]
        %v708 = vld [vmem:[#allocation5 + $0x64] sm:$0xf]
        %v709 = vld [vmem:[#allocation5 + $0x68] sm:$0xf]
        %v710 = vld [vmem:[#allocation5 + $0x6c] sm:$0xf]
        %v711 = vld [vmem:[#allocation5 + $0x70] sm:$0xf]
        %v712 = vld [vmem:[#allocation5 + $0x74] sm:$0xf]
        %v713 = vld [vmem:[#allocation5 + $0x78] sm:$0xf]
        %v714 = vld [vmem:[#allocation5 + $0x7c] sm:$0xf]
        %v715 = vld [vmem:[#allocation5 + $0x80] sm:$0xf]
        %v716 = vld [vmem:[#allocation5 + $0x84] sm:$0xf]
        %v717 = vld [vmem:[#allocation5 + $0x88] sm:$0xf]
        %v718 = vld [vmem:[#allocation5 + $0x8c] sm:$0xf]
        %v719 = vld [vmem:[#allocation5 + $0x90] sm:$0xf]
        %v720 = vld [vmem:[#allocation5 + $0x94] sm:$0xf]
        %v721 = vld [vmem:[#allocation5 + $0x98] sm:$0xf]
        %v722 = vld [vmem:[#allocation5 + $0x9c] sm:$0xf]
        %v723 = vld [vmem:[#allocation5 + $0xa0] sm:$0xf]
        %v724 = vld [vmem:[#allocation5 + $0xa4] sm:$0xf]
        %v725 = vld [vmem:[#allocation5 + $0xa8] sm:$0xf]
        %v726 = vld [vmem:[#allocation5 + $0xac] sm:$0xf]
        %v727 = vld [vmem:[#allocation5 + $0xb0] sm:$0xf]
        %v728 = vld [vmem:[#allocation5 + $0xb4] sm:$0xf]
        %v729 = vld [vmem:[#allocation5 + $0xb8] sm:$0xf]
        %v730 = vld [vmem:[#allocation5 + $0xbc] sm:$0xf]
        %s731 = sadd.s32 %s265, 1
        %s732 = smul.u32 %s731, 3
        %s733 = smul.addr %s732, 4
        %s734 = scalar_lea.vmem %s224, %s733 [#allocation2]
        %v735 = vld [vmem:[%s734] sm:$0xf]
        %v736 = vld [vmem:[%s734 + $0x4] sm:$0xf]
        %v737 = vld [vmem:[%s734 + $0xc] sm:$0xf]
        %v738 = vld [vmem:[%s734 + $0x10] sm:$0xf]
        %v739 = vld [vmem:[%s734 + $0x18] sm:$0xf]
        %v740 = vld [vmem:[%s734 + $0x1c] sm:$0xf]
        %v741 = vld [vmem:[%s734 + $0x24] sm:$0xf]
        %v742 = vld [vmem:[%s734 + $0x28] sm:$0xf]
        %v743 = vld [vmem:[%s734 + $0x30] sm:$0xf]
        %v744 = vld [vmem:[%s734 + $0x34] sm:$0xf]
        %v745 = vld [vmem:[%s734 + $0x3c] sm:$0xf]
        %v746 = vld [vmem:[%s734 + $0x40] sm:$0xf]
        %v747 = vld [vmem:[%s734 + $0x48] sm:$0xf]
        %v748 = vld [vmem:[%s734 + $0x4c] sm:$0xf]
        %v749 = vld [vmem:[%s734 + $0x54] sm:$0xf]
        %v750 = vld [vmem:[%s734 + $0x58] sm:$0xf]
        %v751 = vld [vmem:[%s734 + $0x8] sm:$0x1]
        %v752 = vld [vmem:[%s734 + $0x14] sm:$0x1]
        %v753 = vld [vmem:[%s734 + $0x20] sm:$0x1]
        %v754 = vld [vmem:[%s734 + $0x2c] sm:$0x1]
        %v755 = vld [vmem:[%s734 + $0x38] sm:$0x1]
        %v756 = vld [vmem:[%s734 + $0x44] sm:$0x1]
        %v757 = vld [vmem:[%s734 + $0x50] sm:$0x1]
        %v758 = vld [vmem:[%s734 + $0x5c] sm:$0x1]
        %v760 = vshrl.u32 %v735, 16
        %v762 = vrot.slane %v760, 4
        %v763 = vshll.u32 %v735, 16
        %v765 = vrot.slane %v763, 5
        %v766 = vor.u32 %v762, %v765
        %v767 = vrot.slane %v766, 4
        %v769 = vshll.u32 %v736, 16
        %v771 = vrot.slane %v769, 5
        %v772 = vsel %vm295, %v767, %v771
        %v773 = vshrl.u32 %v736, 16
        %v775 = vrot.slane %v773, 4
        %v776 = vor.u32 %v775, %v771
        %v777 = vrot.slane %v776, 4
        %v779 = vshll.u32 %v751, 16
        %v781 = vrot.slane %v779, 5
        %v782 = vsel %vm295, %v777, %v781
        %v784 = vshrl.u32 %v737, 16
        %v786 = vrot.slane %v784, 4
        %v787 = vshll.u32 %v737, 16
        %v789 = vrot.slane %v787, 5
        %v790 = vor.u32 %v786, %v789
        %v791 = vrot.slane %v790, 4
        %v793 = vshll.u32 %v738, 16
        %v795 = vrot.slane %v793, 5
        %v796 = vsel %vm295, %v791, %v795
        %v797 = vshrl.u32 %v738, 16
        %v799 = vrot.slane %v797, 4
        %v800 = vor.u32 %v799, %v795
        %v801 = vrot.slane %v800, 4
        %v803 = vshll.u32 %v752, 16
        %v805 = vrot.slane %v803, 5
        %v806 = vsel %vm295, %v801, %v805
        %v808 = vshrl.u32 %v739, 16
        %v810 = vrot.slane %v808, 4
        %v811 = vshll.u32 %v739, 16
        %v813 = vrot.slane %v811, 5
        %v814 = vor.u32 %v810, %v813
        %v815 = vrot.slane %v814, 4
        %v817 = vshll.u32 %v740, 16
        %v819 = vrot.slane %v817, 5
        %v820 = vsel %vm295, %v815, %v819
        %v821 = vshrl.u32 %v740, 16
        %v823 = vrot.slane %v821, 4
        %v824 = vor.u32 %v823, %v819
        %v825 = vrot.slane %v824, 4
        %v827 = vshll.u32 %v753, 16
        %v829 = vrot.slane %v827, 5
        %v830 = vsel %vm295, %v825, %v829
        %v832 = vshrl.u32 %v741, 16
        %v834 = vrot.slane %v832, 4
        %v835 = vshll.u32 %v741, 16
        %v837 = vrot.slane %v835, 5
        %v838 = vor.u32 %v834, %v837
        %v839 = vrot.slane %v838, 4
        %v841 = vshll.u32 %v742, 16
        %v843 = vrot.slane %v841, 5
        %v844 = vsel %vm295, %v839, %v843
        %v845 = vshrl.u32 %v742, 16
        %v847 = vrot.slane %v845, 4
        %v848 = vor.u32 %v847, %v843
        %v849 = vrot.slane %v848, 4
        %v851 = vshll.u32 %v754, 16
        %v853 = vrot.slane %v851, 5
        %v854 = vsel %vm295, %v849, %v853
        %v856 = vshrl.u32 %v743, 16
        %v858 = vrot.slane %v856, 4
        %v859 = vshll.u32 %v743, 16
        %v861 = vrot.slane %v859, 5
        %v862 = vor.u32 %v858, %v861
        %v863 = vrot.slane %v862, 4
        %v865 = vshll.u32 %v744, 16
        %v867 = vrot.slane %v865, 5
        %v868 = vsel %vm295, %v863, %v867
        %v869 = vshrl.u32 %v744, 16
        %v871 = vrot.slane %v869, 4
        %v872 = vor.u32 %v871, %v867
        %v873 = vrot.slane %v872, 4
        %v875 = vshll.u32 %v755, 16
        %v877 = vrot.slane %v875, 5
        %v878 = vsel %vm295, %v873, %v877
        %v880 = vshrl.u32 %v745, 16
        %v882 = vrot.slane %v880, 4
        %v883 = vshll.u32 %v745, 16
        %v885 = vrot.slane %v883, 5
        %v886 = vor.u32 %v882, %v885
        %v887 = vrot.slane %v886, 4
        %v889 = vshll.u32 %v746, 16
        %v891 = vrot.slane %v889, 5
        %v892 = vsel %vm295, %v887, %v891
        %v893 = vshrl.u32 %v746, 16
        %v895 = vrot.slane %v893, 4
        %v896 = vor.u32 %v895, %v891
        %v897 = vrot.slane %v896, 4
        %v899 = vshll.u32 %v756, 16
        %v901 = vrot.slane %v899, 5
        %v902 = vsel %vm295, %v897, %v901
        %v904 = vshrl.u32 %v747, 16
        %v906 = vrot.slane %v904, 4
        %v907 = vshll.u32 %v747, 16
        %v909 = vrot.slane %v907, 5
        %v910 = vor.u32 %v906, %v909
        %v911 = vrot.slane %v910, 4
        %v913 = vshll.u32 %v748, 16
        %v915 = vrot.slane %v913, 5
        %v916 = vsel %vm295, %v911, %v915
        %v917 = vshrl.u32 %v748, 16
        %v919 = vrot.slane %v917, 4
        %v920 = vor.u32 %v919, %v915
        %v921 = vrot.slane %v920, 4
        %v923 = vshll.u32 %v757, 16
        %v925 = vrot.slane %v923, 5
        %v926 = vsel %vm295, %v921, %v925
        %v928 = vshrl.u32 %v749, 16
        %v930 = vrot.slane %v928, 4
        %v931 = vshll.u32 %v749, 16
        %v933 = vrot.slane %v931, 5
        %v934 = vor.u32 %v930, %v933
        %v935 = vrot.slane %v934, 4
        %v937 = vshll.u32 %v750, 16
        %v939 = vrot.slane %v937, 5
        %v940 = vsel %vm295, %v935, %v939
        %v941 = vshrl.u32 %v750, 16
        %v943 = vrot.slane %v941, 4
        %v944 = vor.u32 %v943, %v939
        %v945 = vrot.slane %v944, 4
        %v947 = vshll.u32 %v758, 16
        %v949 = vrot.slane %v947, 5
        %v950 = vsel %vm295, %v945, %v949
        %v951 = vld [vmem:[%s734] sm:$0xe]
        %v952 = vld [vmem:[%s734 + $0xc] sm:$0xe]
        %v953 = vld [vmem:[%s734 + $0x18] sm:$0xe]
        %v954 = vld [vmem:[%s734 + $0x24] sm:$0xe]
        %v955 = vld [vmem:[%s734 + $0x30] sm:$0xe]
        %v956 = vld [vmem:[%s734 + $0x3c] sm:$0xe]
        %v957 = vld [vmem:[%s734 + $0x48] sm:$0xe]
        %v958 = vld [vmem:[%s734 + $0x54] sm:$0xe]
        %v983 = vrot.slane %v951, 5
        %v984 = vrot.slane %v983, 4
        %v985 = vrot.slane %v736, 5
        %v986 = vsel %vm522, %v984, %v985
        %v987 = vrot.slane %v985, 4
        %v988 = vrot.slane %v751, 5
        %v989 = vsel %vm522, %v987, %v988
        %v990 = vrot.slane %v952, 5
        %v991 = vrot.slane %v990, 4
        %v992 = vrot.slane %v738, 5
        %v993 = vsel %vm522, %v991, %v992
        %v994 = vrot.slane %v992, 4
        %v995 = vrot.slane %v752, 5
        %v996 = vsel %vm522, %v994, %v995
        %v997 = vrot.slane %v953, 5
        %v998 = vrot.slane %v997, 4
        %v999 = vrot.slane %v740, 5
        %v1000 = vsel %vm522, %v998, %v999
        %v1001 = vrot.slane %v999, 4
        %v1002 = vrot.slane %v753, 5
        %v1003 = vsel %vm522, %v1001, %v1002
        %v1004 = vrot.slane %v954, 5
        %v1005 = vrot.slane %v1004, 4
        %v1006 = vrot.slane %v742, 5
        %v1007 = vsel %vm522, %v1005, %v1006
        %v1008 = vrot.slane %v1006, 4
        %v1009 = vrot.slane %v754, 5
        %v1010 = vsel %vm522, %v1008, %v1009
        %v1011 = vrot.slane %v955, 5
        %v1012 = vrot.slane %v1011, 4
        %v1013 = vrot.slane %v744, 5
        %v1014 = vsel %vm522, %v1012, %v1013
        %v1015 = vrot.slane %v1013, 4
        %v1016 = vrot.slane %v755, 5
        %v1017 = vsel %vm522, %v1015, %v1016
        %v1018 = vrot.slane %v956, 5
        %v1019 = vrot.slane %v1018, 4
        %v1020 = vrot.slane %v746, 5
        %v1021 = vsel %vm522, %v1019, %v1020
        %v1022 = vrot.slane %v1020, 4
        %v1023 = vrot.slane %v756, 5
        %v1024 = vsel %vm522, %v1022, %v1023
        %v1025 = vrot.slane %v957, 5
        %v1026 = vrot.slane %v1025, 4
        %v1027 = vrot.slane %v748, 5
        %v1028 = vsel %vm522, %v1026, %v1027
        %v1029 = vrot.slane %v1027, 4
        %v1030 = vrot.slane %v757, 5
        %v1031 = vsel %vm522, %v1029, %v1030
        %v1032 = vrot.slane %v958, 5
        %v1033 = vrot.slane %v1032, 4
        %v1034 = vrot.slane %v750, 5
        %v1035 = vsel %vm522, %v1033, %v1034
        %v1036 = vrot.slane %v1034, 4
        %v1037 = vrot.slane %v758, 5
        %v1038 = vsel %vm522, %v1036, %v1037
        %v1047 = vunpack.c.l.b16 %v735
        %v1048 = vunpack.c.l.b16 %v736
        %v1049 = vunpack.c.l.b16 %v737
        %v1050 = vunpack.c.l.b16 %v738
        %v1051 = vunpack.c.l.b16 %v739
        %v1052 = vunpack.c.l.b16 %v740
        %v1053 = vunpack.c.l.b16 %v741
        %v1054 = vunpack.c.l.b16 %v742
        %v1055 = vunpack.c.l.b16 %v743
        %v1056 = vunpack.c.l.b16 %v744
        %v1057 = vunpack.c.l.b16 %v745
        %v1058 = vunpack.c.l.b16 %v746
        %v1059 = vunpack.c.l.b16 %v747
        %v1060 = vunpack.c.l.b16 %v748
        %v1061 = vunpack.c.l.b16 %v749
        %v1062 = vunpack.c.l.b16 %v750
        %v1063 = vpack.c.b16 %v1048, %v1047
        %v1064 = vpack.c.b16 %v1050, %v1049
        %v1065 = vpack.c.b16 %v1052, %v1051
        %v1066 = vpack.c.b16 %v1054, %v1053
        %v1067 = vpack.c.b16 %v1056, %v1055
        %v1068 = vpack.c.b16 %v1058, %v1057
        %v1069 = vpack.c.b16 %v1060, %v1059
        %v1070 = vpack.c.b16 %v1062, %v1061
        %v1079 = vunpack.c.l.b16 %v772
        %v1080 = vunpack.c.l.b16 %v782
        %v1081 = vunpack.c.l.b16 %v796
        %v1082 = vunpack.c.l.b16 %v806
        %v1083 = vunpack.c.l.b16 %v820
        %v1084 = vunpack.c.l.b16 %v830
        %v1085 = vunpack.c.l.b16 %v844
        %v1086 = vunpack.c.l.b16 %v854
        %v1087 = vunpack.c.l.b16 %v868
        %v1088 = vunpack.c.l.b16 %v878
        %v1089 = vunpack.c.l.b16 %v892
        %v1090 = vunpack.c.l.b16 %v902
        %v1091 = vunpack.c.l.b16 %v916
        %v1092 = vunpack.c.l.b16 %v926
        %v1093 = vunpack.c.l.b16 %v940
        %v1094 = vunpack.c.l.b16 %v950
        %v1095 = vpack.c.b16 %v1080, %v1079
        %v1096 = vpack.c.b16 %v1082, %v1081
        %v1097 = vpack.c.b16 %v1084, %v1083
        %v1098 = vpack.c.b16 %v1086, %v1085
        %v1099 = vpack.c.b16 %v1088, %v1087
        %v1100 = vpack.c.b16 %v1090, %v1089
        %v1101 = vpack.c.b16 %v1092, %v1091
        %v1102 = vpack.c.b16 %v1094, %v1093
        %v1111 = vunpack.c.l.b16 %v986
        %v1112 = vunpack.c.l.b16 %v989
        %v1113 = vunpack.c.l.b16 %v993
        %v1114 = vunpack.c.l.b16 %v996
        %v1115 = vunpack.c.l.b16 %v1000
        %v1116 = vunpack.c.l.b16 %v1003
        %v1117 = vunpack.c.l.b16 %v1007
        %v1118 = vunpack.c.l.b16 %v1010
        %v1119 = vunpack.c.l.b16 %v1014
        %v1120 = vunpack.c.l.b16 %v1017
        %v1121 = vunpack.c.l.b16 %v1021
        %v1122 = vunpack.c.l.b16 %v1024
        %v1123 = vunpack.c.l.b16 %v1028
        %v1124 = vunpack.c.l.b16 %v1031
        %v1125 = vunpack.c.l.b16 %v1035
        %v1126 = vunpack.c.l.b16 %v1038
        %v1127 = vpack.c.b16 %v1112, %v1111
        %v1128 = vpack.c.b16 %v1114, %v1113
        %v1129 = vpack.c.b16 %v1116, %v1115
        %v1130 = vpack.c.b16 %v1118, %v1117
        %v1131 = vpack.c.b16 %v1120, %v1119
        %v1132 = vpack.c.b16 %v1122, %v1121
        %v1133 = vpack.c.b16 %v1124, %v1123
        %v1134 = vpack.c.b16 %v1126, %v1125
        %v1143 = vld [vmem:[#allocation5 + $0xc0] sm:$0xf]
        %v1144 = vld [vmem:[#allocation5 + $0xc4] sm:$0xf]
        %v1145 = vld [vmem:[#allocation5 + $0xc8] sm:$0xf]
        %v1146 = vld [vmem:[#allocation5 + $0xcc] sm:$0xf]
        %v1147 = vld [vmem:[#allocation5 + $0xd0] sm:$0xf]
        %v1148 = vld [vmem:[#allocation5 + $0xd4] sm:$0xf]
        %v1149 = vld [vmem:[#allocation5 + $0xd8] sm:$0xf]
        %v1150 = vld [vmem:[#allocation5 + $0xdc] sm:$0xf]
        %v1151 = vld [vmem:[#allocation5 + $0xe0] sm:$0xf]
        %v1152 = vld [vmem:[#allocation5 + $0xe4] sm:$0xf]
        %v1153 = vld [vmem:[#allocation5 + $0xe8] sm:$0xf]
        %v1154 = vld [vmem:[#allocation5 + $0xec] sm:$0xf]
        %v1155 = vld [vmem:[#allocation5 + $0xf0] sm:$0xf]
        %v1156 = vld [vmem:[#allocation5 + $0xf4] sm:$0xf]
        %v1157 = vld [vmem:[#allocation5 + $0xf8] sm:$0xf]
        %v1158 = vld [vmem:[#allocation5 + $0xfc] sm:$0xf]
        %v1159 = vld [vmem:[#allocation5 + $0x100] sm:$0xf]
        %v1160 = vld [vmem:[#allocation5 + $0x104] sm:$0xf]
        %v1161 = vld [vmem:[#allocation5 + $0x108] sm:$0xf]
        %v1162 = vld [vmem:[#allocation5 + $0x10c] sm:$0xf]
        %v1163 = vld [vmem:[#allocation5 + $0x110] sm:$0xf]
        %v1164 = vld [vmem:[#allocation5 + $0x114] sm:$0xf]
        %v1165 = vld [vmem:[#allocation5 + $0x118] sm:$0xf]
        %v1166 = vld [vmem:[#allocation5 + $0x11c] sm:$0xf]
        %v1167 = vld [vmem:[#allocation5 + $0x120] sm:$0xf]
        %v1168 = vld [vmem:[#allocation5 + $0x124] sm:$0xf]
        %v1169 = vld [vmem:[#allocation5 + $0x128] sm:$0xf]
        %v1170 = vld [vmem:[#allocation5 + $0x12c] sm:$0xf]
        %v1171 = vld [vmem:[#allocation5 + $0x130] sm:$0xf]
        %v1172 = vld [vmem:[#allocation5 + $0x134] sm:$0xf]
        %v1173 = vld [vmem:[#allocation5 + $0x138] sm:$0xf]
        %v1174 = vld [vmem:[#allocation5 + $0x13c] sm:$0xf]
        %v1175 = vld [vmem:[#allocation5 + $0x140] sm:$0xf]
        %v1176 = vld [vmem:[#allocation5 + $0x144] sm:$0xf]
        %v1177 = vld [vmem:[#allocation5 + $0x148] sm:$0xf]
        %v1178 = vld [vmem:[#allocation5 + $0x14c] sm:$0xf]
        %v1179 = vld [vmem:[#allocation5 + $0x150] sm:$0xf]
        %v1180 = vld [vmem:[#allocation5 + $0x154] sm:$0xf]
        %v1181 = vld [vmem:[#allocation5 + $0x158] sm:$0xf]
        %v1182 = vld [vmem:[#allocation5 + $0x15c] sm:$0xf]
        %v1183 = vld [vmem:[#allocation5 + $0x160] sm:$0xf]
        %v1184 = vld [vmem:[#allocation5 + $0x164] sm:$0xf]
        %v1185 = vld [vmem:[#allocation5 + $0x168] sm:$0xf]
        %v1186 = vld [vmem:[#allocation5 + $0x16c] sm:$0xf]
        %v1187 = vld [vmem:[#allocation5 + $0x170] sm:$0xf]
        %v1188 = vld [vmem:[#allocation5 + $0x174] sm:$0xf]
        %v1189 = vld [vmem:[#allocation5 + $0x178] sm:$0xf]
        %v1190 = vld [vmem:[#allocation5 + $0x17c] sm:$0xf]
        %v1239 = vunpack.c.l.b16 %v1143
        %v1240 = vunpack.c.l.b16 %v1144
        %v1241 = vunpack.c.l.b16 %v1145
        %v1242 = vunpack.c.l.b16 %v1146
        %v1243 = vunpack.c.l.b16 %v1147
        %v1244 = vunpack.c.l.b16 %v1148
        %v1245 = vunpack.c.l.b16 %v1149
        %v1246 = vunpack.c.l.b16 %v1150
        %v1247 = vunpack.c.l.b16 %v1151
        %v1248 = vunpack.c.l.b16 %v1152
        %v1249 = vunpack.c.l.b16 %v1153
        %v1250 = vunpack.c.l.b16 %v1154
        %v1251 = vunpack.c.l.b16 %v1155
        %v1252 = vunpack.c.l.b16 %v1156
        %v1253 = vunpack.c.l.b16 %v1157
        %v1254 = vunpack.c.l.b16 %v1158
        %v1255 = vunpack.c.l.b16 %v1159
        %v1256 = vunpack.c.l.b16 %v1160
        %v1257 = vunpack.c.l.b16 %v1161
        %v1258 = vunpack.c.l.b16 %v1162
        %v1259 = vunpack.c.l.b16 %v1163
        %v1260 = vunpack.c.l.b16 %v1164
        %v1261 = vunpack.c.l.b16 %v1165
        %v1262 = vunpack.c.l.b16 %v1166
        %v1263 = vunpack.c.l.b16 %v1167
        %v1264 = vunpack.c.l.b16 %v1168
        %v1265 = vunpack.c.l.b16 %v1169
        %v1266 = vunpack.c.l.b16 %v1170
        %v1267 = vunpack.c.l.b16 %v1171
        %v1268 = vunpack.c.l.b16 %v1172
        %v1269 = vunpack.c.l.b16 %v1173
        %v1270 = vunpack.c.l.b16 %v1174
        %v1271 = vunpack.c.l.b16 %v1175
        %v1272 = vunpack.c.l.b16 %v1176
        %v1273 = vunpack.c.l.b16 %v1177
        %v1274 = vunpack.c.l.b16 %v1178
        %v1275 = vunpack.c.l.b16 %v1179
        %v1276 = vunpack.c.l.b16 %v1180
        %v1277 = vunpack.c.l.b16 %v1181
        %v1278 = vunpack.c.l.b16 %v1182
        %v1279 = vunpack.c.l.b16 %v1183
        %v1280 = vunpack.c.l.b16 %v1184
        %v1281 = vunpack.c.l.b16 %v1185
        %v1282 = vunpack.c.l.b16 %v1186
        %v1283 = vunpack.c.l.b16 %v1187
        %v1284 = vunpack.c.l.b16 %v1188
        %v1285 = vunpack.c.l.b16 %v1189
        %v1286 = vunpack.c.l.b16 %v1190
        %v1287 = vpack.c.b16 %v1240, %v1239
        %v1288 = vpack.c.b16 %v1242, %v1241
        %v1289 = vpack.c.b16 %v1244, %v1243
        %v1290 = vpack.c.b16 %v1246, %v1245
        %v1291 = vpack.c.b16 %v1248, %v1247
        %v1292 = vpack.c.b16 %v1250, %v1249
        %v1293 = vpack.c.b16 %v1252, %v1251
        %v1294 = vpack.c.b16 %v1254, %v1253
        %v1295 = vpack.c.b16 %v1256, %v1255
        %v1296 = vpack.c.b16 %v1258, %v1257
        %v1297 = vpack.c.b16 %v1260, %v1259
        %v1298 = vpack.c.b16 %v1262, %v1261
        %v1299 = vpack.c.b16 %v1264, %v1263
        %v1300 = vpack.c.b16 %v1266, %v1265
        %v1301 = vpack.c.b16 %v1268, %v1267
        %v1302 = vpack.c.b16 %v1270, %v1269
        %v1303 = vpack.c.b16 %v1272, %v1271
        %v1304 = vpack.c.b16 %v1274, %v1273
        %v1305 = vpack.c.b16 %v1276, %v1275
        %v1306 = vpack.c.b16 %v1278, %v1277
        %v1307 = vpack.c.b16 %v1280, %v1279
        %v1308 = vpack.c.b16 %v1282, %v1281
        %v1309 = vpack.c.b16 %v1284, %v1283
        %v1310 = vpack.c.b16 %v1286, %v1285
        %1335 = vmatprep.subr.bf16.mxu0 0
        %1336 = vmatpush1.bf16.msra.mxu0 %v1287
        %1337 = vmatprep.subr.bf16.mxu0 0
        %1338 = vmatpush1.bf16.msra.mxu0 %v1288
        %1339 = vmatprep.subr.bf16.mxu0 0
        %1340 = vmatpush1.bf16.msra.mxu0 %v1289
        %1341 = vmatprep.subr.bf16.mxu0 0
        %1342 = vmatpush1.bf16.msra.mxu0 %v1290
        %1343 = vmatprep.subr.bf16.mxu0 0
        %1344 = vmatpush1.bf16.msra.mxu0 %v1291
        %1345 = vmatprep.subr.bf16.mxu0 0
        %1346 = vmatpush1.bf16.msra.mxu0 %v1292
        %1347 = vmatprep.subr.bf16.mxu0 0
        %1348 = vmatpush1.bf16.msra.mxu0 %v1293
        %1349 = vmatprep.subr.bf16.mxu0 0
        %1350 = vmatpush1.bf16.msra.mxu0 %v1294
        %1351 = vmatprep.subr.bf16.mxu0 0
        %1352 = vmatpush1.bf16.msra.mxu0 %v1295
        %1353 = vmatprep.subr.bf16.mxu0 0
        %1354 = vmatpush1.bf16.msra.mxu0 %v1296
        %1355 = vmatprep.subr.bf16.mxu0 0
        %1356 = vmatpush1.bf16.msra.mxu0 %v1297
        %1357 = vmatprep.subr.bf16.mxu0 0
        %1358 = vmatpush1.bf16.msra.mxu0 %v1298
        %1359 = vmatprep.subr.bf16.mxu0 0
        %1360 = vmatpush1.bf16.msra.mxu0 %v1299
        %1361 = vmatprep.subr.bf16.mxu0 0
        %1362 = vmatpush1.bf16.msra.mxu0 %v1300
        %1363 = vmatprep.subr.bf16.mxu0 0
        %1364 = vmatpush1.bf16.msra.mxu0 %v1301
        %1365 = vmatprep.subr.bf16.mxu0 0
        %1366 = vmatpush1.bf16.msra.mxu0 %v1302
        %1367 = vmatprep.mubr.bf16.mxu0 %v1095
        %1368 = vmatmul.mubr.bf16.gmra.mrb[0].mxu0 %v1063
        %v1369 = vpop.f32.mrb[0].mxu0
        %v1370 = vadd.f32 0.0, %v1369
        %v1371 = vpop.f32.mrb[0].mxu0
        %v1372 = vpop.f32.mrb[0].mxu0
        %v1373 = vadd.f32 0.0, %v1372
        %v1374 = vpop.f32.mrb[0].mxu0
        %1375 = vmatprep.mubr.bf16.mxu0 %v1096
        %1376 = vmatmul.mubr.bf16.gmra.mrb[0].mxu0 %v1064
        %v1377 = vpop.f32.mrb[0].mxu0
        %v1378 = vadd.f32 0.0, %v1377
        %v1379 = vpop.f32.mrb[0].mxu0
        %v1380 = vpop.f32.mrb[0].mxu0
        %v1381 = vadd.f32 0.0, %v1380
        %v1382 = vpop.f32.mrb[0].mxu0
        %1383 = vmatprep.mubr.bf16.mxu0 %v1097
        %1384 = vmatmul.mubr.bf16.gmra.mrb[0].mxu0 %v1065
        %v1385 = vpop.f32.mrb[0].mxu0
        %v1386 = vadd.f32 0.0, %v1385
        %v1387 = vpop.f32.mrb[0].mxu0
        %v1388 = vpop.f32.mrb[0].mxu0
        %v1389 = vadd.f32 0.0, %v1388
        %v1390 = vpop.f32.mrb[0].mxu0
        %1391 = vmatprep.mubr.bf16.mxu0 %v1098
        %1392 = vmatmul.mubr.bf16.gmra.mrb[0].mxu0 %v1066
        %v1393 = vpop.f32.mrb[0].mxu0
        %v1394 = vadd.f32 0.0, %v1393
        %v1395 = vpop.f32.mrb[0].mxu0
        %v1396 = vpop.f32.mrb[0].mxu0
        %v1397 = vadd.f32 0.0, %v1396
        %v1398 = vpop.f32.mrb[0].mxu0
        %1399 = vmatprep.mubr.bf16.mxu0 %v1099
        %1400 = vmatmul.mubr.bf16.gmra.mrb[0].mxu0 %v1067
        %v1401 = vpop.f32.mrb[0].mxu0
        %v1402 = vadd.f32 0.0, %v1401
        %v1403 = vpop.f32.mrb[0].mxu0
        %v1404 = vpop.f32.mrb[0].mxu0
        %v1405 = vadd.f32 0.0, %v1404
        %v1406 = vpop.f32.mrb[0].mxu0
        %1407 = vmatprep.mubr.bf16.mxu0 %v1100
        %1408 = vmatmul.mubr.bf16.gmra.mrb[0].mxu0 %v1068
        %v1409 = vpop.f32.mrb[0].mxu0
        %v1410 = vadd.f32 0.0, %v1409
        %v1411 = vpop.f32.mrb[0].mxu0
        %v1412 = vpop.f32.mrb[0].mxu0
        %v1413 = vadd.f32 0.0, %v1412
        %v1414 = vpop.f32.mrb[0].mxu0
        %1415 = vmatprep.mubr.bf16.mxu0 %v1101
        %1416 = vmatmul.mubr.bf16.gmra.mrb[0].mxu0 %v1069
        %v1417 = vpop.f32.mrb[0].mxu0
        %v1418 = vadd.f32 0.0, %v1417
        %v1419 = vpop.f32.mrb[0].mxu0
        %v1420 = vpop.f32.mrb[0].mxu0
        %v1421 = vadd.f32 0.0, %v1420
        %v1422 = vpop.f32.mrb[0].mxu0
        %1423 = vmatprep.mubr.bf16.mxu0 %v1102
        %1424 = vmatmul.mubr.bf16.gmra.mrb[0].mxu0 %v1070
        %v1425 = vpop.f32.mrb[0].mxu0
        %v1426 = vadd.f32 0.0, %v1425
        %v1427 = vpop.f32.mrb[0].mxu0
        %v1428 = vpop.f32.mrb[0].mxu0
        %v1429 = vadd.f32 0.0, %v1428
        %v1430 = vpop.f32.mrb[0].mxu0
        %1431 = vdwg.mxu0
        %1432 = vmatprep.subr.bf16.mxu0 0
        %1433 = vmatpush1.bf16.msra.mxu0 %v1303
        %1434 = vmatprep.subr.bf16.mxu0 0
        %1435 = vmatpush1.bf16.msra.mxu0 %v1304
        %1436 = vmatprep.subr.bf16.mxu0 0
        %1437 = vmatpush1.bf16.msra.mxu0 %v1305
        %1438 = vmatprep.subr.bf16.mxu0 0
        %1439 = vmatpush1.bf16.msra.mxu0 %v1306
        %1440 = vmatprep.subr.bf16.mxu0 0
        %1441 = vmatpush1.bf16.msra.mxu0 %v1307
        %1442 = vmatprep.subr.bf16.mxu0 0
        %1443 = vmatpush1.bf16.msra.mxu0 %v1308
        %1444 = vmatprep.subr.bf16.mxu0 0
        %1445 = vmatpush1.bf16.msra.mxu0 %v1309
        %1446 = vmatprep.subr.bf16.mxu0 0
        %1447 = vmatpush1.bf16.msra.mxu0 %v1310
        %1448 = vmatprep.subr.bf16.mxu0 0
        %1449 = vmatpush1.bf16.msra.mxu0 0
        %1450 = vmatprep.subr.bf16.mxu0 0
        %1451 = vmatpush1.bf16.msra.mxu0 0
        %1452 = vmatprep.subr.bf16.mxu0 0
        %1453 = vmatpush1.bf16.msra.mxu0 0
        %1454 = vmatprep.subr.bf16.mxu0 0
        %1455 = vmatpush1.bf16.msra.mxu0 0
        %1456 = vmatprep.subr.bf16.mxu0 0
        %1457 = vmatpush1.bf16.msra.mxu0 0
        %1458 = vmatprep.subr.bf16.mxu0 0
        %1459 = vmatpush1.bf16.msra.mxu0 0
        %1460 = vmatprep.subr.bf16.mxu0 0
        %1461 = vmatpush1.bf16.msra.mxu0 0
        %1462 = vmatprep.subr.bf16.mxu0 0
        %1463 = vmatpush1.bf16.msra.mxu0 0
        %1464 = vmatprep.mubr.bf16.mxu0 0
        %1465 = vmatmul.mubr.bf16.gmra.mrb[0].mxu0 %v1127
        %v1466 = vpop.f32.mrb[0].mxu0
        %v1467 = vadd.f32 %v1370, %v1466
        %v1468 = vpop.f32.mrb[0].mxu0
        %v1469 = vpop.f32.mrb[0].mxu0
        %v1470 = vadd.f32 %v1373, %v1469
        %v1471 = vpop.f32.mrb[0].mxu0
        %1472 = vmatprep.mubr.bf16.mxu0 0
        %1473 = vmatmul.mubr.bf16.gmra.mrb[0].mxu0 %v1128
        %v1474 = vpop.f32.mrb[0].mxu0
        %v1475 = vadd.f32 %v1378, %v1474
        %v1476 = vpop.f32.mrb[0].mxu0
        %v1477 = vpop.f32.mrb[0].mxu0
        %v1478 = vadd.f32 %v1381, %v1477
        %v1479 = vpop.f32.mrb[0].mxu0
        %1480 = vmatprep.mubr.bf16.mxu0 0
        %1481 = vmatmul.mubr.bf16.gmra.mrb[0].mxu0 %v1129
        %v1482 = vpop.f32.mrb[0].mxu0
        %v1483 = vadd.f32 %v1386, %v1482
        %v1484 = vpop.f32.mrb[0].mxu0
        %v1485 = vpop.f32.mrb[0].mxu0
        %v1486 = vadd.f32 %v1389, %v1485
        %v1487 = vpop.f32.mrb[0].mxu0
        %1488 = vmatprep.mubr.bf16.mxu0 0
        %1489 = vmatmul.mubr.bf16.gmra.mrb[0].mxu0 %v1130
        %v1490 = vpop.f32.mrb[0].mxu0
        %v1491 = vadd.f32 %v1394, %v1490
        %v1492 = vpop.f32.mrb[0].mxu0
        %v1493 = vpop.f32.mrb[0].mxu0
        %v1494 = vadd.f32 %v1397, %v1493
        %v1495 = vpop.f32.mrb[0].mxu0
        %1496 = vmatprep.mubr.bf16.mxu0 0
        %1497 = vmatmul.mubr.bf16.gmra.mrb[0].mxu0 %v1131
        %v1498 = vpop.f32.mrb[0].mxu0
        %v1499 = vadd.f32 %v1402, %v1498
        %v1500 = vpop.f32.mrb[0].mxu0
        %v1501 = vpop.f32.mrb[0].mxu0
        %v1502 = vadd.f32 %v1405, %v1501
        %v1503 = vpop.f32.mrb[0].mxu0
        %1504 = vmatprep.mubr.bf16.mxu0 0
        %1505 = vmatmul.mubr.bf16.gmra.mrb[0].mxu0 %v1132
        %v1506 = vpop.f32.mrb[0].mxu0
        %v1507 = vadd.f32 %v1410, %v1506
        %v1508 = vpop.f32.mrb[0].mxu0
        %v1509 = vpop.f32.mrb[0].mxu0
        %v1510 = vadd.f32 %v1413, %v1509
        %v1511 = vpop.f32.mrb[0].mxu0
        %1512 = vmatprep.mubr.bf16.mxu0 0
        %1513 = vmatmul.mubr.bf16.gmra.mrb[0].mxu0 %v1133
        %v1514 = vpop.f32.mrb[0].mxu0
        %v1515 = vadd.f32 %v1418, %v1514
        %v1516 = vpop.f32.mrb[0].mxu0
        %v1517 = vpop.f32.mrb[0].mxu0
        %v1518 = vadd.f32 %v1421, %v1517
        %v1519 = vpop.f32.mrb[0].mxu0
        %1520 = vmatprep.mubr.bf16.mxu0 0
        %1521 = vmatmul.mubr.bf16.gmra.mrb[0].mxu0 %v1134
        %v1522 = vpop.f32.mrb[0].mxu0
        %v1523 = vadd.f32 %v1426, %v1522
        %v1524 = vpop.f32.mrb[0].mxu0
        %v1525 = vpop.f32.mrb[0].mxu0
        %v1526 = vadd.f32 %v1429, %v1525
        %v1527 = vpop.f32.mrb[0].mxu0
        %1528 = vdwg.mxu0
        %v1577 = vunpack.c.l.b16 %v683
        %v1578 = vunpack.c.l.b16 %v684
        %v1579 = vunpack.c.l.b16 %v685
        %v1580 = vunpack.c.l.b16 %v686
        %v1581 = vunpack.c.l.b16 %v687
        %v1582 = vunpack.c.l.b16 %v688
        %v1583 = vunpack.c.l.b16 %v689
        %v1584 = vunpack.c.l.b16 %v690
        %v1585 = vunpack.c.l.b16 %v691
        %v1586 = vunpack.c.l.b16 %v692
        %v1587 = vunpack.c.l.b16 %v693
        %v1588 = vunpack.c.l.b16 %v694
        %v1589 = vunpack.c.l.b16 %v695
        %v1590 = vunpack.c.l.b16 %v696
        %v1591 = vunpack.c.l.b16 %v697
        %v1592 = vunpack.c.l.b16 %v698
        %v1593 = vunpack.c.l.b16 %v699
        %v1594 = vunpack.c.l.b16 %v700
        %v1595 = vunpack.c.l.b16 %v701
        %v1596 = vunpack.c.l.b16 %v702
        %v1597 = vunpack.c.l.b16 %v703
        %v1598 = vunpack.c.l.b16 %v704
        %v1599 = vunpack.c.l.b16 %v705
        %v1600 = vunpack.c.l.b16 %v706
        %v1601 = vunpack.c.l.b16 %v707
        %v1602 = vunpack.c.l.b16 %v708
        %v1603 = vunpack.c.l.b16 %v709
        %v1604 = vunpack.c.l.b16 %v710
        %v1605 = vunpack.c.l.b16 %v711
        %v1606 = vunpack.c.l.b16 %v712
        %v1607 = vunpack.c.l.b16 %v713
        %v1608 = vunpack.c.l.b16 %v714
        %v1609 = vunpack.c.l.b16 %v715
        %v1610 = vunpack.c.l.b16 %v716
        %v1611 = vunpack.c.l.b16 %v717
        %v1612 = vunpack.c.l.b16 %v718
        %v1613 = vunpack.c.l.b16 %v719
        %v1614 = vunpack.c.l.b16 %v720
        %v1615 = vunpack.c.l.b16 %v721
        %v1616 = vunpack.c.l.b16 %v722
        %v1617 = vunpack.c.l.b16 %v723
        %v1618 = vunpack.c.l.b16 %v724
        %v1619 = vunpack.c.l.b16 %v725
        %v1620 = vunpack.c.l.b16 %v726
        %v1621 = vunpack.c.l.b16 %v727
        %v1622 = vunpack.c.l.b16 %v728
        %v1623 = vunpack.c.l.b16 %v729
        %v1624 = vunpack.c.l.b16 %v730
        %v1625 = vpack.c.b16 %v1578, %v1577
        %v1626 = vpack.c.b16 %v1580, %v1579
        %v1627 = vpack.c.b16 %v1582, %v1581
        %v1628 = vpack.c.b16 %v1584, %v1583
        %v1629 = vpack.c.b16 %v1586, %v1585
        %v1630 = vpack.c.b16 %v1588, %v1587
        %v1631 = vpack.c.b16 %v1590, %v1589
        %v1632 = vpack.c.b16 %v1592, %v1591
        %v1633 = vpack.c.b16 %v1594, %v1593
        %v1634 = vpack.c.b16 %v1596, %v1595
        %v1635 = vpack.c.b16 %v1598, %v1597
        %v1636 = vpack.c.b16 %v1600, %v1599
        %v1637 = vpack.c.b16 %v1602, %v1601
        %v1638 = vpack.c.b16 %v1604, %v1603
        %v1639 = vpack.c.b16 %v1606, %v1605
        %v1640 = vpack.c.b16 %v1608, %v1607
        %v1641 = vpack.c.b16 %v1610, %v1609
        %v1642 = vpack.c.b16 %v1612, %v1611
        %v1643 = vpack.c.b16 %v1614, %v1613
        %v1644 = vpack.c.b16 %v1616, %v1615
        %v1645 = vpack.c.b16 %v1618, %v1617
        %v1646 = vpack.c.b16 %v1620, %v1619
        %v1647 = vpack.c.b16 %v1622, %v1621
        %v1648 = vpack.c.b16 %v1624, %v1623
        %1673 = vmatprep.subr.bf16.mxu0 0
        %1674 = vmatpush1.bf16.msra.mxu0 %v1625
        %1675 = vmatprep.subr.bf16.mxu0 0
        %1676 = vmatpush1.bf16.msra.mxu0 %v1626
        %1677 = vmatprep.subr.bf16.mxu0 0
        %1678 = vmatpush1.bf16.msra.mxu0 %v1627
        %1679 = vmatprep.subr.bf16.mxu0 0
        %1680 = vmatpush1.bf16.msra.mxu0 %v1628
        %1681 = vmatprep.subr.bf16.mxu0 0
        %1682 = vmatpush1.bf16.msra.mxu0 %v1629
        %1683 = vmatprep.subr.bf16.mxu0 0
        %1684 = vmatpush1.bf16.msra.mxu0 %v1630
        %1685 = vmatprep.subr.bf16.mxu0 0
        %1686 = vmatpush1.bf16.msra.mxu0 %v1631
        %1687 = vmatprep.subr.bf16.mxu0 0
        %1688 = vmatpush1.bf16.msra.mxu0 %v1632
        %1689 = vmatprep.subr.bf16.mxu0 0
        %1690 = vmatpush1.bf16.msra.mxu0 %v1633
        %1691 = vmatprep.subr.bf16.mxu0 0
        %1692 = vmatpush1.bf16.msra.mxu0 %v1634
        %1693 = vmatprep.subr.bf16.mxu0 0
        %1694 = vmatpush1.bf16.msra.mxu0 %v1635
        %1695 = vmatprep.subr.bf16.mxu0 0
        %1696 = vmatpush1.bf16.msra.mxu0 %v1636
        %1697 = vmatprep.subr.bf16.mxu0 0
        %1698 = vmatpush1.bf16.msra.mxu0 %v1637
        %1699 = vmatprep.subr.bf16.mxu0 0
        %1700 = vmatpush1.bf16.msra.mxu0 %v1638
        %1701 = vmatprep.subr.bf16.mxu0 0
        %1702 = vmatpush1.bf16.msra.mxu0 %v1639
        %1703 = vmatprep.subr.bf16.mxu0 0
        %1704 = vmatpush1.bf16.msra.mxu0 %v1640
        %1705 = vmatprep.mubr.bf16.mxu0 %v635
        %1706 = vmatmul.mubr.bf16.gmra.mrb[0].mxu0 %v603
        %v1707 = vpop.f32.mrb[0].mxu0
        %v1708 = vadd.f32 %v1467, %v1707
        %v1709 = vpop.f32.mrb[0].mxu0
        %v1710 = vpop.f32.mrb[0].mxu0
        %v1711 = vadd.f32 %v1470, %v1710
        %v1712 = vpop.f32.mrb[0].mxu0
        %1713 = vmatprep.mubr.bf16.mxu0 %v636
        %1714 = vmatmul.mubr.bf16.gmra.mrb[0].mxu0 %v604
        %v1715 = vpop.f32.mrb[0].mxu0
        %v1716 = vadd.f32 %v1475, %v1715
        %v1717 = vpop.f32.mrb[0].mxu0
        %v1718 = vpop.f32.mrb[0].mxu0
        %v1719 = vadd.f32 %v1478, %v1718
        %v1720 = vpop.f32.mrb[0].mxu0
        %1721 = vmatprep.mubr.bf16.mxu0 %v637
        %1722 = vmatmul.mubr.bf16.gmra.mrb[0].mxu0 %v605
        %v1723 = vpop.f32.mrb[0].mxu0
        %v1724 = vadd.f32 %v1483, %v1723
        %v1725 = vpop.f32.mrb[0].mxu0
        %v1726 = vpop.f32.mrb[0].mxu0
        %v1727 = vadd.f32 %v1486, %v1726
        %v1728 = vpop.f32.mrb[0].mxu0
        %1729 = vmatprep.mubr.bf16.mxu0 %v638
        %1730 = vmatmul.mubr.bf16.gmra.mrb[0].mxu0 %v606
        %v1731 = vpop.f32.mrb[0].mxu0
        %v1732 = vadd.f32 %v1491, %v1731
        %v1733 = vpop.f32.mrb[0].mxu0
        %v1734 = vpop.f32.mrb[0].mxu0
        %v1735 = vadd.f32 %v1494, %v1734
        %v1736 = vpop.f32.mrb[0].mxu0
        %1737 = vmatprep.mubr.bf16.mxu0 %v639
        %1738 = vmatmul.mubr.bf16.gmra.mrb[0].mxu0 %v607
        %v1739 = vpop.f32.mrb[0].mxu0
        %v1740 = vadd.f32 %v1499, %v1739
        %v1741 = vpop.f32.mrb[0].mxu0
        %v1742 = vpop.f32.mrb[0].mxu0
        %v1743 = vadd.f32 %v1502, %v1742
        %v1744 = vpop.f32.mrb[0].mxu0
        %1745 = vmatprep.mubr.bf16.mxu0 %v640
        %1746 = vmatmul.mubr.bf16.gmra.mrb[0].mxu0 %v608
        %v1747 = vpop.f32.mrb[0].mxu0
        %v1748 = vadd.f32 %v1507, %v1747
        %v1749 = vpop.f32.mrb[0].mxu0
        %v1750 = vpop.f32.mrb[0].mxu0
        %v1751 = vadd.f32 %v1510, %v1750
        %v1752 = vpop.f32.mrb[0].mxu0
        %1753 = vmatprep.mubr.bf16.mxu0 %v641
        %1754 = vmatmul.mubr.bf16.gmra.mrb[0].mxu0 %v609
        %v1755 = vpop.f32.mrb[0].mxu0
        %v1756 = vadd.f32 %v1515, %v1755
        %v1757 = vpop.f32.mrb[0].mxu0
        %v1758 = vpop.f32.mrb[0].mxu0
        %v1759 = vadd.f32 %v1518, %v1758
        %v1760 = vpop.f32.mrb[0].mxu0
        %1761 = vmatprep.mubr.bf16.mxu0 %v642
        %1762 = vmatmul.mubr.bf16.gmra.mrb[0].mxu0 %v610
        %v1763 = vpop.f32.mrb[0].mxu0
        %v1764 = vadd.f32 %v1523, %v1763
        %v1765 = vpop.f32.mrb[0].mxu0
        %v1766 = vpop.f32.mrb[0].mxu0
        %v1767 = vadd.f32 %v1526, %v1766
        %v1768 = vpop.f32.mrb[0].mxu0
        %1769 = vdwg.mxu0
        %1770 = vmatprep.subr.bf16.mxu0 0
        %1771 = vmatpush1.bf16.msra.mxu0 %v1641
        %1772 = vmatprep.subr.bf16.mxu0 0
        %1773 = vmatpush1.bf16.msra.mxu0 %v1642
        %1774 = vmatprep.subr.bf16.mxu0 0
        %1775 = vmatpush1.bf16.msra.mxu0 %v1643
        %1776 = vmatprep.subr.bf16.mxu0 0
        %1777 = vmatpush1.bf16.msra.mxu0 %v1644
        %1778 = vmatprep.subr.bf16.mxu0 0
        %1779 = vmatpush1.bf16.msra.mxu0 %v1645
        %1780 = vmatprep.subr.bf16.mxu0 0
        %1781 = vmatpush1.bf16.msra.mxu0 %v1646
        %1782 = vmatprep.subr.bf16.mxu0 0
        %1783 = vmatpush1.bf16.msra.mxu0 %v1647
        %1784 = vmatprep.subr.bf16.mxu0 0
        %1785 = vmatpush1.bf16.msra.mxu0 %v1648
        %1786 = vmatprep.subr.bf16.mxu0 0
        %1787 = vmatpush1.bf16.msra.mxu0 0
        %1788 = vmatprep.subr.bf16.mxu0 0
        %1789 = vmatpush1.bf16.msra.mxu0 0
        %1790 = vmatprep.subr.bf16.mxu0 0
        %1791 = vmatpush1.bf16.msra.mxu0 0
        %1792 = vmatprep.subr.bf16.mxu0 0
        %1793 = vmatpush1.bf16.msra.mxu0 0
        %1794 = vmatprep.subr.bf16.mxu0 0
        %1795 = vmatpush1.bf16.msra.mxu0 0
        %1796 = vmatprep.subr.bf16.mxu0 0
        %1797 = vmatpush1.bf16.msra.mxu0 0
        %1798 = vmatprep.subr.bf16.mxu0 0
        %1799 = vmatpush1.bf16.msra.mxu0 0
        %1800 = vmatprep.subr.bf16.mxu0 0
        %1801 = vmatpush1.bf16.msra.mxu0 0
        %1802 = vmatprep.mubr.bf16.mxu0 0
        %1803 = vmatmul.mubr.bf16.gmra.mrb[0].mxu0 %v667
        %v1804 = vpop.f32.mrb[0].mxu0
        %v1805 = vadd.f32 %v1708, %v1804
        %v1806 = vpop.f32.mrb[0].mxu0
        %v1807 = vpop.f32.mrb[0].mxu0
        %v1808 = vadd.f32 %v1711, %v1807
        %v1809 = vpop.f32.mrb[0].mxu0
        %1810 = vmatprep.mubr.bf16.mxu0 0
        %1811 = vmatmul.mubr.bf16.gmra.mrb[0].mxu0 %v668
        %v1812 = vpop.f32.mrb[0].mxu0
        %v1813 = vadd.f32 %v1716, %v1812
        %v1814 = vpop.f32.mrb[0].mxu0
        %v1815 = vpop.f32.mrb[0].mxu0
        %v1816 = vadd.f32 %v1719, %v1815
        %v1817 = vpop.f32.mrb[0].mxu0
        %1818 = vmatprep.mubr.bf16.mxu0 0
        %1819 = vmatmul.mubr.bf16.gmra.mrb[0].mxu0 %v669
        %v1820 = vpop.f32.mrb[0].mxu0
        %v1821 = vadd.f32 %v1724, %v1820
        %v1822 = vpop.f32.mrb[0].mxu0
        %v1823 = vpop.f32.mrb[0].mxu0
        %v1824 = vadd.f32 %v1727, %v1823
        %v1825 = vpop.f32.mrb[0].mxu0
        %1826 = vmatprep.mubr.bf16.mxu0 0
        %1827 = vmatmul.mubr.bf16.gmra.mrb[0].mxu0 %v670
        %v1828 = vpop.f32.mrb[0].mxu0
        %v1829 = vadd.f32 %v1732, %v1828
        %v1830 = vpop.f32.mrb[0].mxu0
        %v1831 = vpop.f32.mrb[0].mxu0
        %v1832 = vadd.f32 %v1735, %v1831
        %v1833 = vpop.f32.mrb[0].mxu0
        %1834 = vmatprep.mubr.bf16.mxu0 0
        %1835 = vmatmul.mubr.bf16.gmra.mrb[0].mxu0 %v671
        %v1836 = vpop.f32.mrb[0].mxu0
        %v1837 = vadd.f32 %v1740, %v1836
        %v1838 = vpop.f32.mrb[0].mxu0
        %v1839 = vpop.f32.mrb[0].mxu0
        %v1840 = vadd.f32 %v1743, %v1839
        %v1841 = vpop.f32.mrb[0].mxu0
        %1842 = vmatprep.mubr.bf16.mxu0 0
        %1843 = vmatmul.mubr.bf16.gmra.mrb[0].mxu0 %v672
        %v1844 = vpop.f32.mrb[0].mxu0
        %v1845 = vadd.f32 %v1748, %v1844
        %v1846 = vpop.f32.mrb[0].mxu0
        %v1847 = vpop.f32.mrb[0].mxu0
        %v1848 = vadd.f32 %v1751, %v1847
        %v1849 = vpop.f32.mrb[0].mxu0
        %1850 = vmatprep.mubr.bf16.mxu0 0
        %1851 = vmatmul.mubr.bf16.gmra.mrb[0].mxu0 %v673
        %v1852 = vpop.f32.mrb[0].mxu0
        %v1853 = vadd.f32 %v1756, %v1852
        %v1854 = vpop.f32.mrb[0].mxu0
        %v1855 = vpop.f32.mrb[0].mxu0
        %v1856 = vadd.f32 %v1759, %v1855
        %v1857 = vpop.f32.mrb[0].mxu0
        %1858 = vmatprep.mubr.bf16.mxu0 0
        %1859 = vmatmul.mubr.bf16.gmra.mrb[0].mxu0 %v674
        %v1860 = vpop.f32.mrb[0].mxu0
        %v1861 = vadd.f32 %v1764, %v1860
        %v1862 = vpop.f32.mrb[0].mxu0
        %v1863 = vpop.f32.mrb[0].mxu0
        %v1864 = vadd.f32 %v1767, %v1863
        %v1865 = vpop.f32.mrb[0].mxu0
        %1866 = vdwg.mxu0
        %s1867 = sadd.s32 %s265, 2
        %s1868 = smul.u32 %s1867, 3
        %s1869 = smul.addr %s1868, 4
        %s1870 = scalar_lea.vmem %s224, %s1869 [#allocation2]
        %v1871 = vld [vmem:[%s1870] sm:$0xf]
        %v1872 = vld [vmem:[%s1870 + $0x4] sm:$0xf]
        %v1873 = vld [vmem:[%s1870 + $0xc] sm:$0xf]
        %v1874 = vld [vmem:[%s1870 + $0x10] sm:$0xf]
        %v1875 = vld [vmem:[%s1870 + $0x18] sm:$0xf]
        %v1876 = vld [vmem:[%s1870 + $0x1c] sm:$0xf]
        %v1877 = vld [vmem:[%s1870 + $0x24] sm:$0xf]
        %v1878 = vld [vmem:[%s1870 + $0x28] sm:$0xf]
        %v1879 = vld [vmem:[%s1870 + $0x30] sm:$0xf]
        %v1880 = vld [vmem:[%s1870 + $0x34] sm:$0xf]
        %v1881 = vld [vmem:[%s1870 + $0x3c] sm:$0xf]
        %v1882 = vld [vmem:[%s1870 + $0x40] sm:$0xf]
        %v1883 = vld [vmem:[%s1870 + $0x48] sm:$0xf]
        %v1884 = vld [vmem:[%s1870 + $0x4c] sm:$0xf]
        %v1885 = vld [vmem:[%s1870 + $0x54] sm:$0xf]
        %v1886 = vld [vmem:[%s1870 + $0x58] sm:$0xf]
        %v1887 = vld [vmem:[%s1870 + $0x8] sm:$0x1]
        %v1888 = vld [vmem:[%s1870 + $0x14] sm:$0x1]
        %v1889 = vld [vmem:[%s1870 + $0x20] sm:$0x1]
        %v1890 = vld [vmem:[%s1870 + $0x2c] sm:$0x1]
        %v1891 = vld [vmem:[%s1870 + $0x38] sm:$0x1]
        %v1892 = vld [vmem:[%s1870 + $0x44] sm:$0x1]
        %v1893 = vld [vmem:[%s1870 + $0x50] sm:$0x1]
        %v1894 = vld [vmem:[%s1870 + $0x5c] sm:$0x1]
        %v1896 = vshrl.u32 %v1871, 16
        %v1898 = vrot.slane %v1896, 4
        %v1899 = vshll.u32 %v1871, 16
        %v1901 = vrot.slane %v1899, 5
        %v1902 = vor.u32 %v1898, %v1901
        %v1903 = vrot.slane %v1902, 4
        %v1905 = vshll.u32 %v1872, 16
        %v1907 = vrot.slane %v1905, 5
        %v1908 = vsel %vm295, %v1903, %v1907
        %v1909 = vshrl.u32 %v1872, 16
        %v1911 = vrot.slane %v1909, 4
        %v1912 = vor.u32 %v1911, %v1907
        %v1913 = vrot.slane %v1912, 4
        %v1915 = vshll.u32 %v1887, 16
        %v1917 = vrot.slane %v1915, 5
        %v1918 = vsel %vm295, %v1913, %v1917
        %v1920 = vshrl.u32 %v1873, 16
        %v1922 = vrot.slane %v1920, 4
        %v1923 = vshll.u32 %v1873, 16
        %v1925 = vrot.slane %v1923, 5
        %v1926 = vor.u32 %v1922, %v1925
        %v1927 = vrot.slane %v1926, 4
        %v1929 = vshll.u32 %v1874, 16
        %v1931 = vrot.slane %v1929, 5
        %v1932 = vsel %vm295, %v1927, %v1931
        %v1933 = vshrl.u32 %v1874, 16
        %v1935 = vrot.slane %v1933, 4
        %v1936 = vor.u32 %v1935, %v1931
        %v1937 = vrot.slane %v1936, 4
        %v1939 = vshll.u32 %v1888, 16
        %v1941 = vrot.slane %v1939, 5
        %v1942 = vsel %vm295, %v1937, %v1941
        %v1944 = vshrl.u32 %v1875, 16
        %v1946 = vrot.slane %v1944, 4
        %v1947 = vshll.u32 %v1875, 16
        %v1949 = vrot.slane %v1947, 5
        %v1950 = vor.u32 %v1946, %v1949
        %v1951 = vrot.slane %v1950, 4
        %v1953 = vshll.u32 %v1876, 16
        %v1955 = vrot.slane %v1953, 5
        %v1956 = vsel %vm295, %v1951, %v1955
        %v1957 = vshrl.u32 %v1876, 16
        %v1959 = vrot.slane %v1957, 4
        %v1960 = vor.u32 %v1959, %v1955
        %v1961 = vrot.slane %v1960, 4
        %v1963 = vshll.u32 %v1889, 16
        %v1965 = vrot.slane %v1963, 5
        %v1966 = vsel %vm295, %v1961, %v1965
        %v1968 = vshrl.u32 %v1877, 16
        %v1970 = vrot.slane %v1968, 4
        %v1971 = vshll.u32 %v1877, 16
        %v1973 = vrot.slane %v1971, 5
        %v1974 = vor.u32 %v1970, %v1973
        %v1975 = vrot.slane %v1974, 4
        %v1977 = vshll.u32 %v1878, 16
        %v1979 = vrot.slane %v1977, 5
        %v1980 = vsel %vm295, %v1975, %v1979
        %v1981 = vshrl.u32 %v1878, 16
        %v1983 = vrot.slane %v1981, 4
        %v1984 = vor.u32 %v1983, %v1979
        %v1985 = vrot.slane %v1984, 4
        %v1987 = vshll.u32 %v1890, 16
        %v1989 = vrot.slane %v1987, 5
        %v1990 = vsel %vm295, %v1985, %v1989
        %v1992 = vshrl.u32 %v1879, 16
        %v1994 = vrot.slane %v1992, 4
        %v1995 = vshll.u32 %v1879, 16
        %v1997 = vrot.slane %v1995, 5
        %v1998 = vor.u32 %v1994, %v1997
        %v1999 = vrot.slane %v1998, 4
        %v2001 = vshll.u32 %v1880, 16
        %v2003 = vrot.slane %v2001, 5
        %v2004 = vsel %vm295, %v1999, %v2003
        %v2005 = vshrl.u32 %v1880, 16
        %v2007 = vrot.slane %v2005, 4
        %v2008 = vor.u32 %v2007, %v2003
        %v2009 = vrot.slane %v2008, 4
        %v2011 = vshll.u32 %v1891, 16
        %v2013 = vrot.slane %v2011, 5
        %v2014 = vsel %vm295, %v2009, %v2013
        %v2016 = vshrl.u32 %v1881, 16
        %v2018 = vrot.slane %v2016, 4
        %v2019 = vshll.u32 %v1881, 16
        %v2021 = vrot.slane %v2019, 5
        %v2022 = vor.u32 %v2018, %v2021
        %v2023 = vrot.slane %v2022, 4
        %v2025 = vshll.u32 %v1882, 16
        %v2027 = vrot.slane %v2025, 5
        %v2028 = vsel %vm295, %v2023, %v2027
        %v2029 = vshrl.u32 %v1882, 16
        %v2031 = vrot.slane %v2029, 4
        %v2032 = vor.u32 %v2031, %v2027
        %v2033 = vrot.slane %v2032, 4
        %v2035 = vshll.u32 %v1892, 16
        %v2037 = vrot.slane %v2035, 5
        %v2038 = vsel %vm295, %v2033, %v2037
        %v2040 = vshrl.u32 %v1883, 16
        %v2042 = vrot.slane %v2040, 4
        %v2043 = vshll.u32 %v1883, 16
        %v2045 = vrot.slane %v2043, 5
        %v2046 = vor.u32 %v2042, %v2045
        %v2047 = vrot.slane %v2046, 4
        %v2049 = vshll.u32 %v1884, 16
        %v2051 = vrot.slane %v2049, 5
        %v2052 = vsel %vm295, %v2047, %v2051
        %v2053 = vshrl.u32 %v1884, 16
        %v2055 = vrot.slane %v2053, 4
        %v2056 = vor.u32 %v2055, %v2051
        %v2057 = vrot.slane %v2056, 4
        %v2059 = vshll.u32 %v1893, 16
        %v2061 = vrot.slane %v2059, 5
        %v2062 = vsel %vm295, %v2057, %v2061
        %v2064 = vshrl.u32 %v1885, 16
        %v2066 = vrot.slane %v2064, 4
        %v2067 = vshll.u32 %v1885, 16
        %v2069 = vrot.slane %v2067, 5
        %v2070 = vor.u32 %v2066, %v2069
        %v2071 = vrot.slane %v2070, 4
        %v2073 = vshll.u32 %v1886, 16
        %v2075 = vrot.slane %v2073, 5
        %v2076 = vsel %vm295, %v2071, %v2075
        %v2077 = vshrl.u32 %v1886, 16
        %v2079 = vrot.slane %v2077, 4
        %v2080 = vor.u32 %v2079, %v2075
        %v2081 = vrot.slane %v2080, 4
        %v2083 = vshll.u32 %v1894, 16
        %v2085 = vrot.slane %v2083, 5
        %v2086 = vsel %vm295, %v2081, %v2085
        %v2087 = vld [vmem:[%s1870] sm:$0xe]
        %v2088 = vld [vmem:[%s1870 + $0xc] sm:$0xe]
        %v2089 = vld [vmem:[%s1870 + $0x18] sm:$0xe]
        %v2090 = vld [vmem:[%s1870 + $0x24] sm:$0xe]
        %v2091 = vld [vmem:[%s1870 + $0x30] sm:$0xe]
        %v2092 = vld [vmem:[%s1870 + $0x3c] sm:$0xe]
        %v2093 = vld [vmem:[%s1870 + $0x48] sm:$0xe]
        %v2094 = vld [vmem:[%s1870 + $0x54] sm:$0xe]
        %v2119 = vrot.slane %v2087, 5
        %v2120 = vrot.slane %v2119, 4
        %v2121 = vrot.slane %v1872, 5
        %v2122 = vsel %vm522, %v2120, %v2121
        %v2123 = vrot.slane %v2121, 4
        %v2124 = vrot.slane %v1887, 5
        %v2125 = vsel %vm522, %v2123, %v2124
        %v2126 = vrot.slane %v2088, 5
        %v2127 = vrot.slane %v2126, 4
        %v2128 = vrot.slane %v1874, 5
        %v2129 = vsel %vm522, %v2127, %v2128
        %v2130 = vrot.slane %v2128, 4
        %v2131 = vrot.slane %v1888, 5
        %v2132 = vsel %vm522, %v2130, %v2131
        %v2133 = vrot.slane %v2089, 5
        %v2134 = vrot.slane %v2133, 4
        %v2135 = vrot.slane %v1876, 5
        %v2136 = vsel %vm522, %v2134, %v2135
        %v2137 = vrot.slane %v2135, 4
        %v2138 = vrot.slane %v1889, 5
        %v2139 = vsel %vm522, %v2137, %v2138
        %v2140 = vrot.slane %v2090, 5
        %v2141 = vrot.slane %v2140, 4
        %v2142 = vrot.slane %v1878, 5
        %v2143 = vsel %vm522, %v2141, %v2142
        %v2144 = vrot.slane %v2142, 4
        %v2145 = vrot.slane %v1890, 5
        %v2146 = vsel %vm522, %v2144, %v2145
        %v2147 = vrot.slane %v2091, 5
        %v2148 = vrot.slane %v2147, 4
        %v2149 = vrot.slane %v1880, 5
        %v2150 = vsel %vm522, %v2148, %v2149
        %v2151 = vrot.slane %v2149, 4
        %v2152 = vrot.slane %v1891, 5
        %v2153 = vsel %vm522, %v2151, %v2152
        %v2154 = vrot.slane %v2092, 5
        %v2155 = vrot.slane %v2154, 4
        %v2156 = vrot.slane %v1882, 5
        %v2157 = vsel %vm522, %v2155, %v2156
        %v2158 = vrot.slane %v2156, 4
        %v2159 = vrot.slane %v1892, 5
        %v2160 = vsel %vm522, %v2158, %v2159
        %v2161 = vrot.slane %v2093, 5
        %v2162 = vrot.slane %v2161, 4
        %v2163 = vrot.slane %v1884, 5
        %v2164 = vsel %vm522, %v2162, %v2163
        %v2165 = vrot.slane %v2163, 4
        %v2166 = vrot.slane %v1893, 5
        %v2167 = vsel %vm522, %v2165, %v2166
        %v2168 = vrot.slane %v2094, 5
        %v2169 = vrot.slane %v2168, 4
        %v2170 = vrot.slane %v1886, 5
        %v2171 = vsel %vm522, %v2169, %v2170
        %v2172 = vrot.slane %v2170, 4
        %v2173 = vrot.slane %v1894, 5
        %v2174 = vsel %vm522, %v2172, %v2173
        %v2183 = vunpack.c.l.b16 %v1871
        %v2184 = vunpack.c.l.b16 %v1872
        %v2185 = vunpack.c.l.b16 %v1873
        %v2186 = vunpack.c.l.b16 %v1874
        %v2187 = vunpack.c.l.b16 %v1875
        %v2188 = vunpack.c.l.b16 %v1876
        %v2189 = vunpack.c.l.b16 %v1877
        %v2190 = vunpack.c.l.b16 %v1878
        %v2191 = vunpack.c.l.b16 %v1879
        %v2192 = vunpack.c.l.b16 %v1880
        %v2193 = vunpack.c.l.b16 %v1881
        %v2194 = vunpack.c.l.b16 %v1882
        %v2195 = vunpack.c.l.b16 %v1883
        %v2196 = vunpack.c.l.b16 %v1884
        %v2197 = vunpack.c.l.b16 %v1885
        %v2198 = vunpack.c.l.b16 %v1886
        %v2199 = vpack.c.b16 %v2184, %v2183
        %v2200 = vpack.c.b16 %v2186, %v2185
        %v2201 = vpack.c.b16 %v2188, %v2187
        %v2202 = vpack.c.b16 %v2190, %v2189
        %v2203 = vpack.c.b16 %v2192, %v2191
        %v2204 = vpack.c.b16 %v2194, %v2193
        %v2205 = vpack.c.b16 %v2196, %v2195
        %v2206 = vpack.c.b16 %v2198, %v2197
        %v2215 = vunpack.c.l.b16 %v1908
        %v2216 = vunpack.c.l.b16 %v1918
        %v2217 = vunpack.c.l.b16 %v1932
        %v2218 = vunpack.c.l.b16 %v1942
        %v2219 = vunpack.c.l.b16 %v1956
        %v2220 = vunpack.c.l.b16 %v1966
        %v2221 = vunpack.c.l.b16 %v1980
        %v2222 = vunpack.c.l.b16 %v1990
        %v2223 = vunpack.c.l.b16 %v2004
        %v2224 = vunpack.c.l.b16 %v2014
        %v2225 = vunpack.c.l.b16 %v2028
        %v2226 = vunpack.c.l.b16 %v2038
        %v2227 = vunpack.c.l.b16 %v2052
        %v2228 = vunpack.c.l.b16 %v2062
        %v2229 = vunpack.c.l.b16 %v2076
        %v2230 = vunpack.c.l.b16 %v2086
        %v2231 = vpack.c.b16 %v2216, %v2215
        %v2232 = vpack.c.b16 %v2218, %v2217
        %v2233 = vpack.c.b16 %v2220, %v2219
        %v2234 = vpack.c.b16 %v2222, %v2221
        %v2235 = vpack.c.b16 %v2224, %v2223
        %v2236 = vpack.c.b16 %v2226, %v2225
        %v2237 = vpack.c.b16 %v2228, %v2227
        %v2238 = vpack.c.b16 %v2230, %v2229
        %v2247 = vunpack.c.l.b16 %v2122
        %v2248 = vunpack.c.l.b16 %v2125
        %v2249 = vunpack.c.l.b16 %v2129
        %v2250 = vunpack.c.l.b16 %v2132
        %v2251 = vunpack.c.l.b16 %v2136
        %v2252 = vunpack.c.l.b16 %v2139
        %v2253 = vunpack.c.l.b16 %v2143
        %v2254 = vunpack.c.l.b16 %v2146
        %v2255 = vunpack.c.l.b16 %v2150
        %v2256 = vunpack.c.l.b16 %v2153
        %v2257 = vunpack.c.l.b16 %v2157
        %v2258 = vunpack.c.l.b16 %v2160
        %v2259 = vunpack.c.l.b16 %v2164
        %v2260 = vunpack.c.l.b16 %v2167
        %v2261 = vunpack.c.l.b16 %v2171
        %v2262 = vunpack.c.l.b16 %v2174
        %v2263 = vpack.c.b16 %v2248, %v2247
        %v2264 = vpack.c.b16 %v2250, %v2249
        %v2265 = vpack.c.b16 %v2252, %v2251
        %v2266 = vpack.c.b16 %v2254, %v2253
        %v2267 = vpack.c.b16 %v2256, %v2255
        %v2268 = vpack.c.b16 %v2258, %v2257
        %v2269 = vpack.c.b16 %v2260, %v2259
        %v2270 = vpack.c.b16 %v2262, %v2261
        %v2279 = vld [vmem:[#allocation5 + $0x180] sm:$0xf]
        %v2280 = vld [vmem:[#allocation5 + $0x184] sm:$0xf]
        %v2281 = vld [vmem:[#allocation5 + $0x188] sm:$0xf]
        %v2282 = vld [vmem:[#allocation5 + $0x18c] sm:$0xf]
        %v2283 = vld [vmem:[#allocation5 + $0x190] sm:$0xf]
        %v2284 = vld [vmem:[#allocation5 + $0x194] sm:$0xf]
        %v2285 = vld [vmem:[#allocation5 + $0x198] sm:$0xf]
        %v2286 = vld [vmem:[#allocation5 + $0x19c] sm:$0xf]
        %v2287 = vld [vmem:[#allocation5 + $0x1a0] sm:$0xf]
        %v2288 = vld [vmem:[#allocation5 + $0x1a4] sm:$0xf]
        %v2289 = vld [vmem:[#allocation5 + $0x1a8] sm:$0xf]
        %v2290 = vld [vmem:[#allocation5 + $0x1ac] sm:$0xf]
        %v2291 = vld [vmem:[#allocation5 + $0x1b0] sm:$0xf]
        %v2292 = vld [vmem:[#allocation5 + $0x1b4] sm:$0xf]
        %v2293 = vld [vmem:[#allocation5 + $0x1b8] sm:$0xf]
        %v2294 = vld [vmem:[#allocation5 + $0x1bc] sm:$0xf]
        %v2295 = vld [vmem:[#allocation5 + $0x1c0] sm:$0xf]
        %v2296 = vld [vmem:[#allocation5 + $0x1c4] sm:$0xf]
        %v2297 = vld [vmem:[#allocation5 + $0x1c8] sm:$0xf]
        %v2298 = vld [vmem:[#allocation5 + $0x1cc] sm:$0xf]
        %v2299 = vld [vmem:[#allocation5 + $0x1d0] sm:$0xf]
        %v2300 = vld [vmem:[#allocation5 + $0x1d4] sm:$0xf]
        %v2301 = vld [vmem:[#allocation5 + $0x1d8] sm:$0xf]
        %v2302 = vld [vmem:[#allocation5 + $0x1dc] sm:$0xf]
        %v2303 = vld [vmem:[#allocation5 + $0x1e0] sm:$0xf]
        %v2304 = vld [vmem:[#allocation5 + $0x1e4] sm:$0xf]
        %v2305 = vld [vmem:[#allocation5 + $0x1e8] sm:$0xf]
        %v2306 = vld [vmem:[#allocation5 + $0x1ec] sm:$0xf]
        %v2307 = vld [vmem:[#allocation5 + $0x1f0] sm:$0xf]
        %v2308 = vld [vmem:[#allocation5 + $0x1f4] sm:$0xf]
        %v2309 = vld [vmem:[#allocation5 + $0x1f8] sm:$0xf]
        %v2310 = vld [vmem:[#allocation5 + $0x1fc] sm:$0xf]
        %v2311 = vld [vmem:[#allocation5 + $0x200] sm:$0xf]
        %v2312 = vld [vmem:[#allocation5 + $0x204] sm:$0xf]
        %v2313 = vld [vmem:[#allocation5 + $0x208] sm:$0xf]
        %v2314 = vld [vmem:[#allocation5 + $0x20c] sm:$0xf]
        %v2315 = vld [vmem:[#allocation5 + $0x210] sm:$0xf]
        %v2316 = vld [vmem:[#allocation5 + $0x214] sm:$0xf]
        %v2317 = vld [vmem:[#allocation5 + $0x218] sm:$0xf]
        %v2318 = vld [vmem:[#allocation5 + $0x21c] sm:$0xf]
        %v2319 = vld [vmem:[#allocation5 + $0x220] sm:$0xf]
        %v2320 = vld [vmem:[#allocation5 + $0x224] sm:$0xf]
        %v2321 = vld [vmem:[#allocation5 + $0x228] sm:$0xf]
        %v2322 = vld [vmem:[#allocation5 + $0x22c] sm:$0xf]
        %v2323 = vld [vmem:[#allocation5 + $0x230] sm:$0xf]
        %v2324 = vld [vmem:[#allocation5 + $0x234] sm:$0xf]
        %v2325 = vld [vmem:[#allocation5 + $0x238] sm:$0xf]
        %v2326 = vld [vmem:[#allocation5 + $0x23c] sm:$0xf]
        %v2375 = vunpack.c.l.b16 %v2279
        %v2376 = vunpack.c.l.b16 %v2280
        %v2377 = vunpack.c.l.b16 %v2281
        %v2378 = vunpack.c.l.b16 %v2282
        %v2379 = vunpack.c.l.b16 %v2283
        %v2380 = vunpack.c.l.b16 %v2284
        %v2381 = vunpack.c.l.b16 %v2285
        %v2382 = vunpack.c.l.b16 %v2286
        %v2383 = vunpack.c.l.b16 %v2287
        %v2384 = vunpack.c.l.b16 %v2288
        %v2385 = vunpack.c.l.b16 %v2289
        %v2386 = vunpack.c.l.b16 %v2290
        %v2387 = vunpack.c.l.b16 %v2291
        %v2388 = vunpack.c.l.b16 %v2292
        %v2389 = vunpack.c.l.b16 %v2293
        %v2390 = vunpack.c.l.b16 %v2294
        %v2391 = vunpack.c.l.b16 %v2295
        %v2392 = vunpack.c.l.b16 %v2296
        %v2393 = vunpack.c.l.b16 %v2297
        %v2394 = vunpack.c.l.b16 %v2298
        %v2395 = vunpack.c.l.b16 %v2299
        %v2396 = vunpack.c.l.b16 %v2300
        %v2397 = vunpack.c.l.b16 %v2301
        %v2398 = vunpack.c.l.b16 %v2302
        %v2399 = vunpack.c.l.b16 %v2303
        %v2400 = vunpack.c.l.b16 %v2304
        %v2401 = vunpack.c.l.b16 %v2305
        %v2402 = vunpack.c.l.b16 %v2306
        %v2403 = vunpack.c.l.b16 %v2307
        %v2404 = vunpack.c.l.b16 %v2308
        %v2405 = vunpack.c.l.b16 %v2309
        %v2406 = vunpack.c.l.b16 %v2310
        %v2407 = vunpack.c.l.b16 %v2311
        %v2408 = vunpack.c.l.b16 %v2312
        %v2409 = vunpack.c.l.b16 %v2313
        %v2410 = vunpack.c.l.b16 %v2314
        %v2411 = vunpack.c.l.b16 %v2315
        %v2412 = vunpack.c.l.b16 %v2316
        %v2413 = vunpack.c.l.b16 %v2317
        %v2414 = vunpack.c.l.b16 %v2318
        %v2415 = vunpack.c.l.b16 %v2319
        %v2416 = vunpack.c.l.b16 %v2320
        %v2417 = vunpack.c.l.b16 %v2321
        %v2418 = vunpack.c.l.b16 %v2322
        %v2419 = vunpack.c.l.b16 %v2323
        %v2420 = vunpack.c.l.b16 %v2324
        %v2421 = vunpack.c.l.b16 %v2325
        %v2422 = vunpack.c.l.b16 %v2326
        %v2423 = vpack.c.b16 %v2376, %v2375
        %v2424 = vpack.c.b16 %v2378, %v2377
        %v2425 = vpack.c.b16 %v2380, %v2379
        %v2426 = vpack.c.b16 %v2382, %v2381
        %v2427 = vpack.c.b16 %v2384, %v2383
        %v2428 = vpack.c.b16 %v2386, %v2385
        %v2429 = vpack.c.b16 %v2388, %v2387
        %v2430 = vpack.c.b16 %v2390, %v2389
        %v2431 = vpack.c.b16 %v2392, %v2391
        %v2432 = vpack.c.b16 %v2394, %v2393
        %v2433 = vpack.c.b16 %v2396, %v2395
        %v2434 = vpack.c.b16 %v2398, %v2397
        %v2435 = vpack.c.b16 %v2400, %v2399
        %v2436 = vpack.c.b16 %v2402, %v2401
        %v2437 = vpack.c.b16 %v2404, %v2403
        %v2438 = vpack.c.b16 %v2406, %v2405
        %v2439 = vpack.c.b16 %v2408, %v2407
        %v2440 = vpack.c.b16 %v2410, %v2409
        %v2441 = vpack.c.b16 %v2412, %v2411
        %v2442 = vpack.c.b16 %v2414, %v2413
        %v2443 = vpack.c.b16 %v2416, %v2415
        %v2444 = vpack.c.b16 %v2418, %v2417
        %v2445 = vpack.c.b16 %v2420, %v2419
        %v2446 = vpack.c.b16 %v2422, %v2421
        %2471 = vmatprep.subr.bf16.mxu0 0
        %2472 = vmatpush1.bf16.msra.mxu0 %v2423
        %2473 = vmatprep.subr.bf16.mxu0 0
        %2474 = vmatpush1.bf16.msra.mxu0 %v2424
        %2475 = vmatprep.subr.bf16.mxu0 0
        %2476 = vmatpush1.bf16.msra.mxu0 %v2425
        %2477 = vmatprep.subr.bf16.mxu0 0
        %2478 = vmatpush1.bf16.msra.mxu0 %v2426
        %2479 = vmatprep.subr.bf16.mxu0 0
        %2480 = vmatpush1.bf16.msra.mxu0 %v2427
        %2481 = vmatprep.subr.bf16.mxu0 0
        %2482 = vmatpush1.bf16.msra.mxu0 %v2428
        %2483 = vmatprep.subr.bf16.mxu0 0
        %2484 = vmatpush1.bf16.msra.mxu0 %v2429
        %2485 = vmatprep.subr.bf16.mxu0 0
        %2486 = vmatpush1.bf16.msra.mxu0 %v2430
        %2487 = vmatprep.subr.bf16.mxu0 0
        %2488 = vmatpush1.bf16.msra.mxu0 %v2431
        %2489 = vmatprep.subr.bf16.mxu0 0
        %2490 = vmatpush1.bf16.msra.mxu0 %v2432
        %2491 = vmatprep.subr.bf16.mxu0 0
        %2492 = vmatpush1.bf16.msra.mxu0 %v2433
        %2493 = vmatprep.subr.bf16.mxu0 0
        %2494 = vmatpush1.bf16.msra.mxu0 %v2434
        %2495 = vmatprep.subr.bf16.mxu0 0
        %2496 = vmatpush1.bf16.msra.mxu0 %v2435
        %2497 = vmatprep.subr.bf16.mxu0 0
        %2498 = vmatpush1.bf16.msra.mxu0 %v2436
        %2499 = vmatprep.subr.bf16.mxu0 0
        %2500 = vmatpush1.bf16.msra.mxu0 %v2437
        %2501 = vmatprep.subr.bf16.mxu0 0
        %2502 = vmatpush1.bf16.msra.mxu0 %v2438
        %2503 = vmatprep.mubr.bf16.mxu0 %v2231
        %2504 = vmatmul.mubr.bf16.gmra.mrb[0].mxu0 %v2199
        %v2505 = vpop.f32.mrb[0].mxu0
        %v2506 = vadd.f32 0.0, %v2505
        %v2507 = vpop.f32.mrb[0].mxu0
        %v2508 = vpop.f32.mrb[0].mxu0
        %v2509 = vadd.f32 0.0, %v2508
        %v2510 = vpop.f32.mrb[0].mxu0
        %2511 = vmatprep.mubr.bf16.mxu0 %v2232
        %2512 = vmatmul.mubr.bf16.gmra.mrb[0].mxu0 %v2200
        %v2513 = vpop.f32.mrb[0].mxu0
        %v2514 = vadd.f32 0.0, %v2513
        %v2515 = vpop.f32.mrb[0].mxu0
        %v2516 = vpop.f32.mrb[0].mxu0
        %v2517 = vadd.f32 0.0, %v2516
        %v2518 = vpop.f32.mrb[0].mxu0
        %2519 = vmatprep.mubr.bf16.mxu0 %v2233
        %2520 = vmatmul.mubr.bf16.gmra.mrb[0].mxu0 %v2201
        %v2521 = vpop.f32.mrb[0].mxu0
        %v2522 = vadd.f32 0.0, %v2521
        %v2523 = vpop.f32.mrb[0].mxu0
        %v2524 = vpop.f32.mrb[0].mxu0
        %v2525 = vadd.f32 0.0, %v2524
        %v2526 = vpop.f32.mrb[0].mxu0
        %2527 = vmatprep.mubr.bf16.mxu0 %v2234
        %2528 = vmatmul.mubr.bf16.gmra.mrb[0].mxu0 %v2202
        %v2529 = vpop.f32.mrb[0].mxu0
        %v2530 = vadd.f32 0.0, %v2529
        %v2531 = vpop.f32.mrb[0].mxu0
        %v2532 = vpop.f32.mrb[0].mxu0
        %v2533 = vadd.f32 0.0, %v2532
        %v2534 = vpop.f32.mrb[0].mxu0
        %2535 = vmatprep.mubr.bf16.mxu0 %v2235
        %2536 = vmatmul.mubr.bf16.gmra.mrb[0].mxu0 %v2203
        %v2537 = vpop.f32.mrb[0].mxu0
        %v2538 = vadd.f32 0.0, %v2537
        %v2539 = vpop.f32.mrb[0].mxu0
        %v2540 = vpop.f32.mrb[0].mxu0
        %v2541 = vadd.f32 0.0, %v2540
        %v2542 = vpop.f32.mrb[0].mxu0
        %2543 = vmatprep.mubr.bf16.mxu0 %v2236
        %2544 = vmatmul.mubr.bf16.gmra.mrb[0].mxu0 %v2204
        %v2545 = vpop.f32.mrb[0].mxu0
        %v2546 = vadd.f32 0.0, %v2545
        %v2547 = vpop.f32.mrb[0].mxu0
        %v2548 = vpop.f32.mrb[0].mxu0
        %v2549 = vadd.f32 0.0, %v2548
        %v2550 = vpop.f32.mrb[0].mxu0
        %2551 = vmatprep.mubr.bf16.mxu0 %v2237
        %2552 = vmatmul.mubr.bf16.gmra.mrb[0].mxu0 %v2205
        %v2553 = vpop.f32.mrb[0].mxu0
        %v2554 = vadd.f32 0.0, %v2553
        %v2555 = vpop.f32.mrb[0].mxu0
        %v2556 = vpop.f32.mrb[0].mxu0
        %v2557 = vadd.f32 0.0, %v2556
        %v2558 = vpop.f32.mrb[0].mxu0
        %2559 = vmatprep.mubr.bf16.mxu0 %v2238
        %2560 = vmatmul.mubr.bf16.gmra.mrb[0].mxu0 %v2206
        %v2561 = vpop.f32.mrb[0].mxu0
        %v2562 = vadd.f32 0.0, %v2561
        %v2563 = vpop.f32.mrb[0].mxu0
        %v2564 = vpop.f32.mrb[0].mxu0
        %v2565 = vadd.f32 0.0, %v2564
        %v2566 = vpop.f32.mrb[0].mxu0
        %2567 = vdwg.mxu0
        %2568 = vmatprep.subr.bf16.mxu0 0
        %2569 = vmatpush1.bf16.msra.mxu0 %v2439
        %2570 = vmatprep.subr.bf16.mxu0 0
        %2571 = vmatpush1.bf16.msra.mxu0 %v2440
        %2572 = vmatprep.subr.bf16.mxu0 0
        %2573 = vmatpush1.bf16.msra.mxu0 %v2441
        %2574 = vmatprep.subr.bf16.mxu0 0
        %2575 = vmatpush1.bf16.msra.mxu0 %v2442
        %2576 = vmatprep.subr.bf16.mxu0 0
        %2577 = vmatpush1.bf16.msra.mxu0 %v2443
        %2578 = vmatprep.subr.bf16.mxu0 0
        %2579 = vmatpush1.bf16.msra.mxu0 %v2444
        %2580 = vmatprep.subr.bf16.mxu0 0
        %2581 = vmatpush1.bf16.msra.mxu0 %v2445
        %2582 = vmatprep.subr.bf16.mxu0 0
        %2583 = vmatpush1.bf16.msra.mxu0 %v2446
        %2584 = vmatprep.subr.bf16.mxu0 0
        %2585 = vmatpush1.bf16.msra.mxu0 0
        %2586 = vmatprep.subr.bf16.mxu0 0
        %2587 = vmatpush1.bf16.msra.mxu0 0
        %2588 = vmatprep.subr.bf16.mxu0 0
        %2589 = vmatpush1.bf16.msra.mxu0 0
        %2590 = vmatprep.subr.bf16.mxu0 0
        %2591 = vmatpush1.bf16.msra.mxu0 0
        %2592 = vmatprep.subr.bf16.mxu0 0
        %2593 = vmatpush1.bf16.msra.mxu0 0
        %2594 = vmatprep.subr.bf16.mxu0 0
        %2595 = vmatpush1.bf16.msra.mxu0 0
        %2596 = vmatprep.subr.bf16.mxu0 0
        %2597 = vmatpush1.bf16.msra.mxu0 0
        %2598 = vmatprep.subr.bf16.mxu0 0
        %2599 = vmatpush1.bf16.msra.mxu0 0
        %2600 = vmatprep.mubr.bf16.mxu0 0
        %2601 = vmatmul.mubr.bf16.gmra.mrb[0].mxu0 %v2263
        %v2602 = vpop.f32.mrb[0].mxu0
        %v2603 = vadd.f32 %v2506, %v2602
        %v2604 = vpop.f32.mrb[0].mxu0
        %v2605 = vpop.f32.mrb[0].mxu0
        %v2606 = vadd.f32 %v2509, %v2605
        %v2607 = vpop.f32.mrb[0].mxu0
        %2608 = vmatprep.mubr.bf16.mxu0 0
        %2609 = vmatmul.mubr.bf16.gmra.mrb[0].mxu0 %v2264
        %v2610 = vpop.f32.mrb[0].mxu0
        %v2611 = vadd.f32 %v2514, %v2610
        %v2612 = vpop.f32.mrb[0].mxu0
        %v2613 = vpop.f32.mrb[0].mxu0
        %v2614 = vadd.f32 %v2517, %v2613
        %v2615 = vpop.f32.mrb[0].mxu0
        %2616 = vmatprep.mubr.bf16.mxu0 0
        %2617 = vmatmul.mubr.bf16.gmra.mrb[0].mxu0 %v2265
        %v2618 = vpop.f32.mrb[0].mxu0
        %v2619 = vadd.f32 %v2522, %v2618
        %v2620 = vpop.f32.mrb[0].mxu0
        %v2621 = vpop.f32.mrb[0].mxu0
        %v2622 = vadd.f32 %v2525, %v2621
        %v2623 = vpop.f32.mrb[0].mxu0
        %2624 = vmatprep.mubr.bf16.mxu0 0
        %2625 = vmatmul.mubr.bf16.gmra.mrb[0].mxu0 %v2266
        %v2626 = vpop.f32.mrb[0].mxu0
        %v2627 = vadd.f32 %v2530, %v2626
        %v2628 = vpop.f32.mrb[0].mxu0
        %v2629 = vpop.f32.mrb[0].mxu0
        %v2630 = vadd.f32 %v2533, %v2629
        %v2631 = vpop.f32.mrb[0].mxu0
        %2632 = vmatprep.mubr.bf16.mxu0 0
        %2633 = vmatmul.mubr.bf16.gmra.mrb[0].mxu0 %v2267
        %v2634 = vpop.f32.mrb[0].mxu0
        %v2635 = vadd.f32 %v2538, %v2634
        %v2636 = vpop.f32.mrb[0].mxu0
        %v2637 = vpop.f32.mrb[0].mxu0
        %v2638 = vadd.f32 %v2541, %v2637
        %v2639 = vpop.f32.mrb[0].mxu0
        %2640 = vmatprep.mubr.bf16.mxu0 0
        %2641 = vmatmul.mubr.bf16.gmra.mrb[0].mxu0 %v2268
        %v2642 = vpop.f32.mrb[0].mxu0
        %v2643 = vadd.f32 %v2546, %v2642
        %v2644 = vpop.f32.mrb[0].mxu0
        %v2645 = vpop.f32.mrb[0].mxu0
        %v2646 = vadd.f32 %v2549, %v2645
        %v2647 = vpop.f32.mrb[0].mxu0
        %2648 = vmatprep.mubr.bf16.mxu0 0
        %2649 = vmatmul.mubr.bf16.gmra.mrb[0].mxu0 %v2269
        %v2650 = vpop.f32.mrb[0].mxu0
        %v2651 = vadd.f32 %v2554, %v2650
        %v2652 = vpop.f32.mrb[0].mxu0
        %v2653 = vpop.f32.mrb[0].mxu0
        %v2654 = vadd.f32 %v2557, %v2653
        %v2655 = vpop.f32.mrb[0].mxu0
        %2656 = vmatprep.mubr.bf16.mxu0 0
        %2657 = vmatmul.mubr.bf16.gmra.mrb[0].mxu0 %v2270
        %v2658 = vpop.f32.mrb[0].mxu0
        %v2659 = vadd.f32 %v2562, %v2658
        %v2660 = vpop.f32.mrb[0].mxu0
        %v2661 = vpop.f32.mrb[0].mxu0
        %v2662 = vadd.f32 %v2565, %v2661
        %v2663 = vpop.f32.mrb[0].mxu0
        %2664 = vdwg.mxu0
        %v2665 = vadd.f32 %v1805, %v2603
        %v2666 = vadd.f32 %v1808, %v2606
        %v2667 = vadd.f32 %v1813, %v2611
        %v2668 = vadd.f32 %v1816, %v2614
        %v2669 = vadd.f32 %v1821, %v2619
        %v2670 = vadd.f32 %v1824, %v2622
        %v2671 = vadd.f32 %v1829, %v2627
        %v2672 = vadd.f32 %v1832, %v2630
        %v2673 = vadd.f32 %v1837, %v2635
        %v2674 = vadd.f32 %v1840, %v2638
        %v2675 = vadd.f32 %v1845, %v2643
        %v2676 = vadd.f32 %v1848, %v2646
        %v2677 = vadd.f32 %v1853, %v2651
        %v2678 = vadd.f32 %v1856, %v2654
        %v2679 = vadd.f32 %v1861, %v2659
        %v2680 = vadd.f32 %v1864, %v2662
        %v2681 = vpack.c.bf16 %v2666, %v2665
        %v2682 = vpack.c.bf16 %v2668, %v2667
        %v2683 = vpack.c.bf16 %v2670, %v2669
        %v2684 = vpack.c.bf16 %v2672, %v2671
        %v2685 = vpack.c.bf16 %v2674, %v2673
        %v2686 = vpack.c.bf16 %v2676, %v2675
        %v2687 = vpack.c.bf16 %v2678, %v2677
        %v2688 = vpack.c.bf16 %v2680, %v2679
        %v2697 = vunpack.c.l.b16 %v2681
        %v2698 = vunpack.c.h.b16 %v2681
        %v2699 = vunpack.c.l.b16 %v2682
        %v2700 = vunpack.c.h.b16 %v2682
        %v2701 = vunpack.c.l.b16 %v2683
        %v2702 = vunpack.c.h.b16 %v2683
        %v2703 = vunpack.c.l.b16 %v2684
        %v2704 = vunpack.c.h.b16 %v2684
        %v2705 = vunpack.c.l.b16 %v2685
        %v2706 = vunpack.c.h.b16 %v2685
        %v2707 = vunpack.c.l.b16 %v2686
        %v2708 = vunpack.c.h.b16 %v2686
        %v2709 = vunpack.c.l.b16 %v2687
        %v2710 = vunpack.c.h.b16 %v2687
        %v2711 = vunpack.c.l.b16 %v2688
        %v2712 = vunpack.c.h.b16 %v2688
        %v2713 = vpack.c.b16 %v2697, %v2697
        %v2714 = vpack.c.b16 %v2698, %v2698
        %v2715 = vpack.c.b16 %v2699, %v2699
        %v2716 = vpack.c.b16 %v2700, %v2700
        %v2717 = vpack.c.b16 %v2701, %v2701
        %v2718 = vpack.c.b16 %v2702, %v2702
        %v2719 = vpack.c.b16 %v2703, %v2703
        %v2720 = vpack.c.b16 %v2704, %v2704
        %v2721 = vpack.c.b16 %v2705, %v2705
        %v2722 = vpack.c.b16 %v2706, %v2706
        %v2723 = vpack.c.b16 %v2707, %v2707
        %v2724 = vpack.c.b16 %v2708, %v2708
        %v2725 = vpack.c.b16 %v2709, %v2709
        %v2726 = vpack.c.b16 %v2710, %v2710
        %v2727 = vpack.c.b16 %v2711, %v2711
        %v2728 = vpack.c.b16 %v2712, %v2712
        %2745 = vst [vmem:[%s248] sm:$0xf] %v2713
        %2746 = vst [vmem:[%s248 + $0x4] sm:$0xf] %v2714
        %2747 = vst [vmem:[%s248 + $0x8] sm:$0xf] %v2715
        %2748 = vst [vmem:[%s248 + $0xc] sm:$0xf] %v2716
        %2749 = vst [vmem:[%s248 + $0x10] sm:$0xf] %v2717
        %2750 = vst [vmem:[%s248 + $0x14] sm:$0xf] %v2718
        %2751 = vst [vmem:[%s248 + $0x18] sm:$0xf] %v2719
        %2752 = vst [vmem:[%s248 + $0x1c] sm:$0xf] %v2720
        %2753 = vst [vmem:[%s248 + $0x20] sm:$0xf] %v2721
        %2754 = vst [vmem:[%s248 + $0x24] sm:$0xf] %v2722
        %2755 = vst [vmem:[%s248 + $0x28] sm:$0xf] %v2723
        %2756 = vst [vmem:[%s248 + $0x2c] sm:$0xf] %v2724
        %2757 = vst [vmem:[%s248 + $0x30] sm:$0xf] %v2725
        %2758 = vst [vmem:[%s248 + $0x34] sm:$0xf] %v2726
        %2759 = vst [vmem:[%s248 + $0x38] sm:$0xf] %v2727
        %2760 = vst [vmem:[%s248 + $0x3c] sm:$0xf] %v2728
        %p2761 = scmp.eq.s32.totalorder %s31, 0
        // Predicated region
        $region37: #{uconv2d_forward.3} parent=27 // pred_check
          %p2762 = pneg %p2761
        $region38: #{uconv2d_forward.3} parent=27 // pred_check_branch
          %2764 = sbr.rel (%p2762) target = $region40
        $region39: #{uconv2d_forward.3} parent=27 // pred_region
          %2765 = vst [vmem:[%s255] sm:$0xff] 0.0
          %2766 = vst [vmem:[%s262] sm:$0xff] 0.0
        $region40: #{uconv2d_forward.3} parent=27 // pred_fallthru
          _
        %v2767 = vld [vmem:[%s255] sm:$0x1]
        %v2768 = vadd.f32 %v2665, %v2666
        %v2769 = vadd.f32 %v2768, %v2667
        %v2770 = vadd.f32 %v2769, %v2668
        %v2771 = vadd.f32 %v2770, %v2669
        %v2772 = vadd.f32 %v2771, %v2670
        %v2773 = vadd.f32 %v2772, %v2671
        %v2774 = vadd.f32 %v2773, %v2672
        %v2775 = vadd.f32 %v2774, %v2673
        %v2776 = vadd.f32 %v2775, %v2674
        %v2777 = vadd.f32 %v2776, %v2675
        %v2778 = vadd.f32 %v2777, %v2676
        %v2779 = vadd.f32 %v2778, %v2677
        %v2780 = vadd.f32 %v2779, %v2678
        %v2781 = vadd.f32 %v2780, %v2679
        %v2782 = vadd.f32 %v2781, %v2680
        %v2783 = vrot.slane %v2782, 4
        %v2784 = vadd.f32 %v2782, %v2783
        %v2785 = vrot.slane %v2784, 2
        %v2786 = vadd.f32 %v2784, %v2785
        %v2787 = vrot.slane %v2786, 1
        %v2788 = vadd.f32 %v2786, %v2787
        %v2789 = vadd.f32 %v2767, %v2788
        %2790 = vst [vmem:[%s255] sm:$0x1] %v2789
        %v2791 = vld [vmem:[%s262] sm:$0x1]
        %v2792 = vmul.f32 %v2665, %v2665
        %v2793 = vmul.f32 %v2666, %v2666
        %v2794 = vmul.f32 %v2667, %v2667
        %v2795 = vmul.f32 %v2668, %v2668
        %v2796 = vmul.f32 %v2669, %v2669
        %v2797 = vmul.f32 %v2670, %v2670
        %v2798 = vmul.f32 %v2671, %v2671
        %v2799 = vmul.f32 %v2672, %v2672
        %v2800 = vmul.f32 %v2673, %v2673
        %v2801 = vmul.f32 %v2674, %v2674
        %v2802 = vmul.f32 %v2675, %v2675
        %v2803 = vmul.f32 %v2676, %v2676
        %v2804 = vmul.f32 %v2677, %v2677
        %v2805 = vmul.f32 %v2678, %v2678
        %v2806 = vmul.f32 %v2679, %v2679
        %v2807 = vmul.f32 %v2680, %v2680
        %v2808 = vadd.f32 %v2792, %v2793
        %v2809 = vadd.f32 %v2808, %v2794
        %v2810 = vadd.f32 %v2809, %v2795
        %v2811 = vadd.f32 %v2810, %v2796
        %v2812 = vadd.f32 %v2811, %v2797
        %v2813 = vadd.f32 %v2812, %v2798
        %v2814 = vadd.f32 %v2813, %v2799
        %v2815 = vadd.f32 %v2814, %v2800
        %v2816 = vadd.f32 %v2815, %v2801
        %v2817 = vadd.f32 %v2816, %v2802
        %v2818 = vadd.f32 %v2817, %v2803
        %v2819 = vadd.f32 %v2818, %v2804
        %v2820 = vadd.f32 %v2819, %v2805
        %v2821 = vadd.f32 %v2820, %v2806
        %v2822 = vadd.f32 %v2821, %v2807
        %v2823 = vrot.slane %v2822, 4
        %v2824 = vadd.f32 %v2822, %v2823
        %v2825 = vrot.slane %v2824, 2
        %v2826 = vadd.f32 %v2824, %v2825
        %v2827 = vrot.slane %v2826, 1
        %v2828 = vadd.f32 %v2826, %v2827
        %v2829 = vadd.f32 %v2791, %v2828
        %2830 = vst [vmem:[%s262] sm:$0x1] %v2829
        %s2831 = sand.u32 %s95, 1
        %s2832 = scalar_lea.sflag [#allocation4], %s2831
        %s2833 = sand.u32 %s95, 1
        %s2834 = smul.addr %s2833, 64
        %s2835 = scalar_lea.vmem [#allocation7], %s2834
        %s2836 = sand.u32 %s26, 1
        %s2837 = scalar_lea.sflag [#allocation9], %s2836
        %s2838 = sand.u32 %s121, 1
        %s2839 = smul.addr %s2838, 8
        %s2840 = scalar_lea.vmem [#allocation8], %s2839
        %s2841 = sand.u32 %s26, 1
        %s2842 = scalar_lea.sflag [#allocation9], %s2841
        %s2843 = sand.u32 %s147, 1
        %s2844 = smul.addr %s2843, 8
        %s2845 = scalar_lea.vmem [#allocation10], %s2844
        // Predicated region
        $region41: #{uconv2d_forward.3} parent=27 // pred_check
          %p2846 = pneg %p105
        $region42: #{uconv2d_forward.3} parent=27 // pred_check_branch
          %2848 = sbr.rel (%p2846) target = $region44
        $region43: #{uconv2d_forward.3} parent=27 // pred_region
          %s2849 = smul.u32 8, %s31
          %s2851 = ssub.s32 1024, 1024
          %2852 = vsyncadd %s2832, %s2851
          %s2853 = smul.addr %s2849, 2
          %s2854 = smul.addr %s30, 32
          %s2855 = sadd.s32 %s2853, %s2854
          %s2856 = smul.addr %s2855, 64
          %s2857 = scalar_lea.hbm %s2, %s2856
          %s2858 = sshll.u32 %s2835, 4
          %s2859 = int_to_ptr.vmem [resolvable:$true] %s2858
          %2864 = dma.vmem_to_hbm [thread:$0]  %s2859, 1024, %s2857, %s2832, 64, 64, 4
        $region44: #{uconv2d_forward.3} parent=27 // pred_fallthru
          _
        // Predicated region
        $region45: #{uconv2d_forward.3} parent=27 // pred_check
          %p2865 = pneg %p131
        $region46: #{uconv2d_forward.3} parent=27 // pred_check_branch
          %2867 = sbr.rel (%p2865) target = $region48
        $region47: #{uconv2d_forward.3} parent=27 // pred_region
          %s2869 = ssub.s32 128, 128
          %2870 = vsyncadd %s2837, %s2869
          %s2871 = smul.addr %s30, 128
          %s2872 = scalar_lea.hbm %s3, %s2871
          %s2874 = sshll.u32 %s2840, 4
          %s2875 = int_to_ptr.vmem [resolvable:$true] %s2874
          %2877 = dma.vmem_to_hbm [thread:$0]  %s2875, 128, %s2872, %s2837
        $region48: #{uconv2d_forward.3} parent=27 // pred_fallthru
          _
        // Predicated region
        $region49: #{uconv2d_forward.3} parent=27 // pred_check
          %p2878 = pneg %p157
        $region50: #{uconv2d_forward.3} parent=27 // pred_check_branch
          %2880 = sbr.rel (%p2878) target = $region52
        $region51: #{uconv2d_forward.3} parent=27 // pred_region
          %s2882 = ssub.s32 128, 128
          %2883 = vsyncadd %s2842, %s2882
          %s2884 = smul.addr %s30, 128
          %s2885 = scalar_lea.hbm %s4, %s2884
          %s2887 = sshll.u32 %s2845, 4
          %s2888 = int_to_ptr.vmem [resolvable:$true] %s2887
          %2890 = dma.vmem_to_hbm [thread:$0]  %s2888, 128, %s2885, %s2842
        $region52: #{uconv2d_forward.3} parent=27 // pred_fallthru
          _
      $region28: #{uconv2d_forward.3} parent=5 // pred_fallthru
        _
      %p2891 = scmp.le.s32.totalorder 2, %s21
      // Predicated region
      $region53: #{uconv2d_forward.3} parent=5 // pred_check
        %p2892 = pneg %p2891
      $region54: #{uconv2d_forward.3} parent=5 // pred_check_branch
        %2894 = sbr.rel (%p2892) target = $region56
      $region55: #{uconv2d_forward.3} parent=5 // pred_region
        %s2895 = ssub.s32 %s21, 2
        // Predicated region
        $region57: #{uconv2d_forward.3} parent=55 // pred_check
          %p2896 = pneg %p111
        $region58: #{uconv2d_forward.3} parent=55 // pred_check_branch
          %2898 = sbr.rel (%p2896) target = $region60
        $region59: #{uconv2d_forward.3} parent=55 // pred_region
          %s2899 = sand.u32 %s96, 1
          %s2900 = scalar_lea.sflag [#allocation4], %s2899
          %s2901 = sand.u32 %s96, 1
          %s2902 = smul.addr %s2901, 64
          %s2903 = scalar_lea.vmem [#allocation7], %s2902
          %2904 = dma.done %s2900, 1024
        $region60: #{uconv2d_forward.3} parent=55 // pred_fallthru
          _
        // Predicated region
        $region61: #{uconv2d_forward.3} parent=55 // pred_check
          %p2905 = pneg %p137
        $region62: #{uconv2d_forward.3} parent=55 // pred_check_branch
          %2907 = sbr.rel (%p2905) target = $region64
        $region63: #{uconv2d_forward.3} parent=55 // pred_region
          %s2908 = sand.u32 %s27, 1
          %s2909 = scalar_lea.sflag [#allocation9], %s2908
          %s2910 = sand.u32 %s122, 1
          %s2911 = smul.addr %s2910, 8
          %s2912 = scalar_lea.vmem [#allocation8], %s2911
          %2913 = dma.done %s2909, 128
        $region64: #{uconv2d_forward.3} parent=55 // pred_fallthru
          _
        // Predicated region
        $region65: #{uconv2d_forward.3} parent=55 // pred_check
          %p2914 = pneg %p163
        $region66: #{uconv2d_forward.3} parent=55 // pred_check_branch
          %2916 = sbr.rel (%p2914) target = $region68
        $region67: #{uconv2d_forward.3} parent=55 // pred_region
          %s2917 = sand.u32 %s27, 1
          %s2918 = scalar_lea.sflag [#allocation9], %s2917
          %s2919 = sand.u32 %s148, 1
          %s2920 = smul.addr %s2919, 8
          %s2921 = scalar_lea.vmem [#allocation10], %s2920
          %2922 = dma.done %s2918, 128
        $region68: #{uconv2d_forward.3} parent=55 // pred_fallthru
          _
      $region56: #{uconv2d_forward.3} parent=5 // pred_fallthru
        _
    $region6: #{uconv2d_forward.3} parent=1 // loop_footer
      %s25 = sadd.s32 1, %s21
    $region7: #{uconv2d_forward.3} parent=1 // loop_footer_branch
      %20 = sbr.rel target = $region3
    $region8: #{uconv2d_forward.3} parent=1 // loop_exit
      _
    %2923 = vsyncpa [#allocation3], 1
    %s2924 = scalar_lea.sflag [#allocation3], 1
    %2925 = vsyncpa %s2924, 1
    %2926 = vsyncpa [#allocation6], 1
    %2927 = vsyncpa [#allocation4], 1
    %s2928 = scalar_lea.sflag [#allocation4], 1
    %2929 = vsyncpa %s2928, 1
    %2930 = vsyncpa [#allocation9], 1
    %s2931 = scalar_lea.sflag [#allocation9], 1
    %2932 = vsyncpa %s2931, 1

// kernel: uconv2d_forward.4
$region0: #{uconv2d_forward.4}
  #allocation0 [shape = 'u32[]', space=smem, size = 0x4, offset = 0x4, fixed_abs, tag = 'smem constant byte address 0x4 - core index']
  #allocation1 [shape = 'u32[144,128]{1,0:T(1,128)}', space=vmem, size = 0x12000, scoped, tag = 'internal scratch']
  #allocation2 [shape = 'bf16[10,18,128]{2,1,0:T(8,128)(2,1)}', space=vmem, size = 0xf000, scoped, tag = 'scratch operand']
  %s0 = inlined_call_operand.hbm [shape: bf16[2,16,16,128], index: 0, kind: input, shape index: {}]
  %s1 = inlined_call_operand.hbm [shape: f32[1,128], index: 1, kind: input, shape index: {}]
  %s2 = inlined_call_operand.hbm [shape: f32[1,128], index: 2, kind: input, shape index: {}]
  %s3 = inlined_call_operand.hbm [shape: bf16[1152,128], index: 3, kind: input, shape index: {}]
  %s4 = inlined_call_operand.hbm [shape: bf16[2,16,16,128], index: 4, kind: output, shape index: {0}]
  %s5 = inlined_call_operand.hbm [shape: f32[2,8,128], index: 5, kind: output, shape index: {1}]
  %s6 = inlined_call_operand.hbm [shape: f32[2,8,128], index: 6, kind: output, shape index: {2}]
  %7 = xla_tuple %s4, %s5, %s6
  %s8 = sld [smem:[#allocation0]]
  $region85: #{uconv2d_forward.4} parent=0
    _
  %s10 = ssub.s32 1, %s8
  %s11 = scalar_select 0, %s10, %s8
  $region1: #{uconv2d_forward.4} parent=0
    #allocation3 [shape = 'u8[131072]{0}', space=vmem, size = 0x20000, scoped, tag = 'input window, operand 0']
    #allocation4 [shape = 's32[2]{0}', space=sflag, size = 0x8, scoped, tag = 'scoped memory for uconv2d_forward.4']
    #allocation5 [shape = 's32[2]{0}', space=sflag, size = 0x8, scoped, tag = 'scoped memory for uconv2d_forward.4']
    #allocation6 [shape = 'u8[512]{0}', space=vmem, size = 0x400, scoped, tag = 'input window, operand 1, single buffered']
    #allocation7 [shape = 's32[1]{0}', space=sflag, size = 0x4, scoped, tag = 'scoped memory for uconv2d_forward.4']
    #allocation8 [shape = 'u8[512]{0}', space=vmem, size = 0x400, scoped, tag = 'input window, operand 2, single buffered']
    #allocation9 [shape = 'u8[294912]{0}', space=vmem, size = 0x48000, scoped, tag = 'input window, operand 3, single buffered']
    #allocation10 [shape = 's32[1]{0}', space=sflag, size = 0x4, scoped, tag = 'scoped memory for uconv2d_forward.4']
    #allocation11 [shape = 'u8[65536]{0}', space=vmem, size = 0x10000, scoped, tag = 'output window, operand 0']
    #allocation12 [shape = 'u8[8192]{0}', space=vmem, size = 0x2000, scoped, tag = 'output window, operand 1']
    #allocation13 [shape = 's32[2]{0}', space=sflag, size = 0x8, scoped, tag = 'scoped memory for uconv2d_forward.4']
    #allocation14 [shape = 'u8[8192]{0}', space=vmem, size = 0x2000, scoped, tag = 'output window, operand 2']
    %12 = vsyncpa [#allocation4], 0
    %s13 = scalar_lea.sflag [#allocation4], 1
    %14 = vsyncpa %s13, 0
    %15 = vsyncpa [#allocation7], 0
    %16 = vsyncpa [#allocation10], 0
    %17 = vsyncpa [#allocation5], 0
    %s18 = scalar_lea.sflag [#allocation5], 1
    %19 = vsyncpa %s18, 0
    %20 = vsyncpa [#allocation13], 0
    %s21 = scalar_lea.sflag [#allocation13], 1
    %22 = vsyncpa %s21, 0
    loop: start=0, step=1, limit=6
    $region2: #{uconv2d_forward.4} parent=1 // loop_pre_header
      _
    $region3: #{uconv2d_forward.4} parent=1 // loop_header
      %s24 = sphi 0, %s28
      %p25 = scmp.ge.s32.totalorder %s24, 6
      %s31 = sphi 0, %s43
      %s32 = sphi 0, %s39
      %s33 = sphi 0, %s31
      %s34 = sphi 0, %s32
      %s35 = sphi 0, %s33
      %s36 = sphi 0, %s34
      %s46 = sphi 0, %s48
      %s49 = sphi 0, %s46
      %s50 = sphi 0, %s49
      %s66 = sphi 0, %s50
      %s70 = sphi 0, %s70
      %s72 = sphi 0, %s70
      %s73 = sphi 0, %s72
      %s87 = sphi 0, %s73
      %s91 = sphi 0, %s91
      %s93 = sphi 0, %s91
      %s94 = sphi 0, %s93
      %s108 = sphi 0, %s94
      %s112 = sphi 0, %s112
      %s114 = sphi 0, %s112
      %s115 = sphi 0, %s114
      %s129 = sphi 0, %s115
      %s137 = sphi 0, %s139
      %s140 = sphi 0, %s137
      %s141 = sphi 0, %s140
      %s157 = sphi 0, %s141
      %s163 = sphi 0, %s165
      %s166 = sphi 0, %s163
      %s167 = sphi 0, %s166
      %s183 = sphi 0, %s167
      %s189 = sphi 0, %s191
      %s192 = sphi 0, %s189
      %s193 = sphi 0, %s192
      %s209 = sphi 0, %s193
    $region4: #{uconv2d_forward.4} parent=1 // loop_header_branch
      %27 = sbr.rel (%p25) target = $region8
    $region5: #{uconv2d_forward.4} parent=1 // loop_body
      %s29 = ssub.s32 %s24, 1
      %s30 = ssub.s32 %s24, 2
      %s37 = sadd.s32 1, %s32
      %p38 = scmp.ge.s32.totalorder %s37, 2
      %s39 = scalar_select %p38, 0, %s37
      %s40 = sadd.s32 1, %s31
      %s41 = scalar_select %p38, %s40, %s31
      %p42 = scmp.ge.s32.totalorder %s41, 2
      %s43 = scalar_select %p42, 0, %s41
      %s44 = ssub.s32 %s31, %s43
      %p45 = scmp.eq.s32.totalorder %s44, 0
      %s47 = sadd.s32 %s46, 1
      %s48 = scalar_select %p45, %s46, %s47
      %p51 = pneg %p45
      %p52 = scmp.eq.s32.totalorder %s24, 3
      %p53 = por %p51, %p52
      %p54 = scmp.ne.s32.totalorder %s46, %s49
      %p55 = scmp.eq.s32.totalorder %s24, 0
      %p56 = por %p54, %p55
      %p57 = scmp.ne.s32.totalorder %s46, %s49
      %p58 = scmp.eq.s32.totalorder %s29, 3
      %p59 = por %p57, %p58
      %p60 = scmp.ne.s32.totalorder %s49, %s50
      %p61 = scmp.eq.s32.totalorder %s29, 0
      %p62 = por %p60, %p61
      %p63 = scmp.ne.s32.totalorder %s49, %s50
      %p64 = scmp.eq.s32.totalorder %s30, 3
      %p65 = por %p63, %p64
      %p67 = scmp.ne.s32.totalorder %s50, %s66
      %p68 = scmp.eq.s32.totalorder %s30, 0
      %p69 = por %p67, %p68
      %s71 = sadd.s32 %s70, 1
      %p74 = scmp.eq.s32.totalorder %s24, 3
      %p75 = scmp.ne.s32.totalorder %s70, %s72
      %p76 = scmp.eq.s32.totalorder %s24, 0
      %p77 = por %p75, %p76
      %p78 = scmp.ne.s32.totalorder %s70, %s72
      %p79 = scmp.eq.s32.totalorder %s29, 3
      %p80 = por %p78, %p79
      %p81 = scmp.ne.s32.totalorder %s72, %s73
      %p82 = scmp.eq.s32.totalorder %s29, 0
      %p83 = por %p81, %p82
      %p84 = scmp.ne.s32.totalorder %s72, %s73
      %p85 = scmp.eq.s32.totalorder %s30, 3
      %p86 = por %p84, %p85
      %p88 = scmp.ne.s32.totalorder %s73, %s87
      %p89 = scmp.eq.s32.totalorder %s30, 0
      %p90 = por %p88, %p89
      %s92 = sadd.s32 %s91, 1
      %p95 = scmp.eq.s32.totalorder %s24, 3
      %p96 = scmp.ne.s32.totalorder %s91, %s93
      %p97 = scmp.eq.s32.totalorder %s24, 0
      %p98 = por %p96, %p97
      %p99 = scmp.ne.s32.totalorder %s91, %s93
      %p100 = scmp.eq.s32.totalorder %s29, 3
      %p101 = por %p99, %p100
      %p102 = scmp.ne.s32.totalorder %s93, %s94
      %p103 = scmp.eq.s32.totalorder %s29, 0
      %p104 = por %p102, %p103
      %p105 = scmp.ne.s32.totalorder %s93, %s94
      %p106 = scmp.eq.s32.totalorder %s30, 3
      %p107 = por %p105, %p106
      %p109 = scmp.ne.s32.totalorder %s94, %s108
      %p110 = scmp.eq.s32.totalorder %s30, 0
      %p111 = por %p109, %p110
      %s113 = sadd.s32 %s112, 1
      %p116 = scmp.eq.s32.totalorder %s24, 3
      %p117 = scmp.ne.s32.totalorder %s112, %s114
      %p118 = scmp.eq.s32.totalorder %s24, 0
      %p119 = por %p117, %p118
      %p120 = scmp.ne.s32.totalorder %s112, %s114
      %p121 = scmp.eq.s32.totalorder %s29, 3
      %p122 = por %p120, %p121
      %p123 = scmp.ne.s32.totalorder %s114, %s115
      %p124 = scmp.eq.s32.totalorder %s29, 0
      %p125 = por %p123, %p124
      %p126 = scmp.ne.s32.totalorder %s114, %s115
      %p127 = scmp.eq.s32.totalorder %s30, 3
      %p128 = por %p126, %p127
      %p130 = scmp.ne.s32.totalorder %s115, %s129
      %p131 = scmp.eq.s32.totalorder %s30, 0
      %p132 = por %p130, %p131
      %s133 = ssub.s32 %s31, %s43
      %s134 = ssub.s32 %s32, %s39
      %s135 = sor.u32 %s133, %s134
      %p136 = scmp.eq.s32.totalorder %s135, 0
      %s138 = sadd.s32 %s137, 1
      %s139 = scalar_select %p136, %s137, %s138
      %p142 = pneg %p136
      %p143 = scmp.eq.s32.totalorder %s24, 3
      %p144 = por %p142, %p143
      %p145 = scmp.ne.s32.totalorder %s137, %s140
      %p146 = scmp.eq.s32.totalorder %s24, 0
      %p147 = por %p145, %p146
      %p148 = scmp.ne.s32.totalorder %s137, %s140
      %p149 = scmp.eq.s32.totalorder %s29, 3
      %p150 = por %p148, %p149
      %p151 = scmp.ne.s32.totalorder %s140, %s141
      %p152 = scmp.eq.s32.totalorder %s29, 0
      %p153 = por %p151, %p152
      %p154 = scmp.ne.s32.totalorder %s140, %s141
      %p155 = scmp.eq.s32.totalorder %s30, 3
      %p156 = por %p154, %p155
      %p158 = scmp.ne.s32.totalorder %s141, %s157
      %p159 = scmp.eq.s32.totalorder %s30, 0
      %p160 = por %p158, %p159
      %s161 = ssub.s32 %s31, %s43
      %p162 = scmp.eq.s32.totalorder %s161, 0
      %s164 = sadd.s32 %s163, 1
      %s165 = scalar_select %p162, %s163, %s164
      %p168 = pneg %p162
      %p169 = scmp.eq.s32.totalorder %s24, 3
      %p170 = por %p168, %p169
      %p171 = scmp.ne.s32.totalorder %s163, %s166
      %p172 = scmp.eq.s32.totalorder %s24, 0
      %p173 = por %p171, %p172
      %p174 = scmp.ne.s32.totalorder %s163, %s166
      %p175 = scmp.eq.s32.totalorder %s29, 3
      %p176 = por %p174, %p175
      %p177 = scmp.ne.s32.totalorder %s166, %s167
      %p178 = scmp.eq.s32.totalorder %s29, 0
      %p179 = por %p177, %p178
      %p180 = scmp.ne.s32.totalorder %s166, %s167
      %p181 = scmp.eq.s32.totalorder %s30, 3
      %p182 = por %p180, %p181
      %p184 = scmp.ne.s32.totalorder %s167, %s183
      %p185 = scmp.eq.s32.totalorder %s30, 0
      %p186 = por %p184, %p185
      %s187 = ssub.s32 %s31, %s43
      %p188 = scmp.eq.s32.totalorder %s187, 0
      %s190 = sadd.s32 %s189, 1
      %s191 = scalar_select %p188, %s189, %s190
      %p194 = pneg %p188
      %p195 = scmp.eq.s32.totalorder %s24, 3
      %p196 = por %p194, %p195
      %p197 = scmp.ne.s32.totalorder %s189, %s192
      %p198 = scmp.eq.s32.totalorder %s24, 0
      %p199 = por %p197, %p198
      %p200 = scmp.ne.s32.totalorder %s189, %s192
      %p201 = scmp.eq.s32.totalorder %s29, 3
      %p202 = por %p200, %p201
      %p203 = scmp.ne.s32.totalorder %s192, %s193
      %p204 = scmp.eq.s32.totalorder %s29, 0
      %p205 = por %p203, %p204
      %p206 = scmp.ne.s32.totalorder %s192, %s193
      %p207 = scmp.eq.s32.totalorder %s30, 3
      %p208 = por %p206, %p207
      %p210 = scmp.ne.s32.totalorder %s193, %s209
      %p211 = scmp.eq.s32.totalorder %s30, 0
      %p212 = por %p210, %p211
      %p213 = scmp.le.s32.totalorder 1, %s24
      %p214 = scmp.lt.s32.totalorder %s24, 5
      %p215 = pnand %p213, %p214
      %p216 = pneg %p215
      // Predicated region
      $region9: #{uconv2d_forward.4} parent=5 // pred_check
        _
      $region10: #{uconv2d_forward.4} parent=5 // pred_check_branch
        %218 = sbr.rel (%p215) target = $region12
      $region11: #{uconv2d_forward.4} parent=5 // pred_region
        %s219 = ssub.s32 %s24, 1
        // Predicated region
        $region13: #{uconv2d_forward.4} parent=11 // pred_check
          %p220 = pneg %p83
        $region14: #{uconv2d_forward.4} parent=11 // pred_check_branch
          %222 = sbr.rel (%p220) target = $region16
        $region15: #{uconv2d_forward.4} parent=11 // pred_region
          %s224 = ssub.s32 16, 16
          %225 = vsyncadd [#allocation7], %s224
          %s227 = sshll.u32 [#allocation6], 4
          %s228 = int_to_ptr.vmem [resolvable:$true] %s227
          %230 = dma.hbm_to_vmem [thread:$0]  %s1, 16, %s228, [#allocation7]
        $region16: #{uconv2d_forward.4} parent=11 // pred_fallthru
          _
        // Predicated region
        $region17: #{uconv2d_forward.4} parent=11 // pred_check
          %p231 = pneg %p104
        $region18: #{uconv2d_forward.4} parent=11 // pred_check_branch
          %233 = sbr.rel (%p231) target = $region20
        $region19: #{uconv2d_forward.4} parent=11 // pred_region
          %s235 = ssub.s32 16, 16
          %236 = vsyncadd [#allocation7], %s235
          %s238 = sshll.u32 [#allocation8], 4
          %s239 = int_to_ptr.vmem [resolvable:$true] %s238
          %241 = dma.hbm_to_vmem [thread:$0]  %s2, 16, %s239, [#allocation7]
        $region20: #{uconv2d_forward.4} parent=11 // pred_fallthru
          _
        // Predicated region
        $region21: #{uconv2d_forward.4} parent=11 // pred_check
          %p242 = pneg %p125
        $region22: #{uconv2d_forward.4} parent=11 // pred_check_branch
          %244 = sbr.rel (%p242) target = $region24
        $region23: #{uconv2d_forward.4} parent=11 // pred_region
          %s246 = ssub.s32 9216, 9216
          %247 = vsyncadd [#allocation10], %s246
          %s248 = sshll.u32 [#allocation9], 4
          %s249 = int_to_ptr.vmem [resolvable:$true] %s248
          %254 = dma.hbm_to_vmem [thread:$0]  %s3, 9216, %s249, [#allocation10], 64, 64, 4
        $region24: #{uconv2d_forward.4} parent=11 // pred_fallthru
          _
      $region12: #{uconv2d_forward.4} parent=5 // pred_fallthru
        _
      %p255 = scmp.lt.s32.totalorder %s24, 4
      // Predicated region
      $region25: #{uconv2d_forward.4} parent=5 // pred_check
        %p256 = pneg %p255
      $region26: #{uconv2d_forward.4} parent=5 // pred_check_branch
        %258 = sbr.rel (%p256) target = $region28
      $region27: #{uconv2d_forward.4} parent=5 // pred_region
        // Predicated region
        $region29: #{uconv2d_forward.4} parent=27 // pred_check
          %p259 = pneg %p56
        $region30: #{uconv2d_forward.4} parent=27 // pred_check_branch
          %261 = sbr.rel (%p259) target = $region32
        $region31: #{uconv2d_forward.4} parent=27 // pred_region
          %s262 = sand.u32 %s46, 1
          %s263 = scalar_lea.sflag [#allocation4], %s262
          %s264 = sand.u32 %s46, 1
          %s265 = smul.addr %s264, 128
          %s266 = scalar_lea.vmem [#allocation3], %s265
          %s268 = ssub.s32 2048, 2048
          %269 = vsyncadd %s263, %s268
          %s270 = smul.addr %s31, 32
          %s271 = smul.addr %s270, 64
          %s272 = scalar_lea.hbm %s0, %s271
          %s273 = sshll.u32 %s266, 4
          %s274 = int_to_ptr.vmem [resolvable:$true] %s273
          %279 = dma.hbm_to_vmem [thread:$0]  %s272, 2048, %s274, %s263, 64, 64, 4
        $region32: #{uconv2d_forward.4} parent=27 // pred_fallthru
          _
      $region28: #{uconv2d_forward.4} parent=5 // pred_fallthru
        _
      %p280 = scmp.le.s32.totalorder 1, %s24
      %p281 = scmp.lt.s32.totalorder %s24, 5
      %p282 = pnand %p280, %p281
      %p283 = pneg %p282
      // Predicated region
      $region33: #{uconv2d_forward.4} parent=5 // pred_check
        _
      $region34: #{uconv2d_forward.4} parent=5 // pred_check_branch
        %285 = sbr.rel (%p282) target = $region36
      $region35: #{uconv2d_forward.4} parent=5 // pred_region
        %s286 = ssub.s32 %s24, 1
        %s287 = sand.u32 %s49, 1
        %s288 = scalar_lea.sflag [#allocation4], %s287
        %s289 = sand.u32 %s49, 1
        %s290 = smul.addr %s289, 128
        %s291 = scalar_lea.vmem [#allocation3], %s290
        // Predicated region
        $region37: #{uconv2d_forward.4} parent=35 // pred_check
          %p292 = pneg %p62
        $region38: #{uconv2d_forward.4} parent=35 // pred_check_branch
          %294 = sbr.rel (%p292) target = $region40
        $region39: #{uconv2d_forward.4} parent=35 // pred_region
          %295 = dma.done %s288, 2048
        $region40: #{uconv2d_forward.4} parent=35 // pred_fallthru
          _
        // Predicated region
        $region41: #{uconv2d_forward.4} parent=35 // pred_check
          %p296 = pneg %p83
        $region42: #{uconv2d_forward.4} parent=35 // pred_check_branch
          %298 = sbr.rel (%p296) target = $region44
        $region43: #{uconv2d_forward.4} parent=35 // pred_region
          %299 = dma.done [#allocation7], 16
        $region44: #{uconv2d_forward.4} parent=35 // pred_fallthru
          _
        // Predicated region
        $region45: #{uconv2d_forward.4} parent=35 // pred_check
          %p300 = pneg %p104
        $region46: #{uconv2d_forward.4} parent=35 // pred_check_branch
          %302 = sbr.rel (%p300) target = $region48
        $region47: #{uconv2d_forward.4} parent=35 // pred_region
          %303 = dma.done [#allocation7], 16
        $region48: #{uconv2d_forward.4} parent=35 // pred_fallthru
          _
        // Predicated region
        $region49: #{uconv2d_forward.4} parent=35 // pred_check
          %p304 = pneg %p125
        $region50: #{uconv2d_forward.4} parent=35 // pred_check_branch
          %306 = sbr.rel (%p304) target = $region52
        $region51: #{uconv2d_forward.4} parent=35 // pred_region
          %307 = dma.done [#allocation10], 9216
        $region52: #{uconv2d_forward.4} parent=35 // pred_fallthru
          _
        %s308 = sand.u32 %s49, 1
        %s309 = scalar_lea.sflag [#allocation4], %s308
        %s310 = sand.u32 %s49, 1
        %s311 = smul.addr %s310, 128
        %s312 = scalar_lea.vmem [#allocation3], %s311
        %p313 = pneg %p62
        %p314 = pneg %p59
        %p315 = pneg %p83
        %p316 = pneg %p80
        %p317 = pneg %p104
        %p318 = pneg %p101
        %p319 = pneg %p125
        %p320 = pneg %p122
        %p321 = pneg %p153
        %p322 = pneg %p150
        %s323 = sand.u32 %s140, 1
        %s324 = scalar_lea.sflag [#allocation5], %s323
        %s325 = sand.u32 %s140, 1
        %s326 = smul.addr %s325, 64
        %s327 = scalar_lea.vmem [#allocation11], %s326
        %p328 = pneg %p179
        %p329 = pneg %p176
        %s330 = sand.u32 %s29, 1
        %s331 = scalar_lea.sflag [#allocation13], %s330
        %s332 = sand.u32 %s166, 1
        %s333 = smul.addr %s332, 8
        %s334 = scalar_lea.vmem [#allocation12], %s333
        %p335 = pneg %p205
        %p336 = pneg %p202
        %s337 = sand.u32 %s29, 1
        %s338 = scalar_lea.sflag [#allocation13], %s337
        %s339 = sand.u32 %s192, 1
        %s340 = smul.addr %s339, 8
        %s341 = scalar_lea.vmem [#allocation14], %s340
        %s342 = smul.u32 8, %s34
        %s344 = smul.u32 %s34, 8
        %v345 = vld [vmem:[#allocation6] sm:$0x1]
        %v346 = vld [vmem:[#allocation8] sm:$0x1]
        %vm347 = vcmask 1040384
        %vm348 = vsmask.f32 256
        %vm349 = vmand %vm347, %vm348
        %v350 = vld [vmem:[#allocation2] sm:$0x1]
        %v351 = vsel %vm349, 0, %v350
        %352 = vst [vmem:[#allocation2] sm:$0x1] %v351
        %v353 = vld [vmem:[#allocation2 + $0xc] sm:$0x1]
        %v354 = vsel %vm349, 0, %v353
        %355 = vst [vmem:[#allocation2 + $0xc] sm:$0x1] %v354
        %v356 = vld [vmem:[#allocation2 + $0x18] sm:$0x1]
        %v357 = vsel %vm349, 0, %v356
        %358 = vst [vmem:[#allocation2 + $0x18] sm:$0x1] %v357
        %v359 = vld [vmem:[#allocation2 + $0x24] sm:$0x1]
        %v360 = vsel %vm349, 0, %v359
        %361 = vst [vmem:[#allocation2 + $0x24] sm:$0x1] %v360
        %v362 = vld [vmem:[#allocation2 + $0x30] sm:$0x1]
        %v363 = vsel %vm349, 0, %v362
        %364 = vst [vmem:[#allocation2 + $0x30] sm:$0x1] %v363
        %v365 = vld [vmem:[#allocation2 + $0x3c] sm:$0x1]
        %v366 = vsel %vm349, 0, %v365
        %367 = vst [vmem:[#allocation2 + $0x3c] sm:$0x1] %v366
        %v368 = vld [vmem:[#allocation2 + $0x48] sm:$0x1]
        %v369 = vsel %vm349, 0, %v368
        %370 = vst [vmem:[#allocation2 + $0x48] sm:$0x1] %v369
        %v371 = vld [vmem:[#allocation2 + $0x54] sm:$0x1]
        %v372 = vsel %vm349, 0, %v371
        %373 = vst [vmem:[#allocation2 + $0x54] sm:$0x1] %v372
        %v374 = vld [vmem:[#allocation2 + $0x60] sm:$0x1]
        %v375 = vsel %vm349, 0, %v374
        %376 = vst [vmem:[#allocation2 + $0x60] sm:$0x1] %v375
        %v377 = vld [vmem:[#allocation2 + $0x6c] sm:$0x1]
        %v378 = vsel %vm349, 0, %v377
        %379 = vst [vmem:[#allocation2 + $0x6c] sm:$0x1] %v378
        %vm380 = vsmask.f32 7938
        %vm381 = vmand %vm347, %vm380
        %v382 = vld [vmem:[#allocation2 + $0x8] sm:$0x1]
        %v383 = vsel %vm381, 0, %v382
        %384 = vst [vmem:[#allocation2 + $0x8] sm:$0x1] %v383
        %v385 = vld [vmem:[#allocation2 + $0x14] sm:$0x1]
        %v386 = vsel %vm381, 0, %v385
        %387 = vst [vmem:[#allocation2 + $0x14] sm:$0x1] %v386
        %v388 = vld [vmem:[#allocation2 + $0x20] sm:$0x1]
        %v389 = vsel %vm381, 0, %v388
        %390 = vst [vmem:[#allocation2 + $0x20] sm:$0x1] %v389
        %v391 = vld [vmem:[#allocation2 + $0x2c] sm:$0x1]
        %v392 = vsel %vm381, 0, %v391
        %393 = vst [vmem:[#allocation2 + $0x2c] sm:$0x1] %v392
        %v394 = vld [vmem:[#allocation2 + $0x38] sm:$0x1]
        %v395 = vsel %vm381, 0, %v394
        %396 = vst [vmem:[#allocation2 + $0x38] sm:$0x1] %v395
        %v397 = vld [vmem:[#allocation2 + $0x44] sm:$0x1]
        %v398 = vsel %vm381, 0, %v397
        %399 = vst [vmem:[#allocation2 + $0x44] sm:$0x1] %v398
        %v400 = vld [vmem:[#allocation2 + $0x50] sm:$0x1]
        %v401 = vsel %vm381, 0, %v400
        %402 = vst [vmem:[#allocation2 + $0x50] sm:$0x1] %v401
        %v403 = vld [vmem:[#allocation2 + $0x5c] sm:$0x1]
        %v404 = vsel %vm381, 0, %v403
        %405 = vst [vmem:[#allocation2 + $0x5c] sm:$0x1] %v404
        %v406 = vld [vmem:[#allocation2 + $0x68] sm:$0x1]
        %v407 = vsel %vm381, 0, %v406
        %408 = vst [vmem:[#allocation2 + $0x68] sm:$0x1] %v407
        %v409 = vld [vmem:[#allocation2 + $0x74] sm:$0x1]
        %v410 = vsel %vm381, 0, %v409
        %411 = vst [vmem:[#allocation2 + $0x74] sm:$0x1] %v410
        %s412 = smul.u32 %s344, 2
        %s413 = smul.addr %s412, 4
        %s414 = scalar_lea.vmem %s291, %s413 [#allocation3]
        %v415 = vld [vmem:[%s414] sm:$0xf]
        %v416 = vld [vmem:[%s414 + $0x4] sm:$0xf]
        %v417 = vld [vmem:[%s414 + $0x8] sm:$0xf]
        %v418 = vld [vmem:[%s414 + $0xc] sm:$0xf]
        %v419 = vld [vmem:[%s414 + $0x10] sm:$0xf]
        %v420 = vld [vmem:[%s414 + $0x14] sm:$0xf]
        %v421 = vld [vmem:[%s414 + $0x18] sm:$0xf]
        %v422 = vld [vmem:[%s414 + $0x1c] sm:$0xf]
        %v423 = vld [vmem:[%s414 + $0x20] sm:$0xf]
        %v424 = vld [vmem:[%s414 + $0x24] sm:$0xf]
        %v425 = vld [vmem:[%s414 + $0x28] sm:$0xf]
        %v426 = vld [vmem:[%s414 + $0x2c] sm:$0xf]
        %v427 = vld [vmem:[%s414 + $0x30] sm:$0xf]
        %v428 = vld [vmem:[%s414 + $0x34] sm:$0xf]
        %v429 = vld [vmem:[%s414 + $0x38] sm:$0xf]
        %v430 = vld [vmem:[%s414 + $0x3c] sm:$0xf]
        %v431 = vunpack.c.l.bf16 %v415
        %v432 = vunpack.c.l.bf16 %v416
        %v433 = vunpack.c.l.bf16 %v417
        %v434 = vunpack.c.l.bf16 %v418
        %v435 = vunpack.c.l.bf16 %v419
        %v436 = vunpack.c.l.bf16 %v420
        %v437 = vunpack.c.l.bf16 %v421
        %v438 = vunpack.c.l.bf16 %v422
        %v439 = vunpack.c.l.bf16 %v423
        %v440 = vunpack.c.l.bf16 %v424
        %v441 = vunpack.c.l.bf16 %v425
        %v442 = vunpack.c.l.bf16 %v426
        %v443 = vunpack.c.l.bf16 %v427
        %v444 = vunpack.c.l.bf16 %v428
        %v445 = vunpack.c.l.bf16 %v429
        %v446 = vunpack.c.l.bf16 %v430
        %v448 = vlaneseq
        %v449 = vshrl.u32 %v448, 7
        %v450 = vsub.s32 0, %v449
        %v451 = vrot.slane %v345, %v450
        %v453 = vmul.f32 %v431, %v451
        %v454 = vmul.f32 %v432, %v451
        %v455 = vmul.f32 %v433, %v451
        %v456 = vmul.f32 %v434, %v451
        %v457 = vmul.f32 %v435, %v451
        %v458 = vmul.f32 %v436, %v451
        %v459 = vmul.f32 %v437, %v451
        %v460 = vmul.f32 %v438, %v451
        %v461 = vmul.f32 %v439, %v451
        %v462 = vmul.f32 %v440, %v451
        %v463 = vmul.f32 %v441, %v451
        %v464 = vmul.f32 %v442, %v451
        %v465 = vmul.f32 %v443, %v451
        %v466 = vmul.f32 %v444, %v451
        %v467 = vmul.f32 %v445, %v451
        %v468 = vmul.f32 %v446, %v451
        %v470 = vlaneseq
        %v471 = vshrl.u32 %v470, 7
        %v472 = vsub.s32 0, %v471
        %v473 = vrot.slane %v346, %v472
        %v475 = vadd.f32 %v453, %v473
        %v476 = vadd.f32 %v454, %v473
        %v477 = vadd.f32 %v455, %v473
        %v478 = vadd.f32 %v456, %v473
        %v479 = vadd.f32 %v457, %v473
        %v480 = vadd.f32 %v458, %v473
        %v481 = vadd.f32 %v459, %v473
        %v482 = vadd.f32 %v460, %v473
        %v483 = vadd.f32 %v461, %v473
        %v484 = vadd.f32 %v462, %v473
        %v485 = vadd.f32 %v463, %v473
        %v486 = vadd.f32 %v464, %v473
        %v487 = vadd.f32 %v465, %v473
        %v488 = vadd.f32 %v466, %v473
        %v489 = vadd.f32 %v467, %v473
        %v490 = vadd.f32 %v468, %v473
        %v491 = vmax.f32 %v475, 0.0
        %v492 = vmax.f32 %v476, 0.0
        %v493 = vmax.f32 %v477, 0.0
        %v494 = vmax.f32 %v478, 0.0
        %v495 = vmax.f32 %v479, 0.0
        %v496 = vmax.f32 %v480, 0.0
        %v497 = vmax.f32 %v481, 0.0
        %v498 = vmax.f32 %v482, 0.0
        %v499 = vmax.f32 %v483, 0.0
        %v500 = vmax.f32 %v484, 0.0
        %v501 = vmax.f32 %v485, 0.0
        %v502 = vmax.f32 %v486, 0.0
        %v503 = vmax.f32 %v487, 0.0
        %v504 = vmax.f32 %v488, 0.0
        %v505 = vmax.f32 %v489, 0.0
        %v506 = vmax.f32 %v490, 0.0
        %v507 = vpack.c.bf16 %v492, %v491
        %v508 = vpack.c.bf16 %v494, %v493
        %v509 = vpack.c.bf16 %v496, %v495
        %v510 = vpack.c.bf16 %v498, %v497
        %v511 = vpack.c.bf16 %v500, %v499
        %v512 = vpack.c.bf16 %v502, %v501
        %v513 = vpack.c.bf16 %v504, %v503
        %v514 = vpack.c.bf16 %v506, %v505
        %v523 = vunpack.c.l.b16 %v507
        %v524 = vunpack.c.h.b16 %v507
        %v525 = vunpack.c.l.b16 %v508
        %v526 = vunpack.c.h.b16 %v508
        %v527 = vunpack.c.l.b16 %v509
        %v528 = vunpack.c.h.b16 %v509
        %v529 = vunpack.c.l.b16 %v510
        %v530 = vunpack.c.h.b16 %v510
        %v531 = vunpack.c.l.b16 %v511
        %v532 = vunpack.c.h.b16 %v511
        %v533 = vunpack.c.l.b16 %v512
        %v534 = vunpack.c.h.b16 %v512
        %v535 = vunpack.c.l.b16 %v513
        %v536 = vunpack.c.h.b16 %v513
        %v537 = vunpack.c.l.b16 %v514
        %v538 = vunpack.c.h.b16 %v514
        %v539 = vpack.c.b16 %v523, %v523
        %v540 = vpack.c.b16 %v524, %v524
        %v541 = vpack.c.b16 %v525, %v525
        %v542 = vpack.c.b16 %v526, %v526
        %v543 = vpack.c.b16 %v527, %v527
        %v544 = vpack.c.b16 %v528, %v528
        %v545 = vpack.c.b16 %v529, %v529
        %v546 = vpack.c.b16 %v530, %v530
        %v547 = vpack.c.b16 %v531, %v531
        %v548 = vpack.c.b16 %v532, %v532
        %v549 = vpack.c.b16 %v533, %v533
        %v550 = vpack.c.b16 %v534, %v534
        %v551 = vpack.c.b16 %v535, %v535
        %v552 = vpack.c.b16 %v536, %v536
        %v553 = vpack.c.b16 %v537, %v537
        %v554 = vpack.c.b16 %v538, %v538
        %vm555 = vsmask.f32 4368
        %vm556 = vmor %vm348, %vm555
        %v558 = vshrl.u32 %v539, 16
        %v560 = vrot.slane %v558, 7
        %v561 = vshll.u32 %v539, 16
        %v563 = vor.u32 %v560, %v561
        %v564 = vrot.slane %v560, 4
        %v566 = vshrl.u32 %v540, 16
        %v568 = vrot.slane %v566, 7
        %v569 = vshll.u32 %v540, 16
        %v571 = vor.u32 %v568, %v569
        %v572 = vsel %vm556, %v564, %v571
        %v573 = vrot.slane %v568, 4
        %v575 = vshrl.u32 %v541, 16
        %v577 = vrot.slane %v575, 7
        %v578 = vshll.u32 %v541, 16
        %v580 = vor.u32 %v577, %v578
        %v581 = vrot.slane %v577, 4
        %v583 = vshrl.u32 %v542, 16
        %v585 = vrot.slane %v583, 7
        %v586 = vshll.u32 %v542, 16
        %v588 = vor.u32 %v585, %v586
        %v589 = vsel %vm556, %v581, %v588
        %v590 = vrot.slane %v585, 4
        %v592 = vshrl.u32 %v543, 16
        %v594 = vrot.slane %v592, 7
        %v595 = vshll.u32 %v543, 16
        %v597 = vor.u32 %v594, %v595
        %v598 = vrot.slane %v594, 4
        %v600 = vshrl.u32 %v544, 16
        %v602 = vrot.slane %v600, 7
        %v603 = vshll.u32 %v544, 16
        %v605 = vor.u32 %v602, %v603
        %v606 = vsel %vm556, %v598, %v605
        %v607 = vrot.slane %v602, 4
        %v609 = vshrl.u32 %v545, 16
        %v611 = vrot.slane %v609, 7
        %v612 = vshll.u32 %v545, 16
        %v614 = vor.u32 %v611, %v612
        %v615 = vrot.slane %v611, 4
        %v617 = vshrl.u32 %v546, 16
        %v619 = vrot.slane %v617, 7
        %v620 = vshll.u32 %v546, 16
        %v622 = vor.u32 %v619, %v620
        %v623 = vsel %vm556, %v615, %v622
        %v624 = vrot.slane %v619, 4
        %v626 = vshrl.u32 %v547, 16
        %v628 = vrot.slane %v626, 7
        %v629 = vshll.u32 %v547, 16
        %v631 = vor.u32 %v628, %v629
        %v632 = vrot.slane %v628, 4
        %v634 = vshrl.u32 %v548, 16
        %v636 = vrot.slane %v634, 7
        %v637 = vshll.u32 %v548, 16
        %v639 = vor.u32 %v636, %v637
        %v640 = vsel %vm556, %v632, %v639
        %v641 = vrot.slane %v636, 4
        %v643 = vshrl.u32 %v549, 16
        %v645 = vrot.slane %v643, 7
        %v646 = vshll.u32 %v549, 16
        %v648 = vor.u32 %v645, %v646
        %v649 = vrot.slane %v645, 4
        %v651 = vshrl.u32 %v550, 16
        %v653 = vrot.slane %v651, 7
        %v654 = vshll.u32 %v550, 16
        %v656 = vor.u32 %v653, %v654
        %v657 = vsel %vm556, %v649, %v656
        %v658 = vrot.slane %v653, 4
        %v660 = vshrl.u32 %v551, 16
        %v662 = vrot.slane %v660, 7
        %v663 = vshll.u32 %v551, 16
        %v665 = vor.u32 %v662, %v663
        %v666 = vrot.slane %v662, 4
        %v668 = vshrl.u32 %v552, 16
        %v670 = vrot.slane %v668, 7
        %v671 = vshll.u32 %v552, 16
        %v673 = vor.u32 %v670, %v671
        %v674 = vsel %vm556, %v666, %v673
        %v675 = vrot.slane %v670, 4
        %v677 = vshrl.u32 %v553, 16
        %v679 = vrot.slane %v677, 7
        %v680 = vshll.u32 %v553, 16
        %v682 = vor.u32 %v679, %v680
        %v683 = vrot.slane %v679, 4
        %v685 = vshrl.u32 %v554, 16
        %v687 = vrot.slane %v685, 7
        %v688 = vshll.u32 %v554, 16
        %v690 = vor.u32 %v687, %v688
        %v691 = vsel %vm556, %v683, %v690
        %v692 = vrot.slane %v687, 4
        %s717 = scalar_lea.vmem [#allocation2], 12
        %vm718 = vcmask 1043456
        %vm719 = vmand %vm718, %vm380
        %v720 = vld [vmem:[%s717] sm:$0xf]
        %v721 = vsel %vm719, %v563, %v720
        %722 = vst [vmem:[%s717] sm:$0xf] %v721
        %723 = vst [vmem:[%s717 + $0x4] sm:$0xf] %v572
        %v724 = vld [vmem:[%s717 + $0x8] sm:$0x1]
        %v725 = vsel %vm349, %v573, %v724
        %726 = vst [vmem:[%s717 + $0x8] sm:$0x1] %v725
        %v727 = vld [vmem:[%s717 + $0xc] sm:$0xf]
        %v728 = vsel %vm719, %v580, %v727
        %729 = vst [vmem:[%s717 + $0xc] sm:$0xf] %v728
        %730 = vst [vmem:[%s717 + $0x10] sm:$0xf] %v589
        %v731 = vld [vmem:[%s717 + $0x14] sm:$0x1]
        %v732 = vsel %vm349, %v590, %v731
        %733 = vst [vmem:[%s717 + $0x14] sm:$0x1] %v732
        %v734 = vld [vmem:[%s717 + $0x18] sm:$0xf]
        %v735 = vsel %vm719, %v597, %v734
        %736 = vst [vmem:[%s717 + $0x18] sm:$0xf] %v735
        %737 = vst [vmem:[%s717 + $0x1c] sm:$0xf] %v606
        %v738 = vld [vmem:[%s717 + $0x20] sm:$0x1]
        %v739 = vsel %vm349, %v607, %v738
        %740 = vst [vmem:[%s717 + $0x20] sm:$0x1] %v739
        %v741 = vld [vmem:[%s717 + $0x24] sm:$0xf]
        %v742 = vsel %vm719, %v614, %v741
        %743 = vst [vmem:[%s717 + $0x24] sm:$0xf] %v742
        %744 = vst [vmem:[%s717 + $0x28] sm:$0xf] %v623
        %v745 = vld [vmem:[%s717 + $0x2c] sm:$0x1]
        %v746 = vsel %vm349, %v624, %v745
        %747 = vst [vmem:[%s717 + $0x2c] sm:$0x1] %v746
        %v748 = vld [vmem:[%s717 + $0x30] sm:$0xf]
        %v749 = vsel %vm719, %v631, %v748
        %750 = vst [vmem:[%s717 + $0x30] sm:$0xf] %v749
        %751 = vst [vmem:[%s717 + $0x34] sm:$0xf] %v640
        %v752 = vld [vmem:[%s717 + $0x38] sm:$0x1]
        %v753 = vsel %vm349, %v641, %v752
        %754 = vst [vmem:[%s717 + $0x38] sm:$0x1] %v753
        %v755 = vld [vmem:[%s717 + $0x3c] sm:$0xf]
        %v756 = vsel %vm719, %v648, %v755
        %757 = vst [vmem:[%s717 + $0x3c] sm:$0xf] %v756
        %758 = vst [vmem:[%s717 + $0x40] sm:$0xf] %v657
        %v759 = vld [vmem:[%s717 + $0x44] sm:$0x1]
        %v760 = vsel %vm349, %v658, %v759
        %761 = vst [vmem:[%s717 + $0x44] sm:$0x1] %v760
        %v762 = vld [vmem:[%s717 + $0x48] sm:$0xf]
        %v763 = vsel %vm719, %v665, %v762
        %764 = vst [vmem:[%s717 + $0x48] sm:$0xf] %v763
        %765 = vst [vmem:[%s717 + $0x4c] sm:$0xf] %v674
        %v766 = vld [vmem:[%s717 + $0x50] sm:$0x1]
        %v767 = vsel %vm349, %v675, %v766
        %768 = vst [vmem:[%s717 + $0x50] sm:$0x1] %v767
        %v769 = vld [vmem:[%s717 + $0x54] sm:$0xf]
        %v770 = vsel %vm719, %v682, %v769
        %771 = vst [vmem:[%s717 + $0x54] sm:$0xf] %v770
        %772 = vst [vmem:[%s717 + $0x58] sm:$0xf] %v691
        %v773 = vld [vmem:[%s717 + $0x5c] sm:$0x1]
        %v774 = vsel %vm349, %v692, %v773
        %775 = vst [vmem:[%s717 + $0x5c] sm:$0x1] %v774
        %s776 = ssub.s32 %s344, 1
        %p777 = scmp.gt.s32.totalorder %s776, 0
        %s778 = scalar_select %p777, %s776, 0
        %s779 = smul.u32 %s778, 2
        %s780 = smul.addr %s779, 4
        %s781 = scalar_lea.vmem %s291, %s780 [#allocation3]
        %v782 = vld [vmem:[%s781] sm:$0xf]
        %v783 = vld [vmem:[%s781 + $0x4] sm:$0xf]
        %v784 = vunpack.c.l.bf16 %v782
        %v785 = vunpack.c.l.bf16 %v783
        %v786 = vmul.f32 %v784, %v451
        %v787 = vmul.f32 %v785, %v451
        %v788 = vadd.f32 %v786, %v473
        %v789 = vadd.f32 %v787, %v473
        %v790 = vmax.f32 %v788, 0.0
        %v791 = vmax.f32 %v789, 0.0
        %v792 = vpack.c.bf16 %v791, %v790
        %p793 = scmp.eq.s32.totalorder %s34, 0
        %s794 = scalar_select %p793, 1, 0
        %v795 = vstv %s794
        %vm796 = vcmp.eq.s32.totalorder %v795, 1
        %v797 = vsel %vm796, 0, %v792
        %v799 = vunpack.c.l.b16 %v797
        %v800 = vunpack.c.h.b16 %v797
        %v801 = vpack.c.b16 %v799, %v799
        %v802 = vpack.c.b16 %v800, %v800
        %v804 = vshrl.u32 %v801, 16
        %v806 = vrot.slane %v804, 7
        %v807 = vshll.u32 %v801, 16
        %v809 = vor.u32 %v806, %v807
        %v810 = vrot.slane %v806, 4
        %v812 = vshrl.u32 %v802, 16
        %v814 = vrot.slane %v812, 7
        %v815 = vshll.u32 %v802, 16
        %v817 = vor.u32 %v814, %v815
        %v818 = vsel %vm556, %v810, %v817
        %v819 = vrot.slane %v814, 4
        %v823 = vld [vmem:[#allocation2] sm:$0xf]
        %v824 = vsel %vm719, %v809, %v823
        %825 = vst [vmem:[#allocation2] sm:$0xf] %v824
        %826 = vst [vmem:[#allocation2 + $0x4] sm:$0xf] %v818
        %v827 = vld [vmem:[#allocation2 + $0x8] sm:$0x1]
        %v828 = vsel %vm349, %v819, %v827
        %829 = vst [vmem:[#allocation2 + $0x8] sm:$0x1] %v828
        %s830 = sadd.s32 %s344, 8
        %p831 = scmp.lt.s32.totalorder %s830, 15
        %s832 = scalar_select %p831, %s830, 15
        %s833 = smul.u32 %s832, 2
        %s834 = smul.addr %s833, 4
        %s835 = scalar_lea.vmem %s291, %s834 [#allocation3]
        %v836 = vld [vmem:[%s835] sm:$0xf]
        %v837 = vld [vmem:[%s835 + $0x4] sm:$0xf]
        %v838 = vunpack.c.l.bf16 %v836
        %v839 = vunpack.c.l.bf16 %v837
        %v840 = vmul.f32 %v838, %v451
        %v841 = vmul.f32 %v839, %v451
        %v842 = vadd.f32 %v840, %v473
        %v843 = vadd.f32 %v841, %v473
        %v844 = vmax.f32 %v842, 0.0
        %v845 = vmax.f32 %v843, 0.0
        %v846 = vpack.c.bf16 %v845, %v844
        %p847 = scmp.eq.s32.totalorder %s34, 1
        %s848 = scalar_select %p847, 1, 0
        %v849 = vstv %s848
        %vm850 = vcmp.eq.s32.totalorder %v849, 1
        %v851 = vsel %vm850, 0, %v846
        %v853 = vunpack.c.l.b16 %v851
        %v854 = vunpack.c.h.b16 %v851
        %v855 = vpack.c.b16 %v853, %v853
        %v856 = vpack.c.b16 %v854, %v854
        %v858 = vshrl.u32 %v855, 16
        %v860 = vrot.slane %v858, 7
        %v861 = vshll.u32 %v855, 16
        %v863 = vor.u32 %v860, %v861
        %v864 = vrot.slane %v860, 4
        %v866 = vshrl.u32 %v856, 16
        %v868 = vrot.slane %v866, 7
        %v869 = vshll.u32 %v856, 16
        %v871 = vor.u32 %v868, %v869
        %v872 = vsel %vm556, %v864, %v871
        %v873 = vrot.slane %v868, 4
        %s877 = scalar_lea.vmem [#allocation2], 108
        %v878 = vld [vmem:[%s877] sm:$0xf]
        %v879 = vsel %vm719, %v863, %v878
        %880 = vst [vmem:[%s877] sm:$0xf] %v879
        %881 = vst [vmem:[%s877 + $0x4] sm:$0xf] %v872
        %v882 = vld [vmem:[%s877 + $0x8] sm:$0x1]
        %v883 = vsel %vm349, %v873, %v882
        %884 = vst [vmem:[%s877 + $0x8] sm:$0x1] %v883
        %v885 = vld [vmem:[#allocation2] sm:$0xf]
        %v886 = vld [vmem:[#allocation2 + $0x4] sm:$0xf]
        %v887 = vld [vmem:[#allocation2 + $0xc] sm:$0xf]
        %v888 = vld [vmem:[#allocation2 + $0x10] sm:$0xf]
        %v889 = vld [vmem:[#allocation2 + $0x18] sm:$0xf]
        %v890 = vld [vmem:[#allocation2 + $0x1c] sm:$0xf]
        %v891 = vld [vmem:[#allocation2 + $0x24] sm:$0xf]
        %v892 = vld [vmem:[#allocation2 + $0x28] sm:$0xf]
        %v893 = vld [vmem:[#allocation2 + $0x30] sm:$0xf]
        %v894 = vld [vmem:[#allocation2 + $0x34] sm:$0xf]
        %v895 = vld [vmem:[#allocation2 + $0x3c] sm:$0xf]
        %v896 = vld [vmem:[#allocation2 + $0x40] sm:$0xf]
        %v897 = vld [vmem:[#allocation2 + $0x48] sm:$0xf]
        %v898 = vld [vmem:[#allocation2 + $0x4c] sm:$0xf]
        %v899 = vld [vmem:[#allocation2 + $0x54] sm:$0xf]
        %v900 = vld [vmem:[#allocation2 + $0x58] sm:$0xf]
        %v901 = vld [vmem:[#allocation2 + $0x8] sm:$0x1]
        %v902 = vld [vmem:[#allocation2 + $0x14] sm:$0x1]
        %v903 = vld [vmem:[#allocation2 + $0x20] sm:$0x1]
        %v904 = vld [vmem:[#allocation2 + $0x2c] sm:$0x1]
        %v905 = vld [vmem:[#allocation2 + $0x38] sm:$0x1]
        %v906 = vld [vmem:[#allocation2 + $0x44] sm:$0x1]
        %v907 = vld [vmem:[#allocation2 + $0x50] sm:$0x1]
        %v908 = vld [vmem:[#allocation2 + $0x5c] sm:$0x1]
        %vm909 = vsmask.f32 3328
        %vm910 = vsmask.f32 7440
        %vm911 = vmor %vm909, %vm910
        %v913 = vshrl.u32 %v885, 16
        %v915 = vrot.slane %v913, 4
        %v916 = vshll.u32 %v885, 16
        %v918 = vrot.slane %v916, 5
        %v919 = vor.u32 %v915, %v918
        %v920 = vrot.slane %v919, 4
        %v922 = vshll.u32 %v886, 16
        %v924 = vrot.slane %v922, 5
        %v925 = vsel %vm911, %v920, %v924
        %v926 = vshrl.u32 %v886, 16
        %v928 = vrot.slane %v926, 4
        %v929 = vor.u32 %v928, %v924
        %v930 = vrot.slane %v929, 4
        %v932 = vshll.u32 %v901, 16
        %v934 = vrot.slane %v932, 5
        %v935 = vsel %vm911, %v930, %v934
        %v937 = vshrl.u32 %v887, 16
        %v939 = vrot.slane %v937, 4
        %v940 = vshll.u32 %v887, 16
        %v942 = vrot.slane %v940, 5
        %v943 = vor.u32 %v939, %v942
        %v944 = vrot.slane %v943, 4
        %v946 = vshll.u32 %v888, 16
        %v948 = vrot.slane %v946, 5
        %v949 = vsel %vm911, %v944, %v948
        %v950 = vshrl.u32 %v888, 16
        %v952 = vrot.slane %v950, 4
        %v953 = vor.u32 %v952, %v948
        %v954 = vrot.slane %v953, 4
        %v956 = vshll.u32 %v902, 16
        %v958 = vrot.slane %v956, 5
        %v959 = vsel %vm911, %v954, %v958
        %v961 = vshrl.u32 %v889, 16
        %v963 = vrot.slane %v961, 4
        %v964 = vshll.u32 %v889, 16
        %v966 = vrot.slane %v964, 5
        %v967 = vor.u32 %v963, %v966
        %v968 = vrot.slane %v967, 4
        %v970 = vshll.u32 %v890, 16
        %v972 = vrot.slane %v970, 5
        %v973 = vsel %vm911, %v968, %v972
        %v974 = vshrl.u32 %v890, 16
        %v976 = vrot.slane %v974, 4
        %v977 = vor.u32 %v976, %v972
        %v978 = vrot.slane %v977, 4
        %v980 = vshll.u32 %v903, 16
        %v982 = vrot.slane %v980, 5
        %v983 = vsel %vm911, %v978, %v982
        %v985 = vshrl.u32 %v891, 16
        %v987 = vrot.slane %v985, 4
        %v988 = vshll.u32 %v891, 16
        %v990 = vrot.slane %v988, 5
        %v991 = vor.u32 %v987, %v990
        %v992 = vrot.slane %v991, 4
        %v994 = vshll.u32 %v892, 16
        %v996 = vrot.slane %v994, 5
        %v997 = vsel %vm911, %v992, %v996
        %v998 = vshrl.u32 %v892, 16
        %v1000 = vrot.slane %v998, 4
        %v1001 = vor.u32 %v1000, %v996
        %v1002 = vrot.slane %v1001, 4
        %v1004 = vshll.u32 %v904, 16
        %v1006 = vrot.slane %v1004, 5
        %v1007 = vsel %vm911, %v1002, %v1006
        %v1009 = vshrl.u32 %v893, 16
        %v1011 = vrot.slane %v1009, 4
        %v1012 = vshll.u32 %v893, 16
        %v1014 = vrot.slane %v1012, 5
        %v1015 = vor.u32 %v1011, %v1014
        %v1016 = vrot.slane %v1015, 4
        %v1018 = vshll.u32 %v894, 16
        %v1020 = vrot.slane %v1018, 5
        %v1021 = vsel %vm911, %v1016, %v1020
        %v1022 = vshrl.u32 %v894, 16
        %v1024 = vrot.slane %v1022, 4
        %v1025 = vor.u32 %v1024, %v1020
        %v1026 = vrot.slane %v1025, 4
        %v1028 = vshll.u32 %v905, 16
        %v1030 = vrot.slane %v1028, 5
        %v1031 = vsel %vm911, %v1026, %v1030
        %v1033 = vshrl.u32 %v895, 16
        %v1035 = vrot.slane %v1033, 4
        %v1036 = vshll.u32 %v895, 16
        %v1038 = vrot.slane %v1036, 5
        %v1039 = vor.u32 %v1035, %v1038
        %v1040 = vrot.slane %v1039, 4
        %v1042 = vshll.u32 %v896, 16
        %v1044 = vrot.slane %v1042, 5
        %v1045 = vsel %vm911, %v1040, %v1044
        %v1046 = vshrl.u32 %v896, 16
        %v1048 = vrot.slane %v1046, 4
        %v1049 = vor.u32 %v1048, %v1044
        %v1050 = vrot.slane %v1049, 4
        %v1052 = vshll.u32 %v906, 16
        %v1054 = vrot.slane %v1052, 5
        %v1055 = vsel %vm911, %v1050, %v1054
        %v1057 = vshrl.u32 %v897, 16
        %v1059 = vrot.slane %v1057, 4
        %v1060 = vshll.u32 %v897, 16
        %v1062 = vrot.slane %v1060, 5
        %v1063 = vor.u32 %v1059, %v1062
        %v1064 = vrot.slane %v1063, 4
        %v1066 = vshll.u32 %v898, 16
        %v1068 = vrot.slane %v1066, 5
        %v1069 = vsel %vm911, %v1064, %v1068
        %v1070 = vshrl.u32 %v898, 16
        %v1072 = vrot.slane %v1070, 4
        %v1073 = vor.u32 %v1072, %v1068
        %v1074 = vrot.slane %v1073, 4
        %v1076 = vshll.u32 %v907, 16
        %v1078 = vrot.slane %v1076, 5
        %v1079 = vsel %vm911, %v1074, %v1078
        %v1081 = vshrl.u32 %v899, 16
        %v1083 = vrot.slane %v1081, 4
        %v1084 = vshll.u32 %v899, 16
        %v1086 = vrot.slane %v1084, 5
        %v1087 = vor.u32 %v1083, %v1086
        %v1088 = vrot.slane %v1087, 4
        %v1090 = vshll.u32 %v900, 16
        %v1092 = vrot.slane %v1090, 5
        %v1093 = vsel %vm911, %v1088, %v1092
        %v1094 = vshrl.u32 %v900, 16
        %v1096 = vrot.slane %v1094, 4
        %v1097 = vor.u32 %v1096, %v1092
        %v1098 = vrot.slane %v1097, 4
        %v1100 = vshll.u32 %v908, 16
        %v1102 = vrot.slane %v1100, 5
        %v1103 = vsel %vm911, %v1098, %v1102
        %v1104 = vld [vmem:[#allocation2] sm:$0xe]
        %v1105 = vld [vmem:[#allocation2 + $0xc] sm:$0xe]
        %v1106 = vld [vmem:[#allocation2 + $0x18] sm:$0xe]
        %v1107 = vld [vmem:[#allocation2 + $0x24] sm:$0xe]
        %v1108 = vld [vmem:[#allocation2 + $0x30] sm:$0xe]
        %v1109 = vld [vmem:[#allocation2 + $0x3c] sm:$0xe]
        %v1110 = vld [vmem:[#allocation2 + $0x48] sm:$0xe]
        %v1111 = vld [vmem:[#allocation2 + $0x54] sm:$0xe]
        %vm1136 = vcmask 1042432
        %vm1137 = vcmask 1046532
        %vm1138 = vmor %vm1136, %vm1137
        %v1139 = vrot.slane %v1104, 5
        %v1140 = vrot.slane %v1139, 4
        %v1141 = vrot.slane %v886, 5
        %v1142 = vsel %vm1138, %v1140, %v1141
        %v1143 = vrot.slane %v1141, 4
        %v1144 = vrot.slane %v901, 5
        %v1145 = vsel %vm1138, %v1143, %v1144
        %v1146 = vrot.slane %v1105, 5
        %v1147 = vrot.slane %v1146, 4
        %v1148 = vrot.slane %v888, 5
        %v1149 = vsel %vm1138, %v1147, %v1148
        %v1150 = vrot.slane %v1148, 4
        %v1151 = vrot.slane %v902, 5
        %v1152 = vsel %vm1138, %v1150, %v1151
        %v1153 = vrot.slane %v1106, 5
        %v1154 = vrot.slane %v1153, 4
        %v1155 = vrot.slane %v890, 5
        %v1156 = vsel %vm1138, %v1154, %v1155
        %v1157 = vrot.slane %v1155, 4
        %v1158 = vrot.slane %v903, 5
        %v1159 = vsel %vm1138, %v1157, %v1158
        %v1160 = vrot.slane %v1107, 5
        %v1161 = vrot.slane %v1160, 4
        %v1162 = vrot.slane %v892, 5
        %v1163 = vsel %vm1138, %v1161, %v1162
        %v1164 = vrot.slane %v1162, 4
        %v1165 = vrot.slane %v904, 5
        %v1166 = vsel %vm1138, %v1164, %v1165
        %v1167 = vrot.slane %v1108, 5
        %v1168 = vrot.slane %v1167, 4
        %v1169 = vrot.slane %v894, 5
        %v1170 = vsel %vm1138, %v1168, %v1169
        %v1171 = vrot.slane %v1169, 4
        %v1172 = vrot.slane %v905, 5
        %v1173 = vsel %vm1138, %v1171, %v1172
        %v1174 = vrot.slane %v1109, 5
        %v1175 = vrot.slane %v1174, 4
        %v1176 = vrot.slane %v896, 5
        %v1177 = vsel %vm1138, %v1175, %v1176
        %v1178 = vrot.slane %v1176, 4
        %v1179 = vrot.slane %v906, 5
        %v1180 = vsel %vm1138, %v1178, %v1179
        %v1181 = vrot.slane %v1110, 5
        %v1182 = vrot.slane %v1181, 4
        %v1183 = vrot.slane %v898, 5
        %v1184 = vsel %vm1138, %v1182, %v1183
        %v1185 = vrot.slane %v1183, 4
        %v1186 = vrot.slane %v907, 5
        %v1187 = vsel %vm1138, %v1185, %v1186
        %v1188 = vrot.slane %v1111, 5
        %v1189 = vrot.slane %v1188, 4
        %v1190 = vrot.slane %v900, 5
        %v1191 = vsel %vm1138, %v1189, %v1190
        %v1192 = vrot.slane %v1190, 4
        %v1193 = vrot.slane %v908, 5
        %v1194 = vsel %vm1138, %v1192, %v1193
        %v1203 = vunpack.c.l.b16 %v885
        %v1204 = vunpack.c.l.b16 %v886
        %v1205 = vunpack.c.l.b16 %v887
        %v1206 = vunpack.c.l.b16 %v888
        %v1207 = vunpack.c.l.b16 %v889
        %v1208 = vunpack.c.l.b16 %v890
        %v1209 = vunpack.c.l.b16 %v891
        %v1210 = vunpack.c.l.b16 %v892
        %v1211 = vunpack.c.l.b16 %v893
        %v1212 = vunpack.c.l.b16 %v894
        %v1213 = vunpack.c.l.b16 %v895
        %v1214 = vunpack.c.l.b16 %v896
        %v1215 = vunpack.c.l.b16 %v897
        %v1216 = vunpack.c.l.b16 %v898
        %v1217 = vunpack.c.l.b16 %v899
        %v1218 = vunpack.c.l.b16 %v900
        %v1219 = vpack.c.b16 %v1204, %v1203
        %v1220 = vpack.c.b16 %v1206, %v1205
        %v1221 = vpack.c.b16 %v1208, %v1207
        %v1222 = vpack.c.b16 %v1210, %v1209
        %v1223 = vpack.c.b16 %v1212, %v1211
        %v1224 = vpack.c.b16 %v1214, %v1213
        %v1225 = vpack.c.b16 %v1216, %v1215
        %v1226 = vpack.c.b16 %v1218, %v1217
        %v1235 = vunpack.c.l.b16 %v925
        %v1236 = vunpack.c.l.b16 %v935
        %v1237 = vunpack.c.l.b16 %v949
        %v1238 = vunpack.c.l.b16 %v959
        %v1239 = vunpack.c.l.b16 %v973
        %v1240 = vunpack.c.l.b16 %v983
        %v1241 = vunpack.c.l.b16 %v997
        %v1242 = vunpack.c.l.b16 %v1007
        %v1243 = vunpack.c.l.b16 %v1021
        %v1244 = vunpack.c.l.b16 %v1031
        %v1245 = vunpack.c.l.b16 %v1045
        %v1246 = vunpack.c.l.b16 %v1055
        %v1247 = vunpack.c.l.b16 %v1069
        %v1248 = vunpack.c.l.b16 %v1079
        %v1249 = vunpack.c.l.b16 %v1093
        %v1250 = vunpack.c.l.b16 %v1103
        %v1251 = vpack.c.b16 %v1236, %v1235
        %v1252 = vpack.c.b16 %v1238, %v1237
        %v1253 = vpack.c.b16 %v1240, %v1239
        %v1254 = vpack.c.b16 %v1242, %v1241
        %v1255 = vpack.c.b16 %v1244, %v1243
        %v1256 = vpack.c.b16 %v1246, %v1245
        %v1257 = vpack.c.b16 %v1248, %v1247
        %v1258 = vpack.c.b16 %v1250, %v1249
        %v1267 = vunpack.c.l.b16 %v1142
        %v1268 = vunpack.c.l.b16 %v1145
        %v1269 = vunpack.c.l.b16 %v1149
        %v1270 = vunpack.c.l.b16 %v1152
        %v1271 = vunpack.c.l.b16 %v1156
        %v1272 = vunpack.c.l.b16 %v1159
        %v1273 = vunpack.c.l.b16 %v1163
        %v1274 = vunpack.c.l.b16 %v1166
        %v1275 = vunpack.c.l.b16 %v1170
        %v1276 = vunpack.c.l.b16 %v1173
        %v1277 = vunpack.c.l.b16 %v1177
        %v1278 = vunpack.c.l.b16 %v1180
        %v1279 = vunpack.c.l.b16 %v1184
        %v1280 = vunpack.c.l.b16 %v1187
        %v1281 = vunpack.c.l.b16 %v1191
        %v1282 = vunpack.c.l.b16 %v1194
        %v1283 = vpack.c.b16 %v1268, %v1267
        %v1284 = vpack.c.b16 %v1270, %v1269
        %v1285 = vpack.c.b16 %v1272, %v1271
        %v1286 = vpack.c.b16 %v1274, %v1273
        %v1287 = vpack.c.b16 %v1276, %v1275
        %v1288 = vpack.c.b16 %v1278, %v1277
        %v1289 = vpack.c.b16 %v1280, %v1279
        %v1290 = vpack.c.b16 %v1282, %v1281
        %v1299 = vld [vmem:[#allocation9] sm:$0xf]
        %v1300 = vld [vmem:[#allocation9 + $0x4] sm:$0xf]
        %v1301 = vld [vmem:[#allocation9 + $0x8] sm:$0xf]
        %v1302 = vld [vmem:[#allocation9 + $0xc] sm:$0xf]
        %v1303 = vld [vmem:[#allocation9 + $0x10] sm:$0xf]
        %v1304 = vld [vmem:[#allocation9 + $0x14] sm:$0xf]
        %v1305 = vld [vmem:[#allocation9 + $0x18] sm:$0xf]
        %v1306 = vld [vmem:[#allocation9 + $0x1c] sm:$0xf]
        %v1307 = vld [vmem:[#allocation9 + $0x20] sm:$0xf]
        %v1308 = vld [vmem:[#allocation9 + $0x24] sm:$0xf]
        %v1309 = vld [vmem:[#allocation9 + $0x28] sm:$0xf]
        %v1310 = vld [vmem:[#allocation9 + $0x2c] sm:$0xf]
        %v1311 = vld [vmem:[#allocation9 + $0x30] sm:$0xf]
        %v1312 = vld [vmem:[#allocation9 + $0x34] sm:$0xf]
        %v1313 = vld [vmem:[#allocation9 + $0x38] sm:$0xf]
        %v1314 = vld [vmem:[#allocation9 + $0x3c] sm:$0xf]
        %v1315 = vld [vmem:[#allocation9 + $0x40] sm:$0xf]
        %v1316 = vld [vmem:[#allocation9 + $0x44] sm:$0xf]
        %v1317 = vld [vmem:[#allocation9 + $0x48] sm:$0xf]
        %v1318 = vld [vmem:[#allocation9 + $0x4c] sm:$0xf]
        %v1319 = vld [vmem:[#allocation9 + $0x50] sm:$0xf]
        %v1320 = vld [vmem:[#allocation9 + $0x54] sm:$0xf]
        %v1321 = vld [vmem:[#allocation9 + $0x58] sm:$0xf]
        %v1322 = vld [vmem:[#allocation9 + $0x5c] sm:$0xf]
        %v1323 = vld [vmem:[#allocation9 + $0x60] sm:$0xf]
        %v1324 = vld [vmem:[#allocation9 + $0x64] sm:$0xf]
        %v1325 = vld [vmem:[#allocation9 + $0x68] sm:$0xf]
        %v1326 = vld [vmem:[#allocation9 + $0x6c] sm:$0xf]
        %v1327 = vld [vmem:[#allocation9 + $0x70] sm:$0xf]
        %v1328 = vld [vmem:[#allocation9 + $0x74] sm:$0xf]
        %v1329 = vld [vmem:[#allocation9 + $0x78] sm:$0xf]
        %v1330 = vld [vmem:[#allocation9 + $0x7c] sm:$0xf]
        %v1331 = vld [vmem:[#allocation9 + $0x80] sm:$0xf]
        %v1332 = vld [vmem:[#allocation9 + $0x84] sm:$0xf]
        %v1333 = vld [vmem:[#allocation9 + $0x88] sm:$0xf]
        %v1334 = vld [vmem:[#allocation9 + $0x8c] sm:$0xf]
        %v1335 = vld [vmem:[#allocation9 + $0x90] sm:$0xf]
        %v1336 = vld [vmem:[#allocation9 + $0x94] sm:$0xf]
        %v1337 = vld [vmem:[#allocation9 + $0x98] sm:$0xf]
        %v1338 = vld [vmem:[#allocation9 + $0x9c] sm:$0xf]
        %v1339 = vld [vmem:[#allocation9 + $0xa0] sm:$0xf]
        %v1340 = vld [vmem:[#allocation9 + $0xa4] sm:$0xf]
        %v1341 = vld [vmem:[#allocation9 + $0xa8] sm:$0xf]
        %v1342 = vld [vmem:[#allocation9 + $0xac] sm:$0xf]
        %v1343 = vld [vmem:[#allocation9 + $0xb0] sm:$0xf]
        %v1344 = vld [vmem:[#allocation9 + $0xb4] sm:$0xf]
        %v1345 = vld [vmem:[#allocation9 + $0xb8] sm:$0xf]
        %v1346 = vld [vmem:[#allocation9 + $0xbc] sm:$0xf]
        %v1347 = vld [vmem:[%s717] sm:$0xf]
        %v1348 = vld [vmem:[%s717 + $0x4] sm:$0xf]
        %v1349 = vld [vmem:[%s717 + $0xc] sm:$0xf]
        %v1350 = vld [vmem:[%s717 + $0x10] sm:$0xf]
        %v1351 = vld [vmem:[%s717 + $0x18] sm:$0xf]
        %v1352 = vld [vmem:[%s717 + $0x1c] sm:$0xf]
        %v1353 = vld [vmem:[%s717 + $0x24] sm:$0xf]
        %v1354 = vld [vmem:[%s717 + $0x28] sm:$0xf]
        %v1355 = vld [vmem:[%s717 + $0x30] sm:$0xf]
        %v1356 = vld [vmem:[%s717 + $0x34] sm:$0xf]
        %v1357 = vld [vmem:[%s717 + $0x3c] sm:$0xf]
        %v1358 = vld [vmem:[%s717 + $0x40] sm:$0xf]
        %v1359 = vld [vmem:[%s717 + $0x48] sm:$0xf]
        %v1360 = vld [vmem:[%s717 + $0x4c] sm:$0xf]
        %v1361 = vld [vmem:[%s717 + $0x54] sm:$0xf]
        %v1362 = vld [vmem:[%s717 + $0x58] sm:$0xf]
        %v1363 = vld [vmem:[%s717 + $0x8] sm:$0x1]
        %v1364 = vld [vmem:[%s717 + $0x14] sm:$0x1]
        %v1365 = vld [vmem:[%s717 + $0x20] sm:$0x1]
        %v1366 = vld [vmem:[%s717 + $0x2c] sm:$0x1]
        %v1367 = vld [vmem:[%s717 + $0x38] sm:$0x1]
        %v1368 = vld [vmem:[%s717 + $0x44] sm:$0x1]
        %v1369 = vld [vmem:[%s717 + $0x50] sm:$0x1]
        %v1370 = vld [vmem:[%s717 + $0x5c] sm:$0x1]
        %v1372 = vshrl.u32 %v1347, 16
        %v1374 = vrot.slane %v1372, 4
        %v1375 = vshll.u32 %v1347, 16
        %v1377 = vrot.slane %v1375, 5
        %v1378 = vor.u32 %v1374, %v1377
        %v1379 = vrot.slane %v1378, 4
        %v1381 = vshll.u32 %v1348, 16
        %v1383 = vrot.slane %v1381, 5
        %v1384 = vsel %vm911, %v1379, %v1383
        %v1385 = vshrl.u32 %v1348, 16
        %v1387 = vrot.slane %v1385, 4
        %v1388 = vor.u32 %v1387, %v1383
        %v1389 = vrot.slane %v1388, 4
        %v1391 = vshll.u32 %v1363, 16
        %v1393 = vrot.slane %v1391, 5
        %v1394 = vsel %vm911, %v1389, %v1393
        %v1396 = vshrl.u32 %v1349, 16
        %v1398 = vrot.slane %v1396, 4
        %v1399 = vshll.u32 %v1349, 16
        %v1401 = vrot.slane %v1399, 5
        %v1402 = vor.u32 %v1398, %v1401
        %v1403 = vrot.slane %v1402, 4
        %v1405 = vshll.u32 %v1350, 16
        %v1407 = vrot.slane %v1405, 5
        %v1408 = vsel %vm911, %v1403, %v1407
        %v1409 = vshrl.u32 %v1350, 16
        %v1411 = vrot.slane %v1409, 4
        %v1412 = vor.u32 %v1411, %v1407
        %v1413 = vrot.slane %v1412, 4
        %v1415 = vshll.u32 %v1364, 16
        %v1417 = vrot.slane %v1415, 5
        %v1418 = vsel %vm911, %v1413, %v1417
        %v1420 = vshrl.u32 %v1351, 16
        %v1422 = vrot.slane %v1420, 4
        %v1423 = vshll.u32 %v1351, 16
        %v1425 = vrot.slane %v1423, 5
        %v1426 = vor.u32 %v1422, %v1425
        %v1427 = vrot.slane %v1426, 4
        %v1429 = vshll.u32 %v1352, 16
        %v1431 = vrot.slane %v1429, 5
        %v1432 = vsel %vm911, %v1427, %v1431
        %v1433 = vshrl.u32 %v1352, 16
        %v1435 = vrot.slane %v1433, 4
        %v1436 = vor.u32 %v1435, %v1431
        %v1437 = vrot.slane %v1436, 4
        %v1439 = vshll.u32 %v1365, 16
        %v1441 = vrot.slane %v1439, 5
        %v1442 = vsel %vm911, %v1437, %v1441
        %v1444 = vshrl.u32 %v1353, 16
        %v1446 = vrot.slane %v1444, 4
        %v1447 = vshll.u32 %v1353, 16
        %v1449 = vrot.slane %v1447, 5
        %v1450 = vor.u32 %v1446, %v1449
        %v1451 = vrot.slane %v1450, 4
        %v1453 = vshll.u32 %v1354, 16
        %v1455 = vrot.slane %v1453, 5
        %v1456 = vsel %vm911, %v1451, %v1455
        %v1457 = vshrl.u32 %v1354, 16
        %v1459 = vrot.slane %v1457, 4
        %v1460 = vor.u32 %v1459, %v1455
        %v1461 = vrot.slane %v1460, 4
        %v1463 = vshll.u32 %v1366, 16
        %v1465 = vrot.slane %v1463, 5
        %v1466 = vsel %vm911, %v1461, %v1465
        %v1468 = vshrl.u32 %v1355, 16
        %v1470 = vrot.slane %v1468, 4
        %v1471 = vshll.u32 %v1355, 16
        %v1473 = vrot.slane %v1471, 5
        %v1474 = vor.u32 %v1470, %v1473
        %v1475 = vrot.slane %v1474, 4
        %v1477 = vshll.u32 %v1356, 16
        %v1479 = vrot.slane %v1477, 5
        %v1480 = vsel %vm911, %v1475, %v1479
        %v1481 = vshrl.u32 %v1356, 16
        %v1483 = vrot.slane %v1481, 4
        %v1484 = vor.u32 %v1483, %v1479
        %v1485 = vrot.slane %v1484, 4
        %v1487 = vshll.u32 %v1367, 16
        %v1489 = vrot.slane %v1487, 5
        %v1490 = vsel %vm911, %v1485, %v1489
        %v1492 = vshrl.u32 %v1357, 16
        %v1494 = vrot.slane %v1492, 4
        %v1495 = vshll.u32 %v1357, 16
        %v1497 = vrot.slane %v1495, 5
        %v1498 = vor.u32 %v1494, %v1497
        %v1499 = vrot.slane %v1498, 4
        %v1501 = vshll.u32 %v1358, 16
        %v1503 = vrot.slane %v1501, 5
        %v1504 = vsel %vm911, %v1499, %v1503
        %v1505 = vshrl.u32 %v1358, 16
        %v1507 = vrot.slane %v1505, 4
        %v1508 = vor.u32 %v1507, %v1503
        %v1509 = vrot.slane %v1508, 4
        %v1511 = vshll.u32 %v1368, 16
        %v1513 = vrot.slane %v1511, 5
        %v1514 = vsel %vm911, %v1509, %v1513
        %v1516 = vshrl.u32 %v1359, 16
        %v1518 = vrot.slane %v1516, 4
        %v1519 = vshll.u32 %v1359, 16
        %v1521 = vrot.slane %v1519, 5
        %v1522 = vor.u32 %v1518, %v1521
        %v1523 = vrot.slane %v1522, 4
        %v1525 = vshll.u32 %v1360, 16
        %v1527 = vrot.slane %v1525, 5
        %v1528 = vsel %vm911, %v1523, %v1527
        %v1529 = vshrl.u32 %v1360, 16
        %v1531 = vrot.slane %v1529, 4
        %v1532 = vor.u32 %v1531, %v1527
        %v1533 = vrot.slane %v1532, 4
        %v1535 = vshll.u32 %v1369, 16
        %v1537 = vrot.slane %v1535, 5
        %v1538 = vsel %vm911, %v1533, %v1537
        %v1540 = vshrl.u32 %v1361, 16
        %v1542 = vrot.slane %v1540, 4
        %v1543 = vshll.u32 %v1361, 16
        %v1545 = vrot.slane %v1543, 5
        %v1546 = vor.u32 %v1542, %v1545
        %v1547 = vrot.slane %v1546, 4
        %v1549 = vshll.u32 %v1362, 16
        %v1551 = vrot.slane %v1549, 5
        %v1552 = vsel %vm911, %v1547, %v1551
        %v1553 = vshrl.u32 %v1362, 16
        %v1555 = vrot.slane %v1553, 4
        %v1556 = vor.u32 %v1555, %v1551
        %v1557 = vrot.slane %v1556, 4
        %v1559 = vshll.u32 %v1370, 16
        %v1561 = vrot.slane %v1559, 5
        %v1562 = vsel %vm911, %v1557, %v1561
        %v1563 = vld [vmem:[%s717] sm:$0xe]
        %v1564 = vld [vmem:[%s717 + $0xc] sm:$0xe]
        %v1565 = vld [vmem:[%s717 + $0x18] sm:$0xe]
        %v1566 = vld [vmem:[%s717 + $0x24] sm:$0xe]
        %v1567 = vld [vmem:[%s717 + $0x30] sm:$0xe]
        %v1568 = vld [vmem:[%s717 + $0x3c] sm:$0xe]
        %v1569 = vld [vmem:[%s717 + $0x48] sm:$0xe]
        %v1570 = vld [vmem:[%s717 + $0x54] sm:$0xe]
        %v1595 = vrot.slane %v1563, 5
        %v1596 = vrot.slane %v1595, 4
        %v1597 = vrot.slane %v1348, 5
        %v1598 = vsel %vm1138, %v1596, %v1597
        %v1599 = vrot.slane %v1597, 4
        %v1600 = vrot.slane %v1363, 5
        %v1601 = vsel %vm1138, %v1599, %v1600
        %v1602 = vrot.slane %v1564, 5
        %v1603 = vrot.slane %v1602, 4
        %v1604 = vrot.slane %v1350, 5
        %v1605 = vsel %vm1138, %v1603, %v1604
        %v1606 = vrot.slane %v1604, 4
        %v1607 = vrot.slane %v1364, 5
        %v1608 = vsel %vm1138, %v1606, %v1607
        %v1609 = vrot.slane %v1565, 5
        %v1610 = vrot.slane %v1609, 4
        %v1611 = vrot.slane %v1352, 5
        %v1612 = vsel %vm1138, %v1610, %v1611
        %v1613 = vrot.slane %v1611, 4
        %v1614 = vrot.slane %v1365, 5
        %v1615 = vsel %vm1138, %v1613, %v1614
        %v1616 = vrot.slane %v1566, 5
        %v1617 = vrot.slane %v1616, 4
        %v1618 = vrot.slane %v1354, 5
        %v1619 = vsel %vm1138, %v1617, %v1618
        %v1620 = vrot.slane %v1618, 4
        %v1621 = vrot.slane %v1366, 5
        %v1622 = vsel %vm1138, %v1620, %v1621
        %v1623 = vrot.slane %v1567, 5
        %v1624 = vrot.slane %v1623, 4
        %v1625 = vrot.slane %v1356, 5
        %v1626 = vsel %vm1138, %v1624, %v1625
        %v1627 = vrot.slane %v1625, 4
        %v1628 = vrot.slane %v1367, 5
        %v1629 = vsel %vm1138, %v1627, %v1628
        %v1630 = vrot.slane %v1568, 5
        %v1631 = vrot.slane %v1630, 4
        %v1632 = vrot.slane %v1358, 5
        %v1633 = vsel %vm1138, %v1631, %v1632
        %v1634 = vrot.slane %v1632, 4
        %v1635 = vrot.slane %v1368, 5
        %v1636 = vsel %vm1138, %v1634, %v1635
        %v1637 = vrot.slane %v1569, 5
        %v1638 = vrot.slane %v1637, 4
        %v1639 = vrot.slane %v1360, 5
        %v1640 = vsel %vm1138, %v1638, %v1639
        %v1641 = vrot.slane %v1639, 4
        %v1642 = vrot.slane %v1369, 5
        %v1643 = vsel %vm1138, %v1641, %v1642
        %v1644 = vrot.slane %v1570, 5
        %v1645 = vrot.slane %v1644, 4
        %v1646 = vrot.slane %v1362, 5
        %v1647 = vsel %vm1138, %v1645, %v1646
        %v1648 = vrot.slane %v1646, 4
        %v1649 = vrot.slane %v1370, 5
        %v1650 = vsel %vm1138, %v1648, %v1649
        %v1659 = vunpack.c.l.b16 %v1347
        %v1660 = vunpack.c.l.b16 %v1348
        %v1661 = vunpack.c.l.b16 %v1349
        %v1662 = vunpack.c.l.b16 %v1350
        %v1663 = vunpack.c.l.b16 %v1351
        %v1664 = vunpack.c.l.b16 %v1352
        %v1665 = vunpack.c.l.b16 %v1353
        %v1666 = vunpack.c.l.b16 %v1354
        %v1667 = vunpack.c.l.b16 %v1355
        %v1668 = vunpack.c.l.b16 %v1356
        %v1669 = vunpack.c.l.b16 %v1357
        %v1670 = vunpack.c.l.b16 %v1358
        %v1671 = vunpack.c.l.b16 %v1359
        %v1672 = vunpack.c.l.b16 %v1360
        %v1673 = vunpack.c.l.b16 %v1361
        %v1674 = vunpack.c.l.b16 %v1362
        %v1675 = vpack.c.b16 %v1660, %v1659
        %v1676 = vpack.c.b16 %v1662, %v1661
        %v1677 = vpack.c.b16 %v1664, %v1663
        %v1678 = vpack.c.b16 %v1666, %v1665
        %v1679 = vpack.c.b16 %v1668, %v1667
        %v1680 = vpack.c.b16 %v1670, %v1669
        %v1681 = vpack.c.b16 %v1672, %v1671
        %v1682 = vpack.c.b16 %v1674, %v1673
        %v1691 = vunpack.c.l.b16 %v1384
        %v1692 = vunpack.c.l.b16 %v1394
        %v1693 = vunpack.c.l.b16 %v1408
        %v1694 = vunpack.c.l.b16 %v1418
        %v1695 = vunpack.c.l.b16 %v1432
        %v1696 = vunpack.c.l.b16 %v1442
        %v1697 = vunpack.c.l.b16 %v1456
        %v1698 = vunpack.c.l.b16 %v1466
        %v1699 = vunpack.c.l.b16 %v1480
        %v1700 = vunpack.c.l.b16 %v1490
        %v1701 = vunpack.c.l.b16 %v1504
        %v1702 = vunpack.c.l.b16 %v1514
        %v1703 = vunpack.c.l.b16 %v1528
        %v1704 = vunpack.c.l.b16 %v1538
        %v1705 = vunpack.c.l.b16 %v1552
        %v1706 = vunpack.c.l.b16 %v1562
        %v1707 = vpack.c.b16 %v1692, %v1691
        %v1708 = vpack.c.b16 %v1694, %v1693
        %v1709 = vpack.c.b16 %v1696, %v1695
        %v1710 = vpack.c.b16 %v1698, %v1697
        %v1711 = vpack.c.b16 %v1700, %v1699
        %v1712 = vpack.c.b16 %v1702, %v1701
        %v1713 = vpack.c.b16 %v1704, %v1703
        %v1714 = vpack.c.b16 %v1706, %v1705
        %v1723 = vunpack.c.l.b16 %v1598
        %v1724 = vunpack.c.l.b16 %v1601
        %v1725 = vunpack.c.l.b16 %v1605
        %v1726 = vunpack.c.l.b16 %v1608
        %v1727 = vunpack.c.l.b16 %v1612
        %v1728 = vunpack.c.l.b16 %v1615
        %v1729 = vunpack.c.l.b16 %v1619
        %v1730 = vunpack.c.l.b16 %v1622
        %v1731 = vunpack.c.l.b16 %v1626
        %v1732 = vunpack.c.l.b16 %v1629
        %v1733 = vunpack.c.l.b16 %v1633
        %v1734 = vunpack.c.l.b16 %v1636
        %v1735 = vunpack.c.l.b16 %v1640
        %v1736 = vunpack.c.l.b16 %v1643
        %v1737 = vunpack.c.l.b16 %v1647
        %v1738 = vunpack.c.l.b16 %v1650
        %v1739 = vpack.c.b16 %v1724, %v1723
        %v1740 = vpack.c.b16 %v1726, %v1725
        %v1741 = vpack.c.b16 %v1728, %v1727
        %v1742 = vpack.c.b16 %v1730, %v1729
        %v1743 = vpack.c.b16 %v1732, %v1731
        %v1744 = vpack.c.b16 %v1734, %v1733
        %v1745 = vpack.c.b16 %v1736, %v1735
        %v1746 = vpack.c.b16 %v1738, %v1737
        %v1755 = vld [vmem:[#allocation9 + $0xc0] sm:$0xf]
        %v1756 = vld [vmem:[#allocation9 + $0xc4] sm:$0xf]
        %v1757 = vld [vmem:[#allocation9 + $0xc8] sm:$0xf]
        %v1758 = vld [vmem:[#allocation9 + $0xcc] sm:$0xf]
        %v1759 = vld [vmem:[#allocation9 + $0xd0] sm:$0xf]
        %v1760 = vld [vmem:[#allocation9 + $0xd4] sm:$0xf]
        %v1761 = vld [vmem:[#allocation9 + $0xd8] sm:$0xf]
        %v1762 = vld [vmem:[#allocation9 + $0xdc] sm:$0xf]
        %v1763 = vld [vmem:[#allocation9 + $0xe0] sm:$0xf]
        %v1764 = vld [vmem:[#allocation9 + $0xe4] sm:$0xf]
        %v1765 = vld [vmem:[#allocation9 + $0xe8] sm:$0xf]
        %v1766 = vld [vmem:[#allocation9 + $0xec] sm:$0xf]
        %v1767 = vld [vmem:[#allocation9 + $0xf0] sm:$0xf]
        %v1768 = vld [vmem:[#allocation9 + $0xf4] sm:$0xf]
        %v1769 = vld [vmem:[#allocation9 + $0xf8] sm:$0xf]
        %v1770 = vld [vmem:[#allocation9 + $0xfc] sm:$0xf]
        %v1771 = vld [vmem:[#allocation9 + $0x100] sm:$0xf]
        %v1772 = vld [vmem:[#allocation9 + $0x104] sm:$0xf]
        %v1773 = vld [vmem:[#allocation9 + $0x108] sm:$0xf]
        %v1774 = vld [vmem:[#allocation9 + $0x10c] sm:$0xf]
        %v1775 = vld [vmem:[#allocation9 + $0x110] sm:$0xf]
        %v1776 = vld [vmem:[#allocation9 + $0x114] sm:$0xf]
        %v1777 = vld [vmem:[#allocation9 + $0x118] sm:$0xf]
        %v1778 = vld [vmem:[#allocation9 + $0x11c] sm:$0xf]
        %v1779 = vld [vmem:[#allocation9 + $0x120] sm:$0xf]
        %v1780 = vld [vmem:[#allocation9 + $0x124] sm:$0xf]
        %v1781 = vld [vmem:[#allocation9 + $0x128] sm:$0xf]
        %v1782 = vld [vmem:[#allocation9 + $0x12c] sm:$0xf]
        %v1783 = vld [vmem:[#allocation9 + $0x130] sm:$0xf]
        %v1784 = vld [vmem:[#allocation9 + $0x134] sm:$0xf]
        %v1785 = vld [vmem:[#allocation9 + $0x138] sm:$0xf]
        %v1786 = vld [vmem:[#allocation9 + $0x13c] sm:$0xf]
        %v1787 = vld [vmem:[#allocation9 + $0x140] sm:$0xf]
        %v1788 = vld [vmem:[#allocation9 + $0x144] sm:$0xf]
        %v1789 = vld [vmem:[#allocation9 + $0x148] sm:$0xf]
        %v1790 = vld [vmem:[#allocation9 + $0x14c] sm:$0xf]
        %v1791 = vld [vmem:[#allocation9 + $0x150] sm:$0xf]
        %v1792 = vld [vmem:[#allocation9 + $0x154] sm:$0xf]
        %v1793 = vld [vmem:[#allocation9 + $0x158] sm:$0xf]
        %v1794 = vld [vmem:[#allocation9 + $0x15c] sm:$0xf]
        %v1795 = vld [vmem:[#allocation9 + $0x160] sm:$0xf]
        %v1796 = vld [vmem:[#allocation9 + $0x164] sm:$0xf]
        %v1797 = vld [vmem:[#allocation9 + $0x168] sm:$0xf]
        %v1798 = vld [vmem:[#allocation9 + $0x16c] sm:$0xf]
        %v1799 = vld [vmem:[#allocation9 + $0x170] sm:$0xf]
        %v1800 = vld [vmem:[#allocation9 + $0x174] sm:$0xf]
        %v1801 = vld [vmem:[#allocation9 + $0x178] sm:$0xf]
        %v1802 = vld [vmem:[#allocation9 + $0x17c] sm:$0xf]
        %v1851 = vunpack.c.l.b16 %v1755
        %v1852 = vunpack.c.l.b16 %v1756
        %v1853 = vunpack.c.l.b16 %v1757
        %v1854 = vunpack.c.l.b16 %v1758
        %v1855 = vunpack.c.l.b16 %v1759
        %v1856 = vunpack.c.l.b16 %v1760
        %v1857 = vunpack.c.l.b16 %v1761
        %v1858 = vunpack.c.l.b16 %v1762
        %v1859 = vunpack.c.l.b16 %v1763
        %v1860 = vunpack.c.l.b16 %v1764
        %v1861 = vunpack.c.l.b16 %v1765
        %v1862 = vunpack.c.l.b16 %v1766
        %v1863 = vunpack.c.l.b16 %v1767
        %v1864 = vunpack.c.l.b16 %v1768
        %v1865 = vunpack.c.l.b16 %v1769
        %v1866 = vunpack.c.l.b16 %v1770
        %v1867 = vunpack.c.l.b16 %v1771
        %v1868 = vunpack.c.l.b16 %v1772
        %v1869 = vunpack.c.l.b16 %v1773
        %v1870 = vunpack.c.l.b16 %v1774
        %v1871 = vunpack.c.l.b16 %v1775
        %v1872 = vunpack.c.l.b16 %v1776
        %v1873 = vunpack.c.l.b16 %v1777
        %v1874 = vunpack.c.l.b16 %v1778
        %v1875 = vunpack.c.l.b16 %v1779
        %v1876 = vunpack.c.l.b16 %v1780
        %v1877 = vunpack.c.l.b16 %v1781
        %v1878 = vunpack.c.l.b16 %v1782
        %v1879 = vunpack.c.l.b16 %v1783
        %v1880 = vunpack.c.l.b16 %v1784
        %v1881 = vunpack.c.l.b16 %v1785
        %v1882 = vunpack.c.l.b16 %v1786
        %v1883 = vunpack.c.l.b16 %v1787
        %v1884 = vunpack.c.l.b16 %v1788
        %v1885 = vunpack.c.l.b16 %v1789
        %v1886 = vunpack.c.l.b16 %v1790
        %v1887 = vunpack.c.l.b16 %v1791
        %v1888 = vunpack.c.l.b16 %v1792
        %v1889 = vunpack.c.l.b16 %v1793
        %v1890 = vunpack.c.l.b16 %v1794
        %v1891 = vunpack.c.l.b16 %v1795
        %v1892 = vunpack.c.l.b16 %v1796
        %v1893 = vunpack.c.l.b16 %v1797
        %v1894 = vunpack.c.l.b16 %v1798
        %v1895 = vunpack.c.l.b16 %v1799
        %v1896 = vunpack.c.l.b16 %v1800
        %v1897 = vunpack.c.l.b16 %v1801
        %v1898 = vunpack.c.l.b16 %v1802
        %v1899 = vpack.c.b16 %v1852, %v1851
        %v1900 = vpack.c.b16 %v1854, %v1853
        %v1901 = vpack.c.b16 %v1856, %v1855
        %v1902 = vpack.c.b16 %v1858, %v1857
        %v1903 = vpack.c.b16 %v1860, %v1859
        %v1904 = vpack.c.b16 %v1862, %v1861
        %v1905 = vpack.c.b16 %v1864, %v1863
        %v1906 = vpack.c.b16 %v1866, %v1865
        %v1907 = vpack.c.b16 %v1868, %v1867
        %v1908 = vpack.c.b16 %v1870, %v1869
        %v1909 = vpack.c.b16 %v1872, %v1871
        %v1910 = vpack.c.b16 %v1874, %v1873
        %v1911 = vpack.c.b16 %v1876, %v1875
        %v1912 = vpack.c.b16 %v1878, %v1877
        %v1913 = vpack.c.b16 %v1880, %v1879
        %v1914 = vpack.c.b16 %v1882, %v1881
        %v1915 = vpack.c.b16 %v1884, %v1883
        %v1916 = vpack.c.b16 %v1886, %v1885
        %v1917 = vpack.c.b16 %v1888, %v1887
        %v1918 = vpack.c.b16 %v1890, %v1889
        %v1919 = vpack.c.b16 %v1892, %v1891
        %v1920 = vpack.c.b16 %v1894, %v1893
        %v1921 = vpack.c.b16 %v1896, %v1895
        %v1922 = vpack.c.b16 %v1898, %v1897
        %1947 = vmatprep.subr.bf16.mxu0 0
        %1948 = vmatpush1.bf16.msra.mxu0 %v1899
        %1949 = vmatprep.subr.bf16.mxu0 0
        %1950 = vmatpush1.bf16.msra.mxu0 %v1900
        %1951 = vmatprep.subr.bf16.mxu0 0
        %1952 = vmatpush1.bf16.msra.mxu0 %v1901
        %1953 = vmatprep.subr.bf16.mxu0 0
        %1954 = vmatpush1.bf16.msra.mxu0 %v1902
        %1955 = vmatprep.subr.bf16.mxu0 0
        %1956 = vmatpush1.bf16.msra.mxu0 %v1903
        %1957 = vmatprep.subr.bf16.mxu0 0
        %1958 = vmatpush1.bf16.msra.mxu0 %v1904
        %1959 = vmatprep.subr.bf16.mxu0 0
        %1960 = vmatpush1.bf16.msra.mxu0 %v1905
        %1961 = vmatprep.subr.bf16.mxu0 0
        %1962 = vmatpush1.bf16.msra.mxu0 %v1906
        %1963 = vmatprep.subr.bf16.mxu0 0
        %1964 = vmatpush1.bf16.msra.mxu0 %v1907
        %1965 = vmatprep.subr.bf16.mxu0 0
        %1966 = vmatpush1.bf16.msra.mxu0 %v1908
        %1967 = vmatprep.subr.bf16.mxu0 0
        %1968 = vmatpush1.bf16.msra.mxu0 %v1909
        %1969 = vmatprep.subr.bf16.mxu0 0
        %1970 = vmatpush1.bf16.msra.mxu0 %v1910
        %1971 = vmatprep.subr.bf16.mxu0 0
        %1972 = vmatpush1.bf16.msra.mxu0 %v1911
        %1973 = vmatprep.subr.bf16.mxu0 0
        %1974 = vmatpush1.bf16.msra.mxu0 %v1912
        %1975 = vmatprep.subr.bf16.mxu0 0
        %1976 = vmatpush1.bf16.msra.mxu0 %v1913
        %1977 = vmatprep.subr.bf16.mxu0 0
        %1978 = vmatpush1.bf16.msra.mxu0 %v1914
        %1979 = vmatprep.mubr.bf16.mxu0 %v1707
        %1980 = vmatmul.mubr.bf16.gmra.mrb[0].mxu0 %v1675
        %v1981 = vpop.f32.mrb[0].mxu0
        %v1982 = vadd.f32 0.0, %v1981
        %v1983 = vpop.f32.mrb[0].mxu0
        %v1984 = vpop.f32.mrb[0].mxu0
        %v1985 = vadd.f32 0.0, %v1984
        %v1986 = vpop.f32.mrb[0].mxu0
        %1987 = vmatprep.mubr.bf16.mxu0 %v1708
        %1988 = vmatmul.mubr.bf16.gmra.mrb[0].mxu0 %v1676
        %v1989 = vpop.f32.mrb[0].mxu0
        %v1990 = vadd.f32 0.0, %v1989
        %v1991 = vpop.f32.mrb[0].mxu0
        %v1992 = vpop.f32.mrb[0].mxu0
        %v1993 = vadd.f32 0.0, %v1992
        %v1994 = vpop.f32.mrb[0].mxu0
        %1995 = vmatprep.mubr.bf16.mxu0 %v1709
        %1996 = vmatmul.mubr.bf16.gmra.mrb[0].mxu0 %v1677
        %v1997 = vpop.f32.mrb[0].mxu0
        %v1998 = vadd.f32 0.0, %v1997
        %v1999 = vpop.f32.mrb[0].mxu0
        %v2000 = vpop.f32.mrb[0].mxu0
        %v2001 = vadd.f32 0.0, %v2000
        %v2002 = vpop.f32.mrb[0].mxu0
        %2003 = vmatprep.mubr.bf16.mxu0 %v1710
        %2004 = vmatmul.mubr.bf16.gmra.mrb[0].mxu0 %v1678
        %v2005 = vpop.f32.mrb[0].mxu0
        %v2006 = vadd.f32 0.0, %v2005
        %v2007 = vpop.f32.mrb[0].mxu0
        %v2008 = vpop.f32.mrb[0].mxu0
        %v2009 = vadd.f32 0.0, %v2008
        %v2010 = vpop.f32.mrb[0].mxu0
        %2011 = vmatprep.mubr.bf16.mxu0 %v1711
        %2012 = vmatmul.mubr.bf16.gmra.mrb[0].mxu0 %v1679
        %v2013 = vpop.f32.mrb[0].mxu0
        %v2014 = vadd.f32 0.0, %v2013
        %v2015 = vpop.f32.mrb[0].mxu0
        %v2016 = vpop.f32.mrb[0].mxu0
        %v2017 = vadd.f32 0.0, %v2016
        %v2018 = vpop.f32.mrb[0].mxu0
        %2019 = vmatprep.mubr.bf16.mxu0 %v1712
        %2020 = vmatmul.mubr.bf16.gmra.mrb[0].mxu0 %v1680
        %v2021 = vpop.f32.mrb[0].mxu0
        %v2022 = vadd.f32 0.0, %v2021
        %v2023 = vpop.f32.mrb[0].mxu0
        %v2024 = vpop.f32.mrb[0].mxu0
        %v2025 = vadd.f32 0.0, %v2024
        %v2026 = vpop.f32.mrb[0].mxu0
        %2027 = vmatprep.mubr.bf16.mxu0 %v1713
        %2028 = vmatmul.mubr.bf16.gmra.mrb[0].mxu0 %v1681
        %v2029 = vpop.f32.mrb[0].mxu0
        %v2030 = vadd.f32 0.0, %v2029
        %v2031 = vpop.f32.mrb[0].mxu0
        %v2032 = vpop.f32.mrb[0].mxu0
        %v2033 = vadd.f32 0.0, %v2032
        %v2034 = vpop.f32.mrb[0].mxu0
        %2035 = vmatprep.mubr.bf16.mxu0 %v1714
        %2036 = vmatmul.mubr.bf16.gmra.mrb[0].mxu0 %v1682
        %v2037 = vpop.f32.mrb[0].mxu0
        %v2038 = vadd.f32 0.0, %v2037
        %v2039 = vpop.f32.mrb[0].mxu0
        %v2040 = vpop.f32.mrb[0].mxu0
        %v2041 = vadd.f32 0.0, %v2040
        %v2042 = vpop.f32.mrb[0].mxu0
        %2043 = vdwg.mxu0
        %2044 = vmatprep.subr.bf16.mxu0 0
        %2045 = vmatpush1.bf16.msra.mxu0 %v1915
        %2046 = vmatprep.subr.bf16.mxu0 0
        %2047 = vmatpush1.bf16.msra.mxu0 %v1916
        %2048 = vmatprep.subr.bf16.mxu0 0
        %2049 = vmatpush1.bf16.msra.mxu0 %v1917
        %2050 = vmatprep.subr.bf16.mxu0 0
        %2051 = vmatpush1.bf16.msra.mxu0 %v1918
        %2052 = vmatprep.subr.bf16.mxu0 0
        %2053 = vmatpush1.bf16.msra.mxu0 %v1919
        %2054 = vmatprep.subr.bf16.mxu0 0
        %2055 = vmatpush1.bf16.msra.mxu0 %v1920
        %2056 = vmatprep.subr.bf16.mxu0 0
        %2057 = vmatpush1.bf16.msra.mxu0 %v1921
        %2058 = vmatprep.subr.bf16.mxu0 0
        %2059 = vmatpush1.bf16.msra.mxu0 %v1922
        %2060 = vmatprep.subr.bf16.mxu0 0
        %2061 = vmatpush1.bf16.msra.mxu0 0
        %2062 = vmatprep.subr.bf16.mxu0 0
        %2063 = vmatpush1.bf16.msra.mxu0 0
        %2064 = vmatprep.subr.bf16.mxu0 0
        %2065 = vmatpush1.bf16.msra.mxu0 0
        %2066 = vmatprep.subr.bf16.mxu0 0
        %2067 = vmatpush1.bf16.msra.mxu0 0
        %2068 = vmatprep.subr.bf16.mxu0 0
        %2069 = vmatpush1.bf16.msra.mxu0 0
        %2070 = vmatprep.subr.bf16.mxu0 0
        %2071 = vmatpush1.bf16.msra.mxu0 0
        %2072 = vmatprep.subr.bf16.mxu0 0
        %2073 = vmatpush1.bf16.msra.mxu0 0
        %2074 = vmatprep.subr.bf16.mxu0 0
        %2075 = vmatpush1.bf16.msra.mxu0 0
        %2076 = vmatprep.mubr.bf16.mxu0 0
        %2077 = vmatmul.mubr.bf16.gmra.mrb[0].mxu0 %v1739
        %v2078 = vpop.f32.mrb[0].mxu0
        %v2079 = vadd.f32 %v1982, %v2078
        %v2080 = vpop.f32.mrb[0].mxu0
        %v2081 = vpop.f32.mrb[0].mxu0
        %v2082 = vadd.f32 %v1985, %v2081
        %v2083 = vpop.f32.mrb[0].mxu0
        %2084 = vmatprep.mubr.bf16.mxu0 0
        %2085 = vmatmul.mubr.bf16.gmra.mrb[0].mxu0 %v1740
        %v2086 = vpop.f32.mrb[0].mxu0
        %v2087 = vadd.f32 %v1990, %v2086
        %v2088 = vpop.f32.mrb[0].mxu0
        %v2089 = vpop.f32.mrb[0].mxu0
        %v2090 = vadd.f32 %v1993, %v2089
        %v2091 = vpop.f32.mrb[0].mxu0
        %2092 = vmatprep.mubr.bf16.mxu0 0
        %2093 = vmatmul.mubr.bf16.gmra.mrb[0].mxu0 %v1741
        %v2094 = vpop.f32.mrb[0].mxu0
        %v2095 = vadd.f32 %v1998, %v2094
        %v2096 = vpop.f32.mrb[0].mxu0
        %v2097 = vpop.f32.mrb[0].mxu0
        %v2098 = vadd.f32 %v2001, %v2097
        %v2099 = vpop.f32.mrb[0].mxu0
        %2100 = vmatprep.mubr.bf16.mxu0 0
        %2101 = vmatmul.mubr.bf16.gmra.mrb[0].mxu0 %v1742
        %v2102 = vpop.f32.mrb[0].mxu0
        %v2103 = vadd.f32 %v2006, %v2102
        %v2104 = vpop.f32.mrb[0].mxu0
        %v2105 = vpop.f32.mrb[0].mxu0
        %v2106 = vadd.f32 %v2009, %v2105
        %v2107 = vpop.f32.mrb[0].mxu0
        %2108 = vmatprep.mubr.bf16.mxu0 0
        %2109 = vmatmul.mubr.bf16.gmra.mrb[0].mxu0 %v1743
        %v2110 = vpop.f32.mrb[0].mxu0
        %v2111 = vadd.f32 %v2014, %v2110
        %v2112 = vpop.f32.mrb[0].mxu0
        %v2113 = vpop.f32.mrb[0].mxu0
        %v2114 = vadd.f32 %v2017, %v2113
        %v2115 = vpop.f32.mrb[0].mxu0
        %2116 = vmatprep.mubr.bf16.mxu0 0
        %2117 = vmatmul.mubr.bf16.gmra.mrb[0].mxu0 %v1744
        %v2118 = vpop.f32.mrb[0].mxu0
        %v2119 = vadd.f32 %v2022, %v2118
        %v2120 = vpop.f32.mrb[0].mxu0
        %v2121 = vpop.f32.mrb[0].mxu0
        %v2122 = vadd.f32 %v2025, %v2121
        %v2123 = vpop.f32.mrb[0].mxu0
        %2124 = vmatprep.mubr.bf16.mxu0 0
        %2125 = vmatmul.mubr.bf16.gmra.mrb[0].mxu0 %v1745
        %v2126 = vpop.f32.mrb[0].mxu0
        %v2127 = vadd.f32 %v2030, %v2126
        %v2128 = vpop.f32.mrb[0].mxu0
        %v2129 = vpop.f32.mrb[0].mxu0
        %v2130 = vadd.f32 %v2033, %v2129
        %v2131 = vpop.f32.mrb[0].mxu0
        %2132 = vmatprep.mubr.bf16.mxu0 0
        %2133 = vmatmul.mubr.bf16.gmra.mrb[0].mxu0 %v1746
        %v2134 = vpop.f32.mrb[0].mxu0
        %v2135 = vadd.f32 %v2038, %v2134
        %v2136 = vpop.f32.mrb[0].mxu0
        %v2137 = vpop.f32.mrb[0].mxu0
        %v2138 = vadd.f32 %v2041, %v2137
        %v2139 = vpop.f32.mrb[0].mxu0
        %2140 = vdwg.mxu0
        %v2189 = vunpack.c.l.b16 %v1299
        %v2190 = vunpack.c.l.b16 %v1300
        %v2191 = vunpack.c.l.b16 %v1301
        %v2192 = vunpack.c.l.b16 %v1302
        %v2193 = vunpack.c.l.b16 %v1303
        %v2194 = vunpack.c.l.b16 %v1304
        %v2195 = vunpack.c.l.b16 %v1305
        %v2196 = vunpack.c.l.b16 %v1306
        %v2197 = vunpack.c.l.b16 %v1307
        %v2198 = vunpack.c.l.b16 %v1308
        %v2199 = vunpack.c.l.b16 %v1309
        %v2200 = vunpack.c.l.b16 %v1310
        %v2201 = vunpack.c.l.b16 %v1311
        %v2202 = vunpack.c.l.b16 %v1312
        %v2203 = vunpack.c.l.b16 %v1313
        %v2204 = vunpack.c.l.b16 %v1314
        %v2205 = vunpack.c.l.b16 %v1315
        %v2206 = vunpack.c.l.b16 %v1316
        %v2207 = vunpack.c.l.b16 %v1317
        %v2208 = vunpack.c.l.b16 %v1318
        %v2209 = vunpack.c.l.b16 %v1319
        %v2210 = vunpack.c.l.b16 %v1320
        %v2211 = vunpack.c.l.b16 %v1321
        %v2212 = vunpack.c.l.b16 %v1322
        %v2213 = vunpack.c.l.b16 %v1323
        %v2214 = vunpack.c.l.b16 %v1324
        %v2215 = vunpack.c.l.b16 %v1325
        %v2216 = vunpack.c.l.b16 %v1326
        %v2217 = vunpack.c.l.b16 %v1327
        %v2218 = vunpack.c.l.b16 %v1328
        %v2219 = vunpack.c.l.b16 %v1329
        %v2220 = vunpack.c.l.b16 %v1330
        %v2221 = vunpack.c.l.b16 %v1331
        %v2222 = vunpack.c.l.b16 %v1332
        %v2223 = vunpack.c.l.b16 %v1333
        %v2224 = vunpack.c.l.b16 %v1334
        %v2225 = vunpack.c.l.b16 %v1335
        %v2226 = vunpack.c.l.b16 %v1336
        %v2227 = vunpack.c.l.b16 %v1337
        %v2228 = vunpack.c.l.b16 %v1338
        %v2229 = vunpack.c.l.b16 %v1339
        %v2230 = vunpack.c.l.b16 %v1340
        %v2231 = vunpack.c.l.b16 %v1341
        %v2232 = vunpack.c.l.b16 %v1342
        %v2233 = vunpack.c.l.b16 %v1343
        %v2234 = vunpack.c.l.b16 %v1344
        %v2235 = vunpack.c.l.b16 %v1345
        %v2236 = vunpack.c.l.b16 %v1346
        %v2237 = vpack.c.b16 %v2190, %v2189
        %v2238 = vpack.c.b16 %v2192, %v2191
        %v2239 = vpack.c.b16 %v2194, %v2193
        %v2240 = vpack.c.b16 %v2196, %v2195
        %v2241 = vpack.c.b16 %v2198, %v2197
        %v2242 = vpack.c.b16 %v2200, %v2199
        %v2243 = vpack.c.b16 %v2202, %v2201
        %v2244 = vpack.c.b16 %v2204, %v2203
        %v2245 = vpack.c.b16 %v2206, %v2205
        %v2246 = vpack.c.b16 %v2208, %v2207
        %v2247 = vpack.c.b16 %v2210, %v2209
        %v2248 = vpack.c.b16 %v2212, %v2211
        %v2249 = vpack.c.b16 %v2214, %v2213
        %v2250 = vpack.c.b16 %v2216, %v2215
        %v2251 = vpack.c.b16 %v2218, %v2217
        %v2252 = vpack.c.b16 %v2220, %v2219
        %v2253 = vpack.c.b16 %v2222, %v2221
        %v2254 = vpack.c.b16 %v2224, %v2223
        %v2255 = vpack.c.b16 %v2226, %v2225
        %v2256 = vpack.c.b16 %v2228, %v2227
        %v2257 = vpack.c.b16 %v2230, %v2229
        %v2258 = vpack.c.b16 %v2232, %v2231
        %v2259 = vpack.c.b16 %v2234, %v2233
        %v2260 = vpack.c.b16 %v2236, %v2235
        %2285 = vmatprep.subr.bf16.mxu0 0
        %2286 = vmatpush1.bf16.msra.mxu0 %v2237
        %2287 = vmatprep.subr.bf16.mxu0 0
        %2288 = vmatpush1.bf16.msra.mxu0 %v2238
        %2289 = vmatprep.subr.bf16.mxu0 0
        %2290 = vmatpush1.bf16.msra.mxu0 %v2239
        %2291 = vmatprep.subr.bf16.mxu0 0
        %2292 = vmatpush1.bf16.msra.mxu0 %v2240
        %2293 = vmatprep.subr.bf16.mxu0 0
        %2294 = vmatpush1.bf16.msra.mxu0 %v2241
        %2295 = vmatprep.subr.bf16.mxu0 0
        %2296 = vmatpush1.bf16.msra.mxu0 %v2242
        %2297 = vmatprep.subr.bf16.mxu0 0
        %2298 = vmatpush1.bf16.msra.mxu0 %v2243
        %2299 = vmatprep.subr.bf16.mxu0 0
        %2300 = vmatpush1.bf16.msra.mxu0 %v2244
        %2301 = vmatprep.subr.bf16.mxu0 0
        %2302 = vmatpush1.bf16.msra.mxu0 %v2245
        %2303 = vmatprep.subr.bf16.mxu0 0
        %2304 = vmatpush1.bf16.msra.mxu0 %v2246
        %2305 = vmatprep.subr.bf16.mxu0 0
        %2306 = vmatpush1.bf16.msra.mxu0 %v2247
        %2307 = vmatprep.subr.bf16.mxu0 0
        %2308 = vmatpush1.bf16.msra.mxu0 %v2248
        %2309 = vmatprep.subr.bf16.mxu0 0
        %2310 = vmatpush1.bf16.msra.mxu0 %v2249
        %2311 = vmatprep.subr.bf16.mxu0 0
        %2312 = vmatpush1.bf16.msra.mxu0 %v2250
        %2313 = vmatprep.subr.bf16.mxu0 0
        %2314 = vmatpush1.bf16.msra.mxu0 %v2251
        %2315 = vmatprep.subr.bf16.mxu0 0
        %2316 = vmatpush1.bf16.msra.mxu0 %v2252
        %2317 = vmatprep.mubr.bf16.mxu0 %v1251
        %2318 = vmatmul.mubr.bf16.gmra.mrb[0].mxu0 %v1219
        %v2319 = vpop.f32.mrb[0].mxu0
        %v2320 = vadd.f32 %v2079, %v2319
        %v2321 = vpop.f32.mrb[0].mxu0
        %v2322 = vpop.f32.mrb[0].mxu0
        %v2323 = vadd.f32 %v2082, %v2322
        %v2324 = vpop.f32.mrb[0].mxu0
        %2325 = vmatprep.mubr.bf16.mxu0 %v1252
        %2326 = vmatmul.mubr.bf16.gmra.mrb[0].mxu0 %v1220
        %v2327 = vpop.f32.mrb[0].mxu0
        %v2328 = vadd.f32 %v2087, %v2327
        %v2329 = vpop.f32.mrb[0].mxu0
        %v2330 = vpop.f32.mrb[0].mxu0
        %v2331 = vadd.f32 %v2090, %v2330
        %v2332 = vpop.f32.mrb[0].mxu0
        %2333 = vmatprep.mubr.bf16.mxu0 %v1253
        %2334 = vmatmul.mubr.bf16.gmra.mrb[0].mxu0 %v1221
        %v2335 = vpop.f32.mrb[0].mxu0
        %v2336 = vadd.f32 %v2095, %v2335
        %v2337 = vpop.f32.mrb[0].mxu0
        %v2338 = vpop.f32.mrb[0].mxu0
        %v2339 = vadd.f32 %v2098, %v2338
        %v2340 = vpop.f32.mrb[0].mxu0
        %2341 = vmatprep.mubr.bf16.mxu0 %v1254
        %2342 = vmatmul.mubr.bf16.gmra.mrb[0].mxu0 %v1222
        %v2343 = vpop.f32.mrb[0].mxu0
        %v2344 = vadd.f32 %v2103, %v2343
        %v2345 = vpop.f32.mrb[0].mxu0
        %v2346 = vpop.f32.mrb[0].mxu0
        %v2347 = vadd.f32 %v2106, %v2346
        %v2348 = vpop.f32.mrb[0].mxu0
        %2349 = vmatprep.mubr.bf16.mxu0 %v1255
        %2350 = vmatmul.mubr.bf16.gmra.mrb[0].mxu0 %v1223
        %v2351 = vpop.f32.mrb[0].mxu0
        %v2352 = vadd.f32 %v2111, %v2351
        %v2353 = vpop.f32.mrb[0].mxu0
        %v2354 = vpop.f32.mrb[0].mxu0
        %v2355 = vadd.f32 %v2114, %v2354
        %v2356 = vpop.f32.mrb[0].mxu0
        %2357 = vmatprep.mubr.bf16.mxu0 %v1256
        %2358 = vmatmul.mubr.bf16.gmra.mrb[0].mxu0 %v1224
        %v2359 = vpop.f32.mrb[0].mxu0
        %v2360 = vadd.f32 %v2119, %v2359
        %v2361 = vpop.f32.mrb[0].mxu0
        %v2362 = vpop.f32.mrb[0].mxu0
        %v2363 = vadd.f32 %v2122, %v2362
        %v2364 = vpop.f32.mrb[0].mxu0
        %2365 = vmatprep.mubr.bf16.mxu0 %v1257
        %2366 = vmatmul.mubr.bf16.gmra.mrb[0].mxu0 %v1225
        %v2367 = vpop.f32.mrb[0].mxu0
        %v2368 = vadd.f32 %v2127, %v2367
        %v2369 = vpop.f32.mrb[0].mxu0
        %v2370 = vpop.f32.mrb[0].mxu0
        %v2371 = vadd.f32 %v2130, %v2370
        %v2372 = vpop.f32.mrb[0].mxu0
        %2373 = vmatprep.mubr.bf16.mxu0 %v1258
        %2374 = vmatmul.mubr.bf16.gmra.mrb[0].mxu0 %v1226
        %v2375 = vpop.f32.mrb[0].mxu0
        %v2376 = vadd.f32 %v2135, %v2375
        %v2377 = vpop.f32.mrb[0].mxu0
        %v2378 = vpop.f32.mrb[0].mxu0
        %v2379 = vadd.f32 %v2138, %v2378
        %v2380 = vpop.f32.mrb[0].mxu0
        %2381 = vdwg.mxu0
        %2382 = vmatprep.subr.bf16.mxu0 0
        %2383 = vmatpush1.bf16.msra.mxu0 %v2253
        %2384 = vmatprep.subr.bf16.mxu0 0
        %2385 = vmatpush1.bf16.msra.mxu0 %v2254
        %2386 = vmatprep.subr.bf16.mxu0 0
        %2387 = vmatpush1.bf16.msra.mxu0 %v2255
        %2388 = vmatprep.subr.bf16.mxu0 0
        %2389 = vmatpush1.bf16.msra.mxu0 %v2256
        %2390 = vmatprep.subr.bf16.mxu0 0
        %2391 = vmatpush1.bf16.msra.mxu0 %v2257
        %2392 = vmatprep.subr.bf16.mxu0 0
        %2393 = vmatpush1.bf16.msra.mxu0 %v2258
        %2394 = vmatprep.subr.bf16.mxu0 0
        %2395 = vmatpush1.bf16.msra.mxu0 %v2259
        %2396 = vmatprep.subr.bf16.mxu0 0
        %2397 = vmatpush1.bf16.msra.mxu0 %v2260
        %2398 = vmatprep.subr.bf16.mxu0 0
        %2399 = vmatpush1.bf16.msra.mxu0 0
        %2400 = vmatprep.subr.bf16.mxu0 0
        %2401 = vmatpush1.bf16.msra.mxu0 0
        %2402 = vmatprep.subr.bf16.mxu0 0
        %2403 = vmatpush1.bf16.msra.mxu0 0
        %2404 = vmatprep.subr.bf16.mxu0 0
        %2405 = vmatpush1.bf16.msra.mxu0 0
        %2406 = vmatprep.subr.bf16.mxu0 0
        %2407 = vmatpush1.bf16.msra.mxu0 0
        %2408 = vmatprep.subr.bf16.mxu0 0
        %2409 = vmatpush1.bf16.msra.mxu0 0
        %2410 = vmatprep.subr.bf16.mxu0 0
        %2411 = vmatpush1.bf16.msra.mxu0 0
        %2412 = vmatprep.subr.bf16.mxu0 0
        %2413 = vmatpush1.bf16.msra.mxu0 0
        %2414 = vmatprep.mubr.bf16.mxu0 0
        %2415 = vmatmul.mubr.bf16.gmra.mrb[0].mxu0 %v1283
        %v2416 = vpop.f32.mrb[0].mxu0
        %v2417 = vadd.f32 %v2320, %v2416
        %v2418 = vpop.f32.mrb[0].mxu0
        %v2419 = vpop.f32.mrb[0].mxu0
        %v2420 = vadd.f32 %v2323, %v2419
        %v2421 = vpop.f32.mrb[0].mxu0
        %2422 = vmatprep.mubr.bf16.mxu0 0
        %2423 = vmatmul.mubr.bf16.gmra.mrb[0].mxu0 %v1284
        %v2424 = vpop.f32.mrb[0].mxu0
        %v2425 = vadd.f32 %v2328, %v2424
        %v2426 = vpop.f32.mrb[0].mxu0
        %v2427 = vpop.f32.mrb[0].mxu0
        %v2428 = vadd.f32 %v2331, %v2427
        %v2429 = vpop.f32.mrb[0].mxu0
        %2430 = vmatprep.mubr.bf16.mxu0 0
        %2431 = vmatmul.mubr.bf16.gmra.mrb[0].mxu0 %v1285
        %v2432 = vpop.f32.mrb[0].mxu0
        %v2433 = vadd.f32 %v2336, %v2432
        %v2434 = vpop.f32.mrb[0].mxu0
        %v2435 = vpop.f32.mrb[0].mxu0
        %v2436 = vadd.f32 %v2339, %v2435
        %v2437 = vpop.f32.mrb[0].mxu0
        %2438 = vmatprep.mubr.bf16.mxu0 0
        %2439 = vmatmul.mubr.bf16.gmra.mrb[0].mxu0 %v1286
        %v2440 = vpop.f32.mrb[0].mxu0
        %v2441 = vadd.f32 %v2344, %v2440
        %v2442 = vpop.f32.mrb[0].mxu0
        %v2443 = vpop.f32.mrb[0].mxu0
        %v2444 = vadd.f32 %v2347, %v2443
        %v2445 = vpop.f32.mrb[0].mxu0
        %2446 = vmatprep.mubr.bf16.mxu0 0
        %2447 = vmatmul.mubr.bf16.gmra.mrb[0].mxu0 %v1287
        %v2448 = vpop.f32.mrb[0].mxu0
        %v2449 = vadd.f32 %v2352, %v2448
        %v2450 = vpop.f32.mrb[0].mxu0
        %v2451 = vpop.f32.mrb[0].mxu0
        %v2452 = vadd.f32 %v2355, %v2451
        %v2453 = vpop.f32.mrb[0].mxu0
        %2454 = vmatprep.mubr.bf16.mxu0 0
        %2455 = vmatmul.mubr.bf16.gmra.mrb[0].mxu0 %v1288
        %v2456 = vpop.f32.mrb[0].mxu0
        %v2457 = vadd.f32 %v2360, %v2456
        %v2458 = vpop.f32.mrb[0].mxu0
        %v2459 = vpop.f32.mrb[0].mxu0
        %v2460 = vadd.f32 %v2363, %v2459
        %v2461 = vpop.f32.mrb[0].mxu0
        %2462 = vmatprep.mubr.bf16.mxu0 0
        %2463 = vmatmul.mubr.bf16.gmra.mrb[0].mxu0 %v1289
        %v2464 = vpop.f32.mrb[0].mxu0
        %v2465 = vadd.f32 %v2368, %v2464
        %v2466 = vpop.f32.mrb[0].mxu0
        %v2467 = vpop.f32.mrb[0].mxu0
        %v2468 = vadd.f32 %v2371, %v2467
        %v2469 = vpop.f32.mrb[0].mxu0
        %2470 = vmatprep.mubr.bf16.mxu0 0
        %2471 = vmatmul.mubr.bf16.gmra.mrb[0].mxu0 %v1290
        %v2472 = vpop.f32.mrb[0].mxu0
        %v2473 = vadd.f32 %v2376, %v2472
        %v2474 = vpop.f32.mrb[0].mxu0
        %v2475 = vpop.f32.mrb[0].mxu0
        %v2476 = vadd.f32 %v2379, %v2475
        %v2477 = vpop.f32.mrb[0].mxu0
        %2478 = vdwg.mxu0
        %s2479 = scalar_lea.vmem [#allocation2], 24
        %v2480 = vld [vmem:[%s2479] sm:$0xf]
        %v2481 = vld [vmem:[%s2479 + $0x4] sm:$0xf]
        %v2482 = vld [vmem:[%s2479 + $0xc] sm:$0xf]
        %v2483 = vld [vmem:[%s2479 + $0x10] sm:$0xf]
        %v2484 = vld [vmem:[%s2479 + $0x18] sm:$0xf]
        %v2485 = vld [vmem:[%s2479 + $0x1c] sm:$0xf]
        %v2486 = vld [vmem:[%s2479 + $0x24] sm:$0xf]
        %v2487 = vld [vmem:[%s2479 + $0x28] sm:$0xf]
        %v2488 = vld [vmem:[%s2479 + $0x30] sm:$0xf]
        %v2489 = vld [vmem:[%s2479 + $0x34] sm:$0xf]
        %v2490 = vld [vmem:[%s2479 + $0x3c] sm:$0xf]
        %v2491 = vld [vmem:[%s2479 + $0x40] sm:$0xf]
        %v2492 = vld [vmem:[%s2479 + $0x48] sm:$0xf]
        %v2493 = vld [vmem:[%s2479 + $0x4c] sm:$0xf]
        %v2494 = vld [vmem:[%s2479 + $0x54] sm:$0xf]
        %v2495 = vld [vmem:[%s2479 + $0x58] sm:$0xf]
        %v2496 = vld [vmem:[%s2479 + $0x8] sm:$0x1]
        %v2497 = vld [vmem:[%s2479 + $0x14] sm:$0x1]
        %v2498 = vld [vmem:[%s2479 + $0x20] sm:$0x1]
        %v2499 = vld [vmem:[%s2479 + $0x2c] sm:$0x1]
        %v2500 = vld [vmem:[%s2479 + $0x38] sm:$0x1]
        %v2501 = vld [vmem:[%s2479 + $0x44] sm:$0x1]
        %v2502 = vld [vmem:[%s2479 + $0x50] sm:$0x1]
        %v2503 = vld [vmem:[%s2479 + $0x5c] sm:$0x1]
        %v2505 = vshrl.u32 %v2480, 16
        %v2507 = vrot.slane %v2505, 4
        %v2508 = vshll.u32 %v2480, 16
        %v2510 = vrot.slane %v2508, 5
        %v2511 = vor.u32 %v2507, %v2510
        %v2512 = vrot.slane %v2511, 4
        %v2514 = vshll.u32 %v2481, 16
        %v2516 = vrot.slane %v2514, 5
        %v2517 = vsel %vm911, %v2512, %v2516
        %v2518 = vshrl.u32 %v2481, 16
        %v2520 = vrot.slane %v2518, 4
        %v2521 = vor.u32 %v2520, %v2516
        %v2522 = vrot.slane %v2521, 4
        %v2524 = vshll.u32 %v2496, 16
        %v2526 = vrot.slane %v2524, 5
        %v2527 = vsel %vm911, %v2522, %v2526
        %v2529 = vshrl.u32 %v2482, 16
        %v2531 = vrot.slane %v2529, 4
        %v2532 = vshll.u32 %v2482, 16
        %v2534 = vrot.slane %v2532, 5
        %v2535 = vor.u32 %v2531, %v2534
        %v2536 = vrot.slane %v2535, 4
        %v2538 = vshll.u32 %v2483, 16
        %v2540 = vrot.slane %v2538, 5
        %v2541 = vsel %vm911, %v2536, %v2540
        %v2542 = vshrl.u32 %v2483, 16
        %v2544 = vrot.slane %v2542, 4
        %v2545 = vor.u32 %v2544, %v2540
        %v2546 = vrot.slane %v2545, 4
        %v2548 = vshll.u32 %v2497, 16
        %v2550 = vrot.slane %v2548, 5
        %v2551 = vsel %vm911, %v2546, %v2550
        %v2553 = vshrl.u32 %v2484, 16
        %v2555 = vrot.slane %v2553, 4
        %v2556 = vshll.u32 %v2484, 16
        %v2558 = vrot.slane %v2556, 5
        %v2559 = vor.u32 %v2555, %v2558
        %v2560 = vrot.slane %v2559, 4
        %v2562 = vshll.u32 %v2485, 16
        %v2564 = vrot.slane %v2562, 5
        %v2565 = vsel %vm911, %v2560, %v2564
        %v2566 = vshrl.u32 %v2485, 16
        %v2568 = vrot.slane %v2566, 4
        %v2569 = vor.u32 %v2568, %v2564
        %v2570 = vrot.slane %v2569, 4
        %v2572 = vshll.u32 %v2498, 16
        %v2574 = vrot.slane %v2572, 5
        %v2575 = vsel %vm911, %v2570, %v2574
        %v2577 = vshrl.u32 %v2486, 16
        %v2579 = vrot.slane %v2577, 4
        %v2580 = vshll.u32 %v2486, 16
        %v2582 = vrot.slane %v2580, 5
        %v2583 = vor.u32 %v2579, %v2582
        %v2584 = vrot.slane %v2583, 4
        %v2586 = vshll.u32 %v2487, 16
        %v2588 = vrot.slane %v2586, 5
        %v2589 = vsel %vm911, %v2584, %v2588
        %v2590 = vshrl.u32 %v2487, 16
        %v2592 = vrot.slane %v2590, 4
        %v2593 = vor.u32 %v2592, %v2588
        %v2594 = vrot.slane %v2593, 4
        %v2596 = vshll.u32 %v2499, 16
        %v2598 = vrot.slane %v2596, 5
        %v2599 = vsel %vm911, %v2594, %v2598
        %v2601 = vshrl.u32 %v2488, 16
        %v2603 = vrot.slane %v2601, 4
        %v2604 = vshll.u32 %v2488, 16
        %v2606 = vrot.slane %v2604, 5
        %v2607 = vor.u32 %v2603, %v2606
        %v2608 = vrot.slane %v2607, 4
        %v2610 = vshll.u32 %v2489, 16
        %v2612 = vrot.slane %v2610, 5
        %v2613 = vsel %vm911, %v2608, %v2612
        %v2614 = vshrl.u32 %v2489, 16
        %v2616 = vrot.slane %v2614, 4
        %v2617 = vor.u32 %v2616, %v2612
        %v2618 = vrot.slane %v2617, 4
        %v2620 = vshll.u32 %v2500, 16
        %v2622 = vrot.slane %v2620, 5
        %v2623 = vsel %vm911, %v2618, %v2622
        %v2625 = vshrl.u32 %v2490, 16
        %v2627 = vrot.slane %v2625, 4
        %v2628 = vshll.u32 %v2490, 16
        %v2630 = vrot.slane %v2628, 5
        %v2631 = vor.u32 %v2627, %v2630
        %v2632 = vrot.slane %v2631, 4
        %v2634 = vshll.u32 %v2491, 16
        %v2636 = vrot.slane %v2634, 5
        %v2637 = vsel %vm911, %v2632, %v2636
        %v2638 = vshrl.u32 %v2491, 16
        %v2640 = vrot.slane %v2638, 4
        %v2641 = vor.u32 %v2640, %v2636
        %v2642 = vrot.slane %v2641, 4
        %v2644 = vshll.u32 %v2501, 16
        %v2646 = vrot.slane %v2644, 5
        %v2647 = vsel %vm911, %v2642, %v2646
        %v2649 = vshrl.u32 %v2492, 16
        %v2651 = vrot.slane %v2649, 4
        %v2652 = vshll.u32 %v2492, 16
        %v2654 = vrot.slane %v2652, 5
        %v2655 = vor.u32 %v2651, %v2654
        %v2656 = vrot.slane %v2655, 4
        %v2658 = vshll.u32 %v2493, 16
        %v2660 = vrot.slane %v2658, 5
        %v2661 = vsel %vm911, %v2656, %v2660
        %v2662 = vshrl.u32 %v2493, 16
        %v2664 = vrot.slane %v2662, 4
        %v2665 = vor.u32 %v2664, %v2660
        %v2666 = vrot.slane %v2665, 4
        %v2668 = vshll.u32 %v2502, 16
        %v2670 = vrot.slane %v2668, 5
        %v2671 = vsel %vm911, %v2666, %v2670
        %v2673 = vshrl.u32 %v2494, 16
        %v2675 = vrot.slane %v2673, 4
        %v2676 = vshll.u32 %v2494, 16
        %v2678 = vrot.slane %v2676, 5
        %v2679 = vor.u32 %v2675, %v2678
        %v2680 = vrot.slane %v2679, 4
        %v2682 = vshll.u32 %v2495, 16
        %v2684 = vrot.slane %v2682, 5
        %v2685 = vsel %vm911, %v2680, %v2684
        %v2686 = vshrl.u32 %v2495, 16
        %v2688 = vrot.slane %v2686, 4
        %v2689 = vor.u32 %v2688, %v2684
        %v2690 = vrot.slane %v2689, 4
        %v2692 = vshll.u32 %v2503, 16
        %v2694 = vrot.slane %v2692, 5
        %v2695 = vsel %vm911, %v2690, %v2694
        %v2696 = vld [vmem:[%s2479] sm:$0xe]
        %v2697 = vld [vmem:[%s2479 + $0xc] sm:$0xe]
        %v2698 = vld [vmem:[%s2479 + $0x18] sm:$0xe]
        %v2699 = vld [vmem:[%s2479 + $0x24] sm:$0xe]
        %v2700 = vld [vmem:[%s2479 + $0x30] sm:$0xe]
        %v2701 = vld [vmem:[%s2479 + $0x3c] sm:$0xe]
        %v2702 = vld [vmem:[%s2479 + $0x48] sm:$0xe]
        %v2703 = vld [vmem:[%s2479 + $0x54] sm:$0xe]
        %v2728 = vrot.slane %v2696, 5
        %v2729 = vrot.slane %v2728, 4
        %v2730 = vrot.slane %v2481, 5
        %v2731 = vsel %vm1138, %v2729, %v2730
        %v2732 = vrot.slane %v2730, 4
        %v2733 = vrot.slane %v2496, 5
        %v2734 = vsel %vm1138, %v2732, %v2733
        %v2735 = vrot.slane %v2697, 5
        %v2736 = vrot.slane %v2735, 4
        %v2737 = vrot.slane %v2483, 5
        %v2738 = vsel %vm1138, %v2736, %v2737
        %v2739 = vrot.slane %v2737, 4
        %v2740 = vrot.slane %v2497, 5
        %v2741 = vsel %vm1138, %v2739, %v2740
        %v2742 = vrot.slane %v2698, 5
        %v2743 = vrot.slane %v2742, 4
        %v2744 = vrot.slane %v2485, 5
        %v2745 = vsel %vm1138, %v2743, %v2744
        %v2746 = vrot.slane %v2744, 4
        %v2747 = vrot.slane %v2498, 5
        %v2748 = vsel %vm1138, %v2746, %v2747
        %v2749 = vrot.slane %v2699, 5
        %v2750 = vrot.slane %v2749, 4
        %v2751 = vrot.slane %v2487, 5
        %v2752 = vsel %vm1138, %v2750, %v2751
        %v2753 = vrot.slane %v2751, 4
        %v2754 = vrot.slane %v2499, 5
        %v2755 = vsel %vm1138, %v2753, %v2754
        %v2756 = vrot.slane %v2700, 5
        %v2757 = vrot.slane %v2756, 4
        %v2758 = vrot.slane %v2489, 5
        %v2759 = vsel %vm1138, %v2757, %v2758
        %v2760 = vrot.slane %v2758, 4
        %v2761 = vrot.slane %v2500, 5
        %v2762 = vsel %vm1138, %v2760, %v2761
        %v2763 = vrot.slane %v2701, 5
        %v2764 = vrot.slane %v2763, 4
        %v2765 = vrot.slane %v2491, 5
        %v2766 = vsel %vm1138, %v2764, %v2765
        %v2767 = vrot.slane %v2765, 4
        %v2768 = vrot.slane %v2501, 5
        %v2769 = vsel %vm1138, %v2767, %v2768
        %v2770 = vrot.slane %v2702, 5
        %v2771 = vrot.slane %v2770, 4
        %v2772 = vrot.slane %v2493, 5
        %v2773 = vsel %vm1138, %v2771, %v2772
        %v2774 = vrot.slane %v2772, 4
        %v2775 = vrot.slane %v2502, 5
        %v2776 = vsel %vm1138, %v2774, %v2775
        %v2777 = vrot.slane %v2703, 5
        %v2778 = vrot.slane %v2777, 4
        %v2779 = vrot.slane %v2495, 5
        %v2780 = vsel %vm1138, %v2778, %v2779
        %v2781 = vrot.slane %v2779, 4
        %v2782 = vrot.slane %v2503, 5
        %v2783 = vsel %vm1138, %v2781, %v2782
        %v2792 = vunpack.c.l.b16 %v2480
        %v2793 = vunpack.c.l.b16 %v2481
        %v2794 = vunpack.c.l.b16 %v2482
        %v2795 = vunpack.c.l.b16 %v2483
        %v2796 = vunpack.c.l.b16 %v2484
        %v2797 = vunpack.c.l.b16 %v2485
        %v2798 = vunpack.c.l.b16 %v2486
        %v2799 = vunpack.c.l.b16 %v2487
        %v2800 = vunpack.c.l.b16 %v2488
        %v2801 = vunpack.c.l.b16 %v2489
        %v2802 = vunpack.c.l.b16 %v2490
        %v2803 = vunpack.c.l.b16 %v2491
        %v2804 = vunpack.c.l.b16 %v2492
        %v2805 = vunpack.c.l.b16 %v2493
        %v2806 = vunpack.c.l.b16 %v2494
        %v2807 = vunpack.c.l.b16 %v2495
        %v2808 = vpack.c.b16 %v2793, %v2792
        %v2809 = vpack.c.b16 %v2795, %v2794
        %v2810 = vpack.c.b16 %v2797, %v2796
        %v2811 = vpack.c.b16 %v2799, %v2798
        %v2812 = vpack.c.b16 %v2801, %v2800
        %v2813 = vpack.c.b16 %v2803, %v2802
        %v2814 = vpack.c.b16 %v2805, %v2804
        %v2815 = vpack.c.b16 %v2807, %v2806
        %v2824 = vunpack.c.l.b16 %v2517
        %v2825 = vunpack.c.l.b16 %v2527
        %v2826 = vunpack.c.l.b16 %v2541
        %v2827 = vunpack.c.l.b16 %v2551
        %v2828 = vunpack.c.l.b16 %v2565
        %v2829 = vunpack.c.l.b16 %v2575
        %v2830 = vunpack.c.l.b16 %v2589
        %v2831 = vunpack.c.l.b16 %v2599
        %v2832 = vunpack.c.l.b16 %v2613
        %v2833 = vunpack.c.l.b16 %v2623
        %v2834 = vunpack.c.l.b16 %v2637
        %v2835 = vunpack.c.l.b16 %v2647
        %v2836 = vunpack.c.l.b16 %v2661
        %v2837 = vunpack.c.l.b16 %v2671
        %v2838 = vunpack.c.l.b16 %v2685
        %v2839 = vunpack.c.l.b16 %v2695
        %v2840 = vpack.c.b16 %v2825, %v2824
        %v2841 = vpack.c.b16 %v2827, %v2826
        %v2842 = vpack.c.b16 %v2829, %v2828
        %v2843 = vpack.c.b16 %v2831, %v2830
        %v2844 = vpack.c.b16 %v2833, %v2832
        %v2845 = vpack.c.b16 %v2835, %v2834
        %v2846 = vpack.c.b16 %v2837, %v2836
        %v2847 = vpack.c.b16 %v2839, %v2838
        %v2856 = vunpack.c.l.b16 %v2731
        %v2857 = vunpack.c.l.b16 %v2734
        %v2858 = vunpack.c.l.b16 %v2738
        %v2859 = vunpack.c.l.b16 %v2741
        %v2860 = vunpack.c.l.b16 %v2745
        %v2861 = vunpack.c.l.b16 %v2748
        %v2862 = vunpack.c.l.b16 %v2752
        %v2863 = vunpack.c.l.b16 %v2755
        %v2864 = vunpack.c.l.b16 %v2759
        %v2865 = vunpack.c.l.b16 %v2762
        %v2866 = vunpack.c.l.b16 %v2766
        %v2867 = vunpack.c.l.b16 %v2769
        %v2868 = vunpack.c.l.b16 %v2773
        %v2869 = vunpack.c.l.b16 %v2776
        %v2870 = vunpack.c.l.b16 %v2780
        %v2871 = vunpack.c.l.b16 %v2783
        %v2872 = vpack.c.b16 %v2857, %v2856
        %v2873 = vpack.c.b16 %v2859, %v2858
        %v2874 = vpack.c.b16 %v2861, %v2860
        %v2875 = vpack.c.b16 %v2863, %v2862
        %v2876 = vpack.c.b16 %v2865, %v2864
        %v2877 = vpack.c.b16 %v2867, %v2866
        %v2878 = vpack.c.b16 %v2869, %v2868
        %v2879 = vpack.c.b16 %v2871, %v2870
        %v2888 = vld [vmem:[#allocation9 + $0x180] sm:$0xf]
        %v2889 = vld [vmem:[#allocation9 + $0x184] sm:$0xf]
        %v2890 = vld [vmem:[#allocation9 + $0x188] sm:$0xf]
        %v2891 = vld [vmem:[#allocation9 + $0x18c] sm:$0xf]
        %v2892 = vld [vmem:[#allocation9 + $0x190] sm:$0xf]
        %v2893 = vld [vmem:[#allocation9 + $0x194] sm:$0xf]
        %v2894 = vld [vmem:[#allocation9 + $0x198] sm:$0xf]
        %v2895 = vld [vmem:[#allocation9 + $0x19c] sm:$0xf]
        %v2896 = vld [vmem:[#allocation9 + $0x1a0] sm:$0xf]
        %v2897 = vld [vmem:[#allocation9 + $0x1a4] sm:$0xf]
        %v2898 = vld [vmem:[#allocation9 + $0x1a8] sm:$0xf]
        %v2899 = vld [vmem:[#allocation9 + $0x1ac] sm:$0xf]
        %v2900 = vld [vmem:[#allocation9 + $0x1b0] sm:$0xf]
        %v2901 = vld [vmem:[#allocation9 + $0x1b4] sm:$0xf]
        %v2902 = vld [vmem:[#allocation9 + $0x1b8] sm:$0xf]
        %v2903 = vld [vmem:[#allocation9 + $0x1bc] sm:$0xf]
        %v2904 = vld [vmem:[#allocation9 + $0x1c0] sm:$0xf]
        %v2905 = vld [vmem:[#allocation9 + $0x1c4] sm:$0xf]
        %v2906 = vld [vmem:[#allocation9 + $0x1c8] sm:$0xf]
        %v2907 = vld [vmem:[#allocation9 + $0x1cc] sm:$0xf]
        %v2908 = vld [vmem:[#allocation9 + $0x1d0] sm:$0xf]
        %v2909 = vld [vmem:[#allocation9 + $0x1d4] sm:$0xf]
        %v2910 = vld [vmem:[#allocation9 + $0x1d8] sm:$0xf]
        %v2911 = vld [vmem:[#allocation9 + $0x1dc] sm:$0xf]
        %v2912 = vld [vmem:[#allocation9 + $0x1e0] sm:$0xf]
        %v2913 = vld [vmem:[#allocation9 + $0x1e4] sm:$0xf]
        %v2914 = vld [vmem:[#allocation9 + $0x1e8] sm:$0xf]
        %v2915 = vld [vmem:[#allocation9 + $0x1ec] sm:$0xf]
        %v2916 = vld [vmem:[#allocation9 + $0x1f0] sm:$0xf]
        %v2917 = vld [vmem:[#allocation9 + $0x1f4] sm:$0xf]
        %v2918 = vld [vmem:[#allocation9 + $0x1f8] sm:$0xf]
        %v2919 = vld [vmem:[#allocation9 + $0x1fc] sm:$0xf]
        %v2920 = vld [vmem:[#allocation9 + $0x200] sm:$0xf]
        %v2921 = vld [vmem:[#allocation9 + $0x204] sm:$0xf]
        %v2922 = vld [vmem:[#allocation9 + $0x208] sm:$0xf]
        %v2923 = vld [vmem:[#allocation9 + $0x20c] sm:$0xf]
        %v2924 = vld [vmem:[#allocation9 + $0x210] sm:$0xf]
        %v2925 = vld [vmem:[#allocation9 + $0x214] sm:$0xf]
        %v2926 = vld [vmem:[#allocation9 + $0x218] sm:$0xf]
        %v2927 = vld [vmem:[#allocation9 + $0x21c] sm:$0xf]
        %v2928 = vld [vmem:[#allocation9 + $0x220] sm:$0xf]
        %v2929 = vld [vmem:[#allocation9 + $0x224] sm:$0xf]
        %v2930 = vld [vmem:[#allocation9 + $0x228] sm:$0xf]
        %v2931 = vld [vmem:[#allocation9 + $0x22c] sm:$0xf]
        %v2932 = vld [vmem:[#allocation9 + $0x230] sm:$0xf]
        %v2933 = vld [vmem:[#allocation9 + $0x234] sm:$0xf]
        %v2934 = vld [vmem:[#allocation9 + $0x238] sm:$0xf]
        %v2935 = vld [vmem:[#allocation9 + $0x23c] sm:$0xf]
        %v2984 = vunpack.c.l.b16 %v2888
        %v2985 = vunpack.c.l.b16 %v2889
        %v2986 = vunpack.c.l.b16 %v2890
        %v2987 = vunpack.c.l.b16 %v2891
        %v2988 = vunpack.c.l.b16 %v2892
        %v2989 = vunpack.c.l.b16 %v2893
        %v2990 = vunpack.c.l.b16 %v2894
        %v2991 = vunpack.c.l.b16 %v2895
        %v2992 = vunpack.c.l.b16 %v2896
        %v2993 = vunpack.c.l.b16 %v2897
        %v2994 = vunpack.c.l.b16 %v2898
        %v2995 = vunpack.c.l.b16 %v2899
        %v2996 = vunpack.c.l.b16 %v2900
        %v2997 = vunpack.c.l.b16 %v2901
        %v2998 = vunpack.c.l.b16 %v2902
        %v2999 = vunpack.c.l.b16 %v2903
        %v3000 = vunpack.c.l.b16 %v2904
        %v3001 = vunpack.c.l.b16 %v2905
        %v3002 = vunpack.c.l.b16 %v2906
        %v3003 = vunpack.c.l.b16 %v2907
        %v3004 = vunpack.c.l.b16 %v2908
        %v3005 = vunpack.c.l.b16 %v2909
        %v3006 = vunpack.c.l.b16 %v2910
        %v3007 = vunpack.c.l.b16 %v2911
        %v3008 = vunpack.c.l.b16 %v2912
        %v3009 = vunpack.c.l.b16 %v2913
        %v3010 = vunpack.c.l.b16 %v2914
        %v3011 = vunpack.c.l.b16 %v2915
        %v3012 = vunpack.c.l.b16 %v2916
        %v3013 = vunpack.c.l.b16 %v2917
        %v3014 = vunpack.c.l.b16 %v2918
        %v3015 = vunpack.c.l.b16 %v2919
        %v3016 = vunpack.c.l.b16 %v2920
        %v3017 = vunpack.c.l.b16 %v2921
        %v3018 = vunpack.c.l.b16 %v2922
        %v3019 = vunpack.c.l.b16 %v2923
        %v3020 = vunpack.c.l.b16 %v2924
        %v3021 = vunpack.c.l.b16 %v2925
        %v3022 = vunpack.c.l.b16 %v2926
        %v3023 = vunpack.c.l.b16 %v2927
        %v3024 = vunpack.c.l.b16 %v2928
        %v3025 = vunpack.c.l.b16 %v2929
        %v3026 = vunpack.c.l.b16 %v2930
        %v3027 = vunpack.c.l.b16 %v2931
        %v3028 = vunpack.c.l.b16 %v2932
        %v3029 = vunpack.c.l.b16 %v2933
        %v3030 = vunpack.c.l.b16 %v2934
        %v3031 = vunpack.c.l.b16 %v2935
        %v3032 = vpack.c.b16 %v2985, %v2984
        %v3033 = vpack.c.b16 %v2987, %v2986
        %v3034 = vpack.c.b16 %v2989, %v2988
        %v3035 = vpack.c.b16 %v2991, %v2990
        %v3036 = vpack.c.b16 %v2993, %v2992
        %v3037 = vpack.c.b16 %v2995, %v2994
        %v3038 = vpack.c.b16 %v2997, %v2996
        %v3039 = vpack.c.b16 %v2999, %v2998
        %v3040 = vpack.c.b16 %v3001, %v3000
        %v3041 = vpack.c.b16 %v3003, %v3002
        %v3042 = vpack.c.b16 %v3005, %v3004
        %v3043 = vpack.c.b16 %v3007, %v3006
        %v3044 = vpack.c.b16 %v3009, %v3008
        %v3045 = vpack.c.b16 %v3011, %v3010
        %v3046 = vpack.c.b16 %v3013, %v3012
        %v3047 = vpack.c.b16 %v3015, %v3014
        %v3048 = vpack.c.b16 %v3017, %v3016
        %v3049 = vpack.c.b16 %v3019, %v3018
        %v3050 = vpack.c.b16 %v3021, %v3020
        %v3051 = vpack.c.b16 %v3023, %v3022
        %v3052 = vpack.c.b16 %v3025, %v3024
        %v3053 = vpack.c.b16 %v3027, %v3026
        %v3054 = vpack.c.b16 %v3029, %v3028
        %v3055 = vpack.c.b16 %v3031, %v3030
        %3080 = vmatprep.subr.bf16.mxu0 0
        %3081 = vmatpush1.bf16.msra.mxu0 %v3032
        %3082 = vmatprep.subr.bf16.mxu0 0
        %3083 = vmatpush1.bf16.msra.mxu0 %v3033
        %3084 = vmatprep.subr.bf16.mxu0 0
        %3085 = vmatpush1.bf16.msra.mxu0 %v3034
        %3086 = vmatprep.subr.bf16.mxu0 0
        %3087 = vmatpush1.bf16.msra.mxu0 %v3035
        %3088 = vmatprep.subr.bf16.mxu0 0
        %3089 = vmatpush1.bf16.msra.mxu0 %v3036
        %3090 = vmatprep.subr.bf16.mxu0 0
        %3091 = vmatpush1.bf16.msra.mxu0 %v3037
        %3092 = vmatprep.subr.bf16.mxu0 0
        %3093 = vmatpush1.bf16.msra.mxu0 %v3038
        %3094 = vmatprep.subr.bf16.mxu0 0
        %3095 = vmatpush1.bf16.msra.mxu0 %v3039
        %3096 = vmatprep.subr.bf16.mxu0 0
        %3097 = vmatpush1.bf16.msra.mxu0 %v3040
        %3098 = vmatprep.subr.bf16.mxu0 0
        %3099 = vmatpush1.bf16.msra.mxu0 %v3041
        %3100 = vmatprep.subr.bf16.mxu0 0
        %3101 = vmatpush1.bf16.msra.mxu0 %v3042
        %3102 = vmatprep.subr.bf16.mxu0 0
        %3103 = vmatpush1.bf16.msra.mxu0 %v3043
        %3104 = vmatprep.subr.bf16.mxu0 0
        %3105 = vmatpush1.bf16.msra.mxu0 %v3044
        %3106 = vmatprep.subr.bf16.mxu0 0
        %3107 = vmatpush1.bf16.msra.mxu0 %v3045
        %3108 = vmatprep.subr.bf16.mxu0 0
        %3109 = vmatpush1.bf16.msra.mxu0 %v3046
        %3110 = vmatprep.subr.bf16.mxu0 0
        %3111 = vmatpush1.bf16.msra.mxu0 %v3047
        %3112 = vmatprep.mubr.bf16.mxu0 %v2840
        %3113 = vmatmul.mubr.bf16.gmra.mrb[0].mxu0 %v2808
        %v3114 = vpop.f32.mrb[0].mxu0
        %v3115 = vadd.f32 0.0, %v3114
        %v3116 = vpop.f32.mrb[0].mxu0
        %v3117 = vpop.f32.mrb[0].mxu0
        %v3118 = vadd.f32 0.0, %v3117
        %v3119 = vpop.f32.mrb[0].mxu0
        %3120 = vmatprep.mubr.bf16.mxu0 %v2841
        %3121 = vmatmul.mubr.bf16.gmra.mrb[0].mxu0 %v2809
        %v3122 = vpop.f32.mrb[0].mxu0
        %v3123 = vadd.f32 0.0, %v3122
        %v3124 = vpop.f32.mrb[0].mxu0
        %v3125 = vpop.f32.mrb[0].mxu0
        %v3126 = vadd.f32 0.0, %v3125
        %v3127 = vpop.f32.mrb[0].mxu0
        %3128 = vmatprep.mubr.bf16.mxu0 %v2842
        %3129 = vmatmul.mubr.bf16.gmra.mrb[0].mxu0 %v2810
        %v3130 = vpop.f32.mrb[0].mxu0
        %v3131 = vadd.f32 0.0, %v3130
        %v3132 = vpop.f32.mrb[0].mxu0
        %v3133 = vpop.f32.mrb[0].mxu0
        %v3134 = vadd.f32 0.0, %v3133
        %v3135 = vpop.f32.mrb[0].mxu0
        %3136 = vmatprep.mubr.bf16.mxu0 %v2843
        %3137 = vmatmul.mubr.bf16.gmra.mrb[0].mxu0 %v2811
        %v3138 = vpop.f32.mrb[0].mxu0
        %v3139 = vadd.f32 0.0, %v3138
        %v3140 = vpop.f32.mrb[0].mxu0
        %v3141 = vpop.f32.mrb[0].mxu0
        %v3142 = vadd.f32 0.0, %v3141
        %v3143 = vpop.f32.mrb[0].mxu0
        %3144 = vmatprep.mubr.bf16.mxu0 %v2844
        %3145 = vmatmul.mubr.bf16.gmra.mrb[0].mxu0 %v2812
        %v3146 = vpop.f32.mrb[0].mxu0
        %v3147 = vadd.f32 0.0, %v3146
        %v3148 = vpop.f32.mrb[0].mxu0
        %v3149 = vpop.f32.mrb[0].mxu0
        %v3150 = vadd.f32 0.0, %v3149
        %v3151 = vpop.f32.mrb[0].mxu0
        %3152 = vmatprep.mubr.bf16.mxu0 %v2845
        %3153 = vmatmul.mubr.bf16.gmra.mrb[0].mxu0 %v2813
        %v3154 = vpop.f32.mrb[0].mxu0
        %v3155 = vadd.f32 0.0, %v3154
        %v3156 = vpop.f32.mrb[0].mxu0
        %v3157 = vpop.f32.mrb[0].mxu0
        %v3158 = vadd.f32 0.0, %v3157
        %v3159 = vpop.f32.mrb[0].mxu0
        %3160 = vmatprep.mubr.bf16.mxu0 %v2846
        %3161 = vmatmul.mubr.bf16.gmra.mrb[0].mxu0 %v2814
        %v3162 = vpop.f32.mrb[0].mxu0
        %v3163 = vadd.f32 0.0, %v3162
        %v3164 = vpop.f32.mrb[0].mxu0
        %v3165 = vpop.f32.mrb[0].mxu0
        %v3166 = vadd.f32 0.0, %v3165
        %v3167 = vpop.f32.mrb[0].mxu0
        %3168 = vmatprep.mubr.bf16.mxu0 %v2847
        %3169 = vmatmul.mubr.bf16.gmra.mrb[0].mxu0 %v2815
        %v3170 = vpop.f32.mrb[0].mxu0
        %v3171 = vadd.f32 0.0, %v3170
        %v3172 = vpop.f32.mrb[0].mxu0
        %v3173 = vpop.f32.mrb[0].mxu0
        %v3174 = vadd.f32 0.0, %v3173
        %v3175 = vpop.f32.mrb[0].mxu0
        %3176 = vdwg.mxu0
        %3177 = vmatprep.subr.bf16.mxu0 0
        %3178 = vmatpush1.bf16.msra.mxu0 %v3048
        %3179 = vmatprep.subr.bf16.mxu0 0
        %3180 = vmatpush1.bf16.msra.mxu0 %v3049
        %3181 = vmatprep.subr.bf16.mxu0 0
        %3182 = vmatpush1.bf16.msra.mxu0 %v3050
        %3183 = vmatprep.subr.bf16.mxu0 0
        %3184 = vmatpush1.bf16.msra.mxu0 %v3051
        %3185 = vmatprep.subr.bf16.mxu0 0
        %3186 = vmatpush1.bf16.msra.mxu0 %v3052
        %3187 = vmatprep.subr.bf16.mxu0 0
        %3188 = vmatpush1.bf16.msra.mxu0 %v3053
        %3189 = vmatprep.subr.bf16.mxu0 0
        %3190 = vmatpush1.bf16.msra.mxu0 %v3054
        %3191 = vmatprep.subr.bf16.mxu0 0
        %3192 = vmatpush1.bf16.msra.mxu0 %v3055
        %3193 = vmatprep.subr.bf16.mxu0 0
        %3194 = vmatpush1.bf16.msra.mxu0 0
        %3195 = vmatprep.subr.bf16.mxu0 0
        %3196 = vmatpush1.bf16.msra.mxu0 0
        %3197 = vmatprep.subr.bf16.mxu0 0
        %3198 = vmatpush1.bf16.msra.mxu0 0
        %3199 = vmatprep.subr.bf16.mxu0 0
        %3200 = vmatpush1.bf16.msra.mxu0 0
        %3201 = vmatprep.subr.bf16.mxu0 0
        %3202 = vmatpush1.bf16.msra.mxu0 0
        %3203 = vmatprep.subr.bf16.mxu0 0
        %3204 = vmatpush1.bf16.msra.mxu0 0
        %3205 = vmatprep.subr.bf16.mxu0 0
        %3206 = vmatpush1.bf16.msra.mxu0 0
        %3207 = vmatprep.subr.bf16.mxu0 0
        %3208 = vmatpush1.bf16.msra.mxu0 0
        %3209 = vmatprep.mubr.bf16.mxu0 0
        %3210 = vmatmul.mubr.bf16.gmra.mrb[0].mxu0 %v2872
        %v3211 = vpop.f32.mrb[0].mxu0
        %v3212 = vadd.f32 %v3115, %v3211
        %v3213 = vpop.f32.mrb[0].mxu0
        %v3214 = vpop.f32.mrb[0].mxu0
        %v3215 = vadd.f32 %v3118, %v3214
        %v3216 = vpop.f32.mrb[0].mxu0
        %3217 = vmatprep.mubr.bf16.mxu0 0
        %3218 = vmatmul.mubr.bf16.gmra.mrb[0].mxu0 %v2873
        %v3219 = vpop.f32.mrb[0].mxu0
        %v3220 = vadd.f32 %v3123, %v3219
        %v3221 = vpop.f32.mrb[0].mxu0
        %v3222 = vpop.f32.mrb[0].mxu0
        %v3223 = vadd.f32 %v3126, %v3222
        %v3224 = vpop.f32.mrb[0].mxu0
        %3225 = vmatprep.mubr.bf16.mxu0 0
        %3226 = vmatmul.mubr.bf16.gmra.mrb[0].mxu0 %v2874
        %v3227 = vpop.f32.mrb[0].mxu0
        %v3228 = vadd.f32 %v3131, %v3227
        %v3229 = vpop.f32.mrb[0].mxu0
        %v3230 = vpop.f32.mrb[0].mxu0
        %v3231 = vadd.f32 %v3134, %v3230
        %v3232 = vpop.f32.mrb[0].mxu0
        %3233 = vmatprep.mubr.bf16.mxu0 0
        %3234 = vmatmul.mubr.bf16.gmra.mrb[0].mxu0 %v2875
        %v3235 = vpop.f32.mrb[0].mxu0
        %v3236 = vadd.f32 %v3139, %v3235
        %v3237 = vpop.f32.mrb[0].mxu0
        %v3238 = vpop.f32.mrb[0].mxu0
        %v3239 = vadd.f32 %v3142, %v3238
        %v3240 = vpop.f32.mrb[0].mxu0
        %3241 = vmatprep.mubr.bf16.mxu0 0
        %3242 = vmatmul.mubr.bf16.gmra.mrb[0].mxu0 %v2876
        %v3243 = vpop.f32.mrb[0].mxu0
        %v3244 = vadd.f32 %v3147, %v3243
        %v3245 = vpop.f32.mrb[0].mxu0
        %v3246 = vpop.f32.mrb[0].mxu0
        %v3247 = vadd.f32 %v3150, %v3246
        %v3248 = vpop.f32.mrb[0].mxu0
        %3249 = vmatprep.mubr.bf16.mxu0 0
        %3250 = vmatmul.mubr.bf16.gmra.mrb[0].mxu0 %v2877
        %v3251 = vpop.f32.mrb[0].mxu0
        %v3252 = vadd.f32 %v3155, %v3251
        %v3253 = vpop.f32.mrb[0].mxu0
        %v3254 = vpop.f32.mrb[0].mxu0
        %v3255 = vadd.f32 %v3158, %v3254
        %v3256 = vpop.f32.mrb[0].mxu0
        %3257 = vmatprep.mubr.bf16.mxu0 0
        %3258 = vmatmul.mubr.bf16.gmra.mrb[0].mxu0 %v2878
        %v3259 = vpop.f32.mrb[0].mxu0
        %v3260 = vadd.f32 %v3163, %v3259
        %v3261 = vpop.f32.mrb[0].mxu0
        %v3262 = vpop.f32.mrb[0].mxu0
        %v3263 = vadd.f32 %v3166, %v3262
        %v3264 = vpop.f32.mrb[0].mxu0
        %3265 = vmatprep.mubr.bf16.mxu0 0
        %3266 = vmatmul.mubr.bf16.gmra.mrb[0].mxu0 %v2879
        %v3267 = vpop.f32.mrb[0].mxu0
        %v3268 = vadd.f32 %v3171, %v3267
        %v3269 = vpop.f32.mrb[0].mxu0
        %v3270 = vpop.f32.mrb[0].mxu0
        %v3271 = vadd.f32 %v3174, %v3270
        %v3272 = vpop.f32.mrb[0].mxu0
        %3273 = vdwg.mxu0
        %v3274 = vadd.f32 %v2417, %v3212
        %v3275 = vadd.f32 %v2420, %v3215
        %v3276 = vadd.f32 %v2425, %v3220
        %v3277 = vadd.f32 %v2428, %v3223
        %v3278 = vadd.f32 %v2433, %v3228
        %v3279 = vadd.f32 %v2436, %v3231
        %v3280 = vadd.f32 %v2441, %v3236
        %v3281 = vadd.f32 %v2444, %v3239
        %v3282 = vadd.f32 %v2449, %v3244
        %v3283 = vadd.f32 %v2452, %v3247
        %v3284 = vadd.f32 %v2457, %v3252
        %v3285 = vadd.f32 %v2460, %v3255
        %v3286 = vadd.f32 %v2465, %v3260
        %v3287 = vadd.f32 %v2468, %v3263
        %v3288 = vadd.f32 %v2473, %v3268
        %v3289 = vadd.f32 %v2476, %v3271
        %v3290 = vpack.c.bf16 %v3275, %v3274
        %v3291 = vpack.c.bf16 %v3277, %v3276
        %v3292 = vpack.c.bf16 %v3279, %v3278
        %v3293 = vpack.c.bf16 %v3281, %v3280
        %v3294 = vpack.c.bf16 %v3283, %v3282
        %v3295 = vpack.c.bf16 %v3285, %v3284
        %v3296 = vpack.c.bf16 %v3287, %v3286
        %v3297 = vpack.c.bf16 %v3289, %v3288
        %v3306 = vunpack.c.l.b16 %v3290
        %v3307 = vunpack.c.h.b16 %v3290
        %v3308 = vunpack.c.l.b16 %v3291
        %v3309 = vunpack.c.h.b16 %v3291
        %v3310 = vunpack.c.l.b16 %v3292
        %v3311 = vunpack.c.h.b16 %v3292
        %v3312 = vunpack.c.l.b16 %v3293
        %v3313 = vunpack.c.h.b16 %v3293
        %v3314 = vunpack.c.l.b16 %v3294
        %v3315 = vunpack.c.h.b16 %v3294
        %v3316 = vunpack.c.l.b16 %v3295
        %v3317 = vunpack.c.h.b16 %v3295
        %v3318 = vunpack.c.l.b16 %v3296
        %v3319 = vunpack.c.h.b16 %v3296
        %v3320 = vunpack.c.l.b16 %v3297
        %v3321 = vunpack.c.h.b16 %v3297
        %v3322 = vpack.c.b16 %v3306, %v3306
        %v3323 = vpack.c.b16 %v3307, %v3307
        %v3324 = vpack.c.b16 %v3308, %v3308
        %v3325 = vpack.c.b16 %v3309, %v3309
        %v3326 = vpack.c.b16 %v3310, %v3310
        %v3327 = vpack.c.b16 %v3311, %v3311
        %v3328 = vpack.c.b16 %v3312, %v3312
        %v3329 = vpack.c.b16 %v3313, %v3313
        %v3330 = vpack.c.b16 %v3314, %v3314
        %v3331 = vpack.c.b16 %v3315, %v3315
        %v3332 = vpack.c.b16 %v3316, %v3316
        %v3333 = vpack.c.b16 %v3317, %v3317
        %v3334 = vpack.c.b16 %v3318, %v3318
        %v3335 = vpack.c.b16 %v3319, %v3319
        %v3336 = vpack.c.b16 %v3320, %v3320
        %v3337 = vpack.c.b16 %v3321, %v3321
        %3354 = vst [vmem:[%s327] sm:$0xf] %v3322
        %3355 = vst [vmem:[%s327 + $0x4] sm:$0xf] %v3323
        %3356 = vst [vmem:[%s327 + $0x8] sm:$0xf] %v3324
        %3357 = vst [vmem:[%s327 + $0xc] sm:$0xf] %v3325
        %3358 = vst [vmem:[%s327 + $0x10] sm:$0xf] %v3326
        %3359 = vst [vmem:[%s327 + $0x14] sm:$0xf] %v3327
        %3360 = vst [vmem:[%s327 + $0x18] sm:$0xf] %v3328
        %3361 = vst [vmem:[%s327 + $0x1c] sm:$0xf] %v3329
        %3362 = vst [vmem:[%s327 + $0x20] sm:$0xf] %v3330
        %3363 = vst [vmem:[%s327 + $0x24] sm:$0xf] %v3331
        %3364 = vst [vmem:[%s327 + $0x28] sm:$0xf] %v3332
        %3365 = vst [vmem:[%s327 + $0x2c] sm:$0xf] %v3333
        %3366 = vst [vmem:[%s327 + $0x30] sm:$0xf] %v3334
        %3367 = vst [vmem:[%s327 + $0x34] sm:$0xf] %v3335
        %3368 = vst [vmem:[%s327 + $0x38] sm:$0xf] %v3336
        %3369 = vst [vmem:[%s327 + $0x3c] sm:$0xf] %v3337
        // Predicated region
        $region53: #{uconv2d_forward.4} parent=35 // pred_check
          %p3370 = pneg %p793
        $region54: #{uconv2d_forward.4} parent=35 // pred_check_branch
          %3372 = sbr.rel (%p3370) target = $region56
        $region55: #{uconv2d_forward.4} parent=35 // pred_region
          %3373 = vst [vmem:[%s334] sm:$0xff] 0.0
          %3374 = vst [vmem:[%s341] sm:$0xff] 0.0
        $region56: #{uconv2d_forward.4} parent=35 // pred_fallthru
          _
        %v3375 = vld [vmem:[%s334] sm:$0x1]
        %v3376 = vadd.f32 %v3274, %v3275
        %v3377 = vadd.f32 %v3376, %v3276
        %v3378 = vadd.f32 %v3377, %v3277
        %v3379 = vadd.f32 %v3378, %v3278
        %v3380 = vadd.f32 %v3379, %v3279
        %v3381 = vadd.f32 %v3380, %v3280
        %v3382 = vadd.f32 %v3381, %v3281
        %v3383 = vadd.f32 %v3382, %v3282
        %v3384 = vadd.f32 %v3383, %v3283
        %v3385 = vadd.f32 %v3384, %v3284
        %v3386 = vadd.f32 %v3385, %v3285
        %v3387 = vadd.f32 %v3386, %v3286
        %v3388 = vadd.f32 %v3387, %v3287
        %v3389 = vadd.f32 %v3388, %v3288
        %v3390 = vadd.f32 %v3389, %v3289
        %v3391 = vrot.slane %v3390, 4
        %v3392 = vadd.f32 %v3390, %v3391
        %v3393 = vrot.slane %v3392, 2
        %v3394 = vadd.f32 %v3392, %v3393
        %v3395 = vrot.slane %v3394, 1
        %v3396 = vadd.f32 %v3394, %v3395
        %v3397 = vadd.f32 %v3375, %v3396
        %3398 = vst [vmem:[%s334] sm:$0x1] %v3397
        %v3399 = vld [vmem:[%s341] sm:$0x1]
        %v3400 = vmul.f32 %v3274, %v3274
        %v3401 = vmul.f32 %v3275, %v3275
        %v3402 = vmul.f32 %v3276, %v3276
        %v3403 = vmul.f32 %v3277, %v3277
        %v3404 = vmul.f32 %v3278, %v3278
        %v3405 = vmul.f32 %v3279, %v3279
        %v3406 = vmul.f32 %v3280, %v3280
        %v3407 = vmul.f32 %v3281, %v3281
        %v3408 = vmul.f32 %v3282, %v3282
        %v3409 = vmul.f32 %v3283, %v3283
        %v3410 = vmul.f32 %v3284, %v3284
        %v3411 = vmul.f32 %v3285, %v3285
        %v3412 = vmul.f32 %v3286, %v3286
        %v3413 = vmul.f32 %v3287, %v3287
        %v3414 = vmul.f32 %v3288, %v3288
        %v3415 = vmul.f32 %v3289, %v3289
        %v3416 = vadd.f32 %v3400, %v3401
        %v3417 = vadd.f32 %v3416, %v3402
        %v3418 = vadd.f32 %v3417, %v3403
        %v3419 = vadd.f32 %v3418, %v3404
        %v3420 = vadd.f32 %v3419, %v3405
        %v3421 = vadd.f32 %v3420, %v3406
        %v3422 = vadd.f32 %v3421, %v3407
        %v3423 = vadd.f32 %v3422, %v3408
        %v3424 = vadd.f32 %v3423, %v3409
        %v3425 = vadd.f32 %v3424, %v3410
        %v3426 = vadd.f32 %v3425, %v3411
        %v3427 = vadd.f32 %v3426, %v3412
        %v3428 = vadd.f32 %v3427, %v3413
        %v3429 = vadd.f32 %v3428, %v3414
        %v3430 = vadd.f32 %v3429, %v3415
        %v3431 = vrot.slane %v3430, 4
        %v3432 = vadd.f32 %v3430, %v3431
        %v3433 = vrot.slane %v3432, 2
        %v3434 = vadd.f32 %v3432, %v3433
        %v3435 = vrot.slane %v3434, 1
        %v3436 = vadd.f32 %v3434, %v3435
        %v3437 = vadd.f32 %v3399, %v3436
        %3438 = vst [vmem:[%s341] sm:$0x1] %v3437
        %s3439 = sand.u32 %s140, 1
        %s3440 = scalar_lea.sflag [#allocation5], %s3439
        %s3441 = sand.u32 %s140, 1
        %s3442 = smul.addr %s3441, 64
        %s3443 = scalar_lea.vmem [#allocation11], %s3442
        %s3444 = sand.u32 %s29, 1
        %s3445 = scalar_lea.sflag [#allocation13], %s3444
        %s3446 = sand.u32 %s166, 1
        %s3447 = smul.addr %s3446, 8
        %s3448 = scalar_lea.vmem [#allocation12], %s3447
        %s3449 = sand.u32 %s29, 1
        %s3450 = scalar_lea.sflag [#allocation13], %s3449
        %s3451 = sand.u32 %s192, 1
        %s3452 = smul.addr %s3451, 8
        %s3453 = scalar_lea.vmem [#allocation14], %s3452
        // Predicated region
        $region57: #{uconv2d_forward.4} parent=35 // pred_check
          %p3454 = pneg %p150
        $region58: #{uconv2d_forward.4} parent=35 // pred_check_branch
          %3456 = sbr.rel (%p3454) target = $region60
        $region59: #{uconv2d_forward.4} parent=35 // pred_region
          %s3457 = smul.u32 8, %s34
          %s3459 = ssub.s32 1024, 1024
          %3460 = vsyncadd %s3440, %s3459
          %s3461 = smul.addr %s3457, 2
          %s3462 = smul.addr %s33, 32
          %s3463 = sadd.s32 %s3461, %s3462
          %s3464 = smul.addr %s3463, 64
          %s3465 = scalar_lea.hbm %s4, %s3464
          %s3466 = sshll.u32 %s3443, 4
          %s3467 = int_to_ptr.vmem [resolvable:$true] %s3466
          %3472 = dma.vmem_to_hbm [thread:$0]  %s3467, 1024, %s3465, %s3440, 64, 64, 4
        $region60: #{uconv2d_forward.4} parent=35 // pred_fallthru
          _
        // Predicated region
        $region61: #{uconv2d_forward.4} parent=35 // pred_check
          %p3473 = pneg %p176
        $region62: #{uconv2d_forward.4} parent=35 // pred_check_branch
          %3475 = sbr.rel (%p3473) target = $region64
        $region63: #{uconv2d_forward.4} parent=35 // pred_region
          %s3477 = ssub.s32 128, 128
          %3478 = vsyncadd %s3445, %s3477
          %s3479 = smul.addr %s33, 128
          %s3480 = scalar_lea.hbm %s5, %s3479
          %s3482 = sshll.u32 %s3448, 4
          %s3483 = int_to_ptr.vmem [resolvable:$true] %s3482
          %3485 = dma.vmem_to_hbm [thread:$0]  %s3483, 128, %s3480, %s3445
        $region64: #{uconv2d_forward.4} parent=35 // pred_fallthru
          _
        // Predicated region
        $region65: #{uconv2d_forward.4} parent=35 // pred_check
          %p3486 = pneg %p202
        $region66: #{uconv2d_forward.4} parent=35 // pred_check_branch
          %3488 = sbr.rel (%p3486) target = $region68
        $region67: #{uconv2d_forward.4} parent=35 // pred_region
          %s3490 = ssub.s32 128, 128
          %3491 = vsyncadd %s3450, %s3490
          %s3492 = smul.addr %s33, 128
          %s3493 = scalar_lea.hbm %s6, %s3492
          %s3495 = sshll.u32 %s3453, 4
          %s3496 = int_to_ptr.vmem [resolvable:$true] %s3495
          %3498 = dma.vmem_to_hbm [thread:$0]  %s3496, 128, %s3493, %s3450
        $region68: #{uconv2d_forward.4} parent=35 // pred_fallthru
          _
      $region36: #{uconv2d_forward.4} parent=5 // pred_fallthru
        _
      %p3499 = scmp.le.s32.totalorder 2, %s24
      // Predicated region
      $region69: #{uconv2d_forward.4} parent=5 // pred_check
        %p3500 = pneg %p3499
      $region70: #{uconv2d_forward.4} parent=5 // pred_check_branch
        %3502 = sbr.rel (%p3500) target = $region72
      $region71: #{uconv2d_forward.4} parent=5 // pred_region
        %s3503 = ssub.s32 %s24, 2
        // Predicated region
        $region73: #{uconv2d_forward.4} parent=71 // pred_check
          %p3504 = pneg %p156
        $region74: #{uconv2d_forward.4} parent=71 // pred_check_branch
          %3506 = sbr.rel (%p3504) target = $region76
        $region75: #{uconv2d_forward.4} parent=71 // pred_region
          %s3507 = sand.u32 %s141, 1
          %s3508 = scalar_lea.sflag [#allocation5], %s3507
          %s3509 = sand.u32 %s141, 1
          %s3510 = smul.addr %s3509, 64
          %s3511 = scalar_lea.vmem [#allocation11], %s3510
          %3512 = dma.done %s3508, 1024
        $region76: #{uconv2d_forward.4} parent=71 // pred_fallthru
          _
        // Predicated region
        $region77: #{uconv2d_forward.4} parent=71 // pred_check
          %p3513 = pneg %p182
        $region78: #{uconv2d_forward.4} parent=71 // pred_check_branch
          %3515 = sbr.rel (%p3513) target = $region80
        $region79: #{uconv2d_forward.4} parent=71 // pred_region
          %s3516 = sand.u32 %s30, 1
          %s3517 = scalar_lea.sflag [#allocation13], %s3516
          %s3518 = sand.u32 %s167, 1
          %s3519 = smul.addr %s3518, 8
          %s3520 = scalar_lea.vmem [#allocation12], %s3519
          %3521 = dma.done %s3517, 128
        $region80: #{uconv2d_forward.4} parent=71 // pred_fallthru
          _
        // Predicated region
        $region81: #{uconv2d_forward.4} parent=71 // pred_check
          %p3522 = pneg %p208
        $region82: #{uconv2d_forward.4} parent=71 // pred_check_branch
          %3524 = sbr.rel (%p3522) target = $region84
        $region83: #{uconv2d_forward.4} parent=71 // pred_region
          %s3525 = sand.u32 %s30, 1
          %s3526 = scalar_lea.sflag [#allocation13], %s3525
          %s3527 = sand.u32 %s193, 1
          %s3528 = smul.addr %s3527, 8
          %s3529 = scalar_lea.vmem [#allocation14], %s3528
          %3530 = dma.done %s3526, 128
        $region84: #{uconv2d_forward.4} parent=71 // pred_fallthru
          _
      $region72: #{uconv2d_forward.4} parent=5 // pred_fallthru
        _
    $region6: #{uconv2d_forward.4} parent=1 // loop_footer
      %s28 = sadd.s32 1, %s24
    $region7: #{uconv2d_forward.4} parent=1 // loop_footer_branch
      %23 = sbr.rel target = $region3
    $region8: #{uconv2d_forward.4} parent=1 // loop_exit
      _
    %3531 = vsyncpa [#allocation4], 1
    %s3532 = scalar_lea.sflag [#allocation4], 1
    %3533 = vsyncpa %s3532, 1
    %3534 = vsyncpa [#allocation7], 1
    %3535 = vsyncpa [#allocation10], 1
    %3536 = vsyncpa [#allocation5], 1
    %s3537 = scalar_lea.sflag [#allocation5], 1
    %3538 = vsyncpa %s3537, 1
    %3539 = vsyncpa [#allocation13], 1
    %s3540 = scalar_lea.sflag [#allocation13], 1
    %3541 = vsyncpa %s3540, 1

</llo_original>
